<compile_context>
chip_gen: v6e
topology: v6e:2x2x1
jax: 0.10.0
libtpu: 0.0.40
codegen_flags: <defaults>
</compile_context>

<pallas_src>
import jax
import jax.numpy as jnp
from jax.experimental import pallas as pl
from jax.experimental.pallas import tpu as pltpu

_BN_EPS = 1e-5
_VMEM = pl.BlockSpec(memory_space=pltpu.MemorySpace.VMEM)


# ----------------------------- Pallas kernels ------------------------------

def _bn(acc, gamma, beta):
    # acc: (M, C) f32 with M = N*H*W  -> training-mode BatchNorm2d (biased var).
    mean = jnp.mean(acc, axis=0, keepdims=True)
    var = jnp.mean(jnp.square(acc - mean), axis=0, keepdims=True)
    return (acc - mean) * jax.lax.rsqrt(var + _BN_EPS) * gamma + beta


def _conv_bn_relu_kernel(cols_ref, w_ref, b_ref, g_ref, bb_ref, o_ref):
    # Conv (as matmul on bf16 im2col columns, f32 accum) + bias + BN + ReLU.
    acc = jnp.dot(cols_ref[...], w_ref[...], preferred_element_type=jnp.float32)
    acc = acc + b_ref[...]
    y = jnp.maximum(_bn(acc, g_ref[...], bb_ref[...]), 0.0)
    o_ref[...] = y.astype(o_ref.dtype)


def _residual_block_kernel(x_ref, cols_ref, w1_ref, b1_ref, g1_ref, bb1_ref,
                           w2_ref, b2_ref, g2_ref, bb2_ref, o_ref):
    # One fused ResidualLayer (num_residual_layers=1, final_relu=True):
    #   y = ReLU(x + BN(Conv1x1(ReLU(BN(Conv3x3(ReLU(x)))))))
    # The leading ReLU(x) is dropped: x is already post-ReLU (no-op recompute).
    a1 = jnp.dot(cols_ref[...], w1_ref[...], preferred_element_type=jnp.float32)
    a1 = a1 + b1_ref[...]
    h1 = jnp.maximum(_bn(a1, g1_ref[...], bb1_ref[...]), 0.0)
    # 1x1 conv == plain matmul on the (M, C) activation (no im2col needed).
    a2 = jnp.dot(h1.astype(w2_ref.dtype), w2_ref[...],
                 preferred_element_type=jnp.float32)
    a2 = a2 + b2_ref[...]
    h2 = _bn(a2, g2_ref[...], bb2_ref[...])
    y = jnp.maximum(x_ref[...].astype(jnp.float32) + h2, 0.0)
    o_ref[...] = y.astype(o_ref.dtype)


def _conv_relu_kernel(cols_ref, w_ref, b_ref, o_ref):
    acc = jnp.dot(cols_ref[...], w_ref[...], preferred_element_type=jnp.float32)
    o_ref[...] = jnp.maximum(acc + b_ref[...], 0.0).astype(o_ref.dtype)


def _conv_pool_fc_sigmoid_kernel(cols_ref, w_ref, b_ref, pool_ref,
                                 fcw_ref, fcb_ref, o_ref):
    # Last Conv3x3 + ReLU, then AvgPool2d(3) (a (N, N*9) pooling matmul),
    # then Linear(hidden, 1) + sigmoid.  Everything stays VMEM resident.
    h = jnp.dot(cols_ref[...], w_ref[...], preferred_element_type=jnp.float32)
    h = jnp.maximum(h + b_ref[...], 0.0)                        # (N*9, C)
    pooled = jnp.dot(pool_ref[...], h,
                     preferred_element_type=jnp.float32)        # (N, C)
    logit = jnp.dot(pooled, fcw_ref[...],
                    preferred_element_type=jnp.float32) + fcb_ref[...]
    o_ref[...] = 1.0 / (1.0 + jnp.exp(-logit))                  # (N, 1)


# ------------------------------ JAX wrappers --------------------------------

def _cost(m, k, n):
    # bf16 matmul + small f32 epilogue (bias/BN/ReLU).
    return pl.CostEstimate(flops=2 * m * k * n + 12 * m * n,
                           transcendentals=0,
                           bytes_accessed=2 * (m * k + k * n) + 4 * m * n)


def _im2col(x, k, stride, pad):
    # x: (N, H, W, C) bf16 -> (N*Ho*Wo, K*K*C); tap order (dy*K+dx), channel
    # fastest (matches the HWIO weight reshape used in init_params).
    n, h, w, c = x.shape
    if pad:
        x = jnp.pad(x, ((0, 0), (pad, pad), (pad, pad), (0, 0)))
    ho = (h + 2 * pad - k) // stride + 1
    wo = (w + 2 * pad - k) // stride + 1
    taps = [x[:, dy:dy + stride * ho:stride, dx:dx + stride * wo:stride, :]
            for dy in range(k) for dx in range(k)]
    cols = jnp.stack(taps, axis=3)                 # (N, Ho, Wo, K*K, C)
    return cols.reshape(n * ho * wo, k * k * c), (n, ho, wo)


def conv_bn_relu(x, w2d, b, g, bb, *, k, stride, pad):
    cols, (n, ho, wo) = _im2col(x, k, stride, pad)
    m, co = cols.shape[0], w2d.shape[1]
    out = pl.pallas_call(
        _conv_bn_relu_kernel,
        out_shape=jax.ShapeDtypeStruct((m, co), jnp.bfloat16),
        in_specs=[_VMEM] * 5, out_specs=_VMEM,
        cost_estimate=_cost(m, w2d.shape[0], co),
    )(cols, w2d, b, g, bb)
    return out.reshape(n, ho, wo, co)


def residual_block(x, p, name):
    n, h, w, c = x.shape
    m = n * h * w
    cols, _ = _im2col(x, 3, 1, 1)                  # only the 3x3 conv needs im2col
    out = pl.pallas_call(
        _residual_block_kernel,
        out_shape=jax.ShapeDtypeStruct((m, c), jnp.bfloat16),
        in_specs=[_VMEM] * 10, out_specs=_VMEM,
        cost_estimate=_cost(m, 10 * c, c),
    )(x.reshape(m, c), cols,
      p[f'{name}_w1'], p[f'{name}_b1'], p[f'{name}_g1'], p[f'{name}_bb1'],
      p[f'{name}_w2'], p[f'{name}_b2'], p[f'{name}_g2'], p[f'{name}_bb2'])
    return out.reshape(n, h, w, c)


def conv_relu(x, w2d, b, *, k, stride, pad):
    cols, (n, ho, wo) = _im2col(x, k, stride, pad)
    m, co = cols.shape[0], w2d.shape[1]
    out = pl.pallas_call(
        _conv_relu_kernel,
        out_shape=jax.ShapeDtypeStruct((m, co), jnp.bfloat16),
        in_specs=[_VMEM] * 3, out_specs=_VMEM,
        cost_estimate=_cost(m, w2d.shape[0], co),
    )(cols, w2d, b)
    return out.reshape(n, ho, wo, co)


def conv_pool_fc_sigmoid(x, w2d, b, fcw, fcb):
    n = x.shape[0]
    cols, (_, ho, wo) = _im2col(x, 3, 1, 0)        # 5x5 -> 3x3
    m, kdim, co = cols.shape[0], w2d.shape[0], w2d.shape[1]
    # AvgPool2d(3) as a (N, N*9) pooling matrix (rows of `cols` are n-major).
    pool_t = jnp.repeat(jnp.eye(n, dtype=jnp.float32), ho * wo, axis=1)
    pool_t = pool_t / float(ho * wo)
    out = pl.pallas_call(
        _conv_pool_fc_sigmoid_kernel,
        out_shape=jax.ShapeDtypeStruct((n, 1), jnp.float32),
        in_specs=[_VMEM] * 6, out_specs=_VMEM,
        cost_estimate=pl.CostEstimate(
            flops=2 * m * kdim * co + 2 * n * m * co + 2 * n * co,
            transcendentals=n,
            bytes_accessed=2 * (m * kdim + kdim * co) + 4 * (n * m + co + n)),
    )(cols, w2d, b, pool_t, fcw, fcb)
    return out                                     # (N, 1)


# ------------------------------ model --------------------------------------

def init_params(key, in_channels, hidden):
    """Kernel-ready parameters.

    Conv weights are stored as bf16 (K*K*Ci, Co) matrices (HWIO flattened in
    the same (dy, dx, ci) order as _im2col); bias/BN/fc params stay f32.
    """
    ks = iter(jax.random.split(key, 32))

    def conv(k, ci, co):
        w = jax.random.normal(next(ks), (k, k, ci, co), jnp.float32)
        w = w / jnp.sqrt(k * k * ci)
        b = 0.01 * jax.random.normal(next(ks), (co,), jnp.float32)
        return w.reshape(k * k * ci, co).astype(jnp.bfloat16), b.reshape(1, co)

    def bn(c):
        return jnp.ones((1, c), jnp.float32), jnp.zeros((1, c), jnp.float32)

    p = {}
    p['cc_w'], p['cc_b'] = conv(3, in_channels, hidden)          # ChangeChannels
    p['cc_g'], p['cc_bb'] = bn(hidden)
    p['ds1_w'], p['ds1_b'] = conv(4, hidden, hidden)             # DownSampleX2
    p['ds1_g'], p['ds1_bb'] = bn(hidden)
    for name in ('rs1', 'rs2'):                                  # ResidualStack x1
        p[f'{name}_w1'], p[f'{name}_b1'] = conv(3, hidden, hidden)
        p[f'{name}_g1'], p[f'{name}_bb1'] = bn(hidden)
        p[f'{name}_w2'], p[f'{name}_b2'] = conv(1, hidden, hidden)
        p[f'{name}_g2'], p[f'{name}_bb2'] = bn(hidden)
    p['ds2_w'], p['ds2_b'] = conv(4, hidden, hidden)             # DownSampleX2
    p['ds2_g'], p['ds2_bb'] = bn(hidden)
    p['c6_w'], p['c6_b'] = conv(3, hidden, hidden)               # Conv3x3 + ReLU
    p['c7_w'], p['c7_b'] = conv(3, hidden, hidden)               # Conv3x3 + ReLU
    p['fc_w'] = jax.random.normal(next(ks), (hidden, 1), jnp.float32) / jnp.sqrt(hidden)
    p['fc_b'] = jnp.zeros((1, 1), jnp.float32)
    return p


@jax.jit
def discriminator28_forward(params, x_nchw):
    p = params
    n = x_nchw.shape[0]
    # NCHW -> NHWC (channels on lanes), bf16 activations for the MXU path.
    x = jnp.transpose(x_nchw, (0, 2, 3, 1)).astype(jnp.bfloat16)
    # ChangeChannels: Conv3x3(pad=1) + BN + ReLU                         28x28
    h = conv_bn_relu(x, p['cc_w'], p['cc_b'], p['cc_g'], p['cc_bb'],
                     k=3, stride=1, pad=1)
    # DownSampleX2: Conv4x4(s=2, pad=1) + BN + ReLU                      14x14
    h = conv_bn_relu(h, p['ds1_w'], p['ds1_b'], p['ds1_g'], p['ds1_bb'],
                     k=4, stride=2, pad=1)
    # ResidualStack (1 layer, final_relu=True), fully fused              14x14
    h = residual_block(h, p, 'rs1')
    # DownSampleX2                                                        7x7
    h = conv_bn_relu(h, p['ds2_w'], p['ds2_b'], p['ds2_g'], p['ds2_bb'],
                     k=4, stride=2, pad=1)
    # ResidualStack                                                       7x7
    h = residual_block(h, p, 'rs2')
    # Conv3x3(pad=0) + ReLU                                               5x5
    h = conv_relu(h, p['c6_w'], p['c6_b'], k=3, stride=1, pad=0)
    # Conv3x3(pad=0) + ReLU + AvgPool2d(3) + Linear + sigmoid (one kernel)
    out = conv_pool_fc_sigmoid(h, p['c7_w'], p['c7_b'], p['fc_w'], p['fc_b'])
    # torch does sigmoid(classifier(x.squeeze()).squeeze()) -> (N,) for N > 1.
    # TODO(synk): for N == 1 torch's .squeeze() yields a 0-d scalar instead.
    return out.reshape(n)


if __name__ == "__main__":
    key = jax.random.PRNGKey(0)
    k_x, k_p = jax.random.split(key)
    batch, in_channels, hidden, spatial = 2, 4, 32, 28   # "28" => 28x28 input
    x = jax.random.normal(k_x, (batch, in_channels, spatial, spatial), jnp.float32)
    params = init_params(k_p, in_channels, hidden)

    out = jax.block_until_ready(discriminator28_forward(params, x))
    assert out.shape == (batch,), out.shape
    assert bool(jnp.all((out >= 0.0) & (out <= 1.0)))
    print("KERNEL_OK")
</pallas_src>

<mosaic_0001>
module attributes {stable_mosaic.version = 11 : i64} {
  func.func @_conv_bn_relu_kernel(%arg0: memref<1568x36xbf16, #tpu.memory_space<vmem>>, %arg1: memref<36x32xbf16, #tpu.memory_space<vmem>>, %arg2: memref<1x32xf32, #tpu.memory_space<vmem>>, %arg3: memref<1x32xf32, #tpu.memory_space<vmem>>, %arg4: memref<1x32xf32, #tpu.memory_space<vmem>>, %arg5: memref<1568x32xbf16, #tpu.memory_space<vmem>>) attributes {dimension_semantics = [], scalar_prefetch = 0 : i64, scratch_operands = 0 : i64, tpu.core_type = #tpu.core_type<tc>} {
    %c0 = arith.constant 0 : index
    %c0_0 = arith.constant 0 : index
    %0 = vector.load %arg0[%c0, %c0_0] : memref<1568x36xbf16, #tpu.memory_space<vmem>>, vector<1568x36xbf16>
    %c0_1 = arith.constant 0 : index
    %c0_2 = arith.constant 0 : index
    %1 = vector.load %arg1[%c0_1, %c0_2] : memref<36x32xbf16, #tpu.memory_space<vmem>>, vector<36x32xbf16>
    %cst = arith.constant dense<0.000000e+00> : vector<1568x32xf32>
    %2 = tpu.matmul %0, %1, %cst {dimension_numbers = #tpu.dot_dimension_numbers<[1], [0], [0], [1], [0, 0, 1, 1], [], []>} : vector<1568x36xbf16>, vector<36x32xbf16>, vector<1568x32xf32> -> vector<1568x32xf32>
    %c0_3 = arith.constant 0 : index
    %c0_4 = arith.constant 0 : index
    %3 = vector.load %arg2[%c0_3, %c0_4] : memref<1x32xf32, #tpu.memory_space<vmem>>, vector<1x32xf32>
    %4 = vector.broadcast %3 : vector<1x32xf32> to vector<1568x32xf32>
    %5 = arith.addf %2, %4 : vector<1568x32xf32>
    %c0_5 = arith.constant 0 : index
    %c0_6 = arith.constant 0 : index
    %6 = vector.load %arg3[%c0_5, %c0_6] : memref<1x32xf32, #tpu.memory_space<vmem>>, vector<1x32xf32>
    %c0_7 = arith.constant 0 : index
    %c0_8 = arith.constant 0 : index
    %7 = vector.load %arg4[%c0_7, %c0_8] : memref<1x32xf32, #tpu.memory_space<vmem>>, vector<1x32xf32>
    %cst_9 = arith.constant dense<0.000000e+00> : vector<32xf32>
    %8 = vector.multi_reduction <add>, %5, %cst_9 [0] : vector<1568x32xf32> to vector<32xf32>
    %9 = vector.shape_cast %8 : vector<32xf32> to vector<1x32xf32>
    %cst_10 = arith.constant 1.568000e+03 : f32
    %10 = vector.broadcast %cst_10 : f32 to vector<1x32xf32>
    %11 = arith.divf %9, %10 : vector<1x32xf32>
    %12 = vector.broadcast %11 : vector<1x32xf32> to vector<1568x32xf32>
    %13 = arith.subf %5, %12 : vector<1568x32xf32>
    %14 = arith.mulf %13, %13 : vector<1568x32xf32>
    %cst_11 = arith.constant dense<0.000000e+00> : vector<32xf32>
    %15 = vector.multi_reduction <add>, %14, %cst_11 [0] : vector<1568x32xf32> to vector<32xf32>
    %16 = vector.shape_cast %15 : vector<32xf32> to vector<1x32xf32>
    %cst_12 = arith.constant 1.568000e+03 : f32
    %17 = vector.broadcast %cst_12 : f32 to vector<1x32xf32>
    %18 = arith.divf %16, %17 : vector<1x32xf32>
    %19 = vector.broadcast %11 : vector<1x32xf32> to vector<1568x32xf32>
    %20 = arith.subf %5, %19 : vector<1568x32xf32>
    %cst_13 = arith.constant 9.99999974E-6 : f32
    %21 = vector.broadcast %cst_13 : f32 to vector<1x32xf32>
    %22 = arith.addf %18, %21 : vector<1x32xf32>
    %23 = math.rsqrt %22 : vector<1x32xf32>
    %24 = vector.broadcast %23 : vector<1x32xf32> to vector<1568x32xf32>
    %25 = arith.mulf %20, %24 : vector<1568x32xf32>
    %26 = vector.broadcast %6 : vector<1x32xf32> to vector<1568x32xf32>
    %27 = arith.mulf %25, %26 : vector<1568x32xf32>
    %28 = vector.broadcast %7 : vector<1x32xf32> to vector<1568x32xf32>
    %29 = arith.addf %27, %28 : vector<1568x32xf32>
    %cst_14 = arith.constant 0.000000e+00 : f32
    %30 = vector.broadcast %cst_14 : f32 to vector<1568x32xf32>
    %31 = arith.maximumf %29, %30 : vector<1568x32xf32>
    %32 = arith.truncf %31 : vector<1568x32xf32> to vector<1568x32xbf16>
    %c0_15 = arith.constant 0 : index
    %c0_16 = arith.constant 0 : index
    %33 = vector.load %arg5[%c0_15, %c0_16] : memref<1568x32xbf16, #tpu.memory_space<vmem>>, vector<1568x32xbf16>
    tpu.vector_store %arg5[%c0_15, %c0_16], %32 {strides = array<i32>} : memref<1568x32xbf16, #tpu.memory_space<vmem>>, vector<1568x32xbf16>,
    return
  }
}

module attributes {stable_mosaic.version = 11 : i64} {
  func.func @_conv_bn_relu_kernel(%arg0: memref<392x512xbf16, #tpu.memory_space<vmem>>, %arg1: memref<512x32xbf16, #tpu.memory_space<vmem>>, %arg2: memref<1x32xf32, #tpu.memory_space<vmem>>, %arg3: memref<1x32xf32, #tpu.memory_space<vmem>>, %arg4: memref<1x32xf32, #tpu.memory_space<vmem>>, %arg5: memref<392x32xbf16, #tpu.memory_space<vmem>>) attributes {dimension_semantics = [], scalar_prefetch = 0 : i64, scratch_operands = 0 : i64, tpu.core_type = #tpu.core_type<tc>} {
    %c0 = arith.constant 0 : index
    %c0_0 = arith.constant 0 : index
    %0 = vector.load %arg0[%c0, %c0_0] : memref<392x512xbf16, #tpu.memory_space<vmem>>, vector<392x512xbf16>
    %c0_1 = arith.constant 0 : index
    %c0_2 = arith.constant 0 : index
    %1 = vector.load %arg1[%c0_1, %c0_2] : memref<512x32xbf16, #tpu.memory_space<vmem>>, vector<512x32xbf16>
    %cst = arith.constant dense<0.000000e+00> : vector<392x32xf32>
    %2 = tpu.matmul %0, %1, %cst {dimension_numbers = #tpu.dot_dimension_numbers<[1], [0], [0], [1], [0, 0, 1, 1], [], []>} : vector<392x512xbf16>, vector<512x32xbf16>, vector<392x32xf32> -> vector<392x32xf32>
    %c0_3 = arith.constant 0 : index
    %c0_4 = arith.constant 0 : index
    %3 = vector.load %arg2[%c0_3, %c0_4] : memref<1x32xf32, #tpu.memory_space<vmem>>, vector<1x32xf32>
    %4 = vector.broadcast %3 : vector<1x32xf32> to vector<392x32xf32>
    %5 = arith.addf %2, %4 : vector<392x32xf32>
    %c0_5 = arith.constant 0 : index
    %c0_6 = arith.constant 0 : index
    %6 = vector.load %arg3[%c0_5, %c0_6] : memref<1x32xf32, #tpu.memory_space<vmem>>, vector<1x32xf32>
    %c0_7 = arith.constant 0 : index
    %c0_8 = arith.constant 0 : index
    %7 = vector.load %arg4[%c0_7, %c0_8] : memref<1x32xf32, #tpu.memory_space<vmem>>, vector<1x32xf32>
    %cst_9 = arith.constant dense<0.000000e+00> : vector<32xf32>
    %8 = vector.multi_reduction <add>, %5, %cst_9 [0] : vector<392x32xf32> to vector<32xf32>
    %9 = vector.shape_cast %8 : vector<32xf32> to vector<1x32xf32>
    %cst_10 = arith.constant 3.920000e+02 : f32
    %10 = vector.broadcast %cst_10 : f32 to vector<1x32xf32>
    %11 = arith.divf %9, %10 : vector<1x32xf32>
    %12 = vector.broadcast %11 : vector<1x32xf32> to vector<392x32xf32>
    %13 = arith.subf %5, %12 : vector<392x32xf32>
    %14 = arith.mulf %13, %13 : vector<392x32xf32>
    %cst_11 = arith.constant dense<0.000000e+00> : vector<32xf32>
    %15 = vector.multi_reduction <add>, %14, %cst_11 [0] : vector<392x32xf32> to vector<32xf32>
    %16 = vector.shape_cast %15 : vector<32xf32> to vector<1x32xf32>
    %cst_12 = arith.constant 3.920000e+02 : f32
    %17 = vector.broadcast %cst_12 : f32 to vector<1x32xf32>
    %18 = arith.divf %16, %17 : vector<1x32xf32>
    %19 = vector.broadcast %11 : vector<1x32xf32> to vector<392x32xf32>
    %20 = arith.subf %5, %19 : vector<392x32xf32>
    %cst_13 = arith.constant 9.99999974E-6 : f32
    %21 = vector.broadcast %cst_13 : f32 to vector<1x32xf32>
    %22 = arith.addf %18, %21 : vector<1x32xf32>
    %23 = math.rsqrt %22 : vector<1x32xf32>
    %24 = vector.broadcast %23 : vector<1x32xf32> to vector<392x32xf32>
    %25 = arith.mulf %20, %24 : vector<392x32xf32>
    %26 = vector.broadcast %6 : vector<1x32xf32> to vector<392x32xf32>
    %27 = arith.mulf %25, %26 : vector<392x32xf32>
    %28 = vector.broadcast %7 : vector<1x32xf32> to vector<392x32xf32>
    %29 = arith.addf %27, %28 : vector<392x32xf32>
    %cst_14 = arith.constant 0.000000e+00 : f32
    %30 = vector.broadcast %cst_14 : f32 to vector<392x32xf32>
    %31 = arith.maximumf %29, %30 : vector<392x32xf32>
    %32 = arith.truncf %31 : vector<392x32xf32> to vector<392x32xbf16>
    %c0_15 = arith.constant 0 : index
    %c0_16 = arith.constant 0 : index
    %33 = vector.load %arg5[%c0_15, %c0_16] : memref<392x32xbf16, #tpu.memory_space<vmem>>, vector<392x32xbf16>
    tpu.vector_store %arg5[%c0_15, %c0_16], %32 {strides = array<i32>} : memref<392x32xbf16, #tpu.memory_space<vmem>>, vector<392x32xbf16>,
    return
  }
}

module attributes {stable_mosaic.version = 11 : i64} {
  func.func @_residual_block_kernel(%arg0: memref<392x32xbf16, #tpu.memory_space<vmem>>, %arg1: memref<392x288xbf16, #tpu.memory_space<vmem>>, %arg2: memref<288x32xbf16, #tpu.memory_space<vmem>>, %arg3: memref<1x32xf32, #tpu.memory_space<vmem>>, %arg4: memref<1x32xf32, #tpu.memory_space<vmem>>, %arg5: memref<1x32xf32, #tpu.memory_space<vmem>>, %arg6: memref<32x32xbf16, #tpu.memory_space<vmem>>, %arg7: memref<1x32xf32, #tpu.memory_space<vmem>>, %arg8: memref<1x32xf32, #tpu.memory_space<vmem>>, %arg9: memref<1x32xf32, #tpu.memory_space<vmem>>, %arg10: memref<392x32xbf16, #tpu.memory_space<vmem>>) attributes {dimension_semantics = [], scalar_prefetch = 0 : i64, scratch_operands = 0 : i64, tpu.core_type = #tpu.core_type<tc>} {
    %c0 = arith.constant 0 : index
    %c0_0 = arith.constant 0 : index
    %0 = vector.load %arg1[%c0, %c0_0] : memref<392x288xbf16, #tpu.memory_space<vmem>>, vector<392x288xbf16>
    %c0_1 = arith.constant 0 : index
    %c0_2 = arith.constant 0 : index
    %1 = vector.load %arg2[%c0_1, %c0_2] : memref<288x32xbf16, #tpu.memory_space<vmem>>, vector<288x32xbf16>
    %cst = arith.constant dense<0.000000e+00> : vector<392x32xf32>
    %2 = tpu.matmul %0, %1, %cst {dimension_numbers = #tpu.dot_dimension_numbers<[1], [0], [0], [1], [0, 0, 1, 1], [], []>} : vector<392x288xbf16>, vector<288x32xbf16>, vector<392x32xf32> -> vector<392x32xf32>
    %c0_3 = arith.constant 0 : index
    %c0_4 = arith.constant 0 : index
    %3 = vector.load %arg3[%c0_3, %c0_4] : memref<1x32xf32, #tpu.memory_space<vmem>>, vector<1x32xf32>
    %4 = vector.broadcast %3 : vector<1x32xf32> to vector<392x32xf32>
    %5 = arith.addf %2, %4 : vector<392x32xf32>
    %c0_5 = arith.constant 0 : index
    %c0_6 = arith.constant 0 : index
    %6 = vector.load %arg4[%c0_5, %c0_6] : memref<1x32xf32, #tpu.memory_space<vmem>>, vector<1x32xf32>
    %c0_7 = arith.constant 0 : index
    %c0_8 = arith.constant 0 : index
    %7 = vector.load %arg5[%c0_7, %c0_8] : memref<1x32xf32, #tpu.memory_space<vmem>>, vector<1x32xf32>
    %cst_9 = arith.constant dense<0.000000e+00> : vector<32xf32>
    %8 = vector.multi_reduction <add>, %5, %cst_9 [0] : vector<392x32xf32> to vector<32xf32>
    %9 = vector.shape_cast %8 : vector<32xf32> to vector<1x32xf32>
    %cst_10 = arith.constant 3.920000e+02 : f32
    %10 = vector.broadcast %cst_10 : f32 to vector<1x32xf32>
    %11 = arith.divf %9, %10 : vector<1x32xf32>
    %12 = vector.broadcast %11 : vector<1x32xf32> to vector<392x32xf32>
    %13 = arith.subf %5, %12 : vector<392x32xf32>
    %14 = arith.mulf %13, %13 : vector<392x32xf32>
    %cst_11 = arith.constant dense<0.000000e+00> : vector<32xf32>
    %15 = vector.multi_reduction <add>, %14, %cst_11 [0] : vector<392x32xf32> to vector<32xf32>
    %16 = vector.shape_cast %15 : vector<32xf32> to vector<1x32xf32>
    %cst_12 = arith.constant 3.920000e+02 : f32
    %17 = vector.broadcast %cst_12 : f32 to vector<1x32xf32>
    %18 = arith.divf %16, %17 : vector<1x32xf32>
    %19 = vector.broadcast %11 : vector<1x32xf32> to vector<392x32xf32>
    %20 = arith.subf %5, %19 : vector<392x32xf32>
    %cst_13 = arith.constant 9.99999974E-6 : f32
    %21 = vector.broadcast %cst_13 : f32 to vector<1x32xf32>
    %22 = arith.addf %18, %21 : vector<1x32xf32>
    %23 = math.rsqrt %22 : vector<1x32xf32>
    %24 = vector.broadcast %23 : vector<1x32xf32> to vector<392x32xf32>
    %25 = arith.mulf %20, %24 : vector<392x32xf32>
    %26 = vector.broadcast %6 : vector<1x32xf32> to vector<392x32xf32>
    %27 = arith.mulf %25, %26 : vector<392x32xf32>
    %28 = vector.broadcast %7 : vector<1x32xf32> to vector<392x32xf32>
    %29 = arith.addf %27, %28 : vector<392x32xf32>
    %cst_14 = arith.constant 0.000000e+00 : f32
    %30 = vector.broadcast %cst_14 : f32 to vector<392x32xf32>
    %31 = arith.maximumf %29, %30 : vector<392x32xf32>
    %32 = arith.truncf %31 : vector<392x32xf32> to vector<392x32xbf16>
    %c0_15 = arith.constant 0 : index
    %c0_16 = arith.constant 0 : index
    %33 = vector.load %arg6[%c0_15, %c0_16] : memref<32x32xbf16, #tpu.memory_space<vmem>>, vector<32x32xbf16>
    %cst_17 = arith.constant dense<0.000000e+00> : vector<392x32xf32>
    %34 = tpu.matmul %32, %33, %cst_17 {dimension_numbers = #tpu.dot_dimension_numbers<[1], [0], [0], [1], [0, 0, 1, 1], [], []>} : vector<392x32xbf16>, vector<32x32xbf16>, vector<392x32xf32> -> vector<392x32xf32>
    %c0_18 = arith.constant 0 : index
    %c0_19 = arith.constant 0 : index
    %35 = vector.load %arg7[%c0_18, %c0_19] : memref<1x32xf32, #tpu.memory_space<vmem>>, vector<1x32xf32>
    %36 = vector.broadcast %35 : vector<1x32xf32> to vector<392x32xf32>
    %37 = arith.addf %34, %36 : vector<392x32xf32>
    %c0_20 = arith.constant 0 : index
    %c0_21 = arith.constant 0 : index
    %38 = vector.load %arg8[%c0_20, %c0_21] : memref<1x32xf32, #tpu.memory_space<vmem>>, vector<1x32xf32>
    %c0_22 = arith.constant 0 : index
    %c0_23 = arith.constant 0 : index
    %39 = vector.load %arg9[%c0_22, %c0_23] : memref<1x32xf32, #tpu.memory_space<vmem>>, vector<1x32xf32>
    %cst_24 = arith.constant dense<0.000000e+00> : vector<32xf32>
    %40 = vector.multi_reduction <add>, %37, %cst_24 [0] : vector<392x32xf32> to vector<32xf32>
    %41 = vector.shape_cast %40 : vector<32xf32> to vector<1x32xf32>
    %cst_25 = arith.constant 3.920000e+02 : f32
    %42 = vector.broadcast %cst_25 : f32 to vector<1x32xf32>
    %43 = arith.divf %41, %42 : vector<1x32xf32>
    %44 = vector.broadcast %43 : vector<1x32xf32> to vector<392x32xf32>
    %45 = arith.subf %37, %44 : vector<392x32xf32>
    %46 = arith.mulf %45, %45 : vector<392x32xf32>
    %cst_26 = arith.constant dense<0.000000e+00> : vector<32xf32>
    %47 = vector.multi_reduction <add>, %46, %cst_26 [0] : vector<392x32xf32> to vector<32xf32>
    %48 = vector.shape_cast %47 : vector<32xf32> to vector<1x32xf32>
    %cst_27 = arith.constant 3.920000e+02 : f32
    %49 = vector.broadcast %cst_27 : f32 to vector<1x32xf32>
    %50 = arith.divf %48, %49 : vector<1x32xf32>
    %51 = vector.broadcast %43 : vector<1x32xf32> to vector<392x32xf32>
    %52 = arith.subf %37, %51 : vector<392x32xf32>
    %cst_28 = arith.constant 9.99999974E-6 : f32
    %53 = vector.broadcast %cst_28 : f32 to vector<1x32xf32>
    %54 = arith.addf %50, %53 : vector<1x32xf32>
    %55 = math.rsqrt %54 : vector<1x32xf32>
    %56 = vector.broadcast %55 : vector<1x32xf32> to vector<392x32xf32>
    %57 = arith.mulf %52, %56 : vector<392x32xf32>
    %58 = vector.broadcast %38 : vector<1x32xf32> to vector<392x32xf32>
    %59 = arith.mulf %57, %58 : vector<392x32xf32>
    %60 = vector.broadcast %39 : vector<1x32xf32> to vector<392x32xf32>
    %61 = arith.addf %59, %60 : vector<392x32xf32>
    %c0_29 = arith.constant 0 : index
    %c0_30 = arith.constant 0 : index
    %62 = vector.load %arg0[%c0_29, %c0_30] : memref<392x32xbf16, #tpu.memory_space<vmem>>, vector<392x32xbf16>
    %63 = arith.extf %62 : vector<392x32xbf16> to vector<392x32xf32>
    %64 = arith.addf %63, %61 : vector<392x32xf32>
    %cst_31 = arith.constant 0.000000e+00 : f32
    %65 = vector.broadcast %cst_31 : f32 to vector<392x32xf32>
    %66 = arith.maximumf %64, %65 : vector<392x32xf32>
    %67 = arith.truncf %66 : vector<392x32xf32> to vector<392x32xbf16>
    %c0_32 = arith.constant 0 : index
    %c0_33 = arith.constant 0 : index
    %68 = vector.load %arg10[%c0_32, %c0_33] : memref<392x32xbf16, #tpu.memory_space<vmem>>, vector<392x32xbf16>
    tpu.vector_store %arg10[%c0_32, %c0_33], %67 {strides = array<i32>} : memref<392x32xbf16, #tpu.memory_space<vmem>>, vector<392x32xbf16>,
    return
  }
}

module attributes {stable_mosaic.version = 11 : i64} {
  func.func @_conv_bn_relu_kernel(%arg0: memref<98x512xbf16, #tpu.memory_space<vmem>>, %arg1: memref<512x32xbf16, #tpu.memory_space<vmem>>, %arg2: memref<1x32xf32, #tpu.memory_space<vmem>>, %arg3: memref<1x32xf32, #tpu.memory_space<vmem>>, %arg4: memref<1x32xf32, #tpu.memory_space<vmem>>, %arg5: memref<98x32xbf16, #tpu.memory_space<vmem>>) attributes {dimension_semantics = [], scalar_prefetch = 0 : i64, scratch_operands = 0 : i64, tpu.core_type = #tpu.core_type<tc>} {
    %c0 = arith.constant 0 : index
    %c0_0 = arith.constant 0 : index
    %0 = vector.load %arg0[%c0, %c0_0] : memref<98x512xbf16, #tpu.memory_space<vmem>>, vector<98x512xbf16>
    %c0_1 = arith.constant 0 : index
    %c0_2 = arith.constant 0 : index
    %1 = vector.load %arg1[%c0_1, %c0_2] : memref<512x32xbf16, #tpu.memory_space<vmem>>, vector<512x32xbf16>
    %cst = arith.constant dense<0.000000e+00> : vector<98x32xf32>
    %2 = tpu.matmul %0, %1, %cst {dimension_numbers = #tpu.dot_dimension_numbers<[1], [0], [0], [1], [0, 0, 1, 1], [], []>} : vector<98x512xbf16>, vector<512x32xbf16>, vector<98x32xf32> -> vector<98x32xf32>
    %c0_3 = arith.constant 0 : index
    %c0_4 = arith.constant 0 : index
    %3 = vector.load %arg2[%c0_3, %c0_4] : memref<1x32xf32, #tpu.memory_space<vmem>>, vector<1x32xf32>
    %4 = vector.broadcast %3 : vector<1x32xf32> to vector<98x32xf32>
    %5 = arith.addf %2, %4 : vector<98x32xf32>
    %c0_5 = arith.constant 0 : index
    %c0_6 = arith.constant 0 : index
    %6 = vector.load %arg3[%c0_5, %c0_6] : memref<1x32xf32, #tpu.memory_space<vmem>>, vector<1x32xf32>
    %c0_7 = arith.constant 0 : index
    %c0_8 = arith.constant 0 : index
    %7 = vector.load %arg4[%c0_7, %c0_8] : memref<1x32xf32, #tpu.memory_space<vmem>>, vector<1x32xf32>
    %cst_9 = arith.constant dense<0.000000e+00> : vector<32xf32>
    %8 = vector.multi_reduction <add>, %5, %cst_9 [0] : vector<98x32xf32> to vector<32xf32>
    %9 = vector.shape_cast %8 : vector<32xf32> to vector<1x32xf32>
    %cst_10 = arith.constant 9.800000e+01 : f32
    %10 = vector.broadcast %cst_10 : f32 to vector<1x32xf32>
    %11 = arith.divf %9, %10 : vector<1x32xf32>
    %12 = vector.broadcast %11 : vector<1x32xf32> to vector<98x32xf32>
    %13 = arith.subf %5, %12 : vector<98x32xf32>
    %14 = arith.mulf %13, %13 : vector<98x32xf32>
    %cst_11 = arith.constant dense<0.000000e+00> : vector<32xf32>
    %15 = vector.multi_reduction <add>, %14, %cst_11 [0] : vector<98x32xf32> to vector<32xf32>
    %16 = vector.shape_cast %15 : vector<32xf32> to vector<1x32xf32>
    %cst_12 = arith.constant 9.800000e+01 : f32
    %17 = vector.broadcast %cst_12 : f32 to vector<1x32xf32>
    %18 = arith.divf %16, %17 : vector<1x32xf32>
    %19 = vector.broadcast %11 : vector<1x32xf32> to vector<98x32xf32>
    %20 = arith.subf %5, %19 : vector<98x32xf32>
    %cst_13 = arith.constant 9.99999974E-6 : f32
    %21 = vector.broadcast %cst_13 : f32 to vector<1x32xf32>
    %22 = arith.addf %18, %21 : vector<1x32xf32>
    %23 = math.rsqrt %22 : vector<1x32xf32>
    %24 = vector.broadcast %23 : vector<1x32xf32> to vector<98x32xf32>
    %25 = arith.mulf %20, %24 : vector<98x32xf32>
    %26 = vector.broadcast %6 : vector<1x32xf32> to vector<98x32xf32>
    %27 = arith.mulf %25, %26 : vector<98x32xf32>
    %28 = vector.broadcast %7 : vector<1x32xf32> to vector<98x32xf32>
    %29 = arith.addf %27, %28 : vector<98x32xf32>
    %cst_14 = arith.constant 0.000000e+00 : f32
    %30 = vector.broadcast %cst_14 : f32 to vector<98x32xf32>
    %31 = arith.maximumf %29, %30 : vector<98x32xf32>
    %32 = arith.truncf %31 : vector<98x32xf32> to vector<98x32xbf16>
    %c0_15 = arith.constant 0 : index
    %c0_16 = arith.constant 0 : index
    %33 = vector.load %arg5[%c0_15, %c0_16] : memref<98x32xbf16, #tpu.memory_space<vmem>>, vector<98x32xbf16>
    tpu.vector_store %arg5[%c0_15, %c0_16], %32 {strides = array<i32>} : memref<98x32xbf16, #tpu.memory_space<vmem>>, vector<98x32xbf16>,
    return
  }
}

module attributes {stable_mosaic.version = 11 : i64} {
  func.func @_residual_block_kernel(%arg0: memref<98x32xbf16, #tpu.memory_space<vmem>>, %arg1: memref<98x288xbf16, #tpu.memory_space<vmem>>, %arg2: memref<288x32xbf16, #tpu.memory_space<vmem>>, %arg3: memref<1x32xf32, #tpu.memory_space<vmem>>, %arg4: memref<1x32xf32, #tpu.memory_space<vmem>>, %arg5: memref<1x32xf32, #tpu.memory_space<vmem>>, %arg6: memref<32x32xbf16, #tpu.memory_space<vmem>>, %arg7: memref<1x32xf32, #tpu.memory_space<vmem>>, %arg8: memref<1x32xf32, #tpu.memory_space<vmem>>, %arg9: memref<1x32xf32, #tpu.memory_space<vmem>>, %arg10: memref<98x32xbf16, #tpu.memory_space<vmem>>) attributes {dimension_semantics = [], scalar_prefetch = 0 : i64, scratch_operands = 0 : i64, tpu.core_type = #tpu.core_type<tc>} {
    %c0 = arith.constant 0 : index
    %c0_0 = arith.constant 0 : index
    %0 = vector.load %arg1[%c0, %c0_0] : memref<98x288xbf16, #tpu.memory_space<vmem>>, vector<98x288xbf16>
    %c0_1 = arith.constant 0 : index
    %c0_2 = arith.constant 0 : index
    %1 = vector.load %arg2[%c0_1, %c0_2] : memref<288x32xbf16, #tpu.memory_space<vmem>>, vector<288x32xbf16>
    %cst = arith.constant dense<0.000000e+00> : vector<98x32xf32>
    %2 = tpu.matmul %0, %1, %cst {dimension_numbers = #tpu.dot_dimension_numbers<[1], [0], [0], [1], [0, 0, 1, 1], [], []>} : vector<98x288xbf16>, vector<288x32xbf16>, vector<98x32xf32> -> vector<98x32xf32>
    %c0_3 = arith.constant 0 : index
    %c0_4 = arith.constant 0 : index
    %3 = vector.load %arg3[%c0_3, %c0_4] : memref<1x32xf32, #tpu.memory_space<vmem>>, vector<1x32xf32>
    %4 = vector.broadcast %3 : vector<1x32xf32> to vector<98x32xf32>
    %5 = arith.addf %2, %4 : vector<98x32xf32>
    %c0_5 = arith.constant 0 : index
    %c0_6 = arith.constant 0 : index
    %6 = vector.load %arg4[%c0_5, %c0_6] : memref<1x32xf32, #tpu.memory_space<vmem>>, vector<1x32xf32>
    %c0_7 = arith.constant 0 : index
    %c0_8 = arith.constant 0 : index
    %7 = vector.load %arg5[%c0_7, %c0_8] : memref<1x32xf32, #tpu.memory_space<vmem>>, vector<1x32xf32>
    %cst_9 = arith.constant dense<0.000000e+00> : vector<32xf32>
    %8 = vector.multi_reduction <add>, %5, %cst_9 [0] : vector<98x32xf32> to vector<32xf32>
    %9 = vector.shape_cast %8 : vector<32xf32> to vector<1x32xf32>
    %cst_10 = arith.constant 9.800000e+01 : f32
    %10 = vector.broadcast %cst_10 : f32 to vector<1x32xf32>
    %11 = arith.divf %9, %10 : vector<1x32xf32>
    %12 = vector.broadcast %11 : vector<1x32xf32> to vector<98x32xf32>
    %13 = arith.subf %5, %12 : vector<98x32xf32>
    %14 = arith.mulf %13, %13 : vector<98x32xf32>
    %cst_11 = arith.constant dense<0.000000e+00> : vector<32xf32>
    %15 = vector.multi_reduction <add>, %14, %cst_11 [0] : vector<98x32xf32> to vector<32xf32>
    %16 = vector.shape_cast %15 : vector<32xf32> to vector<1x32xf32>
    %cst_12 = arith.constant 9.800000e+01 : f32
    %17 = vector.broadcast %cst_12 : f32 to vector<1x32xf32>
    %18 = arith.divf %16, %17 : vector<1x32xf32>
    %19 = vector.broadcast %11 : vector<1x32xf32> to vector<98x32xf32>
    %20 = arith.subf %5, %19 : vector<98x32xf32>
    %cst_13 = arith.constant 9.99999974E-6 : f32
    %21 = vector.broadcast %cst_13 : f32 to vector<1x32xf32>
    %22 = arith.addf %18, %21 : vector<1x32xf32>
    %23 = math.rsqrt %22 : vector<1x32xf32>
    %24 = vector.broadcast %23 : vector<1x32xf32> to vector<98x32xf32>
    %25 = arith.mulf %20, %24 : vector<98x32xf32>
    %26 = vector.broadcast %6 : vector<1x32xf32> to vector<98x32xf32>
    %27 = arith.mulf %25, %26 : vector<98x32xf32>
    %28 = vector.broadcast %7 : vector<1x32xf32> to vector<98x32xf32>
    %29 = arith.addf %27, %28 : vector<98x32xf32>
    %cst_14 = arith.constant 0.000000e+00 : f32
    %30 = vector.broadcast %cst_14 : f32 to vector<98x32xf32>
    %31 = arith.maximumf %29, %30 : vector<98x32xf32>
    %32 = arith.truncf %31 : vector<98x32xf32> to vector<98x32xbf16>
    %c0_15 = arith.constant 0 : index
    %c0_16 = arith.constant 0 : index
    %33 = vector.load %arg6[%c0_15, %c0_16] : memref<32x32xbf16, #tpu.memory_space<vmem>>, vector<32x32xbf16>
    %cst_17 = arith.constant dense<0.000000e+00> : vector<98x32xf32>
    %34 = tpu.matmul %32, %33, %cst_17 {dimension_numbers = #tpu.dot_dimension_numbers<[1], [0], [0], [1], [0, 0, 1, 1], [], []>} : vector<98x32xbf16>, vector<32x32xbf16>, vector<98x32xf32> -> vector<98x32xf32>
    %c0_18 = arith.constant 0 : index
    %c0_19 = arith.constant 0 : index
    %35 = vector.load %arg7[%c0_18, %c0_19] : memref<1x32xf32, #tpu.memory_space<vmem>>, vector<1x32xf32>
    %36 = vector.broadcast %35 : vector<1x32xf32> to vector<98x32xf32>
    %37 = arith.addf %34, %36 : vector<98x32xf32>
    %c0_20 = arith.constant 0 : index
    %c0_21 = arith.constant 0 : index
    %38 = vector.load %arg8[%c0_20, %c0_21] : memref<1x32xf32, #tpu.memory_space<vmem>>, vector<1x32xf32>
    %c0_22 = arith.constant 0 : index
    %c0_23 = arith.constant 0 : index
    %39 = vector.load %arg9[%c0_22, %c0_23] : memref<1x32xf32, #tpu.memory_space<vmem>>, vector<1x32xf32>
    %cst_24 = arith.constant dense<0.000000e+00> : vector<32xf32>
    %40 = vector.multi_reduction <add>, %37, %cst_24 [0] : vector<98x32xf32> to vector<32xf32>
    %41 = vector.shape_cast %40 : vector<32xf32> to vector<1x32xf32>
    %cst_25 = arith.constant 9.800000e+01 : f32
    %42 = vector.broadcast %cst_25 : f32 to vector<1x32xf32>
    %43 = arith.divf %41, %42 : vector<1x32xf32>
    %44 = vector.broadcast %43 : vector<1x32xf32> to vector<98x32xf32>
    %45 = arith.subf %37, %44 : vector<98x32xf32>
    %46 = arith.mulf %45, %45 : vector<98x32xf32>
    %cst_26 = arith.constant dense<0.000000e+00> : vector<32xf32>
    %47 = vector.multi_reduction <add>, %46, %cst_26 [0] : vector<98x32xf32> to vector<32xf32>
    %48 = vector.shape_cast %47 : vector<32xf32> to vector<1x32xf32>
    %cst_27 = arith.constant 9.800000e+01 : f32
    %49 = vector.broadcast %cst_27 : f32 to vector<1x32xf32>
    %50 = arith.divf %48, %49 : vector<1x32xf32>
    %51 = vector.broadcast %43 : vector<1x32xf32> to vector<98x32xf32>
    %52 = arith.subf %37, %51 : vector<98x32xf32>
    %cst_28 = arith.constant 9.99999974E-6 : f32
    %53 = vector.broadcast %cst_28 : f32 to vector<1x32xf32>
    %54 = arith.addf %50, %53 : vector<1x32xf32>
    %55 = math.rsqrt %54 : vector<1x32xf32>
    %56 = vector.broadcast %55 : vector<1x32xf32> to vector<98x32xf32>
    %57 = arith.mulf %52, %56 : vector<98x32xf32>
    %58 = vector.broadcast %38 : vector<1x32xf32> to vector<98x32xf32>
    %59 = arith.mulf %57, %58 : vector<98x32xf32>
    %60 = vector.broadcast %39 : vector<1x32xf32> to vector<98x32xf32>
    %61 = arith.addf %59, %60 : vector<98x32xf32>
    %c0_29 = arith.constant 0 : index
    %c0_30 = arith.constant 0 : index
    %62 = vector.load %arg0[%c0_29, %c0_30] : memref<98x32xbf16, #tpu.memory_space<vmem>>, vector<98x32xbf16>
    %63 = arith.extf %62 : vector<98x32xbf16> to vector<98x32xf32>
    %64 = arith.addf %63, %61 : vector<98x32xf32>
    %cst_31 = arith.constant 0.000000e+00 : f32
    %65 = vector.broadcast %cst_31 : f32 to vector<98x32xf32>
    %66 = arith.maximumf %64, %65 : vector<98x32xf32>
    %67 = arith.truncf %66 : vector<98x32xf32> to vector<98x32xbf16>
    %c0_32 = arith.constant 0 : index
    %c0_33 = arith.constant 0 : index
    %68 = vector.load %arg10[%c0_32, %c0_33] : memref<98x32xbf16, #tpu.memory_space<vmem>>, vector<98x32xbf16>
    tpu.vector_store %arg10[%c0_32, %c0_33], %67 {strides = array<i32>} : memref<98x32xbf16, #tpu.memory_space<vmem>>, vector<98x32xbf16>,
    return
  }
}

module attributes {stable_mosaic.version = 11 : i64} {
  func.func @_conv_relu_kernel(%arg0: memref<50x288xbf16, #tpu.memory_space<vmem>>, %arg1: memref<288x32xbf16, #tpu.memory_space<vmem>>, %arg2: memref<1x32xf32, #tpu.memory_space<vmem>>, %arg3: memref<50x32xbf16, #tpu.memory_space<vmem>>) attributes {dimension_semantics = [], scalar_prefetch = 0 : i64, scratch_operands = 0 : i64, tpu.core_type = #tpu.core_type<tc>} {
    %c0 = arith.constant 0 : index
    %c0_0 = arith.constant 0 : index
    %0 = vector.load %arg0[%c0, %c0_0] : memref<50x288xbf16, #tpu.memory_space<vmem>>, vector<50x288xbf16>
    %c0_1 = arith.constant 0 : index
    %c0_2 = arith.constant 0 : index
    %1 = vector.load %arg1[%c0_1, %c0_2] : memref<288x32xbf16, #tpu.memory_space<vmem>>, vector<288x32xbf16>
    %cst = arith.constant dense<0.000000e+00> : vector<50x32xf32>
    %2 = tpu.matmul %0, %1, %cst {dimension_numbers = #tpu.dot_dimension_numbers<[1], [0], [0], [1], [0, 0, 1, 1], [], []>} : vector<50x288xbf16>, vector<288x32xbf16>, vector<50x32xf32> -> vector<50x32xf32>
    %c0_3 = arith.constant 0 : index
    %c0_4 = arith.constant 0 : index
    %3 = vector.load %arg2[%c0_3, %c0_4] : memref<1x32xf32, #tpu.memory_space<vmem>>, vector<1x32xf32>
    %4 = vector.broadcast %3 : vector<1x32xf32> to vector<50x32xf32>
    %5 = arith.addf %2, %4 : vector<50x32xf32>
    %cst_5 = arith.constant 0.000000e+00 : f32
    %6 = vector.broadcast %cst_5 : f32 to vector<50x32xf32>
    %7 = arith.maximumf %5, %6 : vector<50x32xf32>
    %8 = arith.truncf %7 : vector<50x32xf32> to vector<50x32xbf16>
    %c0_6 = arith.constant 0 : index
    %c0_7 = arith.constant 0 : index
    %9 = vector.load %arg3[%c0_6, %c0_7] : memref<50x32xbf16, #tpu.memory_space<vmem>>, vector<50x32xbf16>
    tpu.vector_store %arg3[%c0_6, %c0_7], %8 {strides = array<i32>} : memref<50x32xbf16, #tpu.memory_space<vmem>>, vector<50x32xbf16>,
    return
  }
}

module attributes {stable_mosaic.version = 11 : i64} {
  func.func @_conv_pool_fc_sigmoid_kernel(%arg0: memref<18x288xbf16, #tpu.memory_space<vmem>>, %arg1: memref<288x32xbf16, #tpu.memory_space<vmem>>, %arg2: memref<1x32xf32, #tpu.memory_space<vmem>>, %arg3: memref<2x18xf32, #tpu.memory_space<vmem>>, %arg4: memref<32x1xf32, #tpu.memory_space<vmem>>, %arg5: memref<1x1xf32, #tpu.memory_space<vmem>>, %arg6: memref<2x1xf32, #tpu.memory_space<vmem>>) attributes {dimension_semantics = [], scalar_prefetch = 0 : i64, scratch_operands = 0 : i64, tpu.core_type = #tpu.core_type<tc>} {
    %c0 = arith.constant 0 : index
    %c0_0 = arith.constant 0 : index
    %0 = vector.load %arg0[%c0, %c0_0] : memref<18x288xbf16, #tpu.memory_space<vmem>>, vector<18x288xbf16>
    %c0_1 = arith.constant 0 : index
    %c0_2 = arith.constant 0 : index
    %1 = vector.load %arg1[%c0_1, %c0_2] : memref<288x32xbf16, #tpu.memory_space<vmem>>, vector<288x32xbf16>
    %cst = arith.constant dense<0.000000e+00> : vector<18x32xf32>
    %2 = tpu.matmul %0, %1, %cst {dimension_numbers = #tpu.dot_dimension_numbers<[1], [0], [0], [1], [0, 0, 1, 1], [], []>} : vector<18x288xbf16>, vector<288x32xbf16>, vector<18x32xf32> -> vector<18x32xf32>
    %c0_3 = arith.constant 0 : index
    %c0_4 = arith.constant 0 : index
    %3 = vector.load %arg2[%c0_3, %c0_4] : memref<1x32xf32, #tpu.memory_space<vmem>>, vector<1x32xf32>
    %4 = vector.broadcast %3 : vector<1x32xf32> to vector<18x32xf32>
    %5 = arith.addf %2, %4 : vector<18x32xf32>
    %cst_5 = arith.constant 0.000000e+00 : f32
    %6 = vector.broadcast %cst_5 : f32 to vector<18x32xf32>
    %7 = arith.maximumf %5, %6 : vector<18x32xf32>
    %c0_6 = arith.constant 0 : index
    %c0_7 = arith.constant 0 : index
    %8 = vector.load %arg3[%c0_6, %c0_7] : memref<2x18xf32, #tpu.memory_space<vmem>>, vector<2x18xf32>
    %cst_8 = arith.constant dense<0.000000e+00> : vector<2x32xf32>
    %9 = tpu.matmul %8, %7, %cst_8 {dimension_numbers = #tpu.dot_dimension_numbers<[1], [0], [0], [1], [0, 0, 1, 1], [], []>} : vector<2x18xf32>, vector<18x32xf32>, vector<2x32xf32> -> vector<2x32xf32>
    %c0_9 = arith.constant 0 : index
    %c0_10 = arith.constant 0 : index
    %10 = vector.load %arg4[%c0_9, %c0_10] : memref<32x1xf32, #tpu.memory_space<vmem>>, vector<32x1xf32>
    %cst_11 = arith.constant dense<0.000000e+00> : vector<2x1xf32>
    %11 = tpu.matmul %9, %10, %cst_11 {dimension_numbers = #tpu.dot_dimension_numbers<[1], [0], [0], [1], [0, 0, 1, 1], [], []>} : vector<2x32xf32>, vector<32x1xf32>, vector<2x1xf32> -> vector<2x1xf32>
    %c0_12 = arith.constant 0 : index
    %c0_13 = arith.constant 0 : index
    %12 = vector.load %arg5[%c0_12, %c0_13] : memref<1x1xf32, #tpu.memory_space<vmem>>, vector<1x1xf32>
    %13 = vector.broadcast %12 : vector<1x1xf32> to vector<2x1xf32>
    %14 = arith.addf %11, %13 : vector<2x1xf32>
    %cst_14 = arith.constant 0.000000e+00 : f32
    %15 = vector.broadcast %cst_14 : f32 to vector<2x1xf32>
    %16 = arith.subf %15, %14 : vector<2x1xf32>
    %17 = math.exp %16 : vector<2x1xf32>
    %cst_15 = arith.constant 1.000000e+00 : f32
    %18 = vector.broadcast %cst_15 : f32 to vector<2x1xf32>
    %19 = arith.addf %18, %17 : vector<2x1xf32>
    %cst_16 = arith.constant 1.000000e+00 : f32
    %20 = vector.broadcast %cst_16 : f32 to vector<2x1xf32>
    %21 = arith.divf %20, %19 : vector<2x1xf32>
    %c0_17 = arith.constant 0 : index
    %c0_18 = arith.constant 0 : index
    %22 = vector.load %arg6[%c0_17, %c0_18] : memref<2x1xf32, #tpu.memory_space<vmem>>, vector<2x1xf32>
    tpu.vector_store %arg6[%c0_17, %c0_18], %21 {strides = array<i32>} : memref<2x1xf32, #tpu.memory_space<vmem>>, vector<2x1xf32>,
    return
  }
}

</mosaic_0001>

<llo_original>
// kernel: discriminator28_forward.7
$region0: #{discriminator28_forward.7}
  #allocation0 [shape = 'u32[]', space=smem, size = 0x4, offset = 0x4, fixed_abs, tag = 'smem constant byte address 0x4 - core index']
  #allocation1 [shape = 'u32[144,128]{1,0:T(1,128)}', space=vmem, size = 0x12000, scoped, tag = 'internal scratch']
  %s0 = inlined_call_operand.vmem [shape: bf16[1568,36], index: 0, kind: input, shape index: {}]
  %s1 = inlined_call_operand.vmem [shape: bf16[36,32], index: 1, kind: input, shape index: {}]
  %s2 = inlined_call_operand.vmem [shape: f32[1,32], index: 2, kind: input, shape index: {}]
  %s3 = inlined_call_operand.vmem [shape: f32[1,32], index: 3, kind: input, shape index: {}]
  %s4 = inlined_call_operand.vmem [shape: f32[1,32], index: 4, kind: input, shape index: {}]
  %s5 = inlined_call_operand.vmem [shape: bf16[1568,32], index: 5, kind: output, shape index: {}]
  %s6 = sld [smem:[#allocation0]]
  $region30: #{discriminator28_forward.7} parent=0
    _
  %s8 = ssub.s32 1, %s6
  %s9 = scalar_select 0, %s8, %s6
  // Predicated region
  $region2: #{discriminator28_forward.7} parent=0 // pred_check
    _
  $region3: #{discriminator28_forward.7} parent=0 // pred_check_branch
    %11 = sbr.rel (0) target = $region5
  $region4: #{discriminator28_forward.7} parent=0 // pred_region
    _
  $region5: #{discriminator28_forward.7} parent=0 // pred_fallthru
    _
  // Predicated region
  $region6: #{discriminator28_forward.7} parent=0 // pred_check
    _
  $region7: #{discriminator28_forward.7} parent=0 // pred_check_branch
    %13 = sbr.rel (0) target = $region9
  $region8: #{discriminator28_forward.7} parent=0 // pred_region
    _
  $region9: #{discriminator28_forward.7} parent=0 // pred_fallthru
    _
  // Predicated region
  $region10: #{discriminator28_forward.7} parent=0 // pred_check
    _
  $region11: #{discriminator28_forward.7} parent=0 // pred_check_branch
    %15 = sbr.rel (0) target = $region13
  $region12: #{discriminator28_forward.7} parent=0 // pred_region
    _
  $region13: #{discriminator28_forward.7} parent=0 // pred_fallthru
    _
  // Predicated region
  $region14: #{discriminator28_forward.7} parent=0 // pred_check
    _
  $region15: #{discriminator28_forward.7} parent=0 // pred_check_branch
    %17 = sbr.rel (0) target = $region17
  $region16: #{discriminator28_forward.7} parent=0 // pred_region
    _
  $region17: #{discriminator28_forward.7} parent=0 // pred_fallthru
    _
  // Predicated region
  $region18: #{discriminator28_forward.7} parent=0 // pred_check
    _
  $region19: #{discriminator28_forward.7} parent=0 // pred_check_branch
    %19 = sbr.rel (0) target = $region21
  $region20: #{discriminator28_forward.7} parent=0 // pred_region
    _
  $region21: #{discriminator28_forward.7} parent=0 // pred_fallthru
    _
  %v21 = vld [vmem:[%s0] sm:$0xf]
  %v22 = vld [vmem:[%s0 + $0x4] sm:$0xf]
  %v23 = vld [vmem:[%s0 + $0x8] sm:$0xf]
  %v24 = vld [vmem:[%s0 + $0xc] sm:$0xf]
  %v25 = vld [vmem:[%s0 + $0x10] sm:$0xf]
  %v26 = vld [vmem:[%s0 + $0x14] sm:$0xf]
  %v27 = vld [vmem:[%s0 + $0x18] sm:$0xf]
  %v28 = vld [vmem:[%s0 + $0x1c] sm:$0xf]
  %v29 = vld [vmem:[%s0 + $0x20] sm:$0xf]
  %v30 = vld [vmem:[%s0 + $0x24] sm:$0xf]
  %v31 = vld [vmem:[%s0 + $0x28] sm:$0xf]
  %v32 = vld [vmem:[%s0 + $0x2c] sm:$0xf]
  %v33 = vld [vmem:[%s0 + $0x30] sm:$0xf]
  %v34 = vld [vmem:[%s0 + $0x34] sm:$0xf]
  %v35 = vld [vmem:[%s0 + $0x38] sm:$0xf]
  %v36 = vld [vmem:[%s0 + $0x3c] sm:$0xf]
  %v37 = vld [vmem:[%s0 + $0x40] sm:$0xf]
  %v38 = vld [vmem:[%s0 + $0x44] sm:$0xf]
  %v39 = vld [vmem:[%s0 + $0x48] sm:$0xf]
  %v40 = vld [vmem:[%s0 + $0x4c] sm:$0xf]
  %v41 = vld [vmem:[%s0 + $0x50] sm:$0xf]
  %v42 = vld [vmem:[%s0 + $0x54] sm:$0xf]
  %v43 = vld [vmem:[%s0 + $0x58] sm:$0xf]
  %v44 = vld [vmem:[%s0 + $0x5c] sm:$0xf]
  %v45 = vld [vmem:[%s0 + $0x60] sm:$0xf]
  %v46 = vld [vmem:[%s0 + $0x64] sm:$0xf]
  %v47 = vld [vmem:[%s0 + $0x68] sm:$0xf]
  %v48 = vld [vmem:[%s0 + $0x6c] sm:$0xf]
  %v49 = vld [vmem:[%s0 + $0x70] sm:$0xf]
  %v50 = vld [vmem:[%s0 + $0x74] sm:$0xf]
  %v51 = vld [vmem:[%s0 + $0x78] sm:$0xf]
  %v52 = vld [vmem:[%s0 + $0x7c] sm:$0xf]
  %v53 = vld [vmem:[%s0 + $0x80] sm:$0xf]
  %v54 = vld [vmem:[%s0 + $0x84] sm:$0xf]
  %v55 = vld [vmem:[%s0 + $0x88] sm:$0xf]
  %v56 = vld [vmem:[%s0 + $0x8c] sm:$0xf]
  %v57 = vld [vmem:[%s0 + $0x90] sm:$0xf]
  %v58 = vld [vmem:[%s0 + $0x94] sm:$0xf]
  %v59 = vld [vmem:[%s0 + $0x98] sm:$0xf]
  %v60 = vld [vmem:[%s0 + $0x9c] sm:$0xf]
  %v61 = vld [vmem:[%s0 + $0xa0] sm:$0xf]
  %v62 = vld [vmem:[%s0 + $0xa4] sm:$0xf]
  %v63 = vld [vmem:[%s0 + $0xa8] sm:$0xf]
  %v64 = vld [vmem:[%s0 + $0xac] sm:$0xf]
  %v65 = vld [vmem:[%s0 + $0xb0] sm:$0xf]
  %v66 = vld [vmem:[%s0 + $0xb4] sm:$0xf]
  %v67 = vld [vmem:[%s0 + $0xb8] sm:$0xf]
  %v68 = vld [vmem:[%s0 + $0xbc] sm:$0xf]
  %v69 = vld [vmem:[%s0 + $0xc0] sm:$0xf]
  %v70 = vld [vmem:[%s0 + $0xc4] sm:$0xf]
  %v71 = vld [vmem:[%s0 + $0xc8] sm:$0xf]
  %v72 = vld [vmem:[%s0 + $0xcc] sm:$0xf]
  %v73 = vld [vmem:[%s0 + $0xd0] sm:$0xf]
  %v74 = vld [vmem:[%s0 + $0xd4] sm:$0xf]
  %v75 = vld [vmem:[%s0 + $0xd8] sm:$0xf]
  %v76 = vld [vmem:[%s0 + $0xdc] sm:$0xf]
  %v77 = vld [vmem:[%s0 + $0xe0] sm:$0xf]
  %v78 = vld [vmem:[%s0 + $0xe4] sm:$0xf]
  %v79 = vld [vmem:[%s0 + $0xe8] sm:$0xf]
  %v80 = vld [vmem:[%s0 + $0xec] sm:$0xf]
  %v81 = vld [vmem:[%s0 + $0xf0] sm:$0xf]
  %v82 = vld [vmem:[%s0 + $0xf4] sm:$0xf]
  %v83 = vld [vmem:[%s0 + $0xf8] sm:$0xf]
  %v84 = vld [vmem:[%s0 + $0xfc] sm:$0xf]
  %v85 = vld [vmem:[%s0 + $0x100] sm:$0xf]
  %v86 = vld [vmem:[%s0 + $0x104] sm:$0xf]
  %v87 = vld [vmem:[%s0 + $0x108] sm:$0xf]
  %v88 = vld [vmem:[%s0 + $0x10c] sm:$0xf]
  %v89 = vld [vmem:[%s0 + $0x110] sm:$0xf]
  %v90 = vld [vmem:[%s0 + $0x114] sm:$0xf]
  %v91 = vld [vmem:[%s0 + $0x118] sm:$0xf]
  %v92 = vld [vmem:[%s0 + $0x11c] sm:$0xf]
  %v93 = vld [vmem:[%s0 + $0x120] sm:$0xf]
  %v94 = vld [vmem:[%s0 + $0x124] sm:$0xf]
  %v95 = vld [vmem:[%s0 + $0x128] sm:$0xf]
  %v96 = vld [vmem:[%s0 + $0x12c] sm:$0xf]
  %v97 = vld [vmem:[%s0 + $0x130] sm:$0xf]
  %v98 = vld [vmem:[%s0 + $0x134] sm:$0xf]
  %v99 = vld [vmem:[%s0 + $0x138] sm:$0xf]
  %v100 = vld [vmem:[%s0 + $0x13c] sm:$0xf]
  %v101 = vld [vmem:[%s0 + $0x140] sm:$0xf]
  %v102 = vld [vmem:[%s0 + $0x144] sm:$0xf]
  %v103 = vld [vmem:[%s0 + $0x148] sm:$0xf]
  %v104 = vld [vmem:[%s0 + $0x14c] sm:$0xf]
  %v105 = vld [vmem:[%s0 + $0x150] sm:$0xf]
  %v106 = vld [vmem:[%s0 + $0x154] sm:$0xf]
  %v107 = vld [vmem:[%s0 + $0x158] sm:$0xf]
  %v108 = vld [vmem:[%s0 + $0x15c] sm:$0xf]
  %v109 = vld [vmem:[%s0 + $0x160] sm:$0xf]
  %v110 = vld [vmem:[%s0 + $0x164] sm:$0xf]
  %v111 = vld [vmem:[%s0 + $0x168] sm:$0xf]
  %v112 = vld [vmem:[%s0 + $0x16c] sm:$0xf]
  %v113 = vld [vmem:[%s0 + $0x170] sm:$0xf]
  %v114 = vld [vmem:[%s0 + $0x174] sm:$0xf]
  %v115 = vld [vmem:[%s0 + $0x178] sm:$0xf]
  %v116 = vld [vmem:[%s0 + $0x17c] sm:$0xf]
  %v117 = vld [vmem:[%s0 + $0x180] sm:$0xf]
  %v118 = vld [vmem:[%s0 + $0x184] sm:$0xf]
  %v119 = vld [vmem:[%s0 + $0x188] sm:$0xf]
  %v120 = vld [vmem:[%s0 + $0x18c] sm:$0xf]
  %v121 = vld [vmem:[%s0 + $0x190] sm:$0xf]
  %v122 = vld [vmem:[%s0 + $0x194] sm:$0xf]
  %v123 = vld [vmem:[%s0 + $0x198] sm:$0xf]
  %v124 = vld [vmem:[%s0 + $0x19c] sm:$0xf]
  %v125 = vld [vmem:[%s0 + $0x1a0] sm:$0xf]
  %v126 = vld [vmem:[%s0 + $0x1a4] sm:$0xf]
  %v127 = vld [vmem:[%s0 + $0x1a8] sm:$0xf]
  %v128 = vld [vmem:[%s0 + $0x1ac] sm:$0xf]
  %v129 = vld [vmem:[%s0 + $0x1b0] sm:$0xf]
  %v130 = vld [vmem:[%s0 + $0x1b4] sm:$0xf]
  %v131 = vld [vmem:[%s0 + $0x1b8] sm:$0xf]
  %v132 = vld [vmem:[%s0 + $0x1bc] sm:$0xf]
  %v133 = vld [vmem:[%s0 + $0x1c0] sm:$0xf]
  %v134 = vld [vmem:[%s0 + $0x1c4] sm:$0xf]
  %v135 = vld [vmem:[%s0 + $0x1c8] sm:$0xf]
  %v136 = vld [vmem:[%s0 + $0x1cc] sm:$0xf]
  %v137 = vld [vmem:[%s0 + $0x1d0] sm:$0xf]
  %v138 = vld [vmem:[%s0 + $0x1d4] sm:$0xf]
  %v139 = vld [vmem:[%s0 + $0x1d8] sm:$0xf]
  %v140 = vld [vmem:[%s0 + $0x1dc] sm:$0xf]
  %v141 = vld [vmem:[%s0 + $0x1e0] sm:$0xf]
  %v142 = vld [vmem:[%s0 + $0x1e4] sm:$0xf]
  %v143 = vld [vmem:[%s0 + $0x1e8] sm:$0xf]
  %v144 = vld [vmem:[%s0 + $0x1ec] sm:$0xf]
  %v145 = vld [vmem:[%s0 + $0x1f0] sm:$0xf]
  %v146 = vld [vmem:[%s0 + $0x1f4] sm:$0xf]
  %v147 = vld [vmem:[%s0 + $0x1f8] sm:$0xf]
  %v148 = vld [vmem:[%s0 + $0x1fc] sm:$0xf]
  %v149 = vld [vmem:[%s0 + $0x200] sm:$0xf]
  %v150 = vld [vmem:[%s0 + $0x204] sm:$0xf]
  %v151 = vld [vmem:[%s0 + $0x208] sm:$0xf]
  %v152 = vld [vmem:[%s0 + $0x20c] sm:$0xf]
  %v153 = vld [vmem:[%s0 + $0x210] sm:$0xf]
  %v154 = vld [vmem:[%s0 + $0x214] sm:$0xf]
  %v155 = vld [vmem:[%s0 + $0x218] sm:$0xf]
  %v156 = vld [vmem:[%s0 + $0x21c] sm:$0xf]
  %v157 = vld [vmem:[%s0 + $0x220] sm:$0xf]
  %v158 = vld [vmem:[%s0 + $0x224] sm:$0xf]
  %v159 = vld [vmem:[%s0 + $0x228] sm:$0xf]
  %v160 = vld [vmem:[%s0 + $0x22c] sm:$0xf]
  %v161 = vld [vmem:[%s0 + $0x230] sm:$0xf]
  %v162 = vld [vmem:[%s0 + $0x234] sm:$0xf]
  %v163 = vld [vmem:[%s0 + $0x238] sm:$0xf]
  %v164 = vld [vmem:[%s0 + $0x23c] sm:$0xf]
  %v165 = vld [vmem:[%s0 + $0x240] sm:$0xf]
  %v166 = vld [vmem:[%s0 + $0x244] sm:$0xf]
  %v167 = vld [vmem:[%s0 + $0x248] sm:$0xf]
  %v168 = vld [vmem:[%s0 + $0x24c] sm:$0xf]
  %v169 = vld [vmem:[%s0 + $0x250] sm:$0xf]
  %v170 = vld [vmem:[%s0 + $0x254] sm:$0xf]
  %v171 = vld [vmem:[%s0 + $0x258] sm:$0xf]
  %v172 = vld [vmem:[%s0 + $0x25c] sm:$0xf]
  %v173 = vld [vmem:[%s0 + $0x260] sm:$0xf]
  %v174 = vld [vmem:[%s0 + $0x264] sm:$0xf]
  %v175 = vld [vmem:[%s0 + $0x268] sm:$0xf]
  %v176 = vld [vmem:[%s0 + $0x26c] sm:$0xf]
  %v177 = vld [vmem:[%s0 + $0x270] sm:$0xf]
  %v178 = vld [vmem:[%s0 + $0x274] sm:$0xf]
  %v179 = vld [vmem:[%s0 + $0x278] sm:$0xf]
  %v180 = vld [vmem:[%s0 + $0x27c] sm:$0xf]
  %v181 = vld [vmem:[%s0 + $0x280] sm:$0xf]
  %v182 = vld [vmem:[%s0 + $0x284] sm:$0xf]
  %v183 = vld [vmem:[%s0 + $0x288] sm:$0xf]
  %v184 = vld [vmem:[%s0 + $0x28c] sm:$0xf]
  %v185 = vld [vmem:[%s0 + $0x290] sm:$0xf]
  %v186 = vld [vmem:[%s0 + $0x294] sm:$0xf]
  %v187 = vld [vmem:[%s0 + $0x298] sm:$0xf]
  %v188 = vld [vmem:[%s0 + $0x29c] sm:$0xf]
  %v189 = vld [vmem:[%s0 + $0x2a0] sm:$0xf]
  %v190 = vld [vmem:[%s0 + $0x2a4] sm:$0xf]
  %v191 = vld [vmem:[%s0 + $0x2a8] sm:$0xf]
  %v192 = vld [vmem:[%s0 + $0x2ac] sm:$0xf]
  %v193 = vld [vmem:[%s0 + $0x2b0] sm:$0xf]
  %v194 = vld [vmem:[%s0 + $0x2b4] sm:$0xf]
  %v195 = vld [vmem:[%s0 + $0x2b8] sm:$0xf]
  %v196 = vld [vmem:[%s0 + $0x2bc] sm:$0xf]
  %v197 = vld [vmem:[%s0 + $0x2c0] sm:$0xf]
  %v198 = vld [vmem:[%s0 + $0x2c4] sm:$0xf]
  %v199 = vld [vmem:[%s0 + $0x2c8] sm:$0xf]
  %v200 = vld [vmem:[%s0 + $0x2cc] sm:$0xf]
  %v201 = vld [vmem:[%s0 + $0x2d0] sm:$0xf]
  %v202 = vld [vmem:[%s0 + $0x2d4] sm:$0xf]
  %v203 = vld [vmem:[%s0 + $0x2d8] sm:$0xf]
  %v204 = vld [vmem:[%s0 + $0x2dc] sm:$0xf]
  %v205 = vld [vmem:[%s0 + $0x2e0] sm:$0xf]
  %v206 = vld [vmem:[%s0 + $0x2e4] sm:$0xf]
  %v207 = vld [vmem:[%s0 + $0x2e8] sm:$0xf]
  %v208 = vld [vmem:[%s0 + $0x2ec] sm:$0xf]
  %v209 = vld [vmem:[%s0 + $0x2f0] sm:$0xf]
  %v210 = vld [vmem:[%s0 + $0x2f4] sm:$0xf]
  %v211 = vld [vmem:[%s0 + $0x2f8] sm:$0xf]
  %v212 = vld [vmem:[%s0 + $0x2fc] sm:$0xf]
  %v213 = vld [vmem:[%s0 + $0x300] sm:$0xf]
  %v214 = vld [vmem:[%s0 + $0x304] sm:$0xf]
  %v215 = vld [vmem:[%s0 + $0x308] sm:$0xf]
  %v216 = vld [vmem:[%s0 + $0x30c] sm:$0xf]
  %v217 = vld [vmem:[%s1] sm:$0xf]
  %v218 = vld [vmem:[%s1 + $0x4] sm:$0xf]
  %v219 = vld [vmem:[%s1 + $0x8] sm:$0xf]
  %v220 = vld [vmem:[%s1 + $0xc] sm:$0xf]
  %v221 = vld [vmem:[%s1 + $0x10] sm:$0x3]
  %v222 = vld [vmem:[%s2] sm:$0x1]
  %v224 = vlaneseq
  %v225 = vshrl.u32 %v224, 7
  %v226 = vsub.s32 0, %v225
  %v227 = vrot.slane %v222, %v226
  %v425 = vunpack.c.l.b16 %v21
  %v426 = vunpack.c.l.b16 %v22
  %v427 = vunpack.c.l.b16 %v23
  %v428 = vunpack.c.l.b16 %v24
  %v429 = vunpack.c.l.b16 %v25
  %v430 = vunpack.c.l.b16 %v26
  %v431 = vunpack.c.l.b16 %v27
  %v432 = vunpack.c.l.b16 %v28
  %v433 = vunpack.c.l.b16 %v29
  %v434 = vunpack.c.l.b16 %v30
  %v435 = vunpack.c.l.b16 %v31
  %v436 = vunpack.c.l.b16 %v32
  %v437 = vunpack.c.l.b16 %v33
  %v438 = vunpack.c.l.b16 %v34
  %v439 = vunpack.c.l.b16 %v35
  %v440 = vunpack.c.l.b16 %v36
  %v441 = vunpack.c.l.b16 %v37
  %v442 = vunpack.c.l.b16 %v38
  %v443 = vunpack.c.l.b16 %v39
  %v444 = vunpack.c.l.b16 %v40
  %v445 = vunpack.c.l.b16 %v41
  %v446 = vunpack.c.l.b16 %v42
  %v447 = vunpack.c.l.b16 %v43
  %v448 = vunpack.c.l.b16 %v44
  %v449 = vunpack.c.l.b16 %v45
  %v450 = vunpack.c.l.b16 %v46
  %v451 = vunpack.c.l.b16 %v47
  %v452 = vunpack.c.l.b16 %v48
  %v453 = vunpack.c.l.b16 %v49
  %v454 = vunpack.c.l.b16 %v50
  %v455 = vunpack.c.l.b16 %v51
  %v456 = vunpack.c.l.b16 %v52
  %v457 = vunpack.c.l.b16 %v53
  %v458 = vunpack.c.l.b16 %v54
  %v459 = vunpack.c.l.b16 %v55
  %v460 = vunpack.c.l.b16 %v56
  %v461 = vunpack.c.l.b16 %v57
  %v462 = vunpack.c.l.b16 %v58
  %v463 = vunpack.c.l.b16 %v59
  %v464 = vunpack.c.l.b16 %v60
  %v465 = vunpack.c.l.b16 %v61
  %v466 = vunpack.c.l.b16 %v62
  %v467 = vunpack.c.l.b16 %v63
  %v468 = vunpack.c.l.b16 %v64
  %v469 = vunpack.c.l.b16 %v65
  %v470 = vunpack.c.l.b16 %v66
  %v471 = vunpack.c.l.b16 %v67
  %v472 = vunpack.c.l.b16 %v68
  %v473 = vunpack.c.l.b16 %v69
  %v474 = vunpack.c.l.b16 %v70
  %v475 = vunpack.c.l.b16 %v71
  %v476 = vunpack.c.l.b16 %v72
  %v477 = vunpack.c.l.b16 %v73
  %v478 = vunpack.c.l.b16 %v74
  %v479 = vunpack.c.l.b16 %v75
  %v480 = vunpack.c.l.b16 %v76
  %v481 = vunpack.c.l.b16 %v77
  %v482 = vunpack.c.l.b16 %v78
  %v483 = vunpack.c.l.b16 %v79
  %v484 = vunpack.c.l.b16 %v80
  %v485 = vunpack.c.l.b16 %v81
  %v486 = vunpack.c.l.b16 %v82
  %v487 = vunpack.c.l.b16 %v83
  %v488 = vunpack.c.l.b16 %v84
  %v489 = vunpack.c.l.b16 %v85
  %v490 = vunpack.c.l.b16 %v86
  %v491 = vunpack.c.l.b16 %v87
  %v492 = vunpack.c.l.b16 %v88
  %v493 = vunpack.c.l.b16 %v89
  %v494 = vunpack.c.l.b16 %v90
  %v495 = vunpack.c.l.b16 %v91
  %v496 = vunpack.c.l.b16 %v92
  %v497 = vunpack.c.l.b16 %v93
  %v498 = vunpack.c.l.b16 %v94
  %v499 = vunpack.c.l.b16 %v95
  %v500 = vunpack.c.l.b16 %v96
  %v501 = vunpack.c.l.b16 %v97
  %v502 = vunpack.c.l.b16 %v98
  %v503 = vunpack.c.l.b16 %v99
  %v504 = vunpack.c.l.b16 %v100
  %v505 = vunpack.c.l.b16 %v101
  %v506 = vunpack.c.l.b16 %v102
  %v507 = vunpack.c.l.b16 %v103
  %v508 = vunpack.c.l.b16 %v104
  %v509 = vunpack.c.l.b16 %v105
  %v510 = vunpack.c.l.b16 %v106
  %v511 = vunpack.c.l.b16 %v107
  %v512 = vunpack.c.l.b16 %v108
  %v513 = vunpack.c.l.b16 %v109
  %v514 = vunpack.c.l.b16 %v110
  %v515 = vunpack.c.l.b16 %v111
  %v516 = vunpack.c.l.b16 %v112
  %v517 = vunpack.c.l.b16 %v113
  %v518 = vunpack.c.l.b16 %v114
  %v519 = vunpack.c.l.b16 %v115
  %v520 = vunpack.c.l.b16 %v116
  %v521 = vunpack.c.l.b16 %v117
  %v522 = vunpack.c.l.b16 %v118
  %v523 = vunpack.c.l.b16 %v119
  %v524 = vunpack.c.l.b16 %v120
  %v525 = vunpack.c.l.b16 %v121
  %v526 = vunpack.c.l.b16 %v122
  %v527 = vunpack.c.l.b16 %v123
  %v528 = vunpack.c.l.b16 %v124
  %v529 = vunpack.c.l.b16 %v125
  %v530 = vunpack.c.l.b16 %v126
  %v531 = vunpack.c.l.b16 %v127
  %v532 = vunpack.c.l.b16 %v128
  %v533 = vunpack.c.l.b16 %v129
  %v534 = vunpack.c.l.b16 %v130
  %v535 = vunpack.c.l.b16 %v131
  %v536 = vunpack.c.l.b16 %v132
  %v537 = vunpack.c.l.b16 %v133
  %v538 = vunpack.c.l.b16 %v134
  %v539 = vunpack.c.l.b16 %v135
  %v540 = vunpack.c.l.b16 %v136
  %v541 = vunpack.c.l.b16 %v137
  %v542 = vunpack.c.l.b16 %v138
  %v543 = vunpack.c.l.b16 %v139
  %v544 = vunpack.c.l.b16 %v140
  %v545 = vunpack.c.l.b16 %v141
  %v546 = vunpack.c.l.b16 %v142
  %v547 = vunpack.c.l.b16 %v143
  %v548 = vunpack.c.l.b16 %v144
  %v549 = vunpack.c.l.b16 %v145
  %v550 = vunpack.c.l.b16 %v146
  %v551 = vunpack.c.l.b16 %v147
  %v552 = vunpack.c.l.b16 %v148
  %v553 = vunpack.c.l.b16 %v149
  %v554 = vunpack.c.l.b16 %v150
  %v555 = vunpack.c.l.b16 %v151
  %v556 = vunpack.c.l.b16 %v152
  %v557 = vunpack.c.l.b16 %v153
  %v558 = vunpack.c.l.b16 %v154
  %v559 = vunpack.c.l.b16 %v155
  %v560 = vunpack.c.l.b16 %v156
  %v561 = vunpack.c.l.b16 %v157
  %v562 = vunpack.c.l.b16 %v158
  %v563 = vunpack.c.l.b16 %v159
  %v564 = vunpack.c.l.b16 %v160
  %v565 = vunpack.c.l.b16 %v161
  %v566 = vunpack.c.l.b16 %v162
  %v567 = vunpack.c.l.b16 %v163
  %v568 = vunpack.c.l.b16 %v164
  %v569 = vunpack.c.l.b16 %v165
  %v570 = vunpack.c.l.b16 %v166
  %v571 = vunpack.c.l.b16 %v167
  %v572 = vunpack.c.l.b16 %v168
  %v573 = vunpack.c.l.b16 %v169
  %v574 = vunpack.c.l.b16 %v170
  %v575 = vunpack.c.l.b16 %v171
  %v576 = vunpack.c.l.b16 %v172
  %v577 = vunpack.c.l.b16 %v173
  %v578 = vunpack.c.l.b16 %v174
  %v579 = vunpack.c.l.b16 %v175
  %v580 = vunpack.c.l.b16 %v176
  %v581 = vunpack.c.l.b16 %v177
  %v582 = vunpack.c.l.b16 %v178
  %v583 = vunpack.c.l.b16 %v179
  %v584 = vunpack.c.l.b16 %v180
  %v585 = vunpack.c.l.b16 %v181
  %v586 = vunpack.c.l.b16 %v182
  %v587 = vunpack.c.l.b16 %v183
  %v588 = vunpack.c.l.b16 %v184
  %v589 = vunpack.c.l.b16 %v185
  %v590 = vunpack.c.l.b16 %v186
  %v591 = vunpack.c.l.b16 %v187
  %v592 = vunpack.c.l.b16 %v188
  %v593 = vunpack.c.l.b16 %v189
  %v594 = vunpack.c.l.b16 %v190
  %v595 = vunpack.c.l.b16 %v191
  %v596 = vunpack.c.l.b16 %v192
  %v597 = vunpack.c.l.b16 %v193
  %v598 = vunpack.c.l.b16 %v194
  %v599 = vunpack.c.l.b16 %v195
  %v600 = vunpack.c.l.b16 %v196
  %v601 = vunpack.c.l.b16 %v197
  %v602 = vunpack.c.l.b16 %v198
  %v603 = vunpack.c.l.b16 %v199
  %v604 = vunpack.c.l.b16 %v200
  %v605 = vunpack.c.l.b16 %v201
  %v606 = vunpack.c.l.b16 %v202
  %v607 = vunpack.c.l.b16 %v203
  %v608 = vunpack.c.l.b16 %v204
  %v609 = vunpack.c.l.b16 %v205
  %v610 = vunpack.c.l.b16 %v206
  %v611 = vunpack.c.l.b16 %v207
  %v612 = vunpack.c.l.b16 %v208
  %v613 = vunpack.c.l.b16 %v209
  %v614 = vunpack.c.l.b16 %v210
  %v615 = vunpack.c.l.b16 %v211
  %v616 = vunpack.c.l.b16 %v212
  %v617 = vunpack.c.l.b16 %v213
  %v618 = vunpack.c.l.b16 %v214
  %v619 = vunpack.c.l.b16 %v215
  %v620 = vunpack.c.l.b16 %v216
  %v621 = vpack.c.b16 %v426, %v425
  %v622 = vpack.c.b16 %v428, %v427
  %v623 = vpack.c.b16 %v430, %v429
  %v624 = vpack.c.b16 %v432, %v431
  %v625 = vpack.c.b16 %v434, %v433
  %v626 = vpack.c.b16 %v436, %v435
  %v627 = vpack.c.b16 %v438, %v437
  %v628 = vpack.c.b16 %v440, %v439
  %v629 = vpack.c.b16 %v442, %v441
  %v630 = vpack.c.b16 %v444, %v443
  %v631 = vpack.c.b16 %v446, %v445
  %v632 = vpack.c.b16 %v448, %v447
  %v633 = vpack.c.b16 %v450, %v449
  %v634 = vpack.c.b16 %v452, %v451
  %v635 = vpack.c.b16 %v454, %v453
  %v636 = vpack.c.b16 %v456, %v455
  %v637 = vpack.c.b16 %v458, %v457
  %v638 = vpack.c.b16 %v460, %v459
  %v639 = vpack.c.b16 %v462, %v461
  %v640 = vpack.c.b16 %v464, %v463
  %v641 = vpack.c.b16 %v466, %v465
  %v642 = vpack.c.b16 %v468, %v467
  %v643 = vpack.c.b16 %v470, %v469
  %v644 = vpack.c.b16 %v472, %v471
  %v645 = vpack.c.b16 %v474, %v473
  %v646 = vpack.c.b16 %v476, %v475
  %v647 = vpack.c.b16 %v478, %v477
  %v648 = vpack.c.b16 %v480, %v479
  %v649 = vpack.c.b16 %v482, %v481
  %v650 = vpack.c.b16 %v484, %v483
  %v651 = vpack.c.b16 %v486, %v485
  %v652 = vpack.c.b16 %v488, %v487
  %v653 = vpack.c.b16 %v490, %v489
  %v654 = vpack.c.b16 %v492, %v491
  %v655 = vpack.c.b16 %v494, %v493
  %v656 = vpack.c.b16 %v496, %v495
  %v657 = vpack.c.b16 %v498, %v497
  %v658 = vpack.c.b16 %v500, %v499
  %v659 = vpack.c.b16 %v502, %v501
  %v660 = vpack.c.b16 %v504, %v503
  %v661 = vpack.c.b16 %v506, %v505
  %v662 = vpack.c.b16 %v508, %v507
  %v663 = vpack.c.b16 %v510, %v509
  %v664 = vpack.c.b16 %v512, %v511
  %v665 = vpack.c.b16 %v514, %v513
  %v666 = vpack.c.b16 %v516, %v515
  %v667 = vpack.c.b16 %v518, %v517
  %v668 = vpack.c.b16 %v520, %v519
  %v669 = vpack.c.b16 %v522, %v521
  %v670 = vpack.c.b16 %v524, %v523
  %v671 = vpack.c.b16 %v526, %v525
  %v672 = vpack.c.b16 %v528, %v527
  %v673 = vpack.c.b16 %v530, %v529
  %v674 = vpack.c.b16 %v532, %v531
  %v675 = vpack.c.b16 %v534, %v533
  %v676 = vpack.c.b16 %v536, %v535
  %v677 = vpack.c.b16 %v538, %v537
  %v678 = vpack.c.b16 %v540, %v539
  %v679 = vpack.c.b16 %v542, %v541
  %v680 = vpack.c.b16 %v544, %v543
  %v681 = vpack.c.b16 %v546, %v545
  %v682 = vpack.c.b16 %v548, %v547
  %v683 = vpack.c.b16 %v550, %v549
  %v684 = vpack.c.b16 %v552, %v551
  %v685 = vpack.c.b16 %v554, %v553
  %v686 = vpack.c.b16 %v556, %v555
  %v687 = vpack.c.b16 %v558, %v557
  %v688 = vpack.c.b16 %v560, %v559
  %v689 = vpack.c.b16 %v562, %v561
  %v690 = vpack.c.b16 %v564, %v563
  %v691 = vpack.c.b16 %v566, %v565
  %v692 = vpack.c.b16 %v568, %v567
  %v693 = vpack.c.b16 %v570, %v569
  %v694 = vpack.c.b16 %v572, %v571
  %v695 = vpack.c.b16 %v574, %v573
  %v696 = vpack.c.b16 %v576, %v575
  %v697 = vpack.c.b16 %v578, %v577
  %v698 = vpack.c.b16 %v580, %v579
  %v699 = vpack.c.b16 %v582, %v581
  %v700 = vpack.c.b16 %v584, %v583
  %v701 = vpack.c.b16 %v586, %v585
  %v702 = vpack.c.b16 %v588, %v587
  %v703 = vpack.c.b16 %v590, %v589
  %v704 = vpack.c.b16 %v592, %v591
  %v705 = vpack.c.b16 %v594, %v593
  %v706 = vpack.c.b16 %v596, %v595
  %v707 = vpack.c.b16 %v598, %v597
  %v708 = vpack.c.b16 %v600, %v599
  %v709 = vpack.c.b16 %v602, %v601
  %v710 = vpack.c.b16 %v604, %v603
  %v711 = vpack.c.b16 %v606, %v605
  %v712 = vpack.c.b16 %v608, %v607
  %v713 = vpack.c.b16 %v610, %v609
  %v714 = vpack.c.b16 %v612, %v611
  %v715 = vpack.c.b16 %v614, %v613
  %v716 = vpack.c.b16 %v616, %v615
  %v717 = vpack.c.b16 %v618, %v617
  %v718 = vpack.c.b16 %v620, %v619
  %v724 = vunpack.c.l.b16 %v217
  %v725 = vunpack.c.l.b16 %v218
  %v726 = vunpack.c.l.b16 %v219
  %v727 = vunpack.c.l.b16 %v220
  %v728 = vunpack.c.l.b16 %v221
  %v729 = vpack.c.b16 %v725, %v724
  %v730 = vpack.c.b16 %v727, %v726
  %v731 = vpack.c.b16 %v728, %v728
  %vm734 = vcmask 293888
  %v736 = vsel %vm734, %v621, 0
  %v739 = vsel %vm734, %v622, 0
  %v742 = vsel %vm734, %v623, 0
  %v745 = vsel %vm734, %v624, 0
  %v748 = vsel %vm734, %v625, 0
  %v751 = vsel %vm734, %v626, 0
  %v754 = vsel %vm734, %v627, 0
  %v757 = vsel %vm734, %v628, 0
  %v760 = vsel %vm734, %v629, 0
  %v763 = vsel %vm734, %v630, 0
  %v766 = vsel %vm734, %v631, 0
  %v769 = vsel %vm734, %v632, 0
  %v772 = vsel %vm734, %v633, 0
  %v775 = vsel %vm734, %v634, 0
  %v778 = vsel %vm734, %v635, 0
  %v781 = vsel %vm734, %v636, 0
  %v784 = vsel %vm734, %v637, 0
  %v787 = vsel %vm734, %v638, 0
  %v790 = vsel %vm734, %v639, 0
  %v793 = vsel %vm734, %v640, 0
  %v796 = vsel %vm734, %v641, 0
  %v799 = vsel %vm734, %v642, 0
  %v802 = vsel %vm734, %v643, 0
  %v805 = vsel %vm734, %v644, 0
  %v808 = vsel %vm734, %v645, 0
  %v811 = vsel %vm734, %v646, 0
  %v814 = vsel %vm734, %v647, 0
  %v817 = vsel %vm734, %v648, 0
  %v820 = vsel %vm734, %v649, 0
  %v823 = vsel %vm734, %v650, 0
  %v826 = vsel %vm734, %v651, 0
  %v829 = vsel %vm734, %v652, 0
  %v832 = vsel %vm734, %v653, 0
  %v835 = vsel %vm734, %v654, 0
  %v838 = vsel %vm734, %v655, 0
  %v841 = vsel %vm734, %v656, 0
  %v844 = vsel %vm734, %v657, 0
  %v847 = vsel %vm734, %v658, 0
  %v850 = vsel %vm734, %v659, 0
  %v853 = vsel %vm734, %v660, 0
  %v856 = vsel %vm734, %v661, 0
  %v859 = vsel %vm734, %v662, 0
  %v862 = vsel %vm734, %v663, 0
  %v865 = vsel %vm734, %v664, 0
  %v868 = vsel %vm734, %v665, 0
  %v871 = vsel %vm734, %v666, 0
  %v874 = vsel %vm734, %v667, 0
  %v877 = vsel %vm734, %v668, 0
  %v880 = vsel %vm734, %v669, 0
  %v883 = vsel %vm734, %v670, 0
  %v886 = vsel %vm734, %v671, 0
  %v889 = vsel %vm734, %v672, 0
  %v892 = vsel %vm734, %v673, 0
  %v895 = vsel %vm734, %v674, 0
  %v898 = vsel %vm734, %v675, 0
  %v901 = vsel %vm734, %v676, 0
  %v904 = vsel %vm734, %v677, 0
  %v907 = vsel %vm734, %v678, 0
  %v910 = vsel %vm734, %v679, 0
  %v913 = vsel %vm734, %v680, 0
  %v916 = vsel %vm734, %v681, 0
  %v919 = vsel %vm734, %v682, 0
  %v922 = vsel %vm734, %v683, 0
  %v925 = vsel %vm734, %v684, 0
  %v928 = vsel %vm734, %v685, 0
  %v931 = vsel %vm734, %v686, 0
  %v934 = vsel %vm734, %v687, 0
  %v937 = vsel %vm734, %v688, 0
  %v940 = vsel %vm734, %v689, 0
  %v943 = vsel %vm734, %v690, 0
  %v946 = vsel %vm734, %v691, 0
  %v949 = vsel %vm734, %v692, 0
  %v952 = vsel %vm734, %v693, 0
  %v955 = vsel %vm734, %v694, 0
  %v958 = vsel %vm734, %v695, 0
  %v961 = vsel %vm734, %v696, 0
  %v964 = vsel %vm734, %v697, 0
  %v967 = vsel %vm734, %v698, 0
  %v970 = vsel %vm734, %v699, 0
  %v973 = vsel %vm734, %v700, 0
  %v976 = vsel %vm734, %v701, 0
  %v979 = vsel %vm734, %v702, 0
  %v982 = vsel %vm734, %v703, 0
  %v985 = vsel %vm734, %v704, 0
  %v988 = vsel %vm734, %v705, 0
  %v991 = vsel %vm734, %v706, 0
  %v994 = vsel %vm734, %v707, 0
  %v997 = vsel %vm734, %v708, 0
  %v1000 = vsel %vm734, %v709, 0
  %v1003 = vsel %vm734, %v710, 0
  %v1006 = vsel %vm734, %v711, 0
  %v1009 = vsel %vm734, %v712, 0
  %v1012 = vsel %vm734, %v713, 0
  %v1015 = vsel %vm734, %v714, 0
  %v1018 = vsel %vm734, %v715, 0
  %v1021 = vsel %vm734, %v716, 0
  %v1024 = vsel %vm734, %v717, 0
  %v1027 = vsel %vm734, %v718, 0
  %vm1029 = vcmask 1041408
  %v1031 = vsel %vm1029, %v731, 0
  %1033 = vmatprep.subr.bf16.mxu0 0
  %1034 = vmatpush1.bf16.msra.mxu0 0
  %1035 = vmatprep.subr.bf16.mxu0 0
  %1036 = vmatpush1.bf16.msra.mxu0 0
  %1037 = vmatprep.subr.bf16.mxu0 0
  %1038 = vmatpush1.bf16.msra.mxu0 0
  %1039 = vmatprep.subr.bf16.mxu0 0
  %1040 = vmatpush1.bf16.msra.mxu0 0
  %1041 = vmatprep.subr.bf16.mxu0 0
  %1042 = vmatpush1.bf16.msra.mxu0 0
  %1043 = vmatprep.subr.bf16.mxu0 0
  %1044 = vmatpush1.bf16.msra.mxu0 %v1031
  %1045 = vmatprep.subr.bf16.mxu0 0
  %1046 = vmatpush1.bf16.msra.mxu0 %v730
  %1047 = vmatprep.subr.bf16.mxu0 0
  %1048 = vmatpush1.bf16.msra.mxu0 %v729
  %1049 = vmatprep.subr.bf16.mxu0 0
  %1050 = vmatpush2.bf16.msra.mxu0 0
  %1051 = vmatprep.subr.bf16.mxu0 0
  %1052 = vmatpush2.bf16.msra.mxu0 0
  %1053 = vmatprep.subr.bf16.mxu0 0
  %1054 = vmatpush2.bf16.msra.mxu0 0
  %1055 = vmatprep.subr.bf16.mxu0 0
  %1056 = vmatpush2.bf16.msra.mxu0 0
  %1057 = vmatprep.subr.bf16.mxu0 0
  %1058 = vmatpush2.bf16.msra.mxu0 0
  %1059 = vmatprep.subr.bf16.mxu0 0
  %1060 = vmatpush2.bf16.msra.mxu0 0
  %1061 = vmatprep.subr.bf16.mxu0 0
  %1062 = vmatpush2.bf16.msra.mxu0 0
  %1063 = vmatprep.subr.bf16.mxu0 0
  %1064 = vmatpush2.bf16.msra.mxu0 0
  %1065 = vmatprep.mubr.bf16.mxu0 0
  %1066 = vmatmul.mubr.bf16.gmra.mxu0 %v736
  %v1067 = vpop.f32.mrf.mxu0
  %v1068 = vadd.f32 %v227, %v1067
  %v1069 = vpop.f32.mrf.mxu0
  %v1070 = vpop.f32.mrf.mxu0
  %v1071 = vadd.f32 %v227, %v1070
  %v1072 = vpop.f32.mrf.mxu0
  %1073 = vmatprep.mubr.bf16.mxu0 0
  %1074 = vmatmul.mubr.bf16.gmra.mxu0 %v739
  %v1075 = vpop.f32.mrf.mxu0
  %v1076 = vadd.f32 %v227, %v1075
  %v1077 = vpop.f32.mrf.mxu0
  %v1078 = vpop.f32.mrf.mxu0
  %v1079 = vadd.f32 %v227, %v1078
  %v1080 = vpop.f32.mrf.mxu0
  %1081 = vmatprep.mubr.bf16.mxu0 0
  %1082 = vmatmul.mubr.bf16.gmra.mxu0 %v742
  %v1083 = vpop.f32.mrf.mxu0
  %v1084 = vadd.f32 %v227, %v1083
  %v1085 = vpop.f32.mrf.mxu0
  %v1086 = vpop.f32.mrf.mxu0
  %v1087 = vadd.f32 %v227, %v1086
  %v1088 = vpop.f32.mrf.mxu0
  %1089 = vmatprep.mubr.bf16.mxu0 0
  %1090 = vmatmul.mubr.bf16.gmra.mxu0 %v745
  %v1091 = vpop.f32.mrf.mxu0
  %v1092 = vadd.f32 %v227, %v1091
  %v1093 = vpop.f32.mrf.mxu0
  %v1094 = vpop.f32.mrf.mxu0
  %v1095 = vadd.f32 %v227, %v1094
  %v1096 = vpop.f32.mrf.mxu0
  %1097 = vmatprep.mubr.bf16.mxu0 0
  %1098 = vmatmul.mubr.bf16.gmra.mxu0 %v748
  %v1099 = vpop.f32.mrf.mxu0
  %v1100 = vadd.f32 %v227, %v1099
  %v1101 = vpop.f32.mrf.mxu0
  %v1102 = vpop.f32.mrf.mxu0
  %v1103 = vadd.f32 %v227, %v1102
  %v1104 = vpop.f32.mrf.mxu0
  %1105 = vmatprep.mubr.bf16.mxu0 0
  %1106 = vmatmul.mubr.bf16.gmra.mxu0 %v751
  %v1107 = vpop.f32.mrf.mxu0
  %v1108 = vadd.f32 %v227, %v1107
  %v1109 = vpop.f32.mrf.mxu0
  %v1110 = vpop.f32.mrf.mxu0
  %v1111 = vadd.f32 %v227, %v1110
  %v1112 = vpop.f32.mrf.mxu0
  %1113 = vmatprep.mubr.bf16.mxu0 0
  %1114 = vmatmul.mubr.bf16.gmra.mxu0 %v754
  %v1115 = vpop.f32.mrf.mxu0
  %v1116 = vadd.f32 %v227, %v1115
  %v1117 = vpop.f32.mrf.mxu0
  %v1118 = vpop.f32.mrf.mxu0
  %v1119 = vadd.f32 %v227, %v1118
  %v1120 = vpop.f32.mrf.mxu0
  %1121 = vmatprep.mubr.bf16.mxu0 0
  %1122 = vmatmul.mubr.bf16.gmra.mxu0 %v757
  %v1123 = vpop.f32.mrf.mxu0
  %v1124 = vadd.f32 %v227, %v1123
  %v1125 = vpop.f32.mrf.mxu0
  %v1126 = vpop.f32.mrf.mxu0
  %v1127 = vadd.f32 %v227, %v1126
  %v1128 = vpop.f32.mrf.mxu0
  %1129 = vmatprep.mubr.bf16.mxu0 0
  %1130 = vmatmul.mubr.bf16.gmra.mxu0 %v760
  %v1131 = vpop.f32.mrf.mxu0
  %v1132 = vadd.f32 %v227, %v1131
  %v1133 = vpop.f32.mrf.mxu0
  %v1134 = vpop.f32.mrf.mxu0
  %v1135 = vadd.f32 %v227, %v1134
  %v1136 = vpop.f32.mrf.mxu0
  %1137 = vmatprep.mubr.bf16.mxu0 0
  %1138 = vmatmul.mubr.bf16.gmra.mxu0 %v763
  %v1139 = vpop.f32.mrf.mxu0
  %v1140 = vadd.f32 %v227, %v1139
  %v1141 = vpop.f32.mrf.mxu0
  %v1142 = vpop.f32.mrf.mxu0
  %v1143 = vadd.f32 %v227, %v1142
  %v1144 = vpop.f32.mrf.mxu0
  %1145 = vmatprep.mubr.bf16.mxu0 0
  %1146 = vmatmul.mubr.bf16.gmra.mxu0 %v766
  %v1147 = vpop.f32.mrf.mxu0
  %v1148 = vadd.f32 %v227, %v1147
  %v1149 = vpop.f32.mrf.mxu0
  %v1150 = vpop.f32.mrf.mxu0
  %v1151 = vadd.f32 %v227, %v1150
  %v1152 = vpop.f32.mrf.mxu0
  %1153 = vmatprep.mubr.bf16.mxu0 0
  %1154 = vmatmul.mubr.bf16.gmra.mxu0 %v769
  %v1155 = vpop.f32.mrf.mxu0
  %v1156 = vadd.f32 %v227, %v1155
  %v1157 = vpop.f32.mrf.mxu0
  %v1158 = vpop.f32.mrf.mxu0
  %v1159 = vadd.f32 %v227, %v1158
  %v1160 = vpop.f32.mrf.mxu0
  %1161 = vmatprep.mubr.bf16.mxu0 0
  %1162 = vmatmul.mubr.bf16.gmra.mxu0 %v772
  %v1163 = vpop.f32.mrf.mxu0
  %v1164 = vadd.f32 %v227, %v1163
  %v1165 = vpop.f32.mrf.mxu0
  %v1166 = vpop.f32.mrf.mxu0
  %v1167 = vadd.f32 %v227, %v1166
  %v1168 = vpop.f32.mrf.mxu0
  %1169 = vmatprep.mubr.bf16.mxu0 0
  %1170 = vmatmul.mubr.bf16.gmra.mxu0 %v775
  %v1171 = vpop.f32.mrf.mxu0
  %v1172 = vadd.f32 %v227, %v1171
  %v1173 = vpop.f32.mrf.mxu0
  %v1174 = vpop.f32.mrf.mxu0
  %v1175 = vadd.f32 %v227, %v1174
  %v1176 = vpop.f32.mrf.mxu0
  %1177 = vmatprep.mubr.bf16.mxu0 0
  %1178 = vmatmul.mubr.bf16.gmra.mxu0 %v778
  %v1179 = vpop.f32.mrf.mxu0
  %v1180 = vadd.f32 %v227, %v1179
  %v1181 = vpop.f32.mrf.mxu0
  %v1182 = vpop.f32.mrf.mxu0
  %v1183 = vadd.f32 %v227, %v1182
  %v1184 = vpop.f32.mrf.mxu0
  %1185 = vmatprep.mubr.bf16.mxu0 0
  %1186 = vmatmul.mubr.bf16.gmra.mxu0 %v781
  %v1187 = vpop.f32.mrf.mxu0
  %v1188 = vadd.f32 %v227, %v1187
  %v1189 = vpop.f32.mrf.mxu0
  %v1190 = vpop.f32.mrf.mxu0
  %v1191 = vadd.f32 %v227, %v1190
  %v1192 = vpop.f32.mrf.mxu0
  %1193 = vmatprep.mubr.bf16.mxu0 0
  %1194 = vmatmul.mubr.bf16.gmra.mxu0 %v784
  %v1195 = vpop.f32.mrf.mxu0
  %v1196 = vadd.f32 %v227, %v1195
  %v1197 = vpop.f32.mrf.mxu0
  %v1198 = vpop.f32.mrf.mxu0
  %v1199 = vadd.f32 %v227, %v1198
  %v1200 = vpop.f32.mrf.mxu0
  %1201 = vmatprep.mubr.bf16.mxu0 0
  %1202 = vmatmul.mubr.bf16.gmra.mxu0 %v787
  %v1203 = vpop.f32.mrf.mxu0
  %v1204 = vadd.f32 %v227, %v1203
  %v1205 = vpop.f32.mrf.mxu0
  %v1206 = vpop.f32.mrf.mxu0
  %v1207 = vadd.f32 %v227, %v1206
  %v1208 = vpop.f32.mrf.mxu0
  %1209 = vmatprep.mubr.bf16.mxu0 0
  %1210 = vmatmul.mubr.bf16.gmra.mxu0 %v790
  %v1211 = vpop.f32.mrf.mxu0
  %v1212 = vadd.f32 %v227, %v1211
  %v1213 = vpop.f32.mrf.mxu0
  %v1214 = vpop.f32.mrf.mxu0
  %v1215 = vadd.f32 %v227, %v1214
  %v1216 = vpop.f32.mrf.mxu0
  %1217 = vmatprep.mubr.bf16.mxu0 0
  %1218 = vmatmul.mubr.bf16.gmra.mxu0 %v793
  %v1219 = vpop.f32.mrf.mxu0
  %v1220 = vadd.f32 %v227, %v1219
  %v1221 = vpop.f32.mrf.mxu0
  %v1222 = vpop.f32.mrf.mxu0
  %v1223 = vadd.f32 %v227, %v1222
  %v1224 = vpop.f32.mrf.mxu0
  %1225 = vmatprep.mubr.bf16.mxu0 0
  %1226 = vmatmul.mubr.bf16.gmra.mxu0 %v796
  %v1227 = vpop.f32.mrf.mxu0
  %v1228 = vadd.f32 %v227, %v1227
  %v1229 = vpop.f32.mrf.mxu0
  %v1230 = vpop.f32.mrf.mxu0
  %v1231 = vadd.f32 %v227, %v1230
  %v1232 = vpop.f32.mrf.mxu0
  %1233 = vmatprep.mubr.bf16.mxu0 0
  %1234 = vmatmul.mubr.bf16.gmra.mxu0 %v799
  %v1235 = vpop.f32.mrf.mxu0
  %v1236 = vadd.f32 %v227, %v1235
  %v1237 = vpop.f32.mrf.mxu0
  %v1238 = vpop.f32.mrf.mxu0
  %v1239 = vadd.f32 %v227, %v1238
  %v1240 = vpop.f32.mrf.mxu0
  %1241 = vmatprep.mubr.bf16.mxu0 0
  %1242 = vmatmul.mubr.bf16.gmra.mxu0 %v802
  %v1243 = vpop.f32.mrf.mxu0
  %v1244 = vadd.f32 %v227, %v1243
  %v1245 = vpop.f32.mrf.mxu0
  %v1246 = vpop.f32.mrf.mxu0
  %v1247 = vadd.f32 %v227, %v1246
  %v1248 = vpop.f32.mrf.mxu0
  %1249 = vmatprep.mubr.bf16.mxu0 0
  %1250 = vmatmul.mubr.bf16.gmra.mxu0 %v805
  %v1251 = vpop.f32.mrf.mxu0
  %v1252 = vadd.f32 %v227, %v1251
  %v1253 = vpop.f32.mrf.mxu0
  %v1254 = vpop.f32.mrf.mxu0
  %v1255 = vadd.f32 %v227, %v1254
  %v1256 = vpop.f32.mrf.mxu0
  %1257 = vmatprep.mubr.bf16.mxu0 0
  %1258 = vmatmul.mubr.bf16.gmra.mxu0 %v808
  %v1259 = vpop.f32.mrf.mxu0
  %v1260 = vadd.f32 %v227, %v1259
  %v1261 = vpop.f32.mrf.mxu0
  %v1262 = vpop.f32.mrf.mxu0
  %v1263 = vadd.f32 %v227, %v1262
  %v1264 = vpop.f32.mrf.mxu0
  %1265 = vmatprep.mubr.bf16.mxu0 0
  %1266 = vmatmul.mubr.bf16.gmra.mxu0 %v811
  %v1267 = vpop.f32.mrf.mxu0
  %v1268 = vadd.f32 %v227, %v1267
  %v1269 = vpop.f32.mrf.mxu0
  %v1270 = vpop.f32.mrf.mxu0
  %v1271 = vadd.f32 %v227, %v1270
  %v1272 = vpop.f32.mrf.mxu0
  %1273 = vmatprep.mubr.bf16.mxu0 0
  %1274 = vmatmul.mubr.bf16.gmra.mxu0 %v814
  %v1275 = vpop.f32.mrf.mxu0
  %v1276 = vadd.f32 %v227, %v1275
  %v1277 = vpop.f32.mrf.mxu0
  %v1278 = vpop.f32.mrf.mxu0
  %v1279 = vadd.f32 %v227, %v1278
  %v1280 = vpop.f32.mrf.mxu0
  %1281 = vmatprep.mubr.bf16.mxu0 0
  %1282 = vmatmul.mubr.bf16.gmra.mxu0 %v817
  %v1283 = vpop.f32.mrf.mxu0
  %v1284 = vadd.f32 %v227, %v1283
  %v1285 = vpop.f32.mrf.mxu0
  %v1286 = vpop.f32.mrf.mxu0
  %v1287 = vadd.f32 %v227, %v1286
  %v1288 = vpop.f32.mrf.mxu0
  %1289 = vmatprep.mubr.bf16.mxu0 0
  %1290 = vmatmul.mubr.bf16.gmra.mxu0 %v820
  %v1291 = vpop.f32.mrf.mxu0
  %v1292 = vadd.f32 %v227, %v1291
  %v1293 = vpop.f32.mrf.mxu0
  %v1294 = vpop.f32.mrf.mxu0
  %v1295 = vadd.f32 %v227, %v1294
  %v1296 = vpop.f32.mrf.mxu0
  %1297 = vmatprep.mubr.bf16.mxu0 0
  %1298 = vmatmul.mubr.bf16.gmra.mxu0 %v823
  %v1299 = vpop.f32.mrf.mxu0
  %v1300 = vadd.f32 %v227, %v1299
  %v1301 = vpop.f32.mrf.mxu0
  %v1302 = vpop.f32.mrf.mxu0
  %v1303 = vadd.f32 %v227, %v1302
  %v1304 = vpop.f32.mrf.mxu0
  %1305 = vmatprep.mubr.bf16.mxu0 0
  %1306 = vmatmul.mubr.bf16.gmra.mxu0 %v826
  %v1307 = vpop.f32.mrf.mxu0
  %v1308 = vadd.f32 %v227, %v1307
  %v1309 = vpop.f32.mrf.mxu0
  %v1310 = vpop.f32.mrf.mxu0
  %v1311 = vadd.f32 %v227, %v1310
  %v1312 = vpop.f32.mrf.mxu0
  %1313 = vmatprep.mubr.bf16.mxu0 0
  %1314 = vmatmul.mubr.bf16.gmra.mxu0 %v829
  %v1315 = vpop.f32.mrf.mxu0
  %v1316 = vadd.f32 %v227, %v1315
  %v1317 = vpop.f32.mrf.mxu0
  %v1318 = vpop.f32.mrf.mxu0
  %v1319 = vadd.f32 %v227, %v1318
  %v1320 = vpop.f32.mrf.mxu0
  %1321 = vmatprep.mubr.bf16.mxu0 0
  %1322 = vmatmul.mubr.bf16.gmra.mxu0 %v832
  %v1323 = vpop.f32.mrf.mxu0
  %v1324 = vadd.f32 %v227, %v1323
  %v1325 = vpop.f32.mrf.mxu0
  %v1326 = vpop.f32.mrf.mxu0
  %v1327 = vadd.f32 %v227, %v1326
  %v1328 = vpop.f32.mrf.mxu0
  %1329 = vmatprep.mubr.bf16.mxu0 0
  %1330 = vmatmul.mubr.bf16.gmra.mxu0 %v835
  %v1331 = vpop.f32.mrf.mxu0
  %v1332 = vadd.f32 %v227, %v1331
  %v1333 = vpop.f32.mrf.mxu0
  %v1334 = vpop.f32.mrf.mxu0
  %v1335 = vadd.f32 %v227, %v1334
  %v1336 = vpop.f32.mrf.mxu0
  %1337 = vmatprep.mubr.bf16.mxu0 0
  %1338 = vmatmul.mubr.bf16.gmra.mxu0 %v838
  %v1339 = vpop.f32.mrf.mxu0
  %v1340 = vadd.f32 %v227, %v1339
  %v1341 = vpop.f32.mrf.mxu0
  %v1342 = vpop.f32.mrf.mxu0
  %v1343 = vadd.f32 %v227, %v1342
  %v1344 = vpop.f32.mrf.mxu0
  %1345 = vmatprep.mubr.bf16.mxu0 0
  %1346 = vmatmul.mubr.bf16.gmra.mxu0 %v841
  %v1347 = vpop.f32.mrf.mxu0
  %v1348 = vadd.f32 %v227, %v1347
  %v1349 = vpop.f32.mrf.mxu0
  %v1350 = vpop.f32.mrf.mxu0
  %v1351 = vadd.f32 %v227, %v1350
  %v1352 = vpop.f32.mrf.mxu0
  %1353 = vmatprep.mubr.bf16.mxu0 0
  %1354 = vmatmul.mubr.bf16.gmra.mxu0 %v844
  %v1355 = vpop.f32.mrf.mxu0
  %v1356 = vadd.f32 %v227, %v1355
  %v1357 = vpop.f32.mrf.mxu0
  %v1358 = vpop.f32.mrf.mxu0
  %v1359 = vadd.f32 %v227, %v1358
  %v1360 = vpop.f32.mrf.mxu0
  %1361 = vmatprep.mubr.bf16.mxu0 0
  %1362 = vmatmul.mubr.bf16.gmra.mxu0 %v847
  %v1363 = vpop.f32.mrf.mxu0
  %v1364 = vadd.f32 %v227, %v1363
  %v1365 = vpop.f32.mrf.mxu0
  %v1366 = vpop.f32.mrf.mxu0
  %v1367 = vadd.f32 %v227, %v1366
  %v1368 = vpop.f32.mrf.mxu0
  %1369 = vmatprep.mubr.bf16.mxu0 0
  %1370 = vmatmul.mubr.bf16.gmra.mxu0 %v850
  %v1371 = vpop.f32.mrf.mxu0
  %v1372 = vadd.f32 %v227, %v1371
  %v1373 = vpop.f32.mrf.mxu0
  %v1374 = vpop.f32.mrf.mxu0
  %v1375 = vadd.f32 %v227, %v1374
  %v1376 = vpop.f32.mrf.mxu0
  %1377 = vmatprep.mubr.bf16.mxu0 0
  %1378 = vmatmul.mubr.bf16.gmra.mxu0 %v853
  %v1379 = vpop.f32.mrf.mxu0
  %v1380 = vadd.f32 %v227, %v1379
  %v1381 = vpop.f32.mrf.mxu0
  %v1382 = vpop.f32.mrf.mxu0
  %v1383 = vadd.f32 %v227, %v1382
  %v1384 = vpop.f32.mrf.mxu0
  %1385 = vmatprep.mubr.bf16.mxu0 0
  %1386 = vmatmul.mubr.bf16.gmra.mxu0 %v856
  %v1387 = vpop.f32.mrf.mxu0
  %v1388 = vadd.f32 %v227, %v1387
  %v1389 = vpop.f32.mrf.mxu0
  %v1390 = vpop.f32.mrf.mxu0
  %v1391 = vadd.f32 %v227, %v1390
  %v1392 = vpop.f32.mrf.mxu0
  %1393 = vmatprep.mubr.bf16.mxu0 0
  %1394 = vmatmul.mubr.bf16.gmra.mxu0 %v859
  %v1395 = vpop.f32.mrf.mxu0
  %v1396 = vadd.f32 %v227, %v1395
  %v1397 = vpop.f32.mrf.mxu0
  %v1398 = vpop.f32.mrf.mxu0
  %v1399 = vadd.f32 %v227, %v1398
  %v1400 = vpop.f32.mrf.mxu0
  %1401 = vmatprep.mubr.bf16.mxu0 0
  %1402 = vmatmul.mubr.bf16.gmra.mxu0 %v862
  %v1403 = vpop.f32.mrf.mxu0
  %v1404 = vadd.f32 %v227, %v1403
  %v1405 = vpop.f32.mrf.mxu0
  %v1406 = vpop.f32.mrf.mxu0
  %v1407 = vadd.f32 %v227, %v1406
  %v1408 = vpop.f32.mrf.mxu0
  %1409 = vmatprep.mubr.bf16.mxu0 0
  %1410 = vmatmul.mubr.bf16.gmra.mxu0 %v865
  %v1411 = vpop.f32.mrf.mxu0
  %v1412 = vadd.f32 %v227, %v1411
  %v1413 = vpop.f32.mrf.mxu0
  %v1414 = vpop.f32.mrf.mxu0
  %v1415 = vadd.f32 %v227, %v1414
  %v1416 = vpop.f32.mrf.mxu0
  %1417 = vmatprep.mubr.bf16.mxu0 0
  %1418 = vmatmul.mubr.bf16.gmra.mxu0 %v868
  %v1419 = vpop.f32.mrf.mxu0
  %v1420 = vadd.f32 %v227, %v1419
  %v1421 = vpop.f32.mrf.mxu0
  %v1422 = vpop.f32.mrf.mxu0
  %v1423 = vadd.f32 %v227, %v1422
  %v1424 = vpop.f32.mrf.mxu0
  %1425 = vmatprep.mubr.bf16.mxu0 0
  %1426 = vmatmul.mubr.bf16.gmra.mxu0 %v871
  %v1427 = vpop.f32.mrf.mxu0
  %v1428 = vadd.f32 %v227, %v1427
  %v1429 = vpop.f32.mrf.mxu0
  %v1430 = vpop.f32.mrf.mxu0
  %v1431 = vadd.f32 %v227, %v1430
  %v1432 = vpop.f32.mrf.mxu0
  %1433 = vmatprep.mubr.bf16.mxu0 0
  %1434 = vmatmul.mubr.bf16.gmra.mxu0 %v874
  %v1435 = vpop.f32.mrf.mxu0
  %v1436 = vadd.f32 %v227, %v1435
  %v1437 = vpop.f32.mrf.mxu0
  %v1438 = vpop.f32.mrf.mxu0
  %v1439 = vadd.f32 %v227, %v1438
  %v1440 = vpop.f32.mrf.mxu0
  %1441 = vmatprep.mubr.bf16.mxu0 0
  %1442 = vmatmul.mubr.bf16.gmra.mxu0 %v877
  %v1443 = vpop.f32.mrf.mxu0
  %v1444 = vadd.f32 %v227, %v1443
  %v1445 = vpop.f32.mrf.mxu0
  %v1446 = vpop.f32.mrf.mxu0
  %v1447 = vadd.f32 %v227, %v1446
  %v1448 = vpop.f32.mrf.mxu0
  %1449 = vmatprep.mubr.bf16.mxu0 0
  %1450 = vmatmul.mubr.bf16.gmra.mxu0 %v880
  %v1451 = vpop.f32.mrf.mxu0
  %v1452 = vadd.f32 %v227, %v1451
  %v1453 = vpop.f32.mrf.mxu0
  %v1454 = vpop.f32.mrf.mxu0
  %v1455 = vadd.f32 %v227, %v1454
  %v1456 = vpop.f32.mrf.mxu0
  %1457 = vmatprep.mubr.bf16.mxu0 0
  %1458 = vmatmul.mubr.bf16.gmra.mxu0 %v883
  %v1459 = vpop.f32.mrf.mxu0
  %v1460 = vadd.f32 %v227, %v1459
  %v1461 = vpop.f32.mrf.mxu0
  %v1462 = vpop.f32.mrf.mxu0
  %v1463 = vadd.f32 %v227, %v1462
  %v1464 = vpop.f32.mrf.mxu0
  %1465 = vmatprep.mubr.bf16.mxu0 0
  %1466 = vmatmul.mubr.bf16.gmra.mxu0 %v886
  %v1467 = vpop.f32.mrf.mxu0
  %v1468 = vadd.f32 %v227, %v1467
  %v1469 = vpop.f32.mrf.mxu0
  %v1470 = vpop.f32.mrf.mxu0
  %v1471 = vadd.f32 %v227, %v1470
  %v1472 = vpop.f32.mrf.mxu0
  %1473 = vmatprep.mubr.bf16.mxu0 0
  %1474 = vmatmul.mubr.bf16.gmra.mxu0 %v889
  %v1475 = vpop.f32.mrf.mxu0
  %v1476 = vadd.f32 %v227, %v1475
  %v1477 = vpop.f32.mrf.mxu0
  %v1478 = vpop.f32.mrf.mxu0
  %v1479 = vadd.f32 %v227, %v1478
  %v1480 = vpop.f32.mrf.mxu0
  %1481 = vmatprep.mubr.bf16.mxu0 0
  %1482 = vmatmul.mubr.bf16.gmra.mxu0 %v892
  %v1483 = vpop.f32.mrf.mxu0
  %v1484 = vadd.f32 %v227, %v1483
  %v1485 = vpop.f32.mrf.mxu0
  %v1486 = vpop.f32.mrf.mxu0
  %v1487 = vadd.f32 %v227, %v1486
  %v1488 = vpop.f32.mrf.mxu0
  %1489 = vmatprep.mubr.bf16.mxu0 0
  %1490 = vmatmul.mubr.bf16.gmra.mxu0 %v895
  %v1491 = vpop.f32.mrf.mxu0
  %v1492 = vadd.f32 %v227, %v1491
  %v1493 = vpop.f32.mrf.mxu0
  %v1494 = vpop.f32.mrf.mxu0
  %v1495 = vadd.f32 %v227, %v1494
  %v1496 = vpop.f32.mrf.mxu0
  %1497 = vmatprep.mubr.bf16.mxu0 0
  %1498 = vmatmul.mubr.bf16.gmra.mxu0 %v898
  %v1499 = vpop.f32.mrf.mxu0
  %v1500 = vadd.f32 %v227, %v1499
  %v1501 = vpop.f32.mrf.mxu0
  %v1502 = vpop.f32.mrf.mxu0
  %v1503 = vadd.f32 %v227, %v1502
  %v1504 = vpop.f32.mrf.mxu0
  %1505 = vmatprep.mubr.bf16.mxu0 0
  %1506 = vmatmul.mubr.bf16.gmra.mxu0 %v901
  %v1507 = vpop.f32.mrf.mxu0
  %v1508 = vadd.f32 %v227, %v1507
  %v1509 = vpop.f32.mrf.mxu0
  %v1510 = vpop.f32.mrf.mxu0
  %v1511 = vadd.f32 %v227, %v1510
  %v1512 = vpop.f32.mrf.mxu0
  %1513 = vmatprep.mubr.bf16.mxu0 0
  %1514 = vmatmul.mubr.bf16.gmra.mxu0 %v904
  %v1515 = vpop.f32.mrf.mxu0
  %v1516 = vadd.f32 %v227, %v1515
  %v1517 = vpop.f32.mrf.mxu0
  %v1518 = vpop.f32.mrf.mxu0
  %v1519 = vadd.f32 %v227, %v1518
  %v1520 = vpop.f32.mrf.mxu0
  %1521 = vmatprep.mubr.bf16.mxu0 0
  %1522 = vmatmul.mubr.bf16.gmra.mxu0 %v907
  %v1523 = vpop.f32.mrf.mxu0
  %v1524 = vadd.f32 %v227, %v1523
  %v1525 = vpop.f32.mrf.mxu0
  %v1526 = vpop.f32.mrf.mxu0
  %v1527 = vadd.f32 %v227, %v1526
  %v1528 = vpop.f32.mrf.mxu0
  %1529 = vmatprep.mubr.bf16.mxu0 0
  %1530 = vmatmul.mubr.bf16.gmra.mxu0 %v910
  %v1531 = vpop.f32.mrf.mxu0
  %v1532 = vadd.f32 %v227, %v1531
  %v1533 = vpop.f32.mrf.mxu0
  %v1534 = vpop.f32.mrf.mxu0
  %v1535 = vadd.f32 %v227, %v1534
  %v1536 = vpop.f32.mrf.mxu0
  %1537 = vmatprep.mubr.bf16.mxu0 0
  %1538 = vmatmul.mubr.bf16.gmra.mxu0 %v913
  %v1539 = vpop.f32.mrf.mxu0
  %v1540 = vadd.f32 %v227, %v1539
  %v1541 = vpop.f32.mrf.mxu0
  %v1542 = vpop.f32.mrf.mxu0
  %v1543 = vadd.f32 %v227, %v1542
  %v1544 = vpop.f32.mrf.mxu0
  %1545 = vmatprep.mubr.bf16.mxu0 0
  %1546 = vmatmul.mubr.bf16.gmra.mxu0 %v916
  %v1547 = vpop.f32.mrf.mxu0
  %v1548 = vadd.f32 %v227, %v1547
  %v1549 = vpop.f32.mrf.mxu0
  %v1550 = vpop.f32.mrf.mxu0
  %v1551 = vadd.f32 %v227, %v1550
  %v1552 = vpop.f32.mrf.mxu0
  %1553 = vmatprep.mubr.bf16.mxu0 0
  %1554 = vmatmul.mubr.bf16.gmra.mxu0 %v919
  %v1555 = vpop.f32.mrf.mxu0
  %v1556 = vadd.f32 %v227, %v1555
  %v1557 = vpop.f32.mrf.mxu0
  %v1558 = vpop.f32.mrf.mxu0
  %v1559 = vadd.f32 %v227, %v1558
  %v1560 = vpop.f32.mrf.mxu0
  %1561 = vmatprep.mubr.bf16.mxu0 0
  %1562 = vmatmul.mubr.bf16.gmra.mxu0 %v922
  %v1563 = vpop.f32.mrf.mxu0
  %v1564 = vadd.f32 %v227, %v1563
  %v1565 = vpop.f32.mrf.mxu0
  %v1566 = vpop.f32.mrf.mxu0
  %v1567 = vadd.f32 %v227, %v1566
  %v1568 = vpop.f32.mrf.mxu0
  %1569 = vmatprep.mubr.bf16.mxu0 0
  %1570 = vmatmul.mubr.bf16.gmra.mxu0 %v925
  %v1571 = vpop.f32.mrf.mxu0
  %v1572 = vadd.f32 %v227, %v1571
  %v1573 = vpop.f32.mrf.mxu0
  %v1574 = vpop.f32.mrf.mxu0
  %v1575 = vadd.f32 %v227, %v1574
  %v1576 = vpop.f32.mrf.mxu0
  %1577 = vmatprep.mubr.bf16.mxu0 0
  %1578 = vmatmul.mubr.bf16.gmra.mxu0 %v928
  %v1579 = vpop.f32.mrf.mxu0
  %v1580 = vadd.f32 %v227, %v1579
  %v1581 = vpop.f32.mrf.mxu0
  %v1582 = vpop.f32.mrf.mxu0
  %v1583 = vadd.f32 %v227, %v1582
  %v1584 = vpop.f32.mrf.mxu0
  %1585 = vmatprep.mubr.bf16.mxu0 0
  %1586 = vmatmul.mubr.bf16.gmra.mxu0 %v931
  %v1587 = vpop.f32.mrf.mxu0
  %v1588 = vadd.f32 %v227, %v1587
  %v1589 = vpop.f32.mrf.mxu0
  %v1590 = vpop.f32.mrf.mxu0
  %v1591 = vadd.f32 %v227, %v1590
  %v1592 = vpop.f32.mrf.mxu0
  %1593 = vmatprep.mubr.bf16.mxu0 0
  %1594 = vmatmul.mubr.bf16.gmra.mxu0 %v934
  %v1595 = vpop.f32.mrf.mxu0
  %v1596 = vadd.f32 %v227, %v1595
  %v1597 = vpop.f32.mrf.mxu0
  %v1598 = vpop.f32.mrf.mxu0
  %v1599 = vadd.f32 %v227, %v1598
  %v1600 = vpop.f32.mrf.mxu0
  %1601 = vmatprep.mubr.bf16.mxu0 0
  %1602 = vmatmul.mubr.bf16.gmra.mxu0 %v937
  %v1603 = vpop.f32.mrf.mxu0
  %v1604 = vadd.f32 %v227, %v1603
  %v1605 = vpop.f32.mrf.mxu0
  %v1606 = vpop.f32.mrf.mxu0
  %v1607 = vadd.f32 %v227, %v1606
  %v1608 = vpop.f32.mrf.mxu0
  %1609 = vmatprep.mubr.bf16.mxu0 0
  %1610 = vmatmul.mubr.bf16.gmra.mxu0 %v940
  %v1611 = vpop.f32.mrf.mxu0
  %v1612 = vadd.f32 %v227, %v1611
  %v1613 = vpop.f32.mrf.mxu0
  %v1614 = vpop.f32.mrf.mxu0
  %v1615 = vadd.f32 %v227, %v1614
  %v1616 = vpop.f32.mrf.mxu0
  %1617 = vmatprep.mubr.bf16.mxu0 0
  %1618 = vmatmul.mubr.bf16.gmra.mxu0 %v943
  %v1619 = vpop.f32.mrf.mxu0
  %v1620 = vadd.f32 %v227, %v1619
  %v1621 = vpop.f32.mrf.mxu0
  %v1622 = vpop.f32.mrf.mxu0
  %v1623 = vadd.f32 %v227, %v1622
  %v1624 = vpop.f32.mrf.mxu0
  %1625 = vmatprep.mubr.bf16.mxu0 0
  %1626 = vmatmul.mubr.bf16.gmra.mxu0 %v946
  %v1627 = vpop.f32.mrf.mxu0
  %v1628 = vadd.f32 %v227, %v1627
  %v1629 = vpop.f32.mrf.mxu0
  %v1630 = vpop.f32.mrf.mxu0
  %v1631 = vadd.f32 %v227, %v1630
  %v1632 = vpop.f32.mrf.mxu0
  %1633 = vmatprep.mubr.bf16.mxu0 0
  %1634 = vmatmul.mubr.bf16.gmra.mxu0 %v949
  %v1635 = vpop.f32.mrf.mxu0
  %v1636 = vadd.f32 %v227, %v1635
  %v1637 = vpop.f32.mrf.mxu0
  %v1638 = vpop.f32.mrf.mxu0
  %v1639 = vadd.f32 %v227, %v1638
  %v1640 = vpop.f32.mrf.mxu0
  %1641 = vmatprep.mubr.bf16.mxu0 0
  %1642 = vmatmul.mubr.bf16.gmra.mxu0 %v952
  %v1643 = vpop.f32.mrf.mxu0
  %v1644 = vadd.f32 %v227, %v1643
  %v1645 = vpop.f32.mrf.mxu0
  %v1646 = vpop.f32.mrf.mxu0
  %v1647 = vadd.f32 %v227, %v1646
  %v1648 = vpop.f32.mrf.mxu0
  %1649 = vmatprep.mubr.bf16.mxu0 0
  %1650 = vmatmul.mubr.bf16.gmra.mxu0 %v955
  %v1651 = vpop.f32.mrf.mxu0
  %v1652 = vadd.f32 %v227, %v1651
  %v1653 = vpop.f32.mrf.mxu0
  %v1654 = vpop.f32.mrf.mxu0
  %v1655 = vadd.f32 %v227, %v1654
  %v1656 = vpop.f32.mrf.mxu0
  %1657 = vmatprep.mubr.bf16.mxu0 0
  %1658 = vmatmul.mubr.bf16.gmra.mxu0 %v958
  %v1659 = vpop.f32.mrf.mxu0
  %v1660 = vadd.f32 %v227, %v1659
  %v1661 = vpop.f32.mrf.mxu0
  %v1662 = vpop.f32.mrf.mxu0
  %v1663 = vadd.f32 %v227, %v1662
  %v1664 = vpop.f32.mrf.mxu0
  %1665 = vmatprep.mubr.bf16.mxu0 0
  %1666 = vmatmul.mubr.bf16.gmra.mxu0 %v961
  %v1667 = vpop.f32.mrf.mxu0
  %v1668 = vadd.f32 %v227, %v1667
  %v1669 = vpop.f32.mrf.mxu0
  %v1670 = vpop.f32.mrf.mxu0
  %v1671 = vadd.f32 %v227, %v1670
  %v1672 = vpop.f32.mrf.mxu0
  %1673 = vmatprep.mubr.bf16.mxu0 0
  %1674 = vmatmul.mubr.bf16.gmra.mxu0 %v964
  %v1675 = vpop.f32.mrf.mxu0
  %v1676 = vadd.f32 %v227, %v1675
  %v1677 = vpop.f32.mrf.mxu0
  %v1678 = vpop.f32.mrf.mxu0
  %v1679 = vadd.f32 %v227, %v1678
  %v1680 = vpop.f32.mrf.mxu0
  %1681 = vmatprep.mubr.bf16.mxu0 0
  %1682 = vmatmul.mubr.bf16.gmra.mxu0 %v967
  %v1683 = vpop.f32.mrf.mxu0
  %v1684 = vadd.f32 %v227, %v1683
  %v1685 = vpop.f32.mrf.mxu0
  %v1686 = vpop.f32.mrf.mxu0
  %v1687 = vadd.f32 %v227, %v1686
  %v1688 = vpop.f32.mrf.mxu0
  %1689 = vmatprep.mubr.bf16.mxu0 0
  %1690 = vmatmul.mubr.bf16.gmra.mxu0 %v970
  %v1691 = vpop.f32.mrf.mxu0
  %v1692 = vadd.f32 %v227, %v1691
  %v1693 = vpop.f32.mrf.mxu0
  %v1694 = vpop.f32.mrf.mxu0
  %v1695 = vadd.f32 %v227, %v1694
  %v1696 = vpop.f32.mrf.mxu0
  %1697 = vmatprep.mubr.bf16.mxu0 0
  %1698 = vmatmul.mubr.bf16.gmra.mxu0 %v973
  %v1699 = vpop.f32.mrf.mxu0
  %v1700 = vadd.f32 %v227, %v1699
  %v1701 = vpop.f32.mrf.mxu0
  %v1702 = vpop.f32.mrf.mxu0
  %v1703 = vadd.f32 %v227, %v1702
  %v1704 = vpop.f32.mrf.mxu0
  %1705 = vmatprep.mubr.bf16.mxu0 0
  %1706 = vmatmul.mubr.bf16.gmra.mxu0 %v976
  %v1707 = vpop.f32.mrf.mxu0
  %v1708 = vadd.f32 %v227, %v1707
  %v1709 = vpop.f32.mrf.mxu0
  %v1710 = vpop.f32.mrf.mxu0
  %v1711 = vadd.f32 %v227, %v1710
  %v1712 = vpop.f32.mrf.mxu0
  %1713 = vmatprep.mubr.bf16.mxu0 0
  %1714 = vmatmul.mubr.bf16.gmra.mxu0 %v979
  %v1715 = vpop.f32.mrf.mxu0
  %v1716 = vadd.f32 %v227, %v1715
  %v1717 = vpop.f32.mrf.mxu0
  %v1718 = vpop.f32.mrf.mxu0
  %v1719 = vadd.f32 %v227, %v1718
  %v1720 = vpop.f32.mrf.mxu0
  %1721 = vmatprep.mubr.bf16.mxu0 0
  %1722 = vmatmul.mubr.bf16.gmra.mxu0 %v982
  %v1723 = vpop.f32.mrf.mxu0
  %v1724 = vadd.f32 %v227, %v1723
  %v1725 = vpop.f32.mrf.mxu0
  %v1726 = vpop.f32.mrf.mxu0
  %v1727 = vadd.f32 %v227, %v1726
  %v1728 = vpop.f32.mrf.mxu0
  %1729 = vmatprep.mubr.bf16.mxu0 0
  %1730 = vmatmul.mubr.bf16.gmra.mxu0 %v985
  %v1731 = vpop.f32.mrf.mxu0
  %v1732 = vadd.f32 %v227, %v1731
  %v1733 = vpop.f32.mrf.mxu0
  %v1734 = vpop.f32.mrf.mxu0
  %v1735 = vadd.f32 %v227, %v1734
  %v1736 = vpop.f32.mrf.mxu0
  %1737 = vmatprep.mubr.bf16.mxu0 0
  %1738 = vmatmul.mubr.bf16.gmra.mxu0 %v988
  %v1739 = vpop.f32.mrf.mxu0
  %v1740 = vadd.f32 %v227, %v1739
  %v1741 = vpop.f32.mrf.mxu0
  %v1742 = vpop.f32.mrf.mxu0
  %v1743 = vadd.f32 %v227, %v1742
  %v1744 = vpop.f32.mrf.mxu0
  %1745 = vmatprep.mubr.bf16.mxu0 0
  %1746 = vmatmul.mubr.bf16.gmra.mxu0 %v991
  %v1747 = vpop.f32.mrf.mxu0
  %v1748 = vadd.f32 %v227, %v1747
  %v1749 = vpop.f32.mrf.mxu0
  %v1750 = vpop.f32.mrf.mxu0
  %v1751 = vadd.f32 %v227, %v1750
  %v1752 = vpop.f32.mrf.mxu0
  %1753 = vmatprep.mubr.bf16.mxu0 0
  %1754 = vmatmul.mubr.bf16.gmra.mxu0 %v994
  %v1755 = vpop.f32.mrf.mxu0
  %v1756 = vadd.f32 %v227, %v1755
  %v1757 = vpop.f32.mrf.mxu0
  %v1758 = vpop.f32.mrf.mxu0
  %v1759 = vadd.f32 %v227, %v1758
  %v1760 = vpop.f32.mrf.mxu0
  %1761 = vmatprep.mubr.bf16.mxu0 0
  %1762 = vmatmul.mubr.bf16.gmra.mxu0 %v997
  %v1763 = vpop.f32.mrf.mxu0
  %v1764 = vadd.f32 %v227, %v1763
  %v1765 = vpop.f32.mrf.mxu0
  %v1766 = vpop.f32.mrf.mxu0
  %v1767 = vadd.f32 %v227, %v1766
  %v1768 = vpop.f32.mrf.mxu0
  %1769 = vmatprep.mubr.bf16.mxu0 0
  %1770 = vmatmul.mubr.bf16.gmra.mxu0 %v1000
  %v1771 = vpop.f32.mrf.mxu0
  %v1772 = vadd.f32 %v227, %v1771
  %v1773 = vpop.f32.mrf.mxu0
  %v1774 = vpop.f32.mrf.mxu0
  %v1775 = vadd.f32 %v227, %v1774
  %v1776 = vpop.f32.mrf.mxu0
  %1777 = vmatprep.mubr.bf16.mxu0 0
  %1778 = vmatmul.mubr.bf16.gmra.mxu0 %v1003
  %v1779 = vpop.f32.mrf.mxu0
  %v1780 = vadd.f32 %v227, %v1779
  %v1781 = vpop.f32.mrf.mxu0
  %v1782 = vpop.f32.mrf.mxu0
  %v1783 = vadd.f32 %v227, %v1782
  %v1784 = vpop.f32.mrf.mxu0
  %1785 = vmatprep.mubr.bf16.mxu0 0
  %1786 = vmatmul.mubr.bf16.gmra.mxu0 %v1006
  %v1787 = vpop.f32.mrf.mxu0
  %v1788 = vadd.f32 %v227, %v1787
  %v1789 = vpop.f32.mrf.mxu0
  %v1790 = vpop.f32.mrf.mxu0
  %v1791 = vadd.f32 %v227, %v1790
  %v1792 = vpop.f32.mrf.mxu0
  %1793 = vmatprep.mubr.bf16.mxu0 0
  %1794 = vmatmul.mubr.bf16.gmra.mxu0 %v1009
  %v1795 = vpop.f32.mrf.mxu0
  %v1796 = vadd.f32 %v227, %v1795
  %v1797 = vpop.f32.mrf.mxu0
  %v1798 = vpop.f32.mrf.mxu0
  %v1799 = vadd.f32 %v227, %v1798
  %v1800 = vpop.f32.mrf.mxu0
  %1801 = vmatprep.mubr.bf16.mxu0 0
  %1802 = vmatmul.mubr.bf16.gmra.mxu0 %v1012
  %v1803 = vpop.f32.mrf.mxu0
  %v1804 = vadd.f32 %v227, %v1803
  %v1805 = vpop.f32.mrf.mxu0
  %v1806 = vpop.f32.mrf.mxu0
  %v1807 = vadd.f32 %v227, %v1806
  %v1808 = vpop.f32.mrf.mxu0
  %1809 = vmatprep.mubr.bf16.mxu0 0
  %1810 = vmatmul.mubr.bf16.gmra.mxu0 %v1015
  %v1811 = vpop.f32.mrf.mxu0
  %v1812 = vadd.f32 %v227, %v1811
  %v1813 = vpop.f32.mrf.mxu0
  %v1814 = vpop.f32.mrf.mxu0
  %v1815 = vadd.f32 %v227, %v1814
  %v1816 = vpop.f32.mrf.mxu0
  %1817 = vmatprep.mubr.bf16.mxu0 0
  %1818 = vmatmul.mubr.bf16.gmra.mxu0 %v1018
  %v1819 = vpop.f32.mrf.mxu0
  %v1820 = vadd.f32 %v227, %v1819
  %v1821 = vpop.f32.mrf.mxu0
  %v1822 = vpop.f32.mrf.mxu0
  %v1823 = vadd.f32 %v227, %v1822
  %v1824 = vpop.f32.mrf.mxu0
  %1825 = vmatprep.mubr.bf16.mxu0 0
  %1826 = vmatmul.mubr.bf16.gmra.mxu0 %v1021
  %v1827 = vpop.f32.mrf.mxu0
  %v1828 = vadd.f32 %v227, %v1827
  %v1829 = vpop.f32.mrf.mxu0
  %v1830 = vpop.f32.mrf.mxu0
  %v1831 = vadd.f32 %v227, %v1830
  %v1832 = vpop.f32.mrf.mxu0
  %1833 = vmatprep.mubr.bf16.mxu0 0
  %1834 = vmatmul.mubr.bf16.gmra.mxu0 %v1024
  %v1835 = vpop.f32.mrf.mxu0
  %v1836 = vadd.f32 %v227, %v1835
  %v1837 = vpop.f32.mrf.mxu0
  %v1838 = vpop.f32.mrf.mxu0
  %v1839 = vadd.f32 %v227, %v1838
  %v1840 = vpop.f32.mrf.mxu0
  %1841 = vmatprep.mubr.bf16.mxu0 0
  %1842 = vmatmul.mubr.bf16.gmra.mxu0 %v1027
  %v1843 = vpop.f32.mrf.mxu0
  %v1844 = vadd.f32 %v227, %v1843
  %v1845 = vpop.f32.mrf.mxu0
  %v1846 = vpop.f32.mrf.mxu0
  %v1847 = vadd.f32 %v227, %v1846
  %v1848 = vpop.f32.mrf.mxu0
  %1849 = vdwg.mxu0
  %v1850 = vld [vmem:[%s3] sm:$0x1]
  %v1851 = vld [vmem:[%s4] sm:$0x1]
  %vm1852 = vcmask 261120
  %v1853 = vsel %vm1852, %v1068, 0.0
  %v1854 = vsel %vm1852, %v1071, 0.0
  %v1855 = vadd.f32 %v1853, %v1854
  %v1856 = vsel %vm1852, %v1076, 0.0
  %v1857 = vadd.f32 %v1855, %v1856
  %v1858 = vsel %vm1852, %v1079, 0.0
  %v1859 = vadd.f32 %v1857, %v1858
  %v1860 = vsel %vm1852, %v1084, 0.0
  %v1861 = vadd.f32 %v1859, %v1860
  %v1862 = vsel %vm1852, %v1087, 0.0
  %v1863 = vadd.f32 %v1861, %v1862
  %v1864 = vsel %vm1852, %v1092, 0.0
  %v1865 = vadd.f32 %v1863, %v1864
  %v1866 = vsel %vm1852, %v1095, 0.0
  %v1867 = vadd.f32 %v1865, %v1866
  %v1868 = vsel %vm1852, %v1100, 0.0
  %v1869 = vadd.f32 %v1867, %v1868
  %v1870 = vsel %vm1852, %v1103, 0.0
  %v1871 = vadd.f32 %v1869, %v1870
  %v1872 = vsel %vm1852, %v1108, 0.0
  %v1873 = vadd.f32 %v1871, %v1872
  %v1874 = vsel %vm1852, %v1111, 0.0
  %v1875 = vadd.f32 %v1873, %v1874
  %v1876 = vsel %vm1852, %v1116, 0.0
  %v1877 = vadd.f32 %v1875, %v1876
  %v1878 = vsel %vm1852, %v1119, 0.0
  %v1879 = vadd.f32 %v1877, %v1878
  %v1880 = vsel %vm1852, %v1124, 0.0
  %v1881 = vadd.f32 %v1879, %v1880
  %v1882 = vsel %vm1852, %v1127, 0.0
  %v1883 = vadd.f32 %v1881, %v1882
  %v1884 = vsel %vm1852, %v1132, 0.0
  %v1885 = vadd.f32 %v1883, %v1884
  %v1886 = vsel %vm1852, %v1135, 0.0
  %v1887 = vadd.f32 %v1885, %v1886
  %v1888 = vsel %vm1852, %v1140, 0.0
  %v1889 = vadd.f32 %v1887, %v1888
  %v1890 = vsel %vm1852, %v1143, 0.0
  %v1891 = vadd.f32 %v1889, %v1890
  %v1892 = vsel %vm1852, %v1148, 0.0
  %v1893 = vadd.f32 %v1891, %v1892
  %v1894 = vsel %vm1852, %v1151, 0.0
  %v1895 = vadd.f32 %v1893, %v1894
  %v1896 = vsel %vm1852, %v1156, 0.0
  %v1897 = vadd.f32 %v1895, %v1896
  %v1898 = vsel %vm1852, %v1159, 0.0
  %v1899 = vadd.f32 %v1897, %v1898
  %v1900 = vsel %vm1852, %v1164, 0.0
  %v1901 = vadd.f32 %v1899, %v1900
  %v1902 = vsel %vm1852, %v1167, 0.0
  %v1903 = vadd.f32 %v1901, %v1902
  %v1904 = vsel %vm1852, %v1172, 0.0
  %v1905 = vadd.f32 %v1903, %v1904
  %v1906 = vsel %vm1852, %v1175, 0.0
  %v1907 = vadd.f32 %v1905, %v1906
  %v1908 = vsel %vm1852, %v1180, 0.0
  %v1909 = vadd.f32 %v1907, %v1908
  %v1910 = vsel %vm1852, %v1183, 0.0
  %v1911 = vadd.f32 %v1909, %v1910
  %v1912 = vsel %vm1852, %v1188, 0.0
  %v1913 = vadd.f32 %v1911, %v1912
  %v1914 = vsel %vm1852, %v1191, 0.0
  %v1915 = vadd.f32 %v1913, %v1914
  %v1916 = vsel %vm1852, %v1196, 0.0
  %v1917 = vadd.f32 %v1915, %v1916
  %v1918 = vsel %vm1852, %v1199, 0.0
  %v1919 = vadd.f32 %v1917, %v1918
  %v1920 = vsel %vm1852, %v1204, 0.0
  %v1921 = vadd.f32 %v1919, %v1920
  %v1922 = vsel %vm1852, %v1207, 0.0
  %v1923 = vadd.f32 %v1921, %v1922
  %v1924 = vsel %vm1852, %v1212, 0.0
  %v1925 = vadd.f32 %v1923, %v1924
  %v1926 = vsel %vm1852, %v1215, 0.0
  %v1927 = vadd.f32 %v1925, %v1926
  %v1928 = vsel %vm1852, %v1220, 0.0
  %v1929 = vadd.f32 %v1927, %v1928
  %v1930 = vsel %vm1852, %v1223, 0.0
  %v1931 = vadd.f32 %v1929, %v1930
  %v1932 = vsel %vm1852, %v1228, 0.0
  %v1933 = vadd.f32 %v1931, %v1932
  %v1934 = vsel %vm1852, %v1231, 0.0
  %v1935 = vadd.f32 %v1933, %v1934
  %v1936 = vsel %vm1852, %v1236, 0.0
  %v1937 = vadd.f32 %v1935, %v1936
  %v1938 = vsel %vm1852, %v1239, 0.0
  %v1939 = vadd.f32 %v1937, %v1938
  %v1940 = vsel %vm1852, %v1244, 0.0
  %v1941 = vadd.f32 %v1939, %v1940
  %v1942 = vsel %vm1852, %v1247, 0.0
  %v1943 = vadd.f32 %v1941, %v1942
  %v1944 = vsel %vm1852, %v1252, 0.0
  %v1945 = vadd.f32 %v1943, %v1944
  %v1946 = vsel %vm1852, %v1255, 0.0
  %v1947 = vadd.f32 %v1945, %v1946
  %v1948 = vsel %vm1852, %v1260, 0.0
  %v1949 = vadd.f32 %v1947, %v1948
  %v1950 = vsel %vm1852, %v1263, 0.0
  %v1951 = vadd.f32 %v1949, %v1950
  %v1952 = vsel %vm1852, %v1268, 0.0
  %v1953 = vadd.f32 %v1951, %v1952
  %v1954 = vsel %vm1852, %v1271, 0.0
  %v1955 = vadd.f32 %v1953, %v1954
  %v1956 = vsel %vm1852, %v1276, 0.0
  %v1957 = vadd.f32 %v1955, %v1956
  %v1958 = vsel %vm1852, %v1279, 0.0
  %v1959 = vadd.f32 %v1957, %v1958
  %v1960 = vsel %vm1852, %v1284, 0.0
  %v1961 = vadd.f32 %v1959, %v1960
  %v1962 = vsel %vm1852, %v1287, 0.0
  %v1963 = vadd.f32 %v1961, %v1962
  %v1964 = vsel %vm1852, %v1292, 0.0
  %v1965 = vadd.f32 %v1963, %v1964
  %v1966 = vsel %vm1852, %v1295, 0.0
  %v1967 = vadd.f32 %v1965, %v1966
  %v1968 = vsel %vm1852, %v1300, 0.0
  %v1969 = vadd.f32 %v1967, %v1968
  %v1970 = vsel %vm1852, %v1303, 0.0
  %v1971 = vadd.f32 %v1969, %v1970
  %v1972 = vsel %vm1852, %v1308, 0.0
  %v1973 = vadd.f32 %v1971, %v1972
  %v1974 = vsel %vm1852, %v1311, 0.0
  %v1975 = vadd.f32 %v1973, %v1974
  %v1976 = vsel %vm1852, %v1316, 0.0
  %v1977 = vadd.f32 %v1975, %v1976
  %v1978 = vsel %vm1852, %v1319, 0.0
  %v1979 = vadd.f32 %v1977, %v1978
  %v1980 = vsel %vm1852, %v1324, 0.0
  %v1981 = vadd.f32 %v1979, %v1980
  %v1982 = vsel %vm1852, %v1327, 0.0
  %v1983 = vadd.f32 %v1981, %v1982
  %v1984 = vsel %vm1852, %v1332, 0.0
  %v1985 = vadd.f32 %v1983, %v1984
  %v1986 = vsel %vm1852, %v1335, 0.0
  %v1987 = vadd.f32 %v1985, %v1986
  %v1988 = vsel %vm1852, %v1340, 0.0
  %v1989 = vadd.f32 %v1987, %v1988
  %v1990 = vsel %vm1852, %v1343, 0.0
  %v1991 = vadd.f32 %v1989, %v1990
  %v1992 = vsel %vm1852, %v1348, 0.0
  %v1993 = vadd.f32 %v1991, %v1992
  %v1994 = vsel %vm1852, %v1351, 0.0
  %v1995 = vadd.f32 %v1993, %v1994
  %v1996 = vsel %vm1852, %v1356, 0.0
  %v1997 = vadd.f32 %v1995, %v1996
  %v1998 = vsel %vm1852, %v1359, 0.0
  %v1999 = vadd.f32 %v1997, %v1998
  %v2000 = vsel %vm1852, %v1364, 0.0
  %v2001 = vadd.f32 %v1999, %v2000
  %v2002 = vsel %vm1852, %v1367, 0.0
  %v2003 = vadd.f32 %v2001, %v2002
  %v2004 = vsel %vm1852, %v1372, 0.0
  %v2005 = vadd.f32 %v2003, %v2004
  %v2006 = vsel %vm1852, %v1375, 0.0
  %v2007 = vadd.f32 %v2005, %v2006
  %v2008 = vsel %vm1852, %v1380, 0.0
  %v2009 = vadd.f32 %v2007, %v2008
  %v2010 = vsel %vm1852, %v1383, 0.0
  %v2011 = vadd.f32 %v2009, %v2010
  %v2012 = vsel %vm1852, %v1388, 0.0
  %v2013 = vadd.f32 %v2011, %v2012
  %v2014 = vsel %vm1852, %v1391, 0.0
  %v2015 = vadd.f32 %v2013, %v2014
  %v2016 = vsel %vm1852, %v1396, 0.0
  %v2017 = vadd.f32 %v2015, %v2016
  %v2018 = vsel %vm1852, %v1399, 0.0
  %v2019 = vadd.f32 %v2017, %v2018
  %v2020 = vsel %vm1852, %v1404, 0.0
  %v2021 = vadd.f32 %v2019, %v2020
  %v2022 = vsel %vm1852, %v1407, 0.0
  %v2023 = vadd.f32 %v2021, %v2022
  %v2024 = vsel %vm1852, %v1412, 0.0
  %v2025 = vadd.f32 %v2023, %v2024
  %v2026 = vsel %vm1852, %v1415, 0.0
  %v2027 = vadd.f32 %v2025, %v2026
  %v2028 = vsel %vm1852, %v1420, 0.0
  %v2029 = vadd.f32 %v2027, %v2028
  %v2030 = vsel %vm1852, %v1423, 0.0
  %v2031 = vadd.f32 %v2029, %v2030
  %v2032 = vsel %vm1852, %v1428, 0.0
  %v2033 = vadd.f32 %v2031, %v2032
  %v2034 = vsel %vm1852, %v1431, 0.0
  %v2035 = vadd.f32 %v2033, %v2034
  %v2036 = vsel %vm1852, %v1436, 0.0
  %v2037 = vadd.f32 %v2035, %v2036
  %v2038 = vsel %vm1852, %v1439, 0.0
  %v2039 = vadd.f32 %v2037, %v2038
  %v2040 = vsel %vm1852, %v1444, 0.0
  %v2041 = vadd.f32 %v2039, %v2040
  %v2042 = vsel %vm1852, %v1447, 0.0
  %v2043 = vadd.f32 %v2041, %v2042
  %v2044 = vsel %vm1852, %v1452, 0.0
  %v2045 = vadd.f32 %v2043, %v2044
  %v2046 = vsel %vm1852, %v1455, 0.0
  %v2047 = vadd.f32 %v2045, %v2046
  %v2048 = vsel %vm1852, %v1460, 0.0
  %v2049 = vadd.f32 %v2047, %v2048
  %v2050 = vsel %vm1852, %v1463, 0.0
  %v2051 = vadd.f32 %v2049, %v2050
  %v2052 = vsel %vm1852, %v1468, 0.0
  %v2053 = vadd.f32 %v2051, %v2052
  %v2054 = vsel %vm1852, %v1471, 0.0
  %v2055 = vadd.f32 %v2053, %v2054
  %v2056 = vsel %vm1852, %v1476, 0.0
  %v2057 = vadd.f32 %v2055, %v2056
  %v2058 = vsel %vm1852, %v1479, 0.0
  %v2059 = vadd.f32 %v2057, %v2058
  %v2060 = vsel %vm1852, %v1484, 0.0
  %v2061 = vadd.f32 %v2059, %v2060
  %v2062 = vsel %vm1852, %v1487, 0.0
  %v2063 = vadd.f32 %v2061, %v2062
  %v2064 = vsel %vm1852, %v1492, 0.0
  %v2065 = vadd.f32 %v2063, %v2064
  %v2066 = vsel %vm1852, %v1495, 0.0
  %v2067 = vadd.f32 %v2065, %v2066
  %v2068 = vsel %vm1852, %v1500, 0.0
  %v2069 = vadd.f32 %v2067, %v2068
  %v2070 = vsel %vm1852, %v1503, 0.0
  %v2071 = vadd.f32 %v2069, %v2070
  %v2072 = vsel %vm1852, %v1508, 0.0
  %v2073 = vadd.f32 %v2071, %v2072
  %v2074 = vsel %vm1852, %v1511, 0.0
  %v2075 = vadd.f32 %v2073, %v2074
  %v2076 = vsel %vm1852, %v1516, 0.0
  %v2077 = vadd.f32 %v2075, %v2076
  %v2078 = vsel %vm1852, %v1519, 0.0
  %v2079 = vadd.f32 %v2077, %v2078
  %v2080 = vsel %vm1852, %v1524, 0.0
  %v2081 = vadd.f32 %v2079, %v2080
  %v2082 = vsel %vm1852, %v1527, 0.0
  %v2083 = vadd.f32 %v2081, %v2082
  %v2084 = vsel %vm1852, %v1532, 0.0
  %v2085 = vadd.f32 %v2083, %v2084
  %v2086 = vsel %vm1852, %v1535, 0.0
  %v2087 = vadd.f32 %v2085, %v2086
  %v2088 = vsel %vm1852, %v1540, 0.0
  %v2089 = vadd.f32 %v2087, %v2088
  %v2090 = vsel %vm1852, %v1543, 0.0
  %v2091 = vadd.f32 %v2089, %v2090
  %v2092 = vsel %vm1852, %v1548, 0.0
  %v2093 = vadd.f32 %v2091, %v2092
  %v2094 = vsel %vm1852, %v1551, 0.0
  %v2095 = vadd.f32 %v2093, %v2094
  %v2096 = vsel %vm1852, %v1556, 0.0
  %v2097 = vadd.f32 %v2095, %v2096
  %v2098 = vsel %vm1852, %v1559, 0.0
  %v2099 = vadd.f32 %v2097, %v2098
  %v2100 = vsel %vm1852, %v1564, 0.0
  %v2101 = vadd.f32 %v2099, %v2100
  %v2102 = vsel %vm1852, %v1567, 0.0
  %v2103 = vadd.f32 %v2101, %v2102
  %v2104 = vsel %vm1852, %v1572, 0.0
  %v2105 = vadd.f32 %v2103, %v2104
  %v2106 = vsel %vm1852, %v1575, 0.0
  %v2107 = vadd.f32 %v2105, %v2106
  %v2108 = vsel %vm1852, %v1580, 0.0
  %v2109 = vadd.f32 %v2107, %v2108
  %v2110 = vsel %vm1852, %v1583, 0.0
  %v2111 = vadd.f32 %v2109, %v2110
  %v2112 = vsel %vm1852, %v1588, 0.0
  %v2113 = vadd.f32 %v2111, %v2112
  %v2114 = vsel %vm1852, %v1591, 0.0
  %v2115 = vadd.f32 %v2113, %v2114
  %v2116 = vsel %vm1852, %v1596, 0.0
  %v2117 = vadd.f32 %v2115, %v2116
  %v2118 = vsel %vm1852, %v1599, 0.0
  %v2119 = vadd.f32 %v2117, %v2118
  %v2120 = vsel %vm1852, %v1604, 0.0
  %v2121 = vadd.f32 %v2119, %v2120
  %v2122 = vsel %vm1852, %v1607, 0.0
  %v2123 = vadd.f32 %v2121, %v2122
  %v2124 = vsel %vm1852, %v1612, 0.0
  %v2125 = vadd.f32 %v2123, %v2124
  %v2126 = vsel %vm1852, %v1615, 0.0
  %v2127 = vadd.f32 %v2125, %v2126
  %v2128 = vsel %vm1852, %v1620, 0.0
  %v2129 = vadd.f32 %v2127, %v2128
  %v2130 = vsel %vm1852, %v1623, 0.0
  %v2131 = vadd.f32 %v2129, %v2130
  %v2132 = vsel %vm1852, %v1628, 0.0
  %v2133 = vadd.f32 %v2131, %v2132
  %v2134 = vsel %vm1852, %v1631, 0.0
  %v2135 = vadd.f32 %v2133, %v2134
  %v2136 = vsel %vm1852, %v1636, 0.0
  %v2137 = vadd.f32 %v2135, %v2136
  %v2138 = vsel %vm1852, %v1639, 0.0
  %v2139 = vadd.f32 %v2137, %v2138
  %v2140 = vsel %vm1852, %v1644, 0.0
  %v2141 = vadd.f32 %v2139, %v2140
  %v2142 = vsel %vm1852, %v1647, 0.0
  %v2143 = vadd.f32 %v2141, %v2142
  %v2144 = vsel %vm1852, %v1652, 0.0
  %v2145 = vadd.f32 %v2143, %v2144
  %v2146 = vsel %vm1852, %v1655, 0.0
  %v2147 = vadd.f32 %v2145, %v2146
  %v2148 = vsel %vm1852, %v1660, 0.0
  %v2149 = vadd.f32 %v2147, %v2148
  %v2150 = vsel %vm1852, %v1663, 0.0
  %v2151 = vadd.f32 %v2149, %v2150
  %v2152 = vsel %vm1852, %v1668, 0.0
  %v2153 = vadd.f32 %v2151, %v2152
  %v2154 = vsel %vm1852, %v1671, 0.0
  %v2155 = vadd.f32 %v2153, %v2154
  %v2156 = vsel %vm1852, %v1676, 0.0
  %v2157 = vadd.f32 %v2155, %v2156
  %v2158 = vsel %vm1852, %v1679, 0.0
  %v2159 = vadd.f32 %v2157, %v2158
  %v2160 = vsel %vm1852, %v1684, 0.0
  %v2161 = vadd.f32 %v2159, %v2160
  %v2162 = vsel %vm1852, %v1687, 0.0
  %v2163 = vadd.f32 %v2161, %v2162
  %v2164 = vsel %vm1852, %v1692, 0.0
  %v2165 = vadd.f32 %v2163, %v2164
  %v2166 = vsel %vm1852, %v1695, 0.0
  %v2167 = vadd.f32 %v2165, %v2166
  %v2168 = vsel %vm1852, %v1700, 0.0
  %v2169 = vadd.f32 %v2167, %v2168
  %v2170 = vsel %vm1852, %v1703, 0.0
  %v2171 = vadd.f32 %v2169, %v2170
  %v2172 = vsel %vm1852, %v1708, 0.0
  %v2173 = vadd.f32 %v2171, %v2172
  %v2174 = vsel %vm1852, %v1711, 0.0
  %v2175 = vadd.f32 %v2173, %v2174
  %v2176 = vsel %vm1852, %v1716, 0.0
  %v2177 = vadd.f32 %v2175, %v2176
  %v2178 = vsel %vm1852, %v1719, 0.0
  %v2179 = vadd.f32 %v2177, %v2178
  %v2180 = vsel %vm1852, %v1724, 0.0
  %v2181 = vadd.f32 %v2179, %v2180
  %v2182 = vsel %vm1852, %v1727, 0.0
  %v2183 = vadd.f32 %v2181, %v2182
  %v2184 = vsel %vm1852, %v1732, 0.0
  %v2185 = vadd.f32 %v2183, %v2184
  %v2186 = vsel %vm1852, %v1735, 0.0
  %v2187 = vadd.f32 %v2185, %v2186
  %v2188 = vsel %vm1852, %v1740, 0.0
  %v2189 = vadd.f32 %v2187, %v2188
  %v2190 = vsel %vm1852, %v1743, 0.0
  %v2191 = vadd.f32 %v2189, %v2190
  %v2192 = vsel %vm1852, %v1748, 0.0
  %v2193 = vadd.f32 %v2191, %v2192
  %v2194 = vsel %vm1852, %v1751, 0.0
  %v2195 = vadd.f32 %v2193, %v2194
  %v2196 = vsel %vm1852, %v1756, 0.0
  %v2197 = vadd.f32 %v2195, %v2196
  %v2198 = vsel %vm1852, %v1759, 0.0
  %v2199 = vadd.f32 %v2197, %v2198
  %v2200 = vsel %vm1852, %v1764, 0.0
  %v2201 = vadd.f32 %v2199, %v2200
  %v2202 = vsel %vm1852, %v1767, 0.0
  %v2203 = vadd.f32 %v2201, %v2202
  %v2204 = vsel %vm1852, %v1772, 0.0
  %v2205 = vadd.f32 %v2203, %v2204
  %v2206 = vsel %vm1852, %v1775, 0.0
  %v2207 = vadd.f32 %v2205, %v2206
  %v2208 = vsel %vm1852, %v1780, 0.0
  %v2209 = vadd.f32 %v2207, %v2208
  %v2210 = vsel %vm1852, %v1783, 0.0
  %v2211 = vadd.f32 %v2209, %v2210
  %v2212 = vsel %vm1852, %v1788, 0.0
  %v2213 = vadd.f32 %v2211, %v2212
  %v2214 = vsel %vm1852, %v1791, 0.0
  %v2215 = vadd.f32 %v2213, %v2214
  %v2216 = vsel %vm1852, %v1796, 0.0
  %v2217 = vadd.f32 %v2215, %v2216
  %v2218 = vsel %vm1852, %v1799, 0.0
  %v2219 = vadd.f32 %v2217, %v2218
  %v2220 = vsel %vm1852, %v1804, 0.0
  %v2221 = vadd.f32 %v2219, %v2220
  %v2222 = vsel %vm1852, %v1807, 0.0
  %v2223 = vadd.f32 %v2221, %v2222
  %v2224 = vsel %vm1852, %v1812, 0.0
  %v2225 = vadd.f32 %v2223, %v2224
  %v2226 = vsel %vm1852, %v1815, 0.0
  %v2227 = vadd.f32 %v2225, %v2226
  %v2228 = vsel %vm1852, %v1820, 0.0
  %v2229 = vadd.f32 %v2227, %v2228
  %v2230 = vsel %vm1852, %v1823, 0.0
  %v2231 = vadd.f32 %v2229, %v2230
  %v2232 = vsel %vm1852, %v1828, 0.0
  %v2233 = vadd.f32 %v2231, %v2232
  %v2234 = vsel %vm1852, %v1831, 0.0
  %v2235 = vadd.f32 %v2233, %v2234
  %v2236 = vsel %vm1852, %v1836, 0.0
  %v2237 = vadd.f32 %v2235, %v2236
  %v2238 = vsel %vm1852, %v1839, 0.0
  %v2239 = vadd.f32 %v2237, %v2238
  %v2240 = vsel %vm1852, %v1844, 0.0
  %v2241 = vadd.f32 %v2239, %v2240
  %v2242 = vsel %vm1852, %v1847, 0.0
  %v2243 = vadd.f32 %v2241, %v2242
  %v2244 = vrot.slane %v2243, 4
  %v2245 = vadd.f32 %v2243, %v2244
  %v2246 = vrot.slane %v2245, 2
  %v2247 = vadd.f32 %v2245, %v2246
  %v2248 = vrot.slane %v2247, 1
  %v2249 = vadd.f32 %v2247, %v2248
  %v2250 = vrcp.pop 1568.0
  %v2251 = vmul.f32 %v2249, %v2250
  %v2252 = vsub.f32 %v1068, %v2251
  %v2253 = vsub.f32 %v1071, %v2251
  %v2254 = vsub.f32 %v1076, %v2251
  %v2255 = vsub.f32 %v1079, %v2251
  %v2256 = vsub.f32 %v1084, %v2251
  %v2257 = vsub.f32 %v1087, %v2251
  %v2258 = vsub.f32 %v1092, %v2251
  %v2259 = vsub.f32 %v1095, %v2251
  %v2260 = vsub.f32 %v1100, %v2251
  %v2261 = vsub.f32 %v1103, %v2251
  %v2262 = vsub.f32 %v1108, %v2251
  %v2263 = vsub.f32 %v1111, %v2251
  %v2264 = vsub.f32 %v1116, %v2251
  %v2265 = vsub.f32 %v1119, %v2251
  %v2266 = vsub.f32 %v1124, %v2251
  %v2267 = vsub.f32 %v1127, %v2251
  %v2268 = vsub.f32 %v1132, %v2251
  %v2269 = vsub.f32 %v1135, %v2251
  %v2270 = vsub.f32 %v1140, %v2251
  %v2271 = vsub.f32 %v1143, %v2251
  %v2272 = vsub.f32 %v1148, %v2251
  %v2273 = vsub.f32 %v1151, %v2251
  %v2274 = vsub.f32 %v1156, %v2251
  %v2275 = vsub.f32 %v1159, %v2251
  %v2276 = vsub.f32 %v1164, %v2251
  %v2277 = vsub.f32 %v1167, %v2251
  %v2278 = vsub.f32 %v1172, %v2251
  %v2279 = vsub.f32 %v1175, %v2251
  %v2280 = vsub.f32 %v1180, %v2251
  %v2281 = vsub.f32 %v1183, %v2251
  %v2282 = vsub.f32 %v1188, %v2251
  %v2283 = vsub.f32 %v1191, %v2251
  %v2284 = vsub.f32 %v1196, %v2251
  %v2285 = vsub.f32 %v1199, %v2251
  %v2286 = vsub.f32 %v1204, %v2251
  %v2287 = vsub.f32 %v1207, %v2251
  %v2288 = vsub.f32 %v1212, %v2251
  %v2289 = vsub.f32 %v1215, %v2251
  %v2290 = vsub.f32 %v1220, %v2251
  %v2291 = vsub.f32 %v1223, %v2251
  %v2292 = vsub.f32 %v1228, %v2251
  %v2293 = vsub.f32 %v1231, %v2251
  %v2294 = vsub.f32 %v1236, %v2251
  %v2295 = vsub.f32 %v1239, %v2251
  %v2296 = vsub.f32 %v1244, %v2251
  %v2297 = vsub.f32 %v1247, %v2251
  %v2298 = vsub.f32 %v1252, %v2251
  %v2299 = vsub.f32 %v1255, %v2251
  %v2300 = vsub.f32 %v1260, %v2251
  %v2301 = vsub.f32 %v1263, %v2251
  %v2302 = vsub.f32 %v1268, %v2251
  %v2303 = vsub.f32 %v1271, %v2251
  %v2304 = vsub.f32 %v1276, %v2251
  %v2305 = vsub.f32 %v1279, %v2251
  %v2306 = vsub.f32 %v1284, %v2251
  %v2307 = vsub.f32 %v1287, %v2251
  %v2308 = vsub.f32 %v1292, %v2251
  %v2309 = vsub.f32 %v1295, %v2251
  %v2310 = vsub.f32 %v1300, %v2251
  %v2311 = vsub.f32 %v1303, %v2251
  %v2312 = vsub.f32 %v1308, %v2251
  %v2313 = vsub.f32 %v1311, %v2251
  %v2314 = vsub.f32 %v1316, %v2251
  %v2315 = vsub.f32 %v1319, %v2251
  %v2316 = vsub.f32 %v1324, %v2251
  %v2317 = vsub.f32 %v1327, %v2251
  %v2318 = vsub.f32 %v1332, %v2251
  %v2319 = vsub.f32 %v1335, %v2251
  %v2320 = vsub.f32 %v1340, %v2251
  %v2321 = vsub.f32 %v1343, %v2251
  %v2322 = vsub.f32 %v1348, %v2251
  %v2323 = vsub.f32 %v1351, %v2251
  %v2324 = vsub.f32 %v1356, %v2251
  %v2325 = vsub.f32 %v1359, %v2251
  %v2326 = vsub.f32 %v1364, %v2251
  %v2327 = vsub.f32 %v1367, %v2251
  %v2328 = vsub.f32 %v1372, %v2251
  %v2329 = vsub.f32 %v1375, %v2251
  %v2330 = vsub.f32 %v1380, %v2251
  %v2331 = vsub.f32 %v1383, %v2251
  %v2332 = vsub.f32 %v1388, %v2251
  %v2333 = vsub.f32 %v1391, %v2251
  %v2334 = vsub.f32 %v1396, %v2251
  %v2335 = vsub.f32 %v1399, %v2251
  %v2336 = vsub.f32 %v1404, %v2251
  %v2337 = vsub.f32 %v1407, %v2251
  %v2338 = vsub.f32 %v1412, %v2251
  %v2339 = vsub.f32 %v1415, %v2251
  %v2340 = vsub.f32 %v1420, %v2251
  %v2341 = vsub.f32 %v1423, %v2251
  %v2342 = vsub.f32 %v1428, %v2251
  %v2343 = vsub.f32 %v1431, %v2251
  %v2344 = vsub.f32 %v1436, %v2251
  %v2345 = vsub.f32 %v1439, %v2251
  %v2346 = vsub.f32 %v1444, %v2251
  %v2347 = vsub.f32 %v1447, %v2251
  %v2348 = vsub.f32 %v1452, %v2251
  %v2349 = vsub.f32 %v1455, %v2251
  %v2350 = vsub.f32 %v1460, %v2251
  %v2351 = vsub.f32 %v1463, %v2251
  %v2352 = vsub.f32 %v1468, %v2251
  %v2353 = vsub.f32 %v1471, %v2251
  %v2354 = vsub.f32 %v1476, %v2251
  %v2355 = vsub.f32 %v1479, %v2251
  %v2356 = vsub.f32 %v1484, %v2251
  %v2357 = vsub.f32 %v1487, %v2251
  %v2358 = vsub.f32 %v1492, %v2251
  %v2359 = vsub.f32 %v1495, %v2251
  %v2360 = vsub.f32 %v1500, %v2251
  %v2361 = vsub.f32 %v1503, %v2251
  %v2362 = vsub.f32 %v1508, %v2251
  %v2363 = vsub.f32 %v1511, %v2251
  %v2364 = vsub.f32 %v1516, %v2251
  %v2365 = vsub.f32 %v1519, %v2251
  %v2366 = vsub.f32 %v1524, %v2251
  %v2367 = vsub.f32 %v1527, %v2251
  %v2368 = vsub.f32 %v1532, %v2251
  %v2369 = vsub.f32 %v1535, %v2251
  %v2370 = vsub.f32 %v1540, %v2251
  %v2371 = vsub.f32 %v1543, %v2251
  %v2372 = vsub.f32 %v1548, %v2251
  %v2373 = vsub.f32 %v1551, %v2251
  %v2374 = vsub.f32 %v1556, %v2251
  %v2375 = vsub.f32 %v1559, %v2251
  %v2376 = vsub.f32 %v1564, %v2251
  %v2377 = vsub.f32 %v1567, %v2251
  %v2378 = vsub.f32 %v1572, %v2251
  %v2379 = vsub.f32 %v1575, %v2251
  %v2380 = vsub.f32 %v1580, %v2251
  %v2381 = vsub.f32 %v1583, %v2251
  %v2382 = vsub.f32 %v1588, %v2251
  %v2383 = vsub.f32 %v1591, %v2251
  %v2384 = vsub.f32 %v1596, %v2251
  %v2385 = vsub.f32 %v1599, %v2251
  %v2386 = vsub.f32 %v1604, %v2251
  %v2387 = vsub.f32 %v1607, %v2251
  %v2388 = vsub.f32 %v1612, %v2251
  %v2389 = vsub.f32 %v1615, %v2251
  %v2390 = vsub.f32 %v1620, %v2251
  %v2391 = vsub.f32 %v1623, %v2251
  %v2392 = vsub.f32 %v1628, %v2251
  %v2393 = vsub.f32 %v1631, %v2251
  %v2394 = vsub.f32 %v1636, %v2251
  %v2395 = vsub.f32 %v1639, %v2251
  %v2396 = vsub.f32 %v1644, %v2251
  %v2397 = vsub.f32 %v1647, %v2251
  %v2398 = vsub.f32 %v1652, %v2251
  %v2399 = vsub.f32 %v1655, %v2251
  %v2400 = vsub.f32 %v1660, %v2251
  %v2401 = vsub.f32 %v1663, %v2251
  %v2402 = vsub.f32 %v1668, %v2251
  %v2403 = vsub.f32 %v1671, %v2251
  %v2404 = vsub.f32 %v1676, %v2251
  %v2405 = vsub.f32 %v1679, %v2251
  %v2406 = vsub.f32 %v1684, %v2251
  %v2407 = vsub.f32 %v1687, %v2251
  %v2408 = vsub.f32 %v1692, %v2251
  %v2409 = vsub.f32 %v1695, %v2251
  %v2410 = vsub.f32 %v1700, %v2251
  %v2411 = vsub.f32 %v1703, %v2251
  %v2412 = vsub.f32 %v1708, %v2251
  %v2413 = vsub.f32 %v1711, %v2251
  %v2414 = vsub.f32 %v1716, %v2251
  %v2415 = vsub.f32 %v1719, %v2251
  %v2416 = vsub.f32 %v1724, %v2251
  %v2417 = vsub.f32 %v1727, %v2251
  %v2418 = vsub.f32 %v1732, %v2251
  %v2419 = vsub.f32 %v1735, %v2251
  %v2420 = vsub.f32 %v1740, %v2251
  %v2421 = vsub.f32 %v1743, %v2251
  %v2422 = vsub.f32 %v1748, %v2251
  %v2423 = vsub.f32 %v1751, %v2251
  %v2424 = vsub.f32 %v1756, %v2251
  %v2425 = vsub.f32 %v1759, %v2251
  %v2426 = vsub.f32 %v1764, %v2251
  %v2427 = vsub.f32 %v1767, %v2251
  %v2428 = vsub.f32 %v1772, %v2251
  %v2429 = vsub.f32 %v1775, %v2251
  %v2430 = vsub.f32 %v1780, %v2251
  %v2431 = vsub.f32 %v1783, %v2251
  %v2432 = vsub.f32 %v1788, %v2251
  %v2433 = vsub.f32 %v1791, %v2251
  %v2434 = vsub.f32 %v1796, %v2251
  %v2435 = vsub.f32 %v1799, %v2251
  %v2436 = vsub.f32 %v1804, %v2251
  %v2437 = vsub.f32 %v1807, %v2251
  %v2438 = vsub.f32 %v1812, %v2251
  %v2439 = vsub.f32 %v1815, %v2251
  %v2440 = vsub.f32 %v1820, %v2251
  %v2441 = vsub.f32 %v1823, %v2251
  %v2442 = vsub.f32 %v1828, %v2251
  %v2443 = vsub.f32 %v1831, %v2251
  %v2444 = vsub.f32 %v1836, %v2251
  %v2445 = vsub.f32 %v1839, %v2251
  %v2446 = vsub.f32 %v1844, %v2251
  %v2447 = vsub.f32 %v1847, %v2251
  %v2448 = vmul.f32 %v2252, %v2252
  %v2449 = vmul.f32 %v2253, %v2253
  %v2450 = vmul.f32 %v2254, %v2254
  %v2451 = vmul.f32 %v2255, %v2255
  %v2452 = vmul.f32 %v2256, %v2256
  %v2453 = vmul.f32 %v2257, %v2257
  %v2454 = vmul.f32 %v2258, %v2258
  %v2455 = vmul.f32 %v2259, %v2259
  %v2456 = vmul.f32 %v2260, %v2260
  %v2457 = vmul.f32 %v2261, %v2261
  %v2458 = vmul.f32 %v2262, %v2262
  %v2459 = vmul.f32 %v2263, %v2263
  %v2460 = vmul.f32 %v2264, %v2264
  %v2461 = vmul.f32 %v2265, %v2265
  %v2462 = vmul.f32 %v2266, %v2266
  %v2463 = vmul.f32 %v2267, %v2267
  %v2464 = vmul.f32 %v2268, %v2268
  %v2465 = vmul.f32 %v2269, %v2269
  %v2466 = vmul.f32 %v2270, %v2270
  %v2467 = vmul.f32 %v2271, %v2271
  %v2468 = vmul.f32 %v2272, %v2272
  %v2469 = vmul.f32 %v2273, %v2273
  %v2470 = vmul.f32 %v2274, %v2274
  %v2471 = vmul.f32 %v2275, %v2275
  %v2472 = vmul.f32 %v2276, %v2276
  %v2473 = vmul.f32 %v2277, %v2277
  %v2474 = vmul.f32 %v2278, %v2278
  %v2475 = vmul.f32 %v2279, %v2279
  %v2476 = vmul.f32 %v2280, %v2280
  %v2477 = vmul.f32 %v2281, %v2281
  %v2478 = vmul.f32 %v2282, %v2282
  %v2479 = vmul.f32 %v2283, %v2283
  %v2480 = vmul.f32 %v2284, %v2284
  %v2481 = vmul.f32 %v2285, %v2285
  %v2482 = vmul.f32 %v2286, %v2286
  %v2483 = vmul.f32 %v2287, %v2287
  %v2484 = vmul.f32 %v2288, %v2288
  %v2485 = vmul.f32 %v2289, %v2289
  %v2486 = vmul.f32 %v2290, %v2290
  %v2487 = vmul.f32 %v2291, %v2291
  %v2488 = vmul.f32 %v2292, %v2292
  %v2489 = vmul.f32 %v2293, %v2293
  %v2490 = vmul.f32 %v2294, %v2294
  %v2491 = vmul.f32 %v2295, %v2295
  %v2492 = vmul.f32 %v2296, %v2296
  %v2493 = vmul.f32 %v2297, %v2297
  %v2494 = vmul.f32 %v2298, %v2298
  %v2495 = vmul.f32 %v2299, %v2299
  %v2496 = vmul.f32 %v2300, %v2300
  %v2497 = vmul.f32 %v2301, %v2301
  %v2498 = vmul.f32 %v2302, %v2302
  %v2499 = vmul.f32 %v2303, %v2303
  %v2500 = vmul.f32 %v2304, %v2304
  %v2501 = vmul.f32 %v2305, %v2305
  %v2502 = vmul.f32 %v2306, %v2306
  %v2503 = vmul.f32 %v2307, %v2307
  %v2504 = vmul.f32 %v2308, %v2308
  %v2505 = vmul.f32 %v2309, %v2309
  %v2506 = vmul.f32 %v2310, %v2310
  %v2507 = vmul.f32 %v2311, %v2311
  %v2508 = vmul.f32 %v2312, %v2312
  %v2509 = vmul.f32 %v2313, %v2313
  %v2510 = vmul.f32 %v2314, %v2314
  %v2511 = vmul.f32 %v2315, %v2315
  %v2512 = vmul.f32 %v2316, %v2316
  %v2513 = vmul.f32 %v2317, %v2317
  %v2514 = vmul.f32 %v2318, %v2318
  %v2515 = vmul.f32 %v2319, %v2319
  %v2516 = vmul.f32 %v2320, %v2320
  %v2517 = vmul.f32 %v2321, %v2321
  %v2518 = vmul.f32 %v2322, %v2322
  %v2519 = vmul.f32 %v2323, %v2323
  %v2520 = vmul.f32 %v2324, %v2324
  %v2521 = vmul.f32 %v2325, %v2325
  %v2522 = vmul.f32 %v2326, %v2326
  %v2523 = vmul.f32 %v2327, %v2327
  %v2524 = vmul.f32 %v2328, %v2328
  %v2525 = vmul.f32 %v2329, %v2329
  %v2526 = vmul.f32 %v2330, %v2330
  %v2527 = vmul.f32 %v2331, %v2331
  %v2528 = vmul.f32 %v2332, %v2332
  %v2529 = vmul.f32 %v2333, %v2333
  %v2530 = vmul.f32 %v2334, %v2334
  %v2531 = vmul.f32 %v2335, %v2335
  %v2532 = vmul.f32 %v2336, %v2336
  %v2533 = vmul.f32 %v2337, %v2337
  %v2534 = vmul.f32 %v2338, %v2338
  %v2535 = vmul.f32 %v2339, %v2339
  %v2536 = vmul.f32 %v2340, %v2340
  %v2537 = vmul.f32 %v2341, %v2341
  %v2538 = vmul.f32 %v2342, %v2342
  %v2539 = vmul.f32 %v2343, %v2343
  %v2540 = vmul.f32 %v2344, %v2344
  %v2541 = vmul.f32 %v2345, %v2345
  %v2542 = vmul.f32 %v2346, %v2346
  %v2543 = vmul.f32 %v2347, %v2347
  %v2544 = vmul.f32 %v2348, %v2348
  %v2545 = vmul.f32 %v2349, %v2349
  %v2546 = vmul.f32 %v2350, %v2350
  %v2547 = vmul.f32 %v2351, %v2351
  %v2548 = vmul.f32 %v2352, %v2352
  %v2549 = vmul.f32 %v2353, %v2353
  %v2550 = vmul.f32 %v2354, %v2354
  %v2551 = vmul.f32 %v2355, %v2355
  %v2552 = vmul.f32 %v2356, %v2356
  %v2553 = vmul.f32 %v2357, %v2357
  %v2554 = vmul.f32 %v2358, %v2358
  %v2555 = vmul.f32 %v2359, %v2359
  %v2556 = vmul.f32 %v2360, %v2360
  %v2557 = vmul.f32 %v2361, %v2361
  %v2558 = vmul.f32 %v2362, %v2362
  %v2559 = vmul.f32 %v2363, %v2363
  %v2560 = vmul.f32 %v2364, %v2364
  %v2561 = vmul.f32 %v2365, %v2365
  %v2562 = vmul.f32 %v2366, %v2366
  %v2563 = vmul.f32 %v2367, %v2367
  %v2564 = vmul.f32 %v2368, %v2368
  %v2565 = vmul.f32 %v2369, %v2369
  %v2566 = vmul.f32 %v2370, %v2370
  %v2567 = vmul.f32 %v2371, %v2371
  %v2568 = vmul.f32 %v2372, %v2372
  %v2569 = vmul.f32 %v2373, %v2373
  %v2570 = vmul.f32 %v2374, %v2374
  %v2571 = vmul.f32 %v2375, %v2375
  %v2572 = vmul.f32 %v2376, %v2376
  %v2573 = vmul.f32 %v2377, %v2377
  %v2574 = vmul.f32 %v2378, %v2378
  %v2575 = vmul.f32 %v2379, %v2379
  %v2576 = vmul.f32 %v2380, %v2380
  %v2577 = vmul.f32 %v2381, %v2381
  %v2578 = vmul.f32 %v2382, %v2382
  %v2579 = vmul.f32 %v2383, %v2383
  %v2580 = vmul.f32 %v2384, %v2384
  %v2581 = vmul.f32 %v2385, %v2385
  %v2582 = vmul.f32 %v2386, %v2386
  %v2583 = vmul.f32 %v2387, %v2387
  %v2584 = vmul.f32 %v2388, %v2388
  %v2585 = vmul.f32 %v2389, %v2389
  %v2586 = vmul.f32 %v2390, %v2390
  %v2587 = vmul.f32 %v2391, %v2391
  %v2588 = vmul.f32 %v2392, %v2392
  %v2589 = vmul.f32 %v2393, %v2393
  %v2590 = vmul.f32 %v2394, %v2394
  %v2591 = vmul.f32 %v2395, %v2395
  %v2592 = vmul.f32 %v2396, %v2396
  %v2593 = vmul.f32 %v2397, %v2397
  %v2594 = vmul.f32 %v2398, %v2398
  %v2595 = vmul.f32 %v2399, %v2399
  %v2596 = vmul.f32 %v2400, %v2400
  %v2597 = vmul.f32 %v2401, %v2401
  %v2598 = vmul.f32 %v2402, %v2402
  %v2599 = vmul.f32 %v2403, %v2403
  %v2600 = vmul.f32 %v2404, %v2404
  %v2601 = vmul.f32 %v2405, %v2405
  %v2602 = vmul.f32 %v2406, %v2406
  %v2603 = vmul.f32 %v2407, %v2407
  %v2604 = vmul.f32 %v2408, %v2408
  %v2605 = vmul.f32 %v2409, %v2409
  %v2606 = vmul.f32 %v2410, %v2410
  %v2607 = vmul.f32 %v2411, %v2411
  %v2608 = vmul.f32 %v2412, %v2412
  %v2609 = vmul.f32 %v2413, %v2413
  %v2610 = vmul.f32 %v2414, %v2414
  %v2611 = vmul.f32 %v2415, %v2415
  %v2612 = vmul.f32 %v2416, %v2416
  %v2613 = vmul.f32 %v2417, %v2417
  %v2614 = vmul.f32 %v2418, %v2418
  %v2615 = vmul.f32 %v2419, %v2419
  %v2616 = vmul.f32 %v2420, %v2420
  %v2617 = vmul.f32 %v2421, %v2421
  %v2618 = vmul.f32 %v2422, %v2422
  %v2619 = vmul.f32 %v2423, %v2423
  %v2620 = vmul.f32 %v2424, %v2424
  %v2621 = vmul.f32 %v2425, %v2425
  %v2622 = vmul.f32 %v2426, %v2426
  %v2623 = vmul.f32 %v2427, %v2427
  %v2624 = vmul.f32 %v2428, %v2428
  %v2625 = vmul.f32 %v2429, %v2429
  %v2626 = vmul.f32 %v2430, %v2430
  %v2627 = vmul.f32 %v2431, %v2431
  %v2628 = vmul.f32 %v2432, %v2432
  %v2629 = vmul.f32 %v2433, %v2433
  %v2630 = vmul.f32 %v2434, %v2434
  %v2631 = vmul.f32 %v2435, %v2435
  %v2632 = vmul.f32 %v2436, %v2436
  %v2633 = vmul.f32 %v2437, %v2437
  %v2634 = vmul.f32 %v2438, %v2438
  %v2635 = vmul.f32 %v2439, %v2439
  %v2636 = vmul.f32 %v2440, %v2440
  %v2637 = vmul.f32 %v2441, %v2441
  %v2638 = vmul.f32 %v2442, %v2442
  %v2639 = vmul.f32 %v2443, %v2443
  %v2640 = vmul.f32 %v2444, %v2444
  %v2641 = vmul.f32 %v2445, %v2445
  %v2642 = vmul.f32 %v2446, %v2446
  %v2643 = vmul.f32 %v2447, %v2447
  %v2644 = vsel %vm1852, %v2448, 0.0
  %v2645 = vsel %vm1852, %v2449, 0.0
  %v2646 = vadd.f32 %v2644, %v2645
  %v2647 = vsel %vm1852, %v2450, 0.0
  %v2648 = vadd.f32 %v2646, %v2647
  %v2649 = vsel %vm1852, %v2451, 0.0
  %v2650 = vadd.f32 %v2648, %v2649
  %v2651 = vsel %vm1852, %v2452, 0.0
  %v2652 = vadd.f32 %v2650, %v2651
  %v2653 = vsel %vm1852, %v2453, 0.0
  %v2654 = vadd.f32 %v2652, %v2653
  %v2655 = vsel %vm1852, %v2454, 0.0
  %v2656 = vadd.f32 %v2654, %v2655
  %v2657 = vsel %vm1852, %v2455, 0.0
  %v2658 = vadd.f32 %v2656, %v2657
  %v2659 = vsel %vm1852, %v2456, 0.0
  %v2660 = vadd.f32 %v2658, %v2659
  %v2661 = vsel %vm1852, %v2457, 0.0
  %v2662 = vadd.f32 %v2660, %v2661
  %v2663 = vsel %vm1852, %v2458, 0.0
  %v2664 = vadd.f32 %v2662, %v2663
  %v2665 = vsel %vm1852, %v2459, 0.0
  %v2666 = vadd.f32 %v2664, %v2665
  %v2667 = vsel %vm1852, %v2460, 0.0
  %v2668 = vadd.f32 %v2666, %v2667
  %v2669 = vsel %vm1852, %v2461, 0.0
  %v2670 = vadd.f32 %v2668, %v2669
  %v2671 = vsel %vm1852, %v2462, 0.0
  %v2672 = vadd.f32 %v2670, %v2671
  %v2673 = vsel %vm1852, %v2463, 0.0
  %v2674 = vadd.f32 %v2672, %v2673
  %v2675 = vsel %vm1852, %v2464, 0.0
  %v2676 = vadd.f32 %v2674, %v2675
  %v2677 = vsel %vm1852, %v2465, 0.0
  %v2678 = vadd.f32 %v2676, %v2677
  %v2679 = vsel %vm1852, %v2466, 0.0
  %v2680 = vadd.f32 %v2678, %v2679
  %v2681 = vsel %vm1852, %v2467, 0.0
  %v2682 = vadd.f32 %v2680, %v2681
  %v2683 = vsel %vm1852, %v2468, 0.0
  %v2684 = vadd.f32 %v2682, %v2683
  %v2685 = vsel %vm1852, %v2469, 0.0
  %v2686 = vadd.f32 %v2684, %v2685
  %v2687 = vsel %vm1852, %v2470, 0.0
  %v2688 = vadd.f32 %v2686, %v2687
  %v2689 = vsel %vm1852, %v2471, 0.0
  %v2690 = vadd.f32 %v2688, %v2689
  %v2691 = vsel %vm1852, %v2472, 0.0
  %v2692 = vadd.f32 %v2690, %v2691
  %v2693 = vsel %vm1852, %v2473, 0.0
  %v2694 = vadd.f32 %v2692, %v2693
  %v2695 = vsel %vm1852, %v2474, 0.0
  %v2696 = vadd.f32 %v2694, %v2695
  %v2697 = vsel %vm1852, %v2475, 0.0
  %v2698 = vadd.f32 %v2696, %v2697
  %v2699 = vsel %vm1852, %v2476, 0.0
  %v2700 = vadd.f32 %v2698, %v2699
  %v2701 = vsel %vm1852, %v2477, 0.0
  %v2702 = vadd.f32 %v2700, %v2701
  %v2703 = vsel %vm1852, %v2478, 0.0
  %v2704 = vadd.f32 %v2702, %v2703
  %v2705 = vsel %vm1852, %v2479, 0.0
  %v2706 = vadd.f32 %v2704, %v2705
  %v2707 = vsel %vm1852, %v2480, 0.0
  %v2708 = vadd.f32 %v2706, %v2707
  %v2709 = vsel %vm1852, %v2481, 0.0
  %v2710 = vadd.f32 %v2708, %v2709
  %v2711 = vsel %vm1852, %v2482, 0.0
  %v2712 = vadd.f32 %v2710, %v2711
  %v2713 = vsel %vm1852, %v2483, 0.0
  %v2714 = vadd.f32 %v2712, %v2713
  %v2715 = vsel %vm1852, %v2484, 0.0
  %v2716 = vadd.f32 %v2714, %v2715
  %v2717 = vsel %vm1852, %v2485, 0.0
  %v2718 = vadd.f32 %v2716, %v2717
  %v2719 = vsel %vm1852, %v2486, 0.0
  %v2720 = vadd.f32 %v2718, %v2719
  %v2721 = vsel %vm1852, %v2487, 0.0
  %v2722 = vadd.f32 %v2720, %v2721
  %v2723 = vsel %vm1852, %v2488, 0.0
  %v2724 = vadd.f32 %v2722, %v2723
  %v2725 = vsel %vm1852, %v2489, 0.0
  %v2726 = vadd.f32 %v2724, %v2725
  %v2727 = vsel %vm1852, %v2490, 0.0
  %v2728 = vadd.f32 %v2726, %v2727
  %v2729 = vsel %vm1852, %v2491, 0.0
  %v2730 = vadd.f32 %v2728, %v2729
  %v2731 = vsel %vm1852, %v2492, 0.0
  %v2732 = vadd.f32 %v2730, %v2731
  %v2733 = vsel %vm1852, %v2493, 0.0
  %v2734 = vadd.f32 %v2732, %v2733
  %v2735 = vsel %vm1852, %v2494, 0.0
  %v2736 = vadd.f32 %v2734, %v2735
  %v2737 = vsel %vm1852, %v2495, 0.0
  %v2738 = vadd.f32 %v2736, %v2737
  %v2739 = vsel %vm1852, %v2496, 0.0
  %v2740 = vadd.f32 %v2738, %v2739
  %v2741 = vsel %vm1852, %v2497, 0.0
  %v2742 = vadd.f32 %v2740, %v2741
  %v2743 = vsel %vm1852, %v2498, 0.0
  %v2744 = vadd.f32 %v2742, %v2743
  %v2745 = vsel %vm1852, %v2499, 0.0
  %v2746 = vadd.f32 %v2744, %v2745
  %v2747 = vsel %vm1852, %v2500, 0.0
  %v2748 = vadd.f32 %v2746, %v2747
  %v2749 = vsel %vm1852, %v2501, 0.0
  %v2750 = vadd.f32 %v2748, %v2749
  %v2751 = vsel %vm1852, %v2502, 0.0
  %v2752 = vadd.f32 %v2750, %v2751
  %v2753 = vsel %vm1852, %v2503, 0.0
  %v2754 = vadd.f32 %v2752, %v2753
  %v2755 = vsel %vm1852, %v2504, 0.0
  %v2756 = vadd.f32 %v2754, %v2755
  %v2757 = vsel %vm1852, %v2505, 0.0
  %v2758 = vadd.f32 %v2756, %v2757
  %v2759 = vsel %vm1852, %v2506, 0.0
  %v2760 = vadd.f32 %v2758, %v2759
  %v2761 = vsel %vm1852, %v2507, 0.0
  %v2762 = vadd.f32 %v2760, %v2761
  %v2763 = vsel %vm1852, %v2508, 0.0
  %v2764 = vadd.f32 %v2762, %v2763
  %v2765 = vsel %vm1852, %v2509, 0.0
  %v2766 = vadd.f32 %v2764, %v2765
  %v2767 = vsel %vm1852, %v2510, 0.0
  %v2768 = vadd.f32 %v2766, %v2767
  %v2769 = vsel %vm1852, %v2511, 0.0
  %v2770 = vadd.f32 %v2768, %v2769
  %v2771 = vsel %vm1852, %v2512, 0.0
  %v2772 = vadd.f32 %v2770, %v2771
  %v2773 = vsel %vm1852, %v2513, 0.0
  %v2774 = vadd.f32 %v2772, %v2773
  %v2775 = vsel %vm1852, %v2514, 0.0
  %v2776 = vadd.f32 %v2774, %v2775
  %v2777 = vsel %vm1852, %v2515, 0.0
  %v2778 = vadd.f32 %v2776, %v2777
  %v2779 = vsel %vm1852, %v2516, 0.0
  %v2780 = vadd.f32 %v2778, %v2779
  %v2781 = vsel %vm1852, %v2517, 0.0
  %v2782 = vadd.f32 %v2780, %v2781
  %v2783 = vsel %vm1852, %v2518, 0.0
  %v2784 = vadd.f32 %v2782, %v2783
  %v2785 = vsel %vm1852, %v2519, 0.0
  %v2786 = vadd.f32 %v2784, %v2785
  %v2787 = vsel %vm1852, %v2520, 0.0
  %v2788 = vadd.f32 %v2786, %v2787
  %v2789 = vsel %vm1852, %v2521, 0.0
  %v2790 = vadd.f32 %v2788, %v2789
  %v2791 = vsel %vm1852, %v2522, 0.0
  %v2792 = vadd.f32 %v2790, %v2791
  %v2793 = vsel %vm1852, %v2523, 0.0
  %v2794 = vadd.f32 %v2792, %v2793
  %v2795 = vsel %vm1852, %v2524, 0.0
  %v2796 = vadd.f32 %v2794, %v2795
  %v2797 = vsel %vm1852, %v2525, 0.0
  %v2798 = vadd.f32 %v2796, %v2797
  %v2799 = vsel %vm1852, %v2526, 0.0
  %v2800 = vadd.f32 %v2798, %v2799
  %v2801 = vsel %vm1852, %v2527, 0.0
  %v2802 = vadd.f32 %v2800, %v2801
  %v2803 = vsel %vm1852, %v2528, 0.0
  %v2804 = vadd.f32 %v2802, %v2803
  %v2805 = vsel %vm1852, %v2529, 0.0
  %v2806 = vadd.f32 %v2804, %v2805
  %v2807 = vsel %vm1852, %v2530, 0.0
  %v2808 = vadd.f32 %v2806, %v2807
  %v2809 = vsel %vm1852, %v2531, 0.0
  %v2810 = vadd.f32 %v2808, %v2809
  %v2811 = vsel %vm1852, %v2532, 0.0
  %v2812 = vadd.f32 %v2810, %v2811
  %v2813 = vsel %vm1852, %v2533, 0.0
  %v2814 = vadd.f32 %v2812, %v2813
  %v2815 = vsel %vm1852, %v2534, 0.0
  %v2816 = vadd.f32 %v2814, %v2815
  %v2817 = vsel %vm1852, %v2535, 0.0
  %v2818 = vadd.f32 %v2816, %v2817
  %v2819 = vsel %vm1852, %v2536, 0.0
  %v2820 = vadd.f32 %v2818, %v2819
  %v2821 = vsel %vm1852, %v2537, 0.0
  %v2822 = vadd.f32 %v2820, %v2821
  %v2823 = vsel %vm1852, %v2538, 0.0
  %v2824 = vadd.f32 %v2822, %v2823
  %v2825 = vsel %vm1852, %v2539, 0.0
  %v2826 = vadd.f32 %v2824, %v2825
  %v2827 = vsel %vm1852, %v2540, 0.0
  %v2828 = vadd.f32 %v2826, %v2827
  %v2829 = vsel %vm1852, %v2541, 0.0
  %v2830 = vadd.f32 %v2828, %v2829
  %v2831 = vsel %vm1852, %v2542, 0.0
  %v2832 = vadd.f32 %v2830, %v2831
  %v2833 = vsel %vm1852, %v2543, 0.0
  %v2834 = vadd.f32 %v2832, %v2833
  %v2835 = vsel %vm1852, %v2544, 0.0
  %v2836 = vadd.f32 %v2834, %v2835
  %v2837 = vsel %vm1852, %v2545, 0.0
  %v2838 = vadd.f32 %v2836, %v2837
  %v2839 = vsel %vm1852, %v2546, 0.0
  %v2840 = vadd.f32 %v2838, %v2839
  %v2841 = vsel %vm1852, %v2547, 0.0
  %v2842 = vadd.f32 %v2840, %v2841
  %v2843 = vsel %vm1852, %v2548, 0.0
  %v2844 = vadd.f32 %v2842, %v2843
  %v2845 = vsel %vm1852, %v2549, 0.0
  %v2846 = vadd.f32 %v2844, %v2845
  %v2847 = vsel %vm1852, %v2550, 0.0
  %v2848 = vadd.f32 %v2846, %v2847
  %v2849 = vsel %vm1852, %v2551, 0.0
  %v2850 = vadd.f32 %v2848, %v2849
  %v2851 = vsel %vm1852, %v2552, 0.0
  %v2852 = vadd.f32 %v2850, %v2851
  %v2853 = vsel %vm1852, %v2553, 0.0
  %v2854 = vadd.f32 %v2852, %v2853
  %v2855 = vsel %vm1852, %v2554, 0.0
  %v2856 = vadd.f32 %v2854, %v2855
  %v2857 = vsel %vm1852, %v2555, 0.0
  %v2858 = vadd.f32 %v2856, %v2857
  %v2859 = vsel %vm1852, %v2556, 0.0
  %v2860 = vadd.f32 %v2858, %v2859
  %v2861 = vsel %vm1852, %v2557, 0.0
  %v2862 = vadd.f32 %v2860, %v2861
  %v2863 = vsel %vm1852, %v2558, 0.0
  %v2864 = vadd.f32 %v2862, %v2863
  %v2865 = vsel %vm1852, %v2559, 0.0
  %v2866 = vadd.f32 %v2864, %v2865
  %v2867 = vsel %vm1852, %v2560, 0.0
  %v2868 = vadd.f32 %v2866, %v2867
  %v2869 = vsel %vm1852, %v2561, 0.0
  %v2870 = vadd.f32 %v2868, %v2869
  %v2871 = vsel %vm1852, %v2562, 0.0
  %v2872 = vadd.f32 %v2870, %v2871
  %v2873 = vsel %vm1852, %v2563, 0.0
  %v2874 = vadd.f32 %v2872, %v2873
  %v2875 = vsel %vm1852, %v2564, 0.0
  %v2876 = vadd.f32 %v2874, %v2875
  %v2877 = vsel %vm1852, %v2565, 0.0
  %v2878 = vadd.f32 %v2876, %v2877
  %v2879 = vsel %vm1852, %v2566, 0.0
  %v2880 = vadd.f32 %v2878, %v2879
  %v2881 = vsel %vm1852, %v2567, 0.0
  %v2882 = vadd.f32 %v2880, %v2881
  %v2883 = vsel %vm1852, %v2568, 0.0
  %v2884 = vadd.f32 %v2882, %v2883
  %v2885 = vsel %vm1852, %v2569, 0.0
  %v2886 = vadd.f32 %v2884, %v2885
  %v2887 = vsel %vm1852, %v2570, 0.0
  %v2888 = vadd.f32 %v2886, %v2887
  %v2889 = vsel %vm1852, %v2571, 0.0
  %v2890 = vadd.f32 %v2888, %v2889
  %v2891 = vsel %vm1852, %v2572, 0.0
  %v2892 = vadd.f32 %v2890, %v2891
  %v2893 = vsel %vm1852, %v2573, 0.0
  %v2894 = vadd.f32 %v2892, %v2893
  %v2895 = vsel %vm1852, %v2574, 0.0
  %v2896 = vadd.f32 %v2894, %v2895
  %v2897 = vsel %vm1852, %v2575, 0.0
  %v2898 = vadd.f32 %v2896, %v2897
  %v2899 = vsel %vm1852, %v2576, 0.0
  %v2900 = vadd.f32 %v2898, %v2899
  %v2901 = vsel %vm1852, %v2577, 0.0
  %v2902 = vadd.f32 %v2900, %v2901
  %v2903 = vsel %vm1852, %v2578, 0.0
  %v2904 = vadd.f32 %v2902, %v2903
  %v2905 = vsel %vm1852, %v2579, 0.0
  %v2906 = vadd.f32 %v2904, %v2905
  %v2907 = vsel %vm1852, %v2580, 0.0
  %v2908 = vadd.f32 %v2906, %v2907
  %v2909 = vsel %vm1852, %v2581, 0.0
  %v2910 = vadd.f32 %v2908, %v2909
  %v2911 = vsel %vm1852, %v2582, 0.0
  %v2912 = vadd.f32 %v2910, %v2911
  %v2913 = vsel %vm1852, %v2583, 0.0
  %v2914 = vadd.f32 %v2912, %v2913
  %v2915 = vsel %vm1852, %v2584, 0.0
  %v2916 = vadd.f32 %v2914, %v2915
  %v2917 = vsel %vm1852, %v2585, 0.0
  %v2918 = vadd.f32 %v2916, %v2917
  %v2919 = vsel %vm1852, %v2586, 0.0
  %v2920 = vadd.f32 %v2918, %v2919
  %v2921 = vsel %vm1852, %v2587, 0.0
  %v2922 = vadd.f32 %v2920, %v2921
  %v2923 = vsel %vm1852, %v2588, 0.0
  %v2924 = vadd.f32 %v2922, %v2923
  %v2925 = vsel %vm1852, %v2589, 0.0
  %v2926 = vadd.f32 %v2924, %v2925
  %v2927 = vsel %vm1852, %v2590, 0.0
  %v2928 = vadd.f32 %v2926, %v2927
  %v2929 = vsel %vm1852, %v2591, 0.0
  %v2930 = vadd.f32 %v2928, %v2929
  %v2931 = vsel %vm1852, %v2592, 0.0
  %v2932 = vadd.f32 %v2930, %v2931
  %v2933 = vsel %vm1852, %v2593, 0.0
  %v2934 = vadd.f32 %v2932, %v2933
  %v2935 = vsel %vm1852, %v2594, 0.0
  %v2936 = vadd.f32 %v2934, %v2935
  %v2937 = vsel %vm1852, %v2595, 0.0
  %v2938 = vadd.f32 %v2936, %v2937
  %v2939 = vsel %vm1852, %v2596, 0.0
  %v2940 = vadd.f32 %v2938, %v2939
  %v2941 = vsel %vm1852, %v2597, 0.0
  %v2942 = vadd.f32 %v2940, %v2941
  %v2943 = vsel %vm1852, %v2598, 0.0
  %v2944 = vadd.f32 %v2942, %v2943
  %v2945 = vsel %vm1852, %v2599, 0.0
  %v2946 = vadd.f32 %v2944, %v2945
  %v2947 = vsel %vm1852, %v2600, 0.0
  %v2948 = vadd.f32 %v2946, %v2947
  %v2949 = vsel %vm1852, %v2601, 0.0
  %v2950 = vadd.f32 %v2948, %v2949
  %v2951 = vsel %vm1852, %v2602, 0.0
  %v2952 = vadd.f32 %v2950, %v2951
  %v2953 = vsel %vm1852, %v2603, 0.0
  %v2954 = vadd.f32 %v2952, %v2953
  %v2955 = vsel %vm1852, %v2604, 0.0
  %v2956 = vadd.f32 %v2954, %v2955
  %v2957 = vsel %vm1852, %v2605, 0.0
  %v2958 = vadd.f32 %v2956, %v2957
  %v2959 = vsel %vm1852, %v2606, 0.0
  %v2960 = vadd.f32 %v2958, %v2959
  %v2961 = vsel %vm1852, %v2607, 0.0
  %v2962 = vadd.f32 %v2960, %v2961
  %v2963 = vsel %vm1852, %v2608, 0.0
  %v2964 = vadd.f32 %v2962, %v2963
  %v2965 = vsel %vm1852, %v2609, 0.0
  %v2966 = vadd.f32 %v2964, %v2965
  %v2967 = vsel %vm1852, %v2610, 0.0
  %v2968 = vadd.f32 %v2966, %v2967
  %v2969 = vsel %vm1852, %v2611, 0.0
  %v2970 = vadd.f32 %v2968, %v2969
  %v2971 = vsel %vm1852, %v2612, 0.0
  %v2972 = vadd.f32 %v2970, %v2971
  %v2973 = vsel %vm1852, %v2613, 0.0
  %v2974 = vadd.f32 %v2972, %v2973
  %v2975 = vsel %vm1852, %v2614, 0.0
  %v2976 = vadd.f32 %v2974, %v2975
  %v2977 = vsel %vm1852, %v2615, 0.0
  %v2978 = vadd.f32 %v2976, %v2977
  %v2979 = vsel %vm1852, %v2616, 0.0
  %v2980 = vadd.f32 %v2978, %v2979
  %v2981 = vsel %vm1852, %v2617, 0.0
  %v2982 = vadd.f32 %v2980, %v2981
  %v2983 = vsel %vm1852, %v2618, 0.0
  %v2984 = vadd.f32 %v2982, %v2983
  %v2985 = vsel %vm1852, %v2619, 0.0
  %v2986 = vadd.f32 %v2984, %v2985
  %v2987 = vsel %vm1852, %v2620, 0.0
  %v2988 = vadd.f32 %v2986, %v2987
  %v2989 = vsel %vm1852, %v2621, 0.0
  %v2990 = vadd.f32 %v2988, %v2989
  %v2991 = vsel %vm1852, %v2622, 0.0
  %v2992 = vadd.f32 %v2990, %v2991
  %v2993 = vsel %vm1852, %v2623, 0.0
  %v2994 = vadd.f32 %v2992, %v2993
  %v2995 = vsel %vm1852, %v2624, 0.0
  %v2996 = vadd.f32 %v2994, %v2995
  %v2997 = vsel %vm1852, %v2625, 0.0
  %v2998 = vadd.f32 %v2996, %v2997
  %v2999 = vsel %vm1852, %v2626, 0.0
  %v3000 = vadd.f32 %v2998, %v2999
  %v3001 = vsel %vm1852, %v2627, 0.0
  %v3002 = vadd.f32 %v3000, %v3001
  %v3003 = vsel %vm1852, %v2628, 0.0
  %v3004 = vadd.f32 %v3002, %v3003
  %v3005 = vsel %vm1852, %v2629, 0.0
  %v3006 = vadd.f32 %v3004, %v3005
  %v3007 = vsel %vm1852, %v2630, 0.0
  %v3008 = vadd.f32 %v3006, %v3007
  %v3009 = vsel %vm1852, %v2631, 0.0
  %v3010 = vadd.f32 %v3008, %v3009
  %v3011 = vsel %vm1852, %v2632, 0.0
  %v3012 = vadd.f32 %v3010, %v3011
  %v3013 = vsel %vm1852, %v2633, 0.0
  %v3014 = vadd.f32 %v3012, %v3013
  %v3015 = vsel %vm1852, %v2634, 0.0
  %v3016 = vadd.f32 %v3014, %v3015
  %v3017 = vsel %vm1852, %v2635, 0.0
  %v3018 = vadd.f32 %v3016, %v3017
  %v3019 = vsel %vm1852, %v2636, 0.0
  %v3020 = vadd.f32 %v3018, %v3019
  %v3021 = vsel %vm1852, %v2637, 0.0
  %v3022 = vadd.f32 %v3020, %v3021
  %v3023 = vsel %vm1852, %v2638, 0.0
  %v3024 = vadd.f32 %v3022, %v3023
  %v3025 = vsel %vm1852, %v2639, 0.0
  %v3026 = vadd.f32 %v3024, %v3025
  %v3027 = vsel %vm1852, %v2640, 0.0
  %v3028 = vadd.f32 %v3026, %v3027
  %v3029 = vsel %vm1852, %v2641, 0.0
  %v3030 = vadd.f32 %v3028, %v3029
  %v3031 = vsel %vm1852, %v2642, 0.0
  %v3032 = vadd.f32 %v3030, %v3031
  %v3033 = vsel %vm1852, %v2643, 0.0
  %v3034 = vadd.f32 %v3032, %v3033
  %v3035 = vrot.slane %v3034, 4
  %v3036 = vadd.f32 %v3034, %v3035
  %v3037 = vrot.slane %v3036, 2
  %v3038 = vadd.f32 %v3036, %v3037
  %v3039 = vrot.slane %v3038, 1
  %v3040 = vadd.f32 %v3038, %v3039
  %v3041 = vmul.f32 %v3040, %v2250
  %v3042 = vadd.f32 %v3041, 1e-05
  %v3043 = vrsqrt.pop %v3042
  %v3044 = vmul.f32 %v2252, %v3043
  %v3045 = vmul.f32 %v2253, %v3043
  %v3046 = vmul.f32 %v2254, %v3043
  %v3047 = vmul.f32 %v2255, %v3043
  %v3048 = vmul.f32 %v2256, %v3043
  %v3049 = vmul.f32 %v2257, %v3043
  %v3050 = vmul.f32 %v2258, %v3043
  %v3051 = vmul.f32 %v2259, %v3043
  %v3052 = vmul.f32 %v2260, %v3043
  %v3053 = vmul.f32 %v2261, %v3043
  %v3054 = vmul.f32 %v2262, %v3043
  %v3055 = vmul.f32 %v2263, %v3043
  %v3056 = vmul.f32 %v2264, %v3043
  %v3057 = vmul.f32 %v2265, %v3043
  %v3058 = vmul.f32 %v2266, %v3043
  %v3059 = vmul.f32 %v2267, %v3043
  %v3060 = vmul.f32 %v2268, %v3043
  %v3061 = vmul.f32 %v2269, %v3043
  %v3062 = vmul.f32 %v2270, %v3043
  %v3063 = vmul.f32 %v2271, %v3043
  %v3064 = vmul.f32 %v2272, %v3043
  %v3065 = vmul.f32 %v2273, %v3043
  %v3066 = vmul.f32 %v2274, %v3043
  %v3067 = vmul.f32 %v2275, %v3043
  %v3068 = vmul.f32 %v2276, %v3043
  %v3069 = vmul.f32 %v2277, %v3043
  %v3070 = vmul.f32 %v2278, %v3043
  %v3071 = vmul.f32 %v2279, %v3043
  %v3072 = vmul.f32 %v2280, %v3043
  %v3073 = vmul.f32 %v2281, %v3043
  %v3074 = vmul.f32 %v2282, %v3043
  %v3075 = vmul.f32 %v2283, %v3043
  %v3076 = vmul.f32 %v2284, %v3043
  %v3077 = vmul.f32 %v2285, %v3043
  %v3078 = vmul.f32 %v2286, %v3043
  %v3079 = vmul.f32 %v2287, %v3043
  %v3080 = vmul.f32 %v2288, %v3043
  %v3081 = vmul.f32 %v2289, %v3043
  %v3082 = vmul.f32 %v2290, %v3043
  %v3083 = vmul.f32 %v2291, %v3043
  %v3084 = vmul.f32 %v2292, %v3043
  %v3085 = vmul.f32 %v2293, %v3043
  %v3086 = vmul.f32 %v2294, %v3043
  %v3087 = vmul.f32 %v2295, %v3043
  %v3088 = vmul.f32 %v2296, %v3043
  %v3089 = vmul.f32 %v2297, %v3043
  %v3090 = vmul.f32 %v2298, %v3043
  %v3091 = vmul.f32 %v2299, %v3043
  %v3092 = vmul.f32 %v2300, %v3043
  %v3093 = vmul.f32 %v2301, %v3043
  %v3094 = vmul.f32 %v2302, %v3043
  %v3095 = vmul.f32 %v2303, %v3043
  %v3096 = vmul.f32 %v2304, %v3043
  %v3097 = vmul.f32 %v2305, %v3043
  %v3098 = vmul.f32 %v2306, %v3043
  %v3099 = vmul.f32 %v2307, %v3043
  %v3100 = vmul.f32 %v2308, %v3043
  %v3101 = vmul.f32 %v2309, %v3043
  %v3102 = vmul.f32 %v2310, %v3043
  %v3103 = vmul.f32 %v2311, %v3043
  %v3104 = vmul.f32 %v2312, %v3043
  %v3105 = vmul.f32 %v2313, %v3043
  %v3106 = vmul.f32 %v2314, %v3043
  %v3107 = vmul.f32 %v2315, %v3043
  %v3108 = vmul.f32 %v2316, %v3043
  %v3109 = vmul.f32 %v2317, %v3043
  %v3110 = vmul.f32 %v2318, %v3043
  %v3111 = vmul.f32 %v2319, %v3043
  %v3112 = vmul.f32 %v2320, %v3043
  %v3113 = vmul.f32 %v2321, %v3043
  %v3114 = vmul.f32 %v2322, %v3043
  %v3115 = vmul.f32 %v2323, %v3043
  %v3116 = vmul.f32 %v2324, %v3043
  %v3117 = vmul.f32 %v2325, %v3043
  %v3118 = vmul.f32 %v2326, %v3043
  %v3119 = vmul.f32 %v2327, %v3043
  %v3120 = vmul.f32 %v2328, %v3043
  %v3121 = vmul.f32 %v2329, %v3043
  %v3122 = vmul.f32 %v2330, %v3043
  %v3123 = vmul.f32 %v2331, %v3043
  %v3124 = vmul.f32 %v2332, %v3043
  %v3125 = vmul.f32 %v2333, %v3043
  %v3126 = vmul.f32 %v2334, %v3043
  %v3127 = vmul.f32 %v2335, %v3043
  %v3128 = vmul.f32 %v2336, %v3043
  %v3129 = vmul.f32 %v2337, %v3043
  %v3130 = vmul.f32 %v2338, %v3043
  %v3131 = vmul.f32 %v2339, %v3043
  %v3132 = vmul.f32 %v2340, %v3043
  %v3133 = vmul.f32 %v2341, %v3043
  %v3134 = vmul.f32 %v2342, %v3043
  %v3135 = vmul.f32 %v2343, %v3043
  %v3136 = vmul.f32 %v2344, %v3043
  %v3137 = vmul.f32 %v2345, %v3043
  %v3138 = vmul.f32 %v2346, %v3043
  %v3139 = vmul.f32 %v2347, %v3043
  %v3140 = vmul.f32 %v2348, %v3043
  %v3141 = vmul.f32 %v2349, %v3043
  %v3142 = vmul.f32 %v2350, %v3043
  %v3143 = vmul.f32 %v2351, %v3043
  %v3144 = vmul.f32 %v2352, %v3043
  %v3145 = vmul.f32 %v2353, %v3043
  %v3146 = vmul.f32 %v2354, %v3043
  %v3147 = vmul.f32 %v2355, %v3043
  %v3148 = vmul.f32 %v2356, %v3043
  %v3149 = vmul.f32 %v2357, %v3043
  %v3150 = vmul.f32 %v2358, %v3043
  %v3151 = vmul.f32 %v2359, %v3043
  %v3152 = vmul.f32 %v2360, %v3043
  %v3153 = vmul.f32 %v2361, %v3043
  %v3154 = vmul.f32 %v2362, %v3043
  %v3155 = vmul.f32 %v2363, %v3043
  %v3156 = vmul.f32 %v2364, %v3043
  %v3157 = vmul.f32 %v2365, %v3043
  %v3158 = vmul.f32 %v2366, %v3043
  %v3159 = vmul.f32 %v2367, %v3043
  %v3160 = vmul.f32 %v2368, %v3043
  %v3161 = vmul.f32 %v2369, %v3043
  %v3162 = vmul.f32 %v2370, %v3043
  %v3163 = vmul.f32 %v2371, %v3043
  %v3164 = vmul.f32 %v2372, %v3043
  %v3165 = vmul.f32 %v2373, %v3043
  %v3166 = vmul.f32 %v2374, %v3043
  %v3167 = vmul.f32 %v2375, %v3043
  %v3168 = vmul.f32 %v2376, %v3043
  %v3169 = vmul.f32 %v2377, %v3043
  %v3170 = vmul.f32 %v2378, %v3043
  %v3171 = vmul.f32 %v2379, %v3043
  %v3172 = vmul.f32 %v2380, %v3043
  %v3173 = vmul.f32 %v2381, %v3043
  %v3174 = vmul.f32 %v2382, %v3043
  %v3175 = vmul.f32 %v2383, %v3043
  %v3176 = vmul.f32 %v2384, %v3043
  %v3177 = vmul.f32 %v2385, %v3043
  %v3178 = vmul.f32 %v2386, %v3043
  %v3179 = vmul.f32 %v2387, %v3043
  %v3180 = vmul.f32 %v2388, %v3043
  %v3181 = vmul.f32 %v2389, %v3043
  %v3182 = vmul.f32 %v2390, %v3043
  %v3183 = vmul.f32 %v2391, %v3043
  %v3184 = vmul.f32 %v2392, %v3043
  %v3185 = vmul.f32 %v2393, %v3043
  %v3186 = vmul.f32 %v2394, %v3043
  %v3187 = vmul.f32 %v2395, %v3043
  %v3188 = vmul.f32 %v2396, %v3043
  %v3189 = vmul.f32 %v2397, %v3043
  %v3190 = vmul.f32 %v2398, %v3043
  %v3191 = vmul.f32 %v2399, %v3043
  %v3192 = vmul.f32 %v2400, %v3043
  %v3193 = vmul.f32 %v2401, %v3043
  %v3194 = vmul.f32 %v2402, %v3043
  %v3195 = vmul.f32 %v2403, %v3043
  %v3196 = vmul.f32 %v2404, %v3043
  %v3197 = vmul.f32 %v2405, %v3043
  %v3198 = vmul.f32 %v2406, %v3043
  %v3199 = vmul.f32 %v2407, %v3043
  %v3200 = vmul.f32 %v2408, %v3043
  %v3201 = vmul.f32 %v2409, %v3043
  %v3202 = vmul.f32 %v2410, %v3043
  %v3203 = vmul.f32 %v2411, %v3043
  %v3204 = vmul.f32 %v2412, %v3043
  %v3205 = vmul.f32 %v2413, %v3043
  %v3206 = vmul.f32 %v2414, %v3043
  %v3207 = vmul.f32 %v2415, %v3043
  %v3208 = vmul.f32 %v2416, %v3043
  %v3209 = vmul.f32 %v2417, %v3043
  %v3210 = vmul.f32 %v2418, %v3043
  %v3211 = vmul.f32 %v2419, %v3043
  %v3212 = vmul.f32 %v2420, %v3043
  %v3213 = vmul.f32 %v2421, %v3043
  %v3214 = vmul.f32 %v2422, %v3043
  %v3215 = vmul.f32 %v2423, %v3043
  %v3216 = vmul.f32 %v2424, %v3043
  %v3217 = vmul.f32 %v2425, %v3043
  %v3218 = vmul.f32 %v2426, %v3043
  %v3219 = vmul.f32 %v2427, %v3043
  %v3220 = vmul.f32 %v2428, %v3043
  %v3221 = vmul.f32 %v2429, %v3043
  %v3222 = vmul.f32 %v2430, %v3043
  %v3223 = vmul.f32 %v2431, %v3043
  %v3224 = vmul.f32 %v2432, %v3043
  %v3225 = vmul.f32 %v2433, %v3043
  %v3226 = vmul.f32 %v2434, %v3043
  %v3227 = vmul.f32 %v2435, %v3043
  %v3228 = vmul.f32 %v2436, %v3043
  %v3229 = vmul.f32 %v2437, %v3043
  %v3230 = vmul.f32 %v2438, %v3043
  %v3231 = vmul.f32 %v2439, %v3043
  %v3232 = vmul.f32 %v2440, %v3043
  %v3233 = vmul.f32 %v2441, %v3043
  %v3234 = vmul.f32 %v2442, %v3043
  %v3235 = vmul.f32 %v2443, %v3043
  %v3236 = vmul.f32 %v2444, %v3043
  %v3237 = vmul.f32 %v2445, %v3043
  %v3238 = vmul.f32 %v2446, %v3043
  %v3239 = vmul.f32 %v2447, %v3043
  %v3241 = vlaneseq
  %v3242 = vshrl.u32 %v3241, 7
  %v3243 = vsub.s32 0, %v3242
  %v3244 = vrot.slane %v1850, %v3243
  %v3246 = vmul.f32 %v3044, %v3244
  %v3247 = vmul.f32 %v3045, %v3244
  %v3248 = vmul.f32 %v3046, %v3244
  %v3249 = vmul.f32 %v3047, %v3244
  %v3250 = vmul.f32 %v3048, %v3244
  %v3251 = vmul.f32 %v3049, %v3244
  %v3252 = vmul.f32 %v3050, %v3244
  %v3253 = vmul.f32 %v3051, %v3244
  %v3254 = vmul.f32 %v3052, %v3244
  %v3255 = vmul.f32 %v3053, %v3244
  %v3256 = vmul.f32 %v3054, %v3244
  %v3257 = vmul.f32 %v3055, %v3244
  %v3258 = vmul.f32 %v3056, %v3244
  %v3259 = vmul.f32 %v3057, %v3244
  %v3260 = vmul.f32 %v3058, %v3244
  %v3261 = vmul.f32 %v3059, %v3244
  %v3262 = vmul.f32 %v3060, %v3244
  %v3263 = vmul.f32 %v3061, %v3244
  %v3264 = vmul.f32 %v3062, %v3244
  %v3265 = vmul.f32 %v3063, %v3244
  %v3266 = vmul.f32 %v3064, %v3244
  %v3267 = vmul.f32 %v3065, %v3244
  %v3268 = vmul.f32 %v3066, %v3244
  %v3269 = vmul.f32 %v3067, %v3244
  %v3270 = vmul.f32 %v3068, %v3244
  %v3271 = vmul.f32 %v3069, %v3244
  %v3272 = vmul.f32 %v3070, %v3244
  %v3273 = vmul.f32 %v3071, %v3244
  %v3274 = vmul.f32 %v3072, %v3244
  %v3275 = vmul.f32 %v3073, %v3244
  %v3276 = vmul.f32 %v3074, %v3244
  %v3277 = vmul.f32 %v3075, %v3244
  %v3278 = vmul.f32 %v3076, %v3244
  %v3279 = vmul.f32 %v3077, %v3244
  %v3280 = vmul.f32 %v3078, %v3244
  %v3281 = vmul.f32 %v3079, %v3244
  %v3282 = vmul.f32 %v3080, %v3244
  %v3283 = vmul.f32 %v3081, %v3244
  %v3284 = vmul.f32 %v3082, %v3244
  %v3285 = vmul.f32 %v3083, %v3244
  %v3286 = vmul.f32 %v3084, %v3244
  %v3287 = vmul.f32 %v3085, %v3244
  %v3288 = vmul.f32 %v3086, %v3244
  %v3289 = vmul.f32 %v3087, %v3244
  %v3290 = vmul.f32 %v3088, %v3244
  %v3291 = vmul.f32 %v3089, %v3244
  %v3292 = vmul.f32 %v3090, %v3244
  %v3293 = vmul.f32 %v3091, %v3244
  %v3294 = vmul.f32 %v3092, %v3244
  %v3295 = vmul.f32 %v3093, %v3244
  %v3296 = vmul.f32 %v3094, %v3244
  %v3297 = vmul.f32 %v3095, %v3244
  %v3298 = vmul.f32 %v3096, %v3244
  %v3299 = vmul.f32 %v3097, %v3244
  %v3300 = vmul.f32 %v3098, %v3244
  %v3301 = vmul.f32 %v3099, %v3244
  %v3302 = vmul.f32 %v3100, %v3244
  %v3303 = vmul.f32 %v3101, %v3244
  %v3304 = vmul.f32 %v3102, %v3244
  %v3305 = vmul.f32 %v3103, %v3244
  %v3306 = vmul.f32 %v3104, %v3244
  %v3307 = vmul.f32 %v3105, %v3244
  %v3308 = vmul.f32 %v3106, %v3244
  %v3309 = vmul.f32 %v3107, %v3244
  %v3310 = vmul.f32 %v3108, %v3244
  %v3311 = vmul.f32 %v3109, %v3244
  %v3312 = vmul.f32 %v3110, %v3244
  %v3313 = vmul.f32 %v3111, %v3244
  %v3314 = vmul.f32 %v3112, %v3244
  %v3315 = vmul.f32 %v3113, %v3244
  %v3316 = vmul.f32 %v3114, %v3244
  %v3317 = vmul.f32 %v3115, %v3244
  %v3318 = vmul.f32 %v3116, %v3244
  %v3319 = vmul.f32 %v3117, %v3244
  %v3320 = vmul.f32 %v3118, %v3244
  %v3321 = vmul.f32 %v3119, %v3244
  %v3322 = vmul.f32 %v3120, %v3244
  %v3323 = vmul.f32 %v3121, %v3244
  %v3324 = vmul.f32 %v3122, %v3244
  %v3325 = vmul.f32 %v3123, %v3244
  %v3326 = vmul.f32 %v3124, %v3244
  %v3327 = vmul.f32 %v3125, %v3244
  %v3328 = vmul.f32 %v3126, %v3244
  %v3329 = vmul.f32 %v3127, %v3244
  %v3330 = vmul.f32 %v3128, %v3244
  %v3331 = vmul.f32 %v3129, %v3244
  %v3332 = vmul.f32 %v3130, %v3244
  %v3333 = vmul.f32 %v3131, %v3244
  %v3334 = vmul.f32 %v3132, %v3244
  %v3335 = vmul.f32 %v3133, %v3244
  %v3336 = vmul.f32 %v3134, %v3244
  %v3337 = vmul.f32 %v3135, %v3244
  %v3338 = vmul.f32 %v3136, %v3244
  %v3339 = vmul.f32 %v3137, %v3244
  %v3340 = vmul.f32 %v3138, %v3244
  %v3341 = vmul.f32 %v3139, %v3244
  %v3342 = vmul.f32 %v3140, %v3244
  %v3343 = vmul.f32 %v3141, %v3244
  %v3344 = vmul.f32 %v3142, %v3244
  %v3345 = vmul.f32 %v3143, %v3244
  %v3346 = vmul.f32 %v3144, %v3244
  %v3347 = vmul.f32 %v3145, %v3244
  %v3348 = vmul.f32 %v3146, %v3244
  %v3349 = vmul.f32 %v3147, %v3244
  %v3350 = vmul.f32 %v3148, %v3244
  %v3351 = vmul.f32 %v3149, %v3244
  %v3352 = vmul.f32 %v3150, %v3244
  %v3353 = vmul.f32 %v3151, %v3244
  %v3354 = vmul.f32 %v3152, %v3244
  %v3355 = vmul.f32 %v3153, %v3244
  %v3356 = vmul.f32 %v3154, %v3244
  %v3357 = vmul.f32 %v3155, %v3244
  %v3358 = vmul.f32 %v3156, %v3244
  %v3359 = vmul.f32 %v3157, %v3244
  %v3360 = vmul.f32 %v3158, %v3244
  %v3361 = vmul.f32 %v3159, %v3244
  %v3362 = vmul.f32 %v3160, %v3244
  %v3363 = vmul.f32 %v3161, %v3244
  %v3364 = vmul.f32 %v3162, %v3244
  %v3365 = vmul.f32 %v3163, %v3244
  %v3366 = vmul.f32 %v3164, %v3244
  %v3367 = vmul.f32 %v3165, %v3244
  %v3368 = vmul.f32 %v3166, %v3244
  %v3369 = vmul.f32 %v3167, %v3244
  %v3370 = vmul.f32 %v3168, %v3244
  %v3371 = vmul.f32 %v3169, %v3244
  %v3372 = vmul.f32 %v3170, %v3244
  %v3373 = vmul.f32 %v3171, %v3244
  %v3374 = vmul.f32 %v3172, %v3244
  %v3375 = vmul.f32 %v3173, %v3244
  %v3376 = vmul.f32 %v3174, %v3244
  %v3377 = vmul.f32 %v3175, %v3244
  %v3378 = vmul.f32 %v3176, %v3244
  %v3379 = vmul.f32 %v3177, %v3244
  %v3380 = vmul.f32 %v3178, %v3244
  %v3381 = vmul.f32 %v3179, %v3244
  %v3382 = vmul.f32 %v3180, %v3244
  %v3383 = vmul.f32 %v3181, %v3244
  %v3384 = vmul.f32 %v3182, %v3244
  %v3385 = vmul.f32 %v3183, %v3244
  %v3386 = vmul.f32 %v3184, %v3244
  %v3387 = vmul.f32 %v3185, %v3244
  %v3388 = vmul.f32 %v3186, %v3244
  %v3389 = vmul.f32 %v3187, %v3244
  %v3390 = vmul.f32 %v3188, %v3244
  %v3391 = vmul.f32 %v3189, %v3244
  %v3392 = vmul.f32 %v3190, %v3244
  %v3393 = vmul.f32 %v3191, %v3244
  %v3394 = vmul.f32 %v3192, %v3244
  %v3395 = vmul.f32 %v3193, %v3244
  %v3396 = vmul.f32 %v3194, %v3244
  %v3397 = vmul.f32 %v3195, %v3244
  %v3398 = vmul.f32 %v3196, %v3244
  %v3399 = vmul.f32 %v3197, %v3244
  %v3400 = vmul.f32 %v3198, %v3244
  %v3401 = vmul.f32 %v3199, %v3244
  %v3402 = vmul.f32 %v3200, %v3244
  %v3403 = vmul.f32 %v3201, %v3244
  %v3404 = vmul.f32 %v3202, %v3244
  %v3405 = vmul.f32 %v3203, %v3244
  %v3406 = vmul.f32 %v3204, %v3244
  %v3407 = vmul.f32 %v3205, %v3244
  %v3408 = vmul.f32 %v3206, %v3244
  %v3409 = vmul.f32 %v3207, %v3244
  %v3410 = vmul.f32 %v3208, %v3244
  %v3411 = vmul.f32 %v3209, %v3244
  %v3412 = vmul.f32 %v3210, %v3244
  %v3413 = vmul.f32 %v3211, %v3244
  %v3414 = vmul.f32 %v3212, %v3244
  %v3415 = vmul.f32 %v3213, %v3244
  %v3416 = vmul.f32 %v3214, %v3244
  %v3417 = vmul.f32 %v3215, %v3244
  %v3418 = vmul.f32 %v3216, %v3244
  %v3419 = vmul.f32 %v3217, %v3244
  %v3420 = vmul.f32 %v3218, %v3244
  %v3421 = vmul.f32 %v3219, %v3244
  %v3422 = vmul.f32 %v3220, %v3244
  %v3423 = vmul.f32 %v3221, %v3244
  %v3424 = vmul.f32 %v3222, %v3244
  %v3425 = vmul.f32 %v3223, %v3244
  %v3426 = vmul.f32 %v3224, %v3244
  %v3427 = vmul.f32 %v3225, %v3244
  %v3428 = vmul.f32 %v3226, %v3244
  %v3429 = vmul.f32 %v3227, %v3244
  %v3430 = vmul.f32 %v3228, %v3244
  %v3431 = vmul.f32 %v3229, %v3244
  %v3432 = vmul.f32 %v3230, %v3244
  %v3433 = vmul.f32 %v3231, %v3244
  %v3434 = vmul.f32 %v3232, %v3244
  %v3435 = vmul.f32 %v3233, %v3244
  %v3436 = vmul.f32 %v3234, %v3244
  %v3437 = vmul.f32 %v3235, %v3244
  %v3438 = vmul.f32 %v3236, %v3244
  %v3439 = vmul.f32 %v3237, %v3244
  %v3440 = vmul.f32 %v3238, %v3244
  %v3441 = vmul.f32 %v3239, %v3244
  %v3443 = vlaneseq
  %v3444 = vshrl.u32 %v3443, 7
  %v3445 = vsub.s32 0, %v3444
  %v3446 = vrot.slane %v1851, %v3445
  %v3448 = vadd.f32 %v3246, %v3446
  %v3449 = vadd.f32 %v3247, %v3446
  %v3450 = vadd.f32 %v3248, %v3446
  %v3451 = vadd.f32 %v3249, %v3446
  %v3452 = vadd.f32 %v3250, %v3446
  %v3453 = vadd.f32 %v3251, %v3446
  %v3454 = vadd.f32 %v3252, %v3446
  %v3455 = vadd.f32 %v3253, %v3446
  %v3456 = vadd.f32 %v3254, %v3446
  %v3457 = vadd.f32 %v3255, %v3446
  %v3458 = vadd.f32 %v3256, %v3446
  %v3459 = vadd.f32 %v3257, %v3446
  %v3460 = vadd.f32 %v3258, %v3446
  %v3461 = vadd.f32 %v3259, %v3446
  %v3462 = vadd.f32 %v3260, %v3446
  %v3463 = vadd.f32 %v3261, %v3446
  %v3464 = vadd.f32 %v3262, %v3446
  %v3465 = vadd.f32 %v3263, %v3446
  %v3466 = vadd.f32 %v3264, %v3446
  %v3467 = vadd.f32 %v3265, %v3446
  %v3468 = vadd.f32 %v3266, %v3446
  %v3469 = vadd.f32 %v3267, %v3446
  %v3470 = vadd.f32 %v3268, %v3446
  %v3471 = vadd.f32 %v3269, %v3446
  %v3472 = vadd.f32 %v3270, %v3446
  %v3473 = vadd.f32 %v3271, %v3446
  %v3474 = vadd.f32 %v3272, %v3446
  %v3475 = vadd.f32 %v3273, %v3446
  %v3476 = vadd.f32 %v3274, %v3446
  %v3477 = vadd.f32 %v3275, %v3446
  %v3478 = vadd.f32 %v3276, %v3446
  %v3479 = vadd.f32 %v3277, %v3446
  %v3480 = vadd.f32 %v3278, %v3446
  %v3481 = vadd.f32 %v3279, %v3446
  %v3482 = vadd.f32 %v3280, %v3446
  %v3483 = vadd.f32 %v3281, %v3446
  %v3484 = vadd.f32 %v3282, %v3446
  %v3485 = vadd.f32 %v3283, %v3446
  %v3486 = vadd.f32 %v3284, %v3446
  %v3487 = vadd.f32 %v3285, %v3446
  %v3488 = vadd.f32 %v3286, %v3446
  %v3489 = vadd.f32 %v3287, %v3446
  %v3490 = vadd.f32 %v3288, %v3446
  %v3491 = vadd.f32 %v3289, %v3446
  %v3492 = vadd.f32 %v3290, %v3446
  %v3493 = vadd.f32 %v3291, %v3446
  %v3494 = vadd.f32 %v3292, %v3446
  %v3495 = vadd.f32 %v3293, %v3446
  %v3496 = vadd.f32 %v3294, %v3446
  %v3497 = vadd.f32 %v3295, %v3446
  %v3498 = vadd.f32 %v3296, %v3446
  %v3499 = vadd.f32 %v3297, %v3446
  %v3500 = vadd.f32 %v3298, %v3446
  %v3501 = vadd.f32 %v3299, %v3446
  %v3502 = vadd.f32 %v3300, %v3446
  %v3503 = vadd.f32 %v3301, %v3446
  %v3504 = vadd.f32 %v3302, %v3446
  %v3505 = vadd.f32 %v3303, %v3446
  %v3506 = vadd.f32 %v3304, %v3446
  %v3507 = vadd.f32 %v3305, %v3446
  %v3508 = vadd.f32 %v3306, %v3446
  %v3509 = vadd.f32 %v3307, %v3446
  %v3510 = vadd.f32 %v3308, %v3446
  %v3511 = vadd.f32 %v3309, %v3446
  %v3512 = vadd.f32 %v3310, %v3446
  %v3513 = vadd.f32 %v3311, %v3446
  %v3514 = vadd.f32 %v3312, %v3446
  %v3515 = vadd.f32 %v3313, %v3446
  %v3516 = vadd.f32 %v3314, %v3446
  %v3517 = vadd.f32 %v3315, %v3446
  %v3518 = vadd.f32 %v3316, %v3446
  %v3519 = vadd.f32 %v3317, %v3446
  %v3520 = vadd.f32 %v3318, %v3446
  %v3521 = vadd.f32 %v3319, %v3446
  %v3522 = vadd.f32 %v3320, %v3446
  %v3523 = vadd.f32 %v3321, %v3446
  %v3524 = vadd.f32 %v3322, %v3446
  %v3525 = vadd.f32 %v3323, %v3446
  %v3526 = vadd.f32 %v3324, %v3446
  %v3527 = vadd.f32 %v3325, %v3446
  %v3528 = vadd.f32 %v3326, %v3446
  %v3529 = vadd.f32 %v3327, %v3446
  %v3530 = vadd.f32 %v3328, %v3446
  %v3531 = vadd.f32 %v3329, %v3446
  %v3532 = vadd.f32 %v3330, %v3446
  %v3533 = vadd.f32 %v3331, %v3446
  %v3534 = vadd.f32 %v3332, %v3446
  %v3535 = vadd.f32 %v3333, %v3446
  %v3536 = vadd.f32 %v3334, %v3446
  %v3537 = vadd.f32 %v3335, %v3446
  %v3538 = vadd.f32 %v3336, %v3446
  %v3539 = vadd.f32 %v3337, %v3446
  %v3540 = vadd.f32 %v3338, %v3446
  %v3541 = vadd.f32 %v3339, %v3446
  %v3542 = vadd.f32 %v3340, %v3446
  %v3543 = vadd.f32 %v3341, %v3446
  %v3544 = vadd.f32 %v3342, %v3446
  %v3545 = vadd.f32 %v3343, %v3446
  %v3546 = vadd.f32 %v3344, %v3446
  %v3547 = vadd.f32 %v3345, %v3446
  %v3548 = vadd.f32 %v3346, %v3446
  %v3549 = vadd.f32 %v3347, %v3446
  %v3550 = vadd.f32 %v3348, %v3446
  %v3551 = vadd.f32 %v3349, %v3446
  %v3552 = vadd.f32 %v3350, %v3446
  %v3553 = vadd.f32 %v3351, %v3446
  %v3554 = vadd.f32 %v3352, %v3446
  %v3555 = vadd.f32 %v3353, %v3446
  %v3556 = vadd.f32 %v3354, %v3446
  %v3557 = vadd.f32 %v3355, %v3446
  %v3558 = vadd.f32 %v3356, %v3446
  %v3559 = vadd.f32 %v3357, %v3446
  %v3560 = vadd.f32 %v3358, %v3446
  %v3561 = vadd.f32 %v3359, %v3446
  %v3562 = vadd.f32 %v3360, %v3446
  %v3563 = vadd.f32 %v3361, %v3446
  %v3564 = vadd.f32 %v3362, %v3446
  %v3565 = vadd.f32 %v3363, %v3446
  %v3566 = vadd.f32 %v3364, %v3446
  %v3567 = vadd.f32 %v3365, %v3446
  %v3568 = vadd.f32 %v3366, %v3446
  %v3569 = vadd.f32 %v3367, %v3446
  %v3570 = vadd.f32 %v3368, %v3446
  %v3571 = vadd.f32 %v3369, %v3446
  %v3572 = vadd.f32 %v3370, %v3446
  %v3573 = vadd.f32 %v3371, %v3446
  %v3574 = vadd.f32 %v3372, %v3446
  %v3575 = vadd.f32 %v3373, %v3446
  %v3576 = vadd.f32 %v3374, %v3446
  %v3577 = vadd.f32 %v3375, %v3446
  %v3578 = vadd.f32 %v3376, %v3446
  %v3579 = vadd.f32 %v3377, %v3446
  %v3580 = vadd.f32 %v3378, %v3446
  %v3581 = vadd.f32 %v3379, %v3446
  %v3582 = vadd.f32 %v3380, %v3446
  %v3583 = vadd.f32 %v3381, %v3446
  %v3584 = vadd.f32 %v3382, %v3446
  %v3585 = vadd.f32 %v3383, %v3446
  %v3586 = vadd.f32 %v3384, %v3446
  %v3587 = vadd.f32 %v3385, %v3446
  %v3588 = vadd.f32 %v3386, %v3446
  %v3589 = vadd.f32 %v3387, %v3446
  %v3590 = vadd.f32 %v3388, %v3446
  %v3591 = vadd.f32 %v3389, %v3446
  %v3592 = vadd.f32 %v3390, %v3446
  %v3593 = vadd.f32 %v3391, %v3446
  %v3594 = vadd.f32 %v3392, %v3446
  %v3595 = vadd.f32 %v3393, %v3446
  %v3596 = vadd.f32 %v3394, %v3446
  %v3597 = vadd.f32 %v3395, %v3446
  %v3598 = vadd.f32 %v3396, %v3446
  %v3599 = vadd.f32 %v3397, %v3446
  %v3600 = vadd.f32 %v3398, %v3446
  %v3601 = vadd.f32 %v3399, %v3446
  %v3602 = vadd.f32 %v3400, %v3446
  %v3603 = vadd.f32 %v3401, %v3446
  %v3604 = vadd.f32 %v3402, %v3446
  %v3605 = vadd.f32 %v3403, %v3446
  %v3606 = vadd.f32 %v3404, %v3446
  %v3607 = vadd.f32 %v3405, %v3446
  %v3608 = vadd.f32 %v3406, %v3446
  %v3609 = vadd.f32 %v3407, %v3446
  %v3610 = vadd.f32 %v3408, %v3446
  %v3611 = vadd.f32 %v3409, %v3446
  %v3612 = vadd.f32 %v3410, %v3446
  %v3613 = vadd.f32 %v3411, %v3446
  %v3614 = vadd.f32 %v3412, %v3446
  %v3615 = vadd.f32 %v3413, %v3446
  %v3616 = vadd.f32 %v3414, %v3446
  %v3617 = vadd.f32 %v3415, %v3446
  %v3618 = vadd.f32 %v3416, %v3446
  %v3619 = vadd.f32 %v3417, %v3446
  %v3620 = vadd.f32 %v3418, %v3446
  %v3621 = vadd.f32 %v3419, %v3446
  %v3622 = vadd.f32 %v3420, %v3446
  %v3623 = vadd.f32 %v3421, %v3446
  %v3624 = vadd.f32 %v3422, %v3446
  %v3625 = vadd.f32 %v3423, %v3446
  %v3626 = vadd.f32 %v3424, %v3446
  %v3627 = vadd.f32 %v3425, %v3446
  %v3628 = vadd.f32 %v3426, %v3446
  %v3629 = vadd.f32 %v3427, %v3446
  %v3630 = vadd.f32 %v3428, %v3446
  %v3631 = vadd.f32 %v3429, %v3446
  %v3632 = vadd.f32 %v3430, %v3446
  %v3633 = vadd.f32 %v3431, %v3446
  %v3634 = vadd.f32 %v3432, %v3446
  %v3635 = vadd.f32 %v3433, %v3446
  %v3636 = vadd.f32 %v3434, %v3446
  %v3637 = vadd.f32 %v3435, %v3446
  %v3638 = vadd.f32 %v3436, %v3446
  %v3639 = vadd.f32 %v3437, %v3446
  %v3640 = vadd.f32 %v3438, %v3446
  %v3641 = vadd.f32 %v3439, %v3446
  %v3642 = vadd.f32 %v3440, %v3446
  %v3643 = vadd.f32 %v3441, %v3446
  %v3644 = vmax.f32 %v3448, 0.0
  %v3645 = vmax.f32 %v3449, 0.0
  %v3646 = vmax.f32 %v3450, 0.0
  %v3647 = vmax.f32 %v3451, 0.0
  %v3648 = vmax.f32 %v3452, 0.0
  %v3649 = vmax.f32 %v3453, 0.0
  %v3650 = vmax.f32 %v3454, 0.0
  %v3651 = vmax.f32 %v3455, 0.0
  %v3652 = vmax.f32 %v3456, 0.0
  %v3653 = vmax.f32 %v3457, 0.0
  %v3654 = vmax.f32 %v3458, 0.0
  %v3655 = vmax.f32 %v3459, 0.0
  %v3656 = vmax.f32 %v3460, 0.0
  %v3657 = vmax.f32 %v3461, 0.0
  %v3658 = vmax.f32 %v3462, 0.0
  %v3659 = vmax.f32 %v3463, 0.0
  %v3660 = vmax.f32 %v3464, 0.0
  %v3661 = vmax.f32 %v3465, 0.0
  %v3662 = vmax.f32 %v3466, 0.0
  %v3663 = vmax.f32 %v3467, 0.0
  %v3664 = vmax.f32 %v3468, 0.0
  %v3665 = vmax.f32 %v3469, 0.0
  %v3666 = vmax.f32 %v3470, 0.0
  %v3667 = vmax.f32 %v3471, 0.0
  %v3668 = vmax.f32 %v3472, 0.0
  %v3669 = vmax.f32 %v3473, 0.0
  %v3670 = vmax.f32 %v3474, 0.0
  %v3671 = vmax.f32 %v3475, 0.0
  %v3672 = vmax.f32 %v3476, 0.0
  %v3673 = vmax.f32 %v3477, 0.0
  %v3674 = vmax.f32 %v3478, 0.0
  %v3675 = vmax.f32 %v3479, 0.0
  %v3676 = vmax.f32 %v3480, 0.0
  %v3677 = vmax.f32 %v3481, 0.0
  %v3678 = vmax.f32 %v3482, 0.0
  %v3679 = vmax.f32 %v3483, 0.0
  %v3680 = vmax.f32 %v3484, 0.0
  %v3681 = vmax.f32 %v3485, 0.0
  %v3682 = vmax.f32 %v3486, 0.0
  %v3683 = vmax.f32 %v3487, 0.0
  %v3684 = vmax.f32 %v3488, 0.0
  %v3685 = vmax.f32 %v3489, 0.0
  %v3686 = vmax.f32 %v3490, 0.0
  %v3687 = vmax.f32 %v3491, 0.0
  %v3688 = vmax.f32 %v3492, 0.0
  %v3689 = vmax.f32 %v3493, 0.0
  %v3690 = vmax.f32 %v3494, 0.0
  %v3691 = vmax.f32 %v3495, 0.0
  %v3692 = vmax.f32 %v3496, 0.0
  %v3693 = vmax.f32 %v3497, 0.0
  %v3694 = vmax.f32 %v3498, 0.0
  %v3695 = vmax.f32 %v3499, 0.0
  %v3696 = vmax.f32 %v3500, 0.0
  %v3697 = vmax.f32 %v3501, 0.0
  %v3698 = vmax.f32 %v3502, 0.0
  %v3699 = vmax.f32 %v3503, 0.0
  %v3700 = vmax.f32 %v3504, 0.0
  %v3701 = vmax.f32 %v3505, 0.0
  %v3702 = vmax.f32 %v3506, 0.0
  %v3703 = vmax.f32 %v3507, 0.0
  %v3704 = vmax.f32 %v3508, 0.0
  %v3705 = vmax.f32 %v3509, 0.0
  %v3706 = vmax.f32 %v3510, 0.0
  %v3707 = vmax.f32 %v3511, 0.0
  %v3708 = vmax.f32 %v3512, 0.0
  %v3709 = vmax.f32 %v3513, 0.0
  %v3710 = vmax.f32 %v3514, 0.0
  %v3711 = vmax.f32 %v3515, 0.0
  %v3712 = vmax.f32 %v3516, 0.0
  %v3713 = vmax.f32 %v3517, 0.0
  %v3714 = vmax.f32 %v3518, 0.0
  %v3715 = vmax.f32 %v3519, 0.0
  %v3716 = vmax.f32 %v3520, 0.0
  %v3717 = vmax.f32 %v3521, 0.0
  %v3718 = vmax.f32 %v3522, 0.0
  %v3719 = vmax.f32 %v3523, 0.0
  %v3720 = vmax.f32 %v3524, 0.0
  %v3721 = vmax.f32 %v3525, 0.0
  %v3722 = vmax.f32 %v3526, 0.0
  %v3723 = vmax.f32 %v3527, 0.0
  %v3724 = vmax.f32 %v3528, 0.0
  %v3725 = vmax.f32 %v3529, 0.0
  %v3726 = vmax.f32 %v3530, 0.0
  %v3727 = vmax.f32 %v3531, 0.0
  %v3728 = vmax.f32 %v3532, 0.0
  %v3729 = vmax.f32 %v3533, 0.0
  %v3730 = vmax.f32 %v3534, 0.0
  %v3731 = vmax.f32 %v3535, 0.0
  %v3732 = vmax.f32 %v3536, 0.0
  %v3733 = vmax.f32 %v3537, 0.0
  %v3734 = vmax.f32 %v3538, 0.0
  %v3735 = vmax.f32 %v3539, 0.0
  %v3736 = vmax.f32 %v3540, 0.0
  %v3737 = vmax.f32 %v3541, 0.0
  %v3738 = vmax.f32 %v3542, 0.0
  %v3739 = vmax.f32 %v3543, 0.0
  %v3740 = vmax.f32 %v3544, 0.0
  %v3741 = vmax.f32 %v3545, 0.0
  %v3742 = vmax.f32 %v3546, 0.0
  %v3743 = vmax.f32 %v3547, 0.0
  %v3744 = vmax.f32 %v3548, 0.0
  %v3745 = vmax.f32 %v3549, 0.0
  %v3746 = vmax.f32 %v3550, 0.0
  %v3747 = vmax.f32 %v3551, 0.0
  %v3748 = vmax.f32 %v3552, 0.0
  %v3749 = vmax.f32 %v3553, 0.0
  %v3750 = vmax.f32 %v3554, 0.0
  %v3751 = vmax.f32 %v3555, 0.0
  %v3752 = vmax.f32 %v3556, 0.0
  %v3753 = vmax.f32 %v3557, 0.0
  %v3754 = vmax.f32 %v3558, 0.0
  %v3755 = vmax.f32 %v3559, 0.0
  %v3756 = vmax.f32 %v3560, 0.0
  %v3757 = vmax.f32 %v3561, 0.0
  %v3758 = vmax.f32 %v3562, 0.0
  %v3759 = vmax.f32 %v3563, 0.0
  %v3760 = vmax.f32 %v3564, 0.0
  %v3761 = vmax.f32 %v3565, 0.0
  %v3762 = vmax.f32 %v3566, 0.0
  %v3763 = vmax.f32 %v3567, 0.0
  %v3764 = vmax.f32 %v3568, 0.0
  %v3765 = vmax.f32 %v3569, 0.0
  %v3766 = vmax.f32 %v3570, 0.0
  %v3767 = vmax.f32 %v3571, 0.0
  %v3768 = vmax.f32 %v3572, 0.0
  %v3769 = vmax.f32 %v3573, 0.0
  %v3770 = vmax.f32 %v3574, 0.0
  %v3771 = vmax.f32 %v3575, 0.0
  %v3772 = vmax.f32 %v3576, 0.0
  %v3773 = vmax.f32 %v3577, 0.0
  %v3774 = vmax.f32 %v3578, 0.0
  %v3775 = vmax.f32 %v3579, 0.0
  %v3776 = vmax.f32 %v3580, 0.0
  %v3777 = vmax.f32 %v3581, 0.0
  %v3778 = vmax.f32 %v3582, 0.0
  %v3779 = vmax.f32 %v3583, 0.0
  %v3780 = vmax.f32 %v3584, 0.0
  %v3781 = vmax.f32 %v3585, 0.0
  %v3782 = vmax.f32 %v3586, 0.0
  %v3783 = vmax.f32 %v3587, 0.0
  %v3784 = vmax.f32 %v3588, 0.0
  %v3785 = vmax.f32 %v3589, 0.0
  %v3786 = vmax.f32 %v3590, 0.0
  %v3787 = vmax.f32 %v3591, 0.0
  %v3788 = vmax.f32 %v3592, 0.0
  %v3789 = vmax.f32 %v3593, 0.0
  %v3790 = vmax.f32 %v3594, 0.0
  %v3791 = vmax.f32 %v3595, 0.0
  %v3792 = vmax.f32 %v3596, 0.0
  %v3793 = vmax.f32 %v3597, 0.0
  %v3794 = vmax.f32 %v3598, 0.0
  %v3795 = vmax.f32 %v3599, 0.0
  %v3796 = vmax.f32 %v3600, 0.0
  %v3797 = vmax.f32 %v3601, 0.0
  %v3798 = vmax.f32 %v3602, 0.0
  %v3799 = vmax.f32 %v3603, 0.0
  %v3800 = vmax.f32 %v3604, 0.0
  %v3801 = vmax.f32 %v3605, 0.0
  %v3802 = vmax.f32 %v3606, 0.0
  %v3803 = vmax.f32 %v3607, 0.0
  %v3804 = vmax.f32 %v3608, 0.0
  %v3805 = vmax.f32 %v3609, 0.0
  %v3806 = vmax.f32 %v3610, 0.0
  %v3807 = vmax.f32 %v3611, 0.0
  %v3808 = vmax.f32 %v3612, 0.0
  %v3809 = vmax.f32 %v3613, 0.0
  %v3810 = vmax.f32 %v3614, 0.0
  %v3811 = vmax.f32 %v3615, 0.0
  %v3812 = vmax.f32 %v3616, 0.0
  %v3813 = vmax.f32 %v3617, 0.0
  %v3814 = vmax.f32 %v3618, 0.0
  %v3815 = vmax.f32 %v3619, 0.0
  %v3816 = vmax.f32 %v3620, 0.0
  %v3817 = vmax.f32 %v3621, 0.0
  %v3818 = vmax.f32 %v3622, 0.0
  %v3819 = vmax.f32 %v3623, 0.0
  %v3820 = vmax.f32 %v3624, 0.0
  %v3821 = vmax.f32 %v3625, 0.0
  %v3822 = vmax.f32 %v3626, 0.0
  %v3823 = vmax.f32 %v3627, 0.0
  %v3824 = vmax.f32 %v3628, 0.0
  %v3825 = vmax.f32 %v3629, 0.0
  %v3826 = vmax.f32 %v3630, 0.0
  %v3827 = vmax.f32 %v3631, 0.0
  %v3828 = vmax.f32 %v3632, 0.0
  %v3829 = vmax.f32 %v3633, 0.0
  %v3830 = vmax.f32 %v3634, 0.0
  %v3831 = vmax.f32 %v3635, 0.0
  %v3832 = vmax.f32 %v3636, 0.0
  %v3833 = vmax.f32 %v3637, 0.0
  %v3834 = vmax.f32 %v3638, 0.0
  %v3835 = vmax.f32 %v3639, 0.0
  %v3836 = vmax.f32 %v3640, 0.0
  %v3837 = vmax.f32 %v3641, 0.0
  %v3838 = vmax.f32 %v3642, 0.0
  %v3839 = vmax.f32 %v3643, 0.0
  %v3840 = vpack.c.bf16 %v3645, %v3644
  %v3841 = vpack.c.bf16 %v3647, %v3646
  %v3842 = vpack.c.bf16 %v3649, %v3648
  %v3843 = vpack.c.bf16 %v3651, %v3650
  %v3844 = vpack.c.bf16 %v3653, %v3652
  %v3845 = vpack.c.bf16 %v3655, %v3654
  %v3846 = vpack.c.bf16 %v3657, %v3656
  %v3847 = vpack.c.bf16 %v3659, %v3658
  %v3848 = vpack.c.bf16 %v3661, %v3660
  %v3849 = vpack.c.bf16 %v3663, %v3662
  %v3850 = vpack.c.bf16 %v3665, %v3664
  %v3851 = vpack.c.bf16 %v3667, %v3666
  %v3852 = vpack.c.bf16 %v3669, %v3668
  %v3853 = vpack.c.bf16 %v3671, %v3670
  %v3854 = vpack.c.bf16 %v3673, %v3672
  %v3855 = vpack.c.bf16 %v3675, %v3674
  %v3856 = vpack.c.bf16 %v3677, %v3676
  %v3857 = vpack.c.bf16 %v3679, %v3678
  %v3858 = vpack.c.bf16 %v3681, %v3680
  %v3859 = vpack.c.bf16 %v3683, %v3682
  %v3860 = vpack.c.bf16 %v3685, %v3684
  %v3861 = vpack.c.bf16 %v3687, %v3686
  %v3862 = vpack.c.bf16 %v3689, %v3688
  %v3863 = vpack.c.bf16 %v3691, %v3690
  %v3864 = vpack.c.bf16 %v3693, %v3692
  %v3865 = vpack.c.bf16 %v3695, %v3694
  %v3866 = vpack.c.bf16 %v3697, %v3696
  %v3867 = vpack.c.bf16 %v3699, %v3698
  %v3868 = vpack.c.bf16 %v3701, %v3700
  %v3869 = vpack.c.bf16 %v3703, %v3702
  %v3870 = vpack.c.bf16 %v3705, %v3704
  %v3871 = vpack.c.bf16 %v3707, %v3706
  %v3872 = vpack.c.bf16 %v3709, %v3708
  %v3873 = vpack.c.bf16 %v3711, %v3710
  %v3874 = vpack.c.bf16 %v3713, %v3712
  %v3875 = vpack.c.bf16 %v3715, %v3714
  %v3876 = vpack.c.bf16 %v3717, %v3716
  %v3877 = vpack.c.bf16 %v3719, %v3718
  %v3878 = vpack.c.bf16 %v3721, %v3720
  %v3879 = vpack.c.bf16 %v3723, %v3722
  %v3880 = vpack.c.bf16 %v3725, %v3724
  %v3881 = vpack.c.bf16 %v3727, %v3726
  %v3882 = vpack.c.bf16 %v3729, %v3728
  %v3883 = vpack.c.bf16 %v3731, %v3730
  %v3884 = vpack.c.bf16 %v3733, %v3732
  %v3885 = vpack.c.bf16 %v3735, %v3734
  %v3886 = vpack.c.bf16 %v3737, %v3736
  %v3887 = vpack.c.bf16 %v3739, %v3738
  %v3888 = vpack.c.bf16 %v3741, %v3740
  %v3889 = vpack.c.bf16 %v3743, %v3742
  %v3890 = vpack.c.bf16 %v3745, %v3744
  %v3891 = vpack.c.bf16 %v3747, %v3746
  %v3892 = vpack.c.bf16 %v3749, %v3748
  %v3893 = vpack.c.bf16 %v3751, %v3750
  %v3894 = vpack.c.bf16 %v3753, %v3752
  %v3895 = vpack.c.bf16 %v3755, %v3754
  %v3896 = vpack.c.bf16 %v3757, %v3756
  %v3897 = vpack.c.bf16 %v3759, %v3758
  %v3898 = vpack.c.bf16 %v3761, %v3760
  %v3899 = vpack.c.bf16 %v3763, %v3762
  %v3900 = vpack.c.bf16 %v3765, %v3764
  %v3901 = vpack.c.bf16 %v3767, %v3766
  %v3902 = vpack.c.bf16 %v3769, %v3768
  %v3903 = vpack.c.bf16 %v3771, %v3770
  %v3904 = vpack.c.bf16 %v3773, %v3772
  %v3905 = vpack.c.bf16 %v3775, %v3774
  %v3906 = vpack.c.bf16 %v3777, %v3776
  %v3907 = vpack.c.bf16 %v3779, %v3778
  %v3908 = vpack.c.bf16 %v3781, %v3780
  %v3909 = vpack.c.bf16 %v3783, %v3782
  %v3910 = vpack.c.bf16 %v3785, %v3784
  %v3911 = vpack.c.bf16 %v3787, %v3786
  %v3912 = vpack.c.bf16 %v3789, %v3788
  %v3913 = vpack.c.bf16 %v3791, %v3790
  %v3914 = vpack.c.bf16 %v3793, %v3792
  %v3915 = vpack.c.bf16 %v3795, %v3794
  %v3916 = vpack.c.bf16 %v3797, %v3796
  %v3917 = vpack.c.bf16 %v3799, %v3798
  %v3918 = vpack.c.bf16 %v3801, %v3800
  %v3919 = vpack.c.bf16 %v3803, %v3802
  %v3920 = vpack.c.bf16 %v3805, %v3804
  %v3921 = vpack.c.bf16 %v3807, %v3806
  %v3922 = vpack.c.bf16 %v3809, %v3808
  %v3923 = vpack.c.bf16 %v3811, %v3810
  %v3924 = vpack.c.bf16 %v3813, %v3812
  %v3925 = vpack.c.bf16 %v3815, %v3814
  %v3926 = vpack.c.bf16 %v3817, %v3816
  %v3927 = vpack.c.bf16 %v3819, %v3818
  %v3928 = vpack.c.bf16 %v3821, %v3820
  %v3929 = vpack.c.bf16 %v3823, %v3822
  %v3930 = vpack.c.bf16 %v3825, %v3824
  %v3931 = vpack.c.bf16 %v3827, %v3826
  %v3932 = vpack.c.bf16 %v3829, %v3828
  %v3933 = vpack.c.bf16 %v3831, %v3830
  %v3934 = vpack.c.bf16 %v3833, %v3832
  %v3935 = vpack.c.bf16 %v3835, %v3834
  %v3936 = vpack.c.bf16 %v3837, %v3836
  %v3937 = vpack.c.bf16 %v3839, %v3838
  %v4036 = vunpack.c.l.b16 %v3840
  %v4037 = vunpack.c.h.b16 %v3840
  %v4038 = vunpack.c.l.b16 %v3841
  %v4039 = vunpack.c.h.b16 %v3841
  %v4040 = vunpack.c.l.b16 %v3842
  %v4041 = vunpack.c.h.b16 %v3842
  %v4042 = vunpack.c.l.b16 %v3843
  %v4043 = vunpack.c.h.b16 %v3843
  %v4044 = vunpack.c.l.b16 %v3844
  %v4045 = vunpack.c.h.b16 %v3844
  %v4046 = vunpack.c.l.b16 %v3845
  %v4047 = vunpack.c.h.b16 %v3845
  %v4048 = vunpack.c.l.b16 %v3846
  %v4049 = vunpack.c.h.b16 %v3846
  %v4050 = vunpack.c.l.b16 %v3847
  %v4051 = vunpack.c.h.b16 %v3847
  %v4052 = vunpack.c.l.b16 %v3848
  %v4053 = vunpack.c.h.b16 %v3848
  %v4054 = vunpack.c.l.b16 %v3849
  %v4055 = vunpack.c.h.b16 %v3849
  %v4056 = vunpack.c.l.b16 %v3850
  %v4057 = vunpack.c.h.b16 %v3850
  %v4058 = vunpack.c.l.b16 %v3851
  %v4059 = vunpack.c.h.b16 %v3851
  %v4060 = vunpack.c.l.b16 %v3852
  %v4061 = vunpack.c.h.b16 %v3852
  %v4062 = vunpack.c.l.b16 %v3853
  %v4063 = vunpack.c.h.b16 %v3853
  %v4064 = vunpack.c.l.b16 %v3854
  %v4065 = vunpack.c.h.b16 %v3854
  %v4066 = vunpack.c.l.b16 %v3855
  %v4067 = vunpack.c.h.b16 %v3855
  %v4068 = vunpack.c.l.b16 %v3856
  %v4069 = vunpack.c.h.b16 %v3856
  %v4070 = vunpack.c.l.b16 %v3857
  %v4071 = vunpack.c.h.b16 %v3857
  %v4072 = vunpack.c.l.b16 %v3858
  %v4073 = vunpack.c.h.b16 %v3858
  %v4074 = vunpack.c.l.b16 %v3859
  %v4075 = vunpack.c.h.b16 %v3859
  %v4076 = vunpack.c.l.b16 %v3860
  %v4077 = vunpack.c.h.b16 %v3860
  %v4078 = vunpack.c.l.b16 %v3861
  %v4079 = vunpack.c.h.b16 %v3861
  %v4080 = vunpack.c.l.b16 %v3862
  %v4081 = vunpack.c.h.b16 %v3862
  %v4082 = vunpack.c.l.b16 %v3863
  %v4083 = vunpack.c.h.b16 %v3863
  %v4084 = vunpack.c.l.b16 %v3864
  %v4085 = vunpack.c.h.b16 %v3864
  %v4086 = vunpack.c.l.b16 %v3865
  %v4087 = vunpack.c.h.b16 %v3865
  %v4088 = vunpack.c.l.b16 %v3866
  %v4089 = vunpack.c.h.b16 %v3866
  %v4090 = vunpack.c.l.b16 %v3867
  %v4091 = vunpack.c.h.b16 %v3867
  %v4092 = vunpack.c.l.b16 %v3868
  %v4093 = vunpack.c.h.b16 %v3868
  %v4094 = vunpack.c.l.b16 %v3869
  %v4095 = vunpack.c.h.b16 %v3869
  %v4096 = vunpack.c.l.b16 %v3870
  %v4097 = vunpack.c.h.b16 %v3870
  %v4098 = vunpack.c.l.b16 %v3871
  %v4099 = vunpack.c.h.b16 %v3871
  %v4100 = vunpack.c.l.b16 %v3872
  %v4101 = vunpack.c.h.b16 %v3872
  %v4102 = vunpack.c.l.b16 %v3873
  %v4103 = vunpack.c.h.b16 %v3873
  %v4104 = vunpack.c.l.b16 %v3874
  %v4105 = vunpack.c.h.b16 %v3874
  %v4106 = vunpack.c.l.b16 %v3875
  %v4107 = vunpack.c.h.b16 %v3875
  %v4108 = vunpack.c.l.b16 %v3876
  %v4109 = vunpack.c.h.b16 %v3876
  %v4110 = vunpack.c.l.b16 %v3877
  %v4111 = vunpack.c.h.b16 %v3877
  %v4112 = vunpack.c.l.b16 %v3878
  %v4113 = vunpack.c.h.b16 %v3878
  %v4114 = vunpack.c.l.b16 %v3879
  %v4115 = vunpack.c.h.b16 %v3879
  %v4116 = vunpack.c.l.b16 %v3880
  %v4117 = vunpack.c.h.b16 %v3880
  %v4118 = vunpack.c.l.b16 %v3881
  %v4119 = vunpack.c.h.b16 %v3881
  %v4120 = vunpack.c.l.b16 %v3882
  %v4121 = vunpack.c.h.b16 %v3882
  %v4122 = vunpack.c.l.b16 %v3883
  %v4123 = vunpack.c.h.b16 %v3883
  %v4124 = vunpack.c.l.b16 %v3884
  %v4125 = vunpack.c.h.b16 %v3884
  %v4126 = vunpack.c.l.b16 %v3885
  %v4127 = vunpack.c.h.b16 %v3885
  %v4128 = vunpack.c.l.b16 %v3886
  %v4129 = vunpack.c.h.b16 %v3886
  %v4130 = vunpack.c.l.b16 %v3887
  %v4131 = vunpack.c.h.b16 %v3887
  %v4132 = vunpack.c.l.b16 %v3888
  %v4133 = vunpack.c.h.b16 %v3888
  %v4134 = vunpack.c.l.b16 %v3889
  %v4135 = vunpack.c.h.b16 %v3889
  %v4136 = vunpack.c.l.b16 %v3890
  %v4137 = vunpack.c.h.b16 %v3890
  %v4138 = vunpack.c.l.b16 %v3891
  %v4139 = vunpack.c.h.b16 %v3891
  %v4140 = vunpack.c.l.b16 %v3892
  %v4141 = vunpack.c.h.b16 %v3892
  %v4142 = vunpack.c.l.b16 %v3893
  %v4143 = vunpack.c.h.b16 %v3893
  %v4144 = vunpack.c.l.b16 %v3894
  %v4145 = vunpack.c.h.b16 %v3894
  %v4146 = vunpack.c.l.b16 %v3895
  %v4147 = vunpack.c.h.b16 %v3895
  %v4148 = vunpack.c.l.b16 %v3896
  %v4149 = vunpack.c.h.b16 %v3896
  %v4150 = vunpack.c.l.b16 %v3897
  %v4151 = vunpack.c.h.b16 %v3897
  %v4152 = vunpack.c.l.b16 %v3898
  %v4153 = vunpack.c.h.b16 %v3898
  %v4154 = vunpack.c.l.b16 %v3899
  %v4155 = vunpack.c.h.b16 %v3899
  %v4156 = vunpack.c.l.b16 %v3900
  %v4157 = vunpack.c.h.b16 %v3900
  %v4158 = vunpack.c.l.b16 %v3901
  %v4159 = vunpack.c.h.b16 %v3901
  %v4160 = vunpack.c.l.b16 %v3902
  %v4161 = vunpack.c.h.b16 %v3902
  %v4162 = vunpack.c.l.b16 %v3903
  %v4163 = vunpack.c.h.b16 %v3903
  %v4164 = vunpack.c.l.b16 %v3904
  %v4165 = vunpack.c.h.b16 %v3904
  %v4166 = vunpack.c.l.b16 %v3905
  %v4167 = vunpack.c.h.b16 %v3905
  %v4168 = vunpack.c.l.b16 %v3906
  %v4169 = vunpack.c.h.b16 %v3906
  %v4170 = vunpack.c.l.b16 %v3907
  %v4171 = vunpack.c.h.b16 %v3907
  %v4172 = vunpack.c.l.b16 %v3908
  %v4173 = vunpack.c.h.b16 %v3908
  %v4174 = vunpack.c.l.b16 %v3909
  %v4175 = vunpack.c.h.b16 %v3909
  %v4176 = vunpack.c.l.b16 %v3910
  %v4177 = vunpack.c.h.b16 %v3910
  %v4178 = vunpack.c.l.b16 %v3911
  %v4179 = vunpack.c.h.b16 %v3911
  %v4180 = vunpack.c.l.b16 %v3912
  %v4181 = vunpack.c.h.b16 %v3912
  %v4182 = vunpack.c.l.b16 %v3913
  %v4183 = vunpack.c.h.b16 %v3913
  %v4184 = vunpack.c.l.b16 %v3914
  %v4185 = vunpack.c.h.b16 %v3914
  %v4186 = vunpack.c.l.b16 %v3915
  %v4187 = vunpack.c.h.b16 %v3915
  %v4188 = vunpack.c.l.b16 %v3916
  %v4189 = vunpack.c.h.b16 %v3916
  %v4190 = vunpack.c.l.b16 %v3917
  %v4191 = vunpack.c.h.b16 %v3917
  %v4192 = vunpack.c.l.b16 %v3918
  %v4193 = vunpack.c.h.b16 %v3918
  %v4194 = vunpack.c.l.b16 %v3919
  %v4195 = vunpack.c.h.b16 %v3919
  %v4196 = vunpack.c.l.b16 %v3920
  %v4197 = vunpack.c.h.b16 %v3920
  %v4198 = vunpack.c.l.b16 %v3921
  %v4199 = vunpack.c.h.b16 %v3921
  %v4200 = vunpack.c.l.b16 %v3922
  %v4201 = vunpack.c.h.b16 %v3922
  %v4202 = vunpack.c.l.b16 %v3923
  %v4203 = vunpack.c.h.b16 %v3923
  %v4204 = vunpack.c.l.b16 %v3924
  %v4205 = vunpack.c.h.b16 %v3924
  %v4206 = vunpack.c.l.b16 %v3925
  %v4207 = vunpack.c.h.b16 %v3925
  %v4208 = vunpack.c.l.b16 %v3926
  %v4209 = vunpack.c.h.b16 %v3926
  %v4210 = vunpack.c.l.b16 %v3927
  %v4211 = vunpack.c.h.b16 %v3927
  %v4212 = vunpack.c.l.b16 %v3928
  %v4213 = vunpack.c.h.b16 %v3928
  %v4214 = vunpack.c.l.b16 %v3929
  %v4215 = vunpack.c.h.b16 %v3929
  %v4216 = vunpack.c.l.b16 %v3930
  %v4217 = vunpack.c.h.b16 %v3930
  %v4218 = vunpack.c.l.b16 %v3931
  %v4219 = vunpack.c.h.b16 %v3931
  %v4220 = vunpack.c.l.b16 %v3932
  %v4221 = vunpack.c.h.b16 %v3932
  %v4222 = vunpack.c.l.b16 %v3933
  %v4223 = vunpack.c.h.b16 %v3933
  %v4224 = vunpack.c.l.b16 %v3934
  %v4225 = vunpack.c.h.b16 %v3934
  %v4226 = vunpack.c.l.b16 %v3935
  %v4227 = vunpack.c.h.b16 %v3935
  %v4228 = vunpack.c.l.b16 %v3936
  %v4229 = vunpack.c.h.b16 %v3936
  %v4230 = vunpack.c.l.b16 %v3937
  %v4231 = vunpack.c.h.b16 %v3937
  %v4232 = vpack.c.b16 %v4036, %v4036
  %v4233 = vpack.c.b16 %v4037, %v4037
  %v4234 = vpack.c.b16 %v4038, %v4038
  %v4235 = vpack.c.b16 %v4039, %v4039
  %v4236 = vpack.c.b16 %v4040, %v4040
  %v4237 = vpack.c.b16 %v4041, %v4041
  %v4238 = vpack.c.b16 %v4042, %v4042
  %v4239 = vpack.c.b16 %v4043, %v4043
  %v4240 = vpack.c.b16 %v4044, %v4044
  %v4241 = vpack.c.b16 %v4045, %v4045
  %v4242 = vpack.c.b16 %v4046, %v4046
  %v4243 = vpack.c.b16 %v4047, %v4047
  %v4244 = vpack.c.b16 %v4048, %v4048
  %v4245 = vpack.c.b16 %v4049, %v4049
  %v4246 = vpack.c.b16 %v4050, %v4050
  %v4247 = vpack.c.b16 %v4051, %v4051
  %v4248 = vpack.c.b16 %v4052, %v4052
  %v4249 = vpack.c.b16 %v4053, %v4053
  %v4250 = vpack.c.b16 %v4054, %v4054
  %v4251 = vpack.c.b16 %v4055, %v4055
  %v4252 = vpack.c.b16 %v4056, %v4056
  %v4253 = vpack.c.b16 %v4057, %v4057
  %v4254 = vpack.c.b16 %v4058, %v4058
  %v4255 = vpack.c.b16 %v4059, %v4059
  %v4256 = vpack.c.b16 %v4060, %v4060
  %v4257 = vpack.c.b16 %v4061, %v4061
  %v4258 = vpack.c.b16 %v4062, %v4062
  %v4259 = vpack.c.b16 %v4063, %v4063
  %v4260 = vpack.c.b16 %v4064, %v4064
  %v4261 = vpack.c.b16 %v4065, %v4065
  %v4262 = vpack.c.b16 %v4066, %v4066
  %v4263 = vpack.c.b16 %v4067, %v4067
  %v4264 = vpack.c.b16 %v4068, %v4068
  %v4265 = vpack.c.b16 %v4069, %v4069
  %v4266 = vpack.c.b16 %v4070, %v4070
  %v4267 = vpack.c.b16 %v4071, %v4071
  %v4268 = vpack.c.b16 %v4072, %v4072
  %v4269 = vpack.c.b16 %v4073, %v4073
  %v4270 = vpack.c.b16 %v4074, %v4074
  %v4271 = vpack.c.b16 %v4075, %v4075
  %v4272 = vpack.c.b16 %v4076, %v4076
  %v4273 = vpack.c.b16 %v4077, %v4077
  %v4274 = vpack.c.b16 %v4078, %v4078
  %v4275 = vpack.c.b16 %v4079, %v4079
  %v4276 = vpack.c.b16 %v4080, %v4080
  %v4277 = vpack.c.b16 %v4081, %v4081
  %v4278 = vpack.c.b16 %v4082, %v4082
  %v4279 = vpack.c.b16 %v4083, %v4083
  %v4280 = vpack.c.b16 %v4084, %v4084
  %v4281 = vpack.c.b16 %v4085, %v4085
  %v4282 = vpack.c.b16 %v4086, %v4086
  %v4283 = vpack.c.b16 %v4087, %v4087
  %v4284 = vpack.c.b16 %v4088, %v4088
  %v4285 = vpack.c.b16 %v4089, %v4089
  %v4286 = vpack.c.b16 %v4090, %v4090
  %v4287 = vpack.c.b16 %v4091, %v4091
  %v4288 = vpack.c.b16 %v4092, %v4092
  %v4289 = vpack.c.b16 %v4093, %v4093
  %v4290 = vpack.c.b16 %v4094, %v4094
  %v4291 = vpack.c.b16 %v4095, %v4095
  %v4292 = vpack.c.b16 %v4096, %v4096
  %v4293 = vpack.c.b16 %v4097, %v4097
  %v4294 = vpack.c.b16 %v4098, %v4098
  %v4295 = vpack.c.b16 %v4099, %v4099
  %v4296 = vpack.c.b16 %v4100, %v4100
  %v4297 = vpack.c.b16 %v4101, %v4101
  %v4298 = vpack.c.b16 %v4102, %v4102
  %v4299 = vpack.c.b16 %v4103, %v4103
  %v4300 = vpack.c.b16 %v4104, %v4104
  %v4301 = vpack.c.b16 %v4105, %v4105
  %v4302 = vpack.c.b16 %v4106, %v4106
  %v4303 = vpack.c.b16 %v4107, %v4107
  %v4304 = vpack.c.b16 %v4108, %v4108
  %v4305 = vpack.c.b16 %v4109, %v4109
  %v4306 = vpack.c.b16 %v4110, %v4110
  %v4307 = vpack.c.b16 %v4111, %v4111
  %v4308 = vpack.c.b16 %v4112, %v4112
  %v4309 = vpack.c.b16 %v4113, %v4113
  %v4310 = vpack.c.b16 %v4114, %v4114
  %v4311 = vpack.c.b16 %v4115, %v4115
  %v4312 = vpack.c.b16 %v4116, %v4116
  %v4313 = vpack.c.b16 %v4117, %v4117
  %v4314 = vpack.c.b16 %v4118, %v4118
  %v4315 = vpack.c.b16 %v4119, %v4119
  %v4316 = vpack.c.b16 %v4120, %v4120
  %v4317 = vpack.c.b16 %v4121, %v4121
  %v4318 = vpack.c.b16 %v4122, %v4122
  %v4319 = vpack.c.b16 %v4123, %v4123
  %v4320 = vpack.c.b16 %v4124, %v4124
  %v4321 = vpack.c.b16 %v4125, %v4125
  %v4322 = vpack.c.b16 %v4126, %v4126
  %v4323 = vpack.c.b16 %v4127, %v4127
  %v4324 = vpack.c.b16 %v4128, %v4128
  %v4325 = vpack.c.b16 %v4129, %v4129
  %v4326 = vpack.c.b16 %v4130, %v4130
  %v4327 = vpack.c.b16 %v4131, %v4131
  %v4328 = vpack.c.b16 %v4132, %v4132
  %v4329 = vpack.c.b16 %v4133, %v4133
  %v4330 = vpack.c.b16 %v4134, %v4134
  %v4331 = vpack.c.b16 %v4135, %v4135
  %v4332 = vpack.c.b16 %v4136, %v4136
  %v4333 = vpack.c.b16 %v4137, %v4137
  %v4334 = vpack.c.b16 %v4138, %v4138
  %v4335 = vpack.c.b16 %v4139, %v4139
  %v4336 = vpack.c.b16 %v4140, %v4140
  %v4337 = vpack.c.b16 %v4141, %v4141
  %v4338 = vpack.c.b16 %v4142, %v4142
  %v4339 = vpack.c.b16 %v4143, %v4143
  %v4340 = vpack.c.b16 %v4144, %v4144
  %v4341 = vpack.c.b16 %v4145, %v4145
  %v4342 = vpack.c.b16 %v4146, %v4146
  %v4343 = vpack.c.b16 %v4147, %v4147
  %v4344 = vpack.c.b16 %v4148, %v4148
  %v4345 = vpack.c.b16 %v4149, %v4149
  %v4346 = vpack.c.b16 %v4150, %v4150
  %v4347 = vpack.c.b16 %v4151, %v4151
  %v4348 = vpack.c.b16 %v4152, %v4152
  %v4349 = vpack.c.b16 %v4153, %v4153
  %v4350 = vpack.c.b16 %v4154, %v4154
  %v4351 = vpack.c.b16 %v4155, %v4155
  %v4352 = vpack.c.b16 %v4156, %v4156
  %v4353 = vpack.c.b16 %v4157, %v4157
  %v4354 = vpack.c.b16 %v4158, %v4158
  %v4355 = vpack.c.b16 %v4159, %v4159
  %v4356 = vpack.c.b16 %v4160, %v4160
  %v4357 = vpack.c.b16 %v4161, %v4161
  %v4358 = vpack.c.b16 %v4162, %v4162
  %v4359 = vpack.c.b16 %v4163, %v4163
  %v4360 = vpack.c.b16 %v4164, %v4164
  %v4361 = vpack.c.b16 %v4165, %v4165
  %v4362 = vpack.c.b16 %v4166, %v4166
  %v4363 = vpack.c.b16 %v4167, %v4167
  %v4364 = vpack.c.b16 %v4168, %v4168
  %v4365 = vpack.c.b16 %v4169, %v4169
  %v4366 = vpack.c.b16 %v4170, %v4170
  %v4367 = vpack.c.b16 %v4171, %v4171
  %v4368 = vpack.c.b16 %v4172, %v4172
  %v4369 = vpack.c.b16 %v4173, %v4173
  %v4370 = vpack.c.b16 %v4174, %v4174
  %v4371 = vpack.c.b16 %v4175, %v4175
  %v4372 = vpack.c.b16 %v4176, %v4176
  %v4373 = vpack.c.b16 %v4177, %v4177
  %v4374 = vpack.c.b16 %v4178, %v4178
  %v4375 = vpack.c.b16 %v4179, %v4179
  %v4376 = vpack.c.b16 %v4180, %v4180
  %v4377 = vpack.c.b16 %v4181, %v4181
  %v4378 = vpack.c.b16 %v4182, %v4182
  %v4379 = vpack.c.b16 %v4183, %v4183
  %v4380 = vpack.c.b16 %v4184, %v4184
  %v4381 = vpack.c.b16 %v4185, %v4185
  %v4382 = vpack.c.b16 %v4186, %v4186
  %v4383 = vpack.c.b16 %v4187, %v4187
  %v4384 = vpack.c.b16 %v4188, %v4188
  %v4385 = vpack.c.b16 %v4189, %v4189
  %v4386 = vpack.c.b16 %v4190, %v4190
  %v4387 = vpack.c.b16 %v4191, %v4191
  %v4388 = vpack.c.b16 %v4192, %v4192
  %v4389 = vpack.c.b16 %v4193, %v4193
  %v4390 = vpack.c.b16 %v4194, %v4194
  %v4391 = vpack.c.b16 %v4195, %v4195
  %v4392 = vpack.c.b16 %v4196, %v4196
  %v4393 = vpack.c.b16 %v4197, %v4197
  %v4394 = vpack.c.b16 %v4198, %v4198
  %v4395 = vpack.c.b16 %v4199, %v4199
  %v4396 = vpack.c.b16 %v4200, %v4200
  %v4397 = vpack.c.b16 %v4201, %v4201
  %v4398 = vpack.c.b16 %v4202, %v4202
  %v4399 = vpack.c.b16 %v4203, %v4203
  %v4400 = vpack.c.b16 %v4204, %v4204
  %v4401 = vpack.c.b16 %v4205, %v4205
  %v4402 = vpack.c.b16 %v4206, %v4206
  %v4403 = vpack.c.b16 %v4207, %v4207
  %v4404 = vpack.c.b16 %v4208, %v4208
  %v4405 = vpack.c.b16 %v4209, %v4209
  %v4406 = vpack.c.b16 %v4210, %v4210
  %v4407 = vpack.c.b16 %v4211, %v4211
  %v4408 = vpack.c.b16 %v4212, %v4212
  %v4409 = vpack.c.b16 %v4213, %v4213
  %v4410 = vpack.c.b16 %v4214, %v4214
  %v4411 = vpack.c.b16 %v4215, %v4215
  %v4412 = vpack.c.b16 %v4216, %v4216
  %v4413 = vpack.c.b16 %v4217, %v4217
  %v4414 = vpack.c.b16 %v4218, %v4218
  %v4415 = vpack.c.b16 %v4219, %v4219
  %v4416 = vpack.c.b16 %v4220, %v4220
  %v4417 = vpack.c.b16 %v4221, %v4221
  %v4418 = vpack.c.b16 %v4222, %v4222
  %v4419 = vpack.c.b16 %v4223, %v4223
  %v4420 = vpack.c.b16 %v4224, %v4224
  %v4421 = vpack.c.b16 %v4225, %v4225
  %v4422 = vpack.c.b16 %v4226, %v4226
  %v4423 = vpack.c.b16 %v4227, %v4227
  %v4424 = vpack.c.b16 %v4228, %v4228
  %v4425 = vpack.c.b16 %v4229, %v4229
  %v4426 = vpack.c.b16 %v4230, %v4230
  %v4427 = vpack.c.b16 %v4231, %v4231
  %vm4624 = vcmask 257024
  %4625 = vst.msk [vmem:[%s5] sm:$0xf] %vm4624, %v4232
  %4626 = vst.msk [vmem:[%s5 + $0x4] sm:$0xf] %vm4624, %v4233
  %4627 = vst.msk [vmem:[%s5 + $0x8] sm:$0xf] %vm4624, %v4234
  %4628 = vst.msk [vmem:[%s5 + $0xc] sm:$0xf] %vm4624, %v4235
  %4629 = vst.msk [vmem:[%s5 + $0x10] sm:$0xf] %vm4624, %v4236
  %4630 = vst.msk [vmem:[%s5 + $0x14] sm:$0xf] %vm4624, %v4237
  %4631 = vst.msk [vmem:[%s5 + $0x18] sm:$0xf] %vm4624, %v4238
  %4632 = vst.msk [vmem:[%s5 + $0x1c] sm:$0xf] %vm4624, %v4239
  %4633 = vst.msk [vmem:[%s5 + $0x20] sm:$0xf] %vm4624, %v4240
  %4634 = vst.msk [vmem:[%s5 + $0x24] sm:$0xf] %vm4624, %v4241
  %4635 = vst.msk [vmem:[%s5 + $0x28] sm:$0xf] %vm4624, %v4242
  %4636 = vst.msk [vmem:[%s5 + $0x2c] sm:$0xf] %vm4624, %v4243
  %4637 = vst.msk [vmem:[%s5 + $0x30] sm:$0xf] %vm4624, %v4244
  %4638 = vst.msk [vmem:[%s5 + $0x34] sm:$0xf] %vm4624, %v4245
  %4639 = vst.msk [vmem:[%s5 + $0x38] sm:$0xf] %vm4624, %v4246
  %4640 = vst.msk [vmem:[%s5 + $0x3c] sm:$0xf] %vm4624, %v4247
  %4641 = vst.msk [vmem:[%s5 + $0x40] sm:$0xf] %vm4624, %v4248
  %4642 = vst.msk [vmem:[%s5 + $0x44] sm:$0xf] %vm4624, %v4249
  %4643 = vst.msk [vmem:[%s5 + $0x48] sm:$0xf] %vm4624, %v4250
  %4644 = vst.msk [vmem:[%s5 + $0x4c] sm:$0xf] %vm4624, %v4251
  %4645 = vst.msk [vmem:[%s5 + $0x50] sm:$0xf] %vm4624, %v4252
  %4646 = vst.msk [vmem:[%s5 + $0x54] sm:$0xf] %vm4624, %v4253
  %4647 = vst.msk [vmem:[%s5 + $0x58] sm:$0xf] %vm4624, %v4254
  %4648 = vst.msk [vmem:[%s5 + $0x5c] sm:$0xf] %vm4624, %v4255
  %4649 = vst.msk [vmem:[%s5 + $0x60] sm:$0xf] %vm4624, %v4256
  %4650 = vst.msk [vmem:[%s5 + $0x64] sm:$0xf] %vm4624, %v4257
  %4651 = vst.msk [vmem:[%s5 + $0x68] sm:$0xf] %vm4624, %v4258
  %4652 = vst.msk [vmem:[%s5 + $0x6c] sm:$0xf] %vm4624, %v4259
  %4653 = vst.msk [vmem:[%s5 + $0x70] sm:$0xf] %vm4624, %v4260
  %4654 = vst.msk [vmem:[%s5 + $0x74] sm:$0xf] %vm4624, %v4261
  %4655 = vst.msk [vmem:[%s5 + $0x78] sm:$0xf] %vm4624, %v4262
  %4656 = vst.msk [vmem:[%s5 + $0x7c] sm:$0xf] %vm4624, %v4263
  %4657 = vst.msk [vmem:[%s5 + $0x80] sm:$0xf] %vm4624, %v4264
  %4658 = vst.msk [vmem:[%s5 + $0x84] sm:$0xf] %vm4624, %v4265
  %4659 = vst.msk [vmem:[%s5 + $0x88] sm:$0xf] %vm4624, %v4266
  %4660 = vst.msk [vmem:[%s5 + $0x8c] sm:$0xf] %vm4624, %v4267
  %4661 = vst.msk [vmem:[%s5 + $0x90] sm:$0xf] %vm4624, %v4268
  %4662 = vst.msk [vmem:[%s5 + $0x94] sm:$0xf] %vm4624, %v4269
  %4663 = vst.msk [vmem:[%s5 + $0x98] sm:$0xf] %vm4624, %v4270
  %4664 = vst.msk [vmem:[%s5 + $0x9c] sm:$0xf] %vm4624, %v4271
  %4665 = vst.msk [vmem:[%s5 + $0xa0] sm:$0xf] %vm4624, %v4272
  %4666 = vst.msk [vmem:[%s5 + $0xa4] sm:$0xf] %vm4624, %v4273
  %4667 = vst.msk [vmem:[%s5 + $0xa8] sm:$0xf] %vm4624, %v4274
  %4668 = vst.msk [vmem:[%s5 + $0xac] sm:$0xf] %vm4624, %v4275
  %4669 = vst.msk [vmem:[%s5 + $0xb0] sm:$0xf] %vm4624, %v4276
  %4670 = vst.msk [vmem:[%s5 + $0xb4] sm:$0xf] %vm4624, %v4277
  %4671 = vst.msk [vmem:[%s5 + $0xb8] sm:$0xf] %vm4624, %v4278
  %4672 = vst.msk [vmem:[%s5 + $0xbc] sm:$0xf] %vm4624, %v4279
  %4673 = vst.msk [vmem:[%s5 + $0xc0] sm:$0xf] %vm4624, %v4280
  %4674 = vst.msk [vmem:[%s5 + $0xc4] sm:$0xf] %vm4624, %v4281
  %4675 = vst.msk [vmem:[%s5 + $0xc8] sm:$0xf] %vm4624, %v4282
  %4676 = vst.msk [vmem:[%s5 + $0xcc] sm:$0xf] %vm4624, %v4283
  %4677 = vst.msk [vmem:[%s5 + $0xd0] sm:$0xf] %vm4624, %v4284
  %4678 = vst.msk [vmem:[%s5 + $0xd4] sm:$0xf] %vm4624, %v4285
  %4679 = vst.msk [vmem:[%s5 + $0xd8] sm:$0xf] %vm4624, %v4286
  %4680 = vst.msk [vmem:[%s5 + $0xdc] sm:$0xf] %vm4624, %v4287
  %4681 = vst.msk [vmem:[%s5 + $0xe0] sm:$0xf] %vm4624, %v4288
  %4682 = vst.msk [vmem:[%s5 + $0xe4] sm:$0xf] %vm4624, %v4289
  %4683 = vst.msk [vmem:[%s5 + $0xe8] sm:$0xf] %vm4624, %v4290
  %4684 = vst.msk [vmem:[%s5 + $0xec] sm:$0xf] %vm4624, %v4291
  %4685 = vst.msk [vmem:[%s5 + $0xf0] sm:$0xf] %vm4624, %v4292
  %4686 = vst.msk [vmem:[%s5 + $0xf4] sm:$0xf] %vm4624, %v4293
  %4687 = vst.msk [vmem:[%s5 + $0xf8] sm:$0xf] %vm4624, %v4294
  %4688 = vst.msk [vmem:[%s5 + $0xfc] sm:$0xf] %vm4624, %v4295
  %4689 = vst.msk [vmem:[%s5 + $0x100] sm:$0xf] %vm4624, %v4296
  %4690 = vst.msk [vmem:[%s5 + $0x104] sm:$0xf] %vm4624, %v4297
  %4691 = vst.msk [vmem:[%s5 + $0x108] sm:$0xf] %vm4624, %v4298
  %4692 = vst.msk [vmem:[%s5 + $0x10c] sm:$0xf] %vm4624, %v4299
  %4693 = vst.msk [vmem:[%s5 + $0x110] sm:$0xf] %vm4624, %v4300
  %4694 = vst.msk [vmem:[%s5 + $0x114] sm:$0xf] %vm4624, %v4301
  %4695 = vst.msk [vmem:[%s5 + $0x118] sm:$0xf] %vm4624, %v4302
  %4696 = vst.msk [vmem:[%s5 + $0x11c] sm:$0xf] %vm4624, %v4303
  %4697 = vst.msk [vmem:[%s5 + $0x120] sm:$0xf] %vm4624, %v4304
  %4698 = vst.msk [vmem:[%s5 + $0x124] sm:$0xf] %vm4624, %v4305
  %4699 = vst.msk [vmem:[%s5 + $0x128] sm:$0xf] %vm4624, %v4306
  %4700 = vst.msk [vmem:[%s5 + $0x12c] sm:$0xf] %vm4624, %v4307
  %4701 = vst.msk [vmem:[%s5 + $0x130] sm:$0xf] %vm4624, %v4308
  %4702 = vst.msk [vmem:[%s5 + $0x134] sm:$0xf] %vm4624, %v4309
  %4703 = vst.msk [vmem:[%s5 + $0x138] sm:$0xf] %vm4624, %v4310
  %4704 = vst.msk [vmem:[%s5 + $0x13c] sm:$0xf] %vm4624, %v4311
  %4705 = vst.msk [vmem:[%s5 + $0x140] sm:$0xf] %vm4624, %v4312
  %4706 = vst.msk [vmem:[%s5 + $0x144] sm:$0xf] %vm4624, %v4313
  %4707 = vst.msk [vmem:[%s5 + $0x148] sm:$0xf] %vm4624, %v4314
  %4708 = vst.msk [vmem:[%s5 + $0x14c] sm:$0xf] %vm4624, %v4315
  %4709 = vst.msk [vmem:[%s5 + $0x150] sm:$0xf] %vm4624, %v4316
  %4710 = vst.msk [vmem:[%s5 + $0x154] sm:$0xf] %vm4624, %v4317
  %4711 = vst.msk [vmem:[%s5 + $0x158] sm:$0xf] %vm4624, %v4318
  %4712 = vst.msk [vmem:[%s5 + $0x15c] sm:$0xf] %vm4624, %v4319
  %4713 = vst.msk [vmem:[%s5 + $0x160] sm:$0xf] %vm4624, %v4320
  %4714 = vst.msk [vmem:[%s5 + $0x164] sm:$0xf] %vm4624, %v4321
  %4715 = vst.msk [vmem:[%s5 + $0x168] sm:$0xf] %vm4624, %v4322
  %4716 = vst.msk [vmem:[%s5 + $0x16c] sm:$0xf] %vm4624, %v4323
  %4717 = vst.msk [vmem:[%s5 + $0x170] sm:$0xf] %vm4624, %v4324
  %4718 = vst.msk [vmem:[%s5 + $0x174] sm:$0xf] %vm4624, %v4325
  %4719 = vst.msk [vmem:[%s5 + $0x178] sm:$0xf] %vm4624, %v4326
  %4720 = vst.msk [vmem:[%s5 + $0x17c] sm:$0xf] %vm4624, %v4327
  %4721 = vst.msk [vmem:[%s5 + $0x180] sm:$0xf] %vm4624, %v4328
  %4722 = vst.msk [vmem:[%s5 + $0x184] sm:$0xf] %vm4624, %v4329
  %4723 = vst.msk [vmem:[%s5 + $0x188] sm:$0xf] %vm4624, %v4330
  %4724 = vst.msk [vmem:[%s5 + $0x18c] sm:$0xf] %vm4624, %v4331
  %4725 = vst.msk [vmem:[%s5 + $0x190] sm:$0xf] %vm4624, %v4332
  %4726 = vst.msk [vmem:[%s5 + $0x194] sm:$0xf] %vm4624, %v4333
  %4727 = vst.msk [vmem:[%s5 + $0x198] sm:$0xf] %vm4624, %v4334
  %4728 = vst.msk [vmem:[%s5 + $0x19c] sm:$0xf] %vm4624, %v4335
  %4729 = vst.msk [vmem:[%s5 + $0x1a0] sm:$0xf] %vm4624, %v4336
  %4730 = vst.msk [vmem:[%s5 + $0x1a4] sm:$0xf] %vm4624, %v4337
  %4731 = vst.msk [vmem:[%s5 + $0x1a8] sm:$0xf] %vm4624, %v4338
  %4732 = vst.msk [vmem:[%s5 + $0x1ac] sm:$0xf] %vm4624, %v4339
  %4733 = vst.msk [vmem:[%s5 + $0x1b0] sm:$0xf] %vm4624, %v4340
  %4734 = vst.msk [vmem:[%s5 + $0x1b4] sm:$0xf] %vm4624, %v4341
  %4735 = vst.msk [vmem:[%s5 + $0x1b8] sm:$0xf] %vm4624, %v4342
  %4736 = vst.msk [vmem:[%s5 + $0x1bc] sm:$0xf] %vm4624, %v4343
  %4737 = vst.msk [vmem:[%s5 + $0x1c0] sm:$0xf] %vm4624, %v4344
  %4738 = vst.msk [vmem:[%s5 + $0x1c4] sm:$0xf] %vm4624, %v4345
  %4739 = vst.msk [vmem:[%s5 + $0x1c8] sm:$0xf] %vm4624, %v4346
  %4740 = vst.msk [vmem:[%s5 + $0x1cc] sm:$0xf] %vm4624, %v4347
  %4741 = vst.msk [vmem:[%s5 + $0x1d0] sm:$0xf] %vm4624, %v4348
  %4742 = vst.msk [vmem:[%s5 + $0x1d4] sm:$0xf] %vm4624, %v4349
  %4743 = vst.msk [vmem:[%s5 + $0x1d8] sm:$0xf] %vm4624, %v4350
  %4744 = vst.msk [vmem:[%s5 + $0x1dc] sm:$0xf] %vm4624, %v4351
  %4745 = vst.msk [vmem:[%s5 + $0x1e0] sm:$0xf] %vm4624, %v4352
  %4746 = vst.msk [vmem:[%s5 + $0x1e4] sm:$0xf] %vm4624, %v4353
  %4747 = vst.msk [vmem:[%s5 + $0x1e8] sm:$0xf] %vm4624, %v4354
  %4748 = vst.msk [vmem:[%s5 + $0x1ec] sm:$0xf] %vm4624, %v4355
  %4749 = vst.msk [vmem:[%s5 + $0x1f0] sm:$0xf] %vm4624, %v4356
  %4750 = vst.msk [vmem:[%s5 + $0x1f4] sm:$0xf] %vm4624, %v4357
  %4751 = vst.msk [vmem:[%s5 + $0x1f8] sm:$0xf] %vm4624, %v4358
  %4752 = vst.msk [vmem:[%s5 + $0x1fc] sm:$0xf] %vm4624, %v4359
  %4753 = vst.msk [vmem:[%s5 + $0x200] sm:$0xf] %vm4624, %v4360
  %4754 = vst.msk [vmem:[%s5 + $0x204] sm:$0xf] %vm4624, %v4361
  %4755 = vst.msk [vmem:[%s5 + $0x208] sm:$0xf] %vm4624, %v4362
  %4756 = vst.msk [vmem:[%s5 + $0x20c] sm:$0xf] %vm4624, %v4363
  %4757 = vst.msk [vmem:[%s5 + $0x210] sm:$0xf] %vm4624, %v4364
  %4758 = vst.msk [vmem:[%s5 + $0x214] sm:$0xf] %vm4624, %v4365
  %4759 = vst.msk [vmem:[%s5 + $0x218] sm:$0xf] %vm4624, %v4366
  %4760 = vst.msk [vmem:[%s5 + $0x21c] sm:$0xf] %vm4624, %v4367
  %4761 = vst.msk [vmem:[%s5 + $0x220] sm:$0xf] %vm4624, %v4368
  %4762 = vst.msk [vmem:[%s5 + $0x224] sm:$0xf] %vm4624, %v4369
  %4763 = vst.msk [vmem:[%s5 + $0x228] sm:$0xf] %vm4624, %v4370
  %4764 = vst.msk [vmem:[%s5 + $0x22c] sm:$0xf] %vm4624, %v4371
  %4765 = vst.msk [vmem:[%s5 + $0x230] sm:$0xf] %vm4624, %v4372
  %4766 = vst.msk [vmem:[%s5 + $0x234] sm:$0xf] %vm4624, %v4373
  %4767 = vst.msk [vmem:[%s5 + $0x238] sm:$0xf] %vm4624, %v4374
  %4768 = vst.msk [vmem:[%s5 + $0x23c] sm:$0xf] %vm4624, %v4375
  %4769 = vst.msk [vmem:[%s5 + $0x240] sm:$0xf] %vm4624, %v4376
  %4770 = vst.msk [vmem:[%s5 + $0x244] sm:$0xf] %vm4624, %v4377
  %4771 = vst.msk [vmem:[%s5 + $0x248] sm:$0xf] %vm4624, %v4378
  %4772 = vst.msk [vmem:[%s5 + $0x24c] sm:$0xf] %vm4624, %v4379
  %4773 = vst.msk [vmem:[%s5 + $0x250] sm:$0xf] %vm4624, %v4380
  %4774 = vst.msk [vmem:[%s5 + $0x254] sm:$0xf] %vm4624, %v4381
  %4775 = vst.msk [vmem:[%s5 + $0x258] sm:$0xf] %vm4624, %v4382
  %4776 = vst.msk [vmem:[%s5 + $0x25c] sm:$0xf] %vm4624, %v4383
  %4777 = vst.msk [vmem:[%s5 + $0x260] sm:$0xf] %vm4624, %v4384
  %4778 = vst.msk [vmem:[%s5 + $0x264] sm:$0xf] %vm4624, %v4385
  %4779 = vst.msk [vmem:[%s5 + $0x268] sm:$0xf] %vm4624, %v4386
  %4780 = vst.msk [vmem:[%s5 + $0x26c] sm:$0xf] %vm4624, %v4387
  %4781 = vst.msk [vmem:[%s5 + $0x270] sm:$0xf] %vm4624, %v4388
  %4782 = vst.msk [vmem:[%s5 + $0x274] sm:$0xf] %vm4624, %v4389
  %4783 = vst.msk [vmem:[%s5 + $0x278] sm:$0xf] %vm4624, %v4390
  %4784 = vst.msk [vmem:[%s5 + $0x27c] sm:$0xf] %vm4624, %v4391
  %4785 = vst.msk [vmem:[%s5 + $0x280] sm:$0xf] %vm4624, %v4392
  %4786 = vst.msk [vmem:[%s5 + $0x284] sm:$0xf] %vm4624, %v4393
  %4787 = vst.msk [vmem:[%s5 + $0x288] sm:$0xf] %vm4624, %v4394
  %4788 = vst.msk [vmem:[%s5 + $0x28c] sm:$0xf] %vm4624, %v4395
  %4789 = vst.msk [vmem:[%s5 + $0x290] sm:$0xf] %vm4624, %v4396
  %4790 = vst.msk [vmem:[%s5 + $0x294] sm:$0xf] %vm4624, %v4397
  %4791 = vst.msk [vmem:[%s5 + $0x298] sm:$0xf] %vm4624, %v4398
  %4792 = vst.msk [vmem:[%s5 + $0x29c] sm:$0xf] %vm4624, %v4399
  %4793 = vst.msk [vmem:[%s5 + $0x2a0] sm:$0xf] %vm4624, %v4400
  %4794 = vst.msk [vmem:[%s5 + $0x2a4] sm:$0xf] %vm4624, %v4401
  %4795 = vst.msk [vmem:[%s5 + $0x2a8] sm:$0xf] %vm4624, %v4402
  %4796 = vst.msk [vmem:[%s5 + $0x2ac] sm:$0xf] %vm4624, %v4403
  %4797 = vst.msk [vmem:[%s5 + $0x2b0] sm:$0xf] %vm4624, %v4404
  %4798 = vst.msk [vmem:[%s5 + $0x2b4] sm:$0xf] %vm4624, %v4405
  %4799 = vst.msk [vmem:[%s5 + $0x2b8] sm:$0xf] %vm4624, %v4406
  %4800 = vst.msk [vmem:[%s5 + $0x2bc] sm:$0xf] %vm4624, %v4407
  %4801 = vst.msk [vmem:[%s5 + $0x2c0] sm:$0xf] %vm4624, %v4408
  %4802 = vst.msk [vmem:[%s5 + $0x2c4] sm:$0xf] %vm4624, %v4409
  %4803 = vst.msk [vmem:[%s5 + $0x2c8] sm:$0xf] %vm4624, %v4410
  %4804 = vst.msk [vmem:[%s5 + $0x2cc] sm:$0xf] %vm4624, %v4411
  %4805 = vst.msk [vmem:[%s5 + $0x2d0] sm:$0xf] %vm4624, %v4412
  %4806 = vst.msk [vmem:[%s5 + $0x2d4] sm:$0xf] %vm4624, %v4413
  %4807 = vst.msk [vmem:[%s5 + $0x2d8] sm:$0xf] %vm4624, %v4414
  %4808 = vst.msk [vmem:[%s5 + $0x2dc] sm:$0xf] %vm4624, %v4415
  %4809 = vst.msk [vmem:[%s5 + $0x2e0] sm:$0xf] %vm4624, %v4416
  %4810 = vst.msk [vmem:[%s5 + $0x2e4] sm:$0xf] %vm4624, %v4417
  %4811 = vst.msk [vmem:[%s5 + $0x2e8] sm:$0xf] %vm4624, %v4418
  %4812 = vst.msk [vmem:[%s5 + $0x2ec] sm:$0xf] %vm4624, %v4419
  %4813 = vst.msk [vmem:[%s5 + $0x2f0] sm:$0xf] %vm4624, %v4420
  %4814 = vst.msk [vmem:[%s5 + $0x2f4] sm:$0xf] %vm4624, %v4421
  %4815 = vst.msk [vmem:[%s5 + $0x2f8] sm:$0xf] %vm4624, %v4422
  %4816 = vst.msk [vmem:[%s5 + $0x2fc] sm:$0xf] %vm4624, %v4423
  %4817 = vst.msk [vmem:[%s5 + $0x300] sm:$0xf] %vm4624, %v4424
  %4818 = vst.msk [vmem:[%s5 + $0x304] sm:$0xf] %vm4624, %v4425
  %4819 = vst.msk [vmem:[%s5 + $0x308] sm:$0xf] %vm4624, %v4426
  %4820 = vst.msk [vmem:[%s5 + $0x30c] sm:$0xf] %vm4624, %v4427
  // Predicated region
  $region22: #{discriminator28_forward.7} parent=0 // pred_check
    _
  $region23: #{discriminator28_forward.7} parent=0 // pred_check_branch
    %4822 = sbr.rel (0) target = $region25
  $region24: #{discriminator28_forward.7} parent=0 // pred_region
    _
  $region25: #{discriminator28_forward.7} parent=0 // pred_fallthru
    _
  // Predicated region
  $region26: #{discriminator28_forward.7} parent=0 // pred_check
    _
  $region27: #{discriminator28_forward.7} parent=0 // pred_check_branch
    %4824 = sbr.rel (0) target = $region29
  $region28: #{discriminator28_forward.7} parent=0 // pred_region
    _
  $region29: #{discriminator28_forward.7} parent=0 // pred_fallthru
    _

// kernel: discriminator28_forward.8
$region0: #{discriminator28_forward.8}
  #allocation0 [shape = 'u32[]', space=smem, size = 0x4, offset = 0x4, fixed_abs, tag = 'smem constant byte address 0x4 - core index']
  #allocation1 [shape = 'u32[144,128]{1,0:T(1,128)}', space=vmem, size = 0x12000, scoped, tag = 'internal scratch']
  %s0 = inlined_call_operand.vmem [shape: bf16[392,512], index: 0, kind: input, shape index: {}]
  %s1 = inlined_call_operand.vmem [shape: bf16[512,32], index: 1, kind: input, shape index: {}]
  %s2 = inlined_call_operand.vmem [shape: f32[1,32], index: 2, kind: input, shape index: {}]
  %s3 = inlined_call_operand.vmem [shape: f32[1,32], index: 3, kind: input, shape index: {}]
  %s4 = inlined_call_operand.vmem [shape: f32[1,32], index: 4, kind: input, shape index: {}]
  %s5 = inlined_call_operand.vmem [shape: bf16[392,32], index: 5, kind: output, shape index: {}]
  %s6 = sld [smem:[#allocation0]]
  $region30: #{discriminator28_forward.8} parent=0
    _
  %s8 = ssub.s32 1, %s6
  %s9 = scalar_select 0, %s8, %s6
  // Predicated region
  $region2: #{discriminator28_forward.8} parent=0 // pred_check
    _
  $region3: #{discriminator28_forward.8} parent=0 // pred_check_branch
    %11 = sbr.rel (0) target = $region5
  $region4: #{discriminator28_forward.8} parent=0 // pred_region
    _
  $region5: #{discriminator28_forward.8} parent=0 // pred_fallthru
    _
  // Predicated region
  $region6: #{discriminator28_forward.8} parent=0 // pred_check
    _
  $region7: #{discriminator28_forward.8} parent=0 // pred_check_branch
    %13 = sbr.rel (0) target = $region9
  $region8: #{discriminator28_forward.8} parent=0 // pred_region
    _
  $region9: #{discriminator28_forward.8} parent=0 // pred_fallthru
    _
  // Predicated region
  $region10: #{discriminator28_forward.8} parent=0 // pred_check
    _
  $region11: #{discriminator28_forward.8} parent=0 // pred_check_branch
    %15 = sbr.rel (0) target = $region13
  $region12: #{discriminator28_forward.8} parent=0 // pred_region
    _
  $region13: #{discriminator28_forward.8} parent=0 // pred_fallthru
    _
  // Predicated region
  $region14: #{discriminator28_forward.8} parent=0 // pred_check
    _
  $region15: #{discriminator28_forward.8} parent=0 // pred_check_branch
    %17 = sbr.rel (0) target = $region17
  $region16: #{discriminator28_forward.8} parent=0 // pred_region
    _
  $region17: #{discriminator28_forward.8} parent=0 // pred_fallthru
    _
  // Predicated region
  $region18: #{discriminator28_forward.8} parent=0 // pred_check
    _
  $region19: #{discriminator28_forward.8} parent=0 // pred_check_branch
    %19 = sbr.rel (0) target = $region21
  $region20: #{discriminator28_forward.8} parent=0 // pred_region
    _
  $region21: #{discriminator28_forward.8} parent=0 // pred_fallthru
    _
  %v21 = vld [vmem:[%s0] sm:$0xff]
  %v22 = vld [vmem:[%s0 + $0x8] sm:$0xff]
  %v23 = vld [vmem:[%s0 + $0x10] sm:$0xff]
  %v24 = vld [vmem:[%s0 + $0x18] sm:$0xff]
  %v25 = vld [vmem:[%s0 + $0x20] sm:$0xff]
  %v26 = vld [vmem:[%s0 + $0x28] sm:$0xff]
  %v27 = vld [vmem:[%s0 + $0x30] sm:$0xff]
  %v28 = vld [vmem:[%s0 + $0x38] sm:$0xff]
  %v29 = vld [vmem:[%s0 + $0x40] sm:$0xff]
  %v30 = vld [vmem:[%s0 + $0x48] sm:$0xff]
  %v31 = vld [vmem:[%s0 + $0x50] sm:$0xff]
  %v32 = vld [vmem:[%s0 + $0x58] sm:$0xff]
  %v33 = vld [vmem:[%s0 + $0x60] sm:$0xff]
  %v34 = vld [vmem:[%s0 + $0x68] sm:$0xff]
  %v35 = vld [vmem:[%s0 + $0x70] sm:$0xff]
  %v36 = vld [vmem:[%s0 + $0x78] sm:$0xff]
  %v37 = vld [vmem:[%s0 + $0x80] sm:$0xff]
  %v38 = vld [vmem:[%s0 + $0x88] sm:$0xff]
  %v39 = vld [vmem:[%s0 + $0x90] sm:$0xff]
  %v40 = vld [vmem:[%s0 + $0x98] sm:$0xff]
  %v41 = vld [vmem:[%s0 + $0xa0] sm:$0xff]
  %v42 = vld [vmem:[%s0 + $0xa8] sm:$0xff]
  %v43 = vld [vmem:[%s0 + $0xb0] sm:$0xff]
  %v44 = vld [vmem:[%s0 + $0xb8] sm:$0xff]
  %v45 = vld [vmem:[%s0 + $0xc0] sm:$0xff]
  %v46 = vld [vmem:[%s0 + $0xc8] sm:$0xff]
  %v47 = vld [vmem:[%s0 + $0xd0] sm:$0xff]
  %v48 = vld [vmem:[%s0 + $0xd8] sm:$0xff]
  %v49 = vld [vmem:[%s0 + $0xe0] sm:$0xff]
  %v50 = vld [vmem:[%s0 + $0xe8] sm:$0xff]
  %v51 = vld [vmem:[%s0 + $0xf0] sm:$0xff]
  %v52 = vld [vmem:[%s0 + $0xf8] sm:$0xff]
  %v53 = vld [vmem:[%s0 + $0x100] sm:$0xff]
  %v54 = vld [vmem:[%s0 + $0x108] sm:$0xff]
  %v55 = vld [vmem:[%s0 + $0x110] sm:$0xff]
  %v56 = vld [vmem:[%s0 + $0x118] sm:$0xff]
  %v57 = vld [vmem:[%s0 + $0x120] sm:$0xff]
  %v58 = vld [vmem:[%s0 + $0x128] sm:$0xff]
  %v59 = vld [vmem:[%s0 + $0x130] sm:$0xff]
  %v60 = vld [vmem:[%s0 + $0x138] sm:$0xff]
  %v61 = vld [vmem:[%s0 + $0x140] sm:$0xff]
  %v62 = vld [vmem:[%s0 + $0x148] sm:$0xff]
  %v63 = vld [vmem:[%s0 + $0x150] sm:$0xff]
  %v64 = vld [vmem:[%s0 + $0x158] sm:$0xff]
  %v65 = vld [vmem:[%s0 + $0x160] sm:$0xff]
  %v66 = vld [vmem:[%s0 + $0x168] sm:$0xff]
  %v67 = vld [vmem:[%s0 + $0x170] sm:$0xff]
  %v68 = vld [vmem:[%s0 + $0x178] sm:$0xff]
  %v69 = vld [vmem:[%s0 + $0x180] sm:$0xff]
  %v70 = vld [vmem:[%s0 + $0x188] sm:$0xff]
  %v71 = vld [vmem:[%s0 + $0x190] sm:$0xff]
  %v72 = vld [vmem:[%s0 + $0x198] sm:$0xff]
  %v73 = vld [vmem:[%s0 + $0x1a0] sm:$0xff]
  %v74 = vld [vmem:[%s0 + $0x1a8] sm:$0xff]
  %v75 = vld [vmem:[%s0 + $0x1b0] sm:$0xff]
  %v76 = vld [vmem:[%s0 + $0x1b8] sm:$0xff]
  %v77 = vld [vmem:[%s0 + $0x1c0] sm:$0xff]
  %v78 = vld [vmem:[%s0 + $0x1c8] sm:$0xff]
  %v79 = vld [vmem:[%s0 + $0x1d0] sm:$0xff]
  %v80 = vld [vmem:[%s0 + $0x1d8] sm:$0xff]
  %v81 = vld [vmem:[%s0 + $0x1e0] sm:$0xff]
  %v82 = vld [vmem:[%s0 + $0x1e8] sm:$0xff]
  %v83 = vld [vmem:[%s0 + $0x1f0] sm:$0xff]
  %v84 = vld [vmem:[%s0 + $0x1f8] sm:$0xff]
  %v85 = vld [vmem:[%s0 + $0x200] sm:$0xff]
  %v86 = vld [vmem:[%s0 + $0x208] sm:$0xff]
  %v87 = vld [vmem:[%s0 + $0x210] sm:$0xff]
  %v88 = vld [vmem:[%s0 + $0x218] sm:$0xff]
  %v89 = vld [vmem:[%s0 + $0x220] sm:$0xff]
  %v90 = vld [vmem:[%s0 + $0x228] sm:$0xff]
  %v91 = vld [vmem:[%s0 + $0x230] sm:$0xff]
  %v92 = vld [vmem:[%s0 + $0x238] sm:$0xff]
  %v93 = vld [vmem:[%s0 + $0x240] sm:$0xff]
  %v94 = vld [vmem:[%s0 + $0x248] sm:$0xff]
  %v95 = vld [vmem:[%s0 + $0x250] sm:$0xff]
  %v96 = vld [vmem:[%s0 + $0x258] sm:$0xff]
  %v97 = vld [vmem:[%s0 + $0x260] sm:$0xff]
  %v98 = vld [vmem:[%s0 + $0x268] sm:$0xff]
  %v99 = vld [vmem:[%s0 + $0x270] sm:$0xff]
  %v100 = vld [vmem:[%s0 + $0x278] sm:$0xff]
  %v101 = vld [vmem:[%s0 + $0x280] sm:$0xff]
  %v102 = vld [vmem:[%s0 + $0x288] sm:$0xff]
  %v103 = vld [vmem:[%s0 + $0x290] sm:$0xff]
  %v104 = vld [vmem:[%s0 + $0x298] sm:$0xff]
  %v105 = vld [vmem:[%s0 + $0x2a0] sm:$0xff]
  %v106 = vld [vmem:[%s0 + $0x2a8] sm:$0xff]
  %v107 = vld [vmem:[%s0 + $0x2b0] sm:$0xff]
  %v108 = vld [vmem:[%s0 + $0x2b8] sm:$0xff]
  %v109 = vld [vmem:[%s0 + $0x2c0] sm:$0xff]
  %v110 = vld [vmem:[%s0 + $0x2c8] sm:$0xff]
  %v111 = vld [vmem:[%s0 + $0x2d0] sm:$0xff]
  %v112 = vld [vmem:[%s0 + $0x2d8] sm:$0xff]
  %v113 = vld [vmem:[%s0 + $0x2e0] sm:$0xff]
  %v114 = vld [vmem:[%s0 + $0x2e8] sm:$0xff]
  %v115 = vld [vmem:[%s0 + $0x2f0] sm:$0xff]
  %v116 = vld [vmem:[%s0 + $0x2f8] sm:$0xff]
  %v117 = vld [vmem:[%s0 + $0x300] sm:$0xff]
  %v118 = vld [vmem:[%s0 + $0x308] sm:$0xff]
  %v119 = vld [vmem:[%s1] sm:$0xf]
  %v120 = vld [vmem:[%s1 + $0x4] sm:$0xf]
  %v121 = vld [vmem:[%s1 + $0x8] sm:$0xf]
  %v122 = vld [vmem:[%s1 + $0xc] sm:$0xf]
  %v123 = vld [vmem:[%s1 + $0x10] sm:$0xf]
  %v124 = vld [vmem:[%s1 + $0x14] sm:$0xf]
  %v125 = vld [vmem:[%s1 + $0x18] sm:$0xf]
  %v126 = vld [vmem:[%s1 + $0x1c] sm:$0xf]
  %v127 = vld [vmem:[%s1 + $0x20] sm:$0xf]
  %v128 = vld [vmem:[%s1 + $0x24] sm:$0xf]
  %v129 = vld [vmem:[%s1 + $0x28] sm:$0xf]
  %v130 = vld [vmem:[%s1 + $0x2c] sm:$0xf]
  %v131 = vld [vmem:[%s1 + $0x30] sm:$0xf]
  %v132 = vld [vmem:[%s1 + $0x34] sm:$0xf]
  %v133 = vld [vmem:[%s1 + $0x38] sm:$0xf]
  %v134 = vld [vmem:[%s1 + $0x3c] sm:$0xf]
  %v135 = vld [vmem:[%s1 + $0x40] sm:$0xf]
  %v136 = vld [vmem:[%s1 + $0x44] sm:$0xf]
  %v137 = vld [vmem:[%s1 + $0x48] sm:$0xf]
  %v138 = vld [vmem:[%s1 + $0x4c] sm:$0xf]
  %v139 = vld [vmem:[%s1 + $0x50] sm:$0xf]
  %v140 = vld [vmem:[%s1 + $0x54] sm:$0xf]
  %v141 = vld [vmem:[%s1 + $0x58] sm:$0xf]
  %v142 = vld [vmem:[%s1 + $0x5c] sm:$0xf]
  %v143 = vld [vmem:[%s1 + $0x60] sm:$0xf]
  %v144 = vld [vmem:[%s1 + $0x64] sm:$0xf]
  %v145 = vld [vmem:[%s1 + $0x68] sm:$0xf]
  %v146 = vld [vmem:[%s1 + $0x6c] sm:$0xf]
  %v147 = vld [vmem:[%s1 + $0x70] sm:$0xf]
  %v148 = vld [vmem:[%s1 + $0x74] sm:$0xf]
  %v149 = vld [vmem:[%s1 + $0x78] sm:$0xf]
  %v150 = vld [vmem:[%s1 + $0x7c] sm:$0xf]
  %v151 = vld [vmem:[%s1 + $0x80] sm:$0xf]
  %v152 = vld [vmem:[%s1 + $0x84] sm:$0xf]
  %v153 = vld [vmem:[%s1 + $0x88] sm:$0xf]
  %v154 = vld [vmem:[%s1 + $0x8c] sm:$0xf]
  %v155 = vld [vmem:[%s1 + $0x90] sm:$0xf]
  %v156 = vld [vmem:[%s1 + $0x94] sm:$0xf]
  %v157 = vld [vmem:[%s1 + $0x98] sm:$0xf]
  %v158 = vld [vmem:[%s1 + $0x9c] sm:$0xf]
  %v159 = vld [vmem:[%s1 + $0xa0] sm:$0xf]
  %v160 = vld [vmem:[%s1 + $0xa4] sm:$0xf]
  %v161 = vld [vmem:[%s1 + $0xa8] sm:$0xf]
  %v162 = vld [vmem:[%s1 + $0xac] sm:$0xf]
  %v163 = vld [vmem:[%s1 + $0xb0] sm:$0xf]
  %v164 = vld [vmem:[%s1 + $0xb4] sm:$0xf]
  %v165 = vld [vmem:[%s1 + $0xb8] sm:$0xf]
  %v166 = vld [vmem:[%s1 + $0xbc] sm:$0xf]
  %v167 = vld [vmem:[%s1 + $0xc0] sm:$0xf]
  %v168 = vld [vmem:[%s1 + $0xc4] sm:$0xf]
  %v169 = vld [vmem:[%s1 + $0xc8] sm:$0xf]
  %v170 = vld [vmem:[%s1 + $0xcc] sm:$0xf]
  %v171 = vld [vmem:[%s1 + $0xd0] sm:$0xf]
  %v172 = vld [vmem:[%s1 + $0xd4] sm:$0xf]
  %v173 = vld [vmem:[%s1 + $0xd8] sm:$0xf]
  %v174 = vld [vmem:[%s1 + $0xdc] sm:$0xf]
  %v175 = vld [vmem:[%s1 + $0xe0] sm:$0xf]
  %v176 = vld [vmem:[%s1 + $0xe4] sm:$0xf]
  %v177 = vld [vmem:[%s1 + $0xe8] sm:$0xf]
  %v178 = vld [vmem:[%s1 + $0xec] sm:$0xf]
  %v179 = vld [vmem:[%s1 + $0xf0] sm:$0xf]
  %v180 = vld [vmem:[%s1 + $0xf4] sm:$0xf]
  %v181 = vld [vmem:[%s1 + $0xf8] sm:$0xf]
  %v182 = vld [vmem:[%s1 + $0xfc] sm:$0xf]
  %v183 = vld [vmem:[%s2] sm:$0x1]
  %v185 = vlaneseq
  %v186 = vshrl.u32 %v185, 7
  %v187 = vsub.s32 0, %v186
  %v188 = vrot.slane %v183, %v187
  %v288 = vunpack.c.l.b16 %v21
  %v289 = vunpack.c.h.b16 %v21
  %v290 = vunpack.c.l.b16 %v22
  %v291 = vunpack.c.h.b16 %v22
  %v292 = vunpack.c.l.b16 %v23
  %v293 = vunpack.c.h.b16 %v23
  %v294 = vunpack.c.l.b16 %v24
  %v295 = vunpack.c.h.b16 %v24
  %v296 = vunpack.c.l.b16 %v25
  %v297 = vunpack.c.h.b16 %v25
  %v298 = vunpack.c.l.b16 %v26
  %v299 = vunpack.c.h.b16 %v26
  %v300 = vunpack.c.l.b16 %v27
  %v301 = vunpack.c.h.b16 %v27
  %v302 = vunpack.c.l.b16 %v28
  %v303 = vunpack.c.h.b16 %v28
  %v304 = vunpack.c.l.b16 %v29
  %v305 = vunpack.c.h.b16 %v29
  %v306 = vunpack.c.l.b16 %v30
  %v307 = vunpack.c.h.b16 %v30
  %v308 = vunpack.c.l.b16 %v31
  %v309 = vunpack.c.h.b16 %v31
  %v310 = vunpack.c.l.b16 %v32
  %v311 = vunpack.c.h.b16 %v32
  %v312 = vunpack.c.l.b16 %v33
  %v313 = vunpack.c.h.b16 %v33
  %v314 = vunpack.c.l.b16 %v34
  %v315 = vunpack.c.h.b16 %v34
  %v316 = vunpack.c.l.b16 %v35
  %v317 = vunpack.c.h.b16 %v35
  %v318 = vunpack.c.l.b16 %v36
  %v319 = vunpack.c.h.b16 %v36
  %v320 = vunpack.c.l.b16 %v37
  %v321 = vunpack.c.h.b16 %v37
  %v322 = vunpack.c.l.b16 %v38
  %v323 = vunpack.c.h.b16 %v38
  %v324 = vunpack.c.l.b16 %v39
  %v325 = vunpack.c.h.b16 %v39
  %v326 = vunpack.c.l.b16 %v40
  %v327 = vunpack.c.h.b16 %v40
  %v328 = vunpack.c.l.b16 %v41
  %v329 = vunpack.c.h.b16 %v41
  %v330 = vunpack.c.l.b16 %v42
  %v331 = vunpack.c.h.b16 %v42
  %v332 = vunpack.c.l.b16 %v43
  %v333 = vunpack.c.h.b16 %v43
  %v334 = vunpack.c.l.b16 %v44
  %v335 = vunpack.c.h.b16 %v44
  %v336 = vunpack.c.l.b16 %v45
  %v337 = vunpack.c.h.b16 %v45
  %v338 = vunpack.c.l.b16 %v46
  %v339 = vunpack.c.h.b16 %v46
  %v340 = vunpack.c.l.b16 %v47
  %v341 = vunpack.c.h.b16 %v47
  %v342 = vunpack.c.l.b16 %v48
  %v343 = vunpack.c.h.b16 %v48
  %v344 = vunpack.c.l.b16 %v49
  %v345 = vunpack.c.h.b16 %v49
  %v346 = vunpack.c.l.b16 %v50
  %v347 = vunpack.c.h.b16 %v50
  %v348 = vunpack.c.l.b16 %v51
  %v349 = vunpack.c.h.b16 %v51
  %v350 = vunpack.c.l.b16 %v52
  %v351 = vunpack.c.h.b16 %v52
  %v352 = vunpack.c.l.b16 %v53
  %v353 = vunpack.c.h.b16 %v53
  %v354 = vunpack.c.l.b16 %v54
  %v355 = vunpack.c.h.b16 %v54
  %v356 = vunpack.c.l.b16 %v55
  %v357 = vunpack.c.h.b16 %v55
  %v358 = vunpack.c.l.b16 %v56
  %v359 = vunpack.c.h.b16 %v56
  %v360 = vunpack.c.l.b16 %v57
  %v361 = vunpack.c.h.b16 %v57
  %v362 = vunpack.c.l.b16 %v58
  %v363 = vunpack.c.h.b16 %v58
  %v364 = vunpack.c.l.b16 %v59
  %v365 = vunpack.c.h.b16 %v59
  %v366 = vunpack.c.l.b16 %v60
  %v367 = vunpack.c.h.b16 %v60
  %v368 = vunpack.c.l.b16 %v61
  %v369 = vunpack.c.h.b16 %v61
  %v370 = vunpack.c.l.b16 %v62
  %v371 = vunpack.c.h.b16 %v62
  %v372 = vunpack.c.l.b16 %v63
  %v373 = vunpack.c.h.b16 %v63
  %v374 = vunpack.c.l.b16 %v64
  %v375 = vunpack.c.h.b16 %v64
  %v376 = vunpack.c.l.b16 %v65
  %v377 = vunpack.c.h.b16 %v65
  %v378 = vunpack.c.l.b16 %v66
  %v379 = vunpack.c.h.b16 %v66
  %v380 = vunpack.c.l.b16 %v67
  %v381 = vunpack.c.h.b16 %v67
  %v382 = vunpack.c.l.b16 %v68
  %v383 = vunpack.c.h.b16 %v68
  %v384 = vunpack.c.l.b16 %v69
  %v385 = vunpack.c.h.b16 %v69
  %v386 = vunpack.c.l.b16 %v70
  %v387 = vunpack.c.h.b16 %v70
  %v388 = vunpack.c.l.b16 %v71
  %v389 = vunpack.c.h.b16 %v71
  %v390 = vunpack.c.l.b16 %v72
  %v391 = vunpack.c.h.b16 %v72
  %v392 = vunpack.c.l.b16 %v73
  %v393 = vunpack.c.h.b16 %v73
  %v394 = vunpack.c.l.b16 %v74
  %v395 = vunpack.c.h.b16 %v74
  %v396 = vunpack.c.l.b16 %v75
  %v397 = vunpack.c.h.b16 %v75
  %v398 = vunpack.c.l.b16 %v76
  %v399 = vunpack.c.h.b16 %v76
  %v400 = vunpack.c.l.b16 %v77
  %v401 = vunpack.c.h.b16 %v77
  %v402 = vunpack.c.l.b16 %v78
  %v403 = vunpack.c.h.b16 %v78
  %v404 = vunpack.c.l.b16 %v79
  %v405 = vunpack.c.h.b16 %v79
  %v406 = vunpack.c.l.b16 %v80
  %v407 = vunpack.c.h.b16 %v80
  %v408 = vunpack.c.l.b16 %v81
  %v409 = vunpack.c.h.b16 %v81
  %v410 = vunpack.c.l.b16 %v82
  %v411 = vunpack.c.h.b16 %v82
  %v412 = vunpack.c.l.b16 %v83
  %v413 = vunpack.c.h.b16 %v83
  %v414 = vunpack.c.l.b16 %v84
  %v415 = vunpack.c.h.b16 %v84
  %v416 = vunpack.c.l.b16 %v85
  %v417 = vunpack.c.h.b16 %v85
  %v418 = vunpack.c.l.b16 %v86
  %v419 = vunpack.c.h.b16 %v86
  %v420 = vunpack.c.l.b16 %v87
  %v421 = vunpack.c.h.b16 %v87
  %v422 = vunpack.c.l.b16 %v88
  %v423 = vunpack.c.h.b16 %v88
  %v424 = vunpack.c.l.b16 %v89
  %v425 = vunpack.c.h.b16 %v89
  %v426 = vunpack.c.l.b16 %v90
  %v427 = vunpack.c.h.b16 %v90
  %v428 = vunpack.c.l.b16 %v91
  %v429 = vunpack.c.h.b16 %v91
  %v430 = vunpack.c.l.b16 %v92
  %v431 = vunpack.c.h.b16 %v92
  %v432 = vunpack.c.l.b16 %v93
  %v433 = vunpack.c.h.b16 %v93
  %v434 = vunpack.c.l.b16 %v94
  %v435 = vunpack.c.h.b16 %v94
  %v436 = vunpack.c.l.b16 %v95
  %v437 = vunpack.c.h.b16 %v95
  %v438 = vunpack.c.l.b16 %v96
  %v439 = vunpack.c.h.b16 %v96
  %v440 = vunpack.c.l.b16 %v97
  %v441 = vunpack.c.h.b16 %v97
  %v442 = vunpack.c.l.b16 %v98
  %v443 = vunpack.c.h.b16 %v98
  %v444 = vunpack.c.l.b16 %v99
  %v445 = vunpack.c.h.b16 %v99
  %v446 = vunpack.c.l.b16 %v100
  %v447 = vunpack.c.h.b16 %v100
  %v448 = vunpack.c.l.b16 %v101
  %v449 = vunpack.c.h.b16 %v101
  %v450 = vunpack.c.l.b16 %v102
  %v451 = vunpack.c.h.b16 %v102
  %v452 = vunpack.c.l.b16 %v103
  %v453 = vunpack.c.h.b16 %v103
  %v454 = vunpack.c.l.b16 %v104
  %v455 = vunpack.c.h.b16 %v104
  %v456 = vunpack.c.l.b16 %v105
  %v457 = vunpack.c.h.b16 %v105
  %v458 = vunpack.c.l.b16 %v106
  %v459 = vunpack.c.h.b16 %v106
  %v460 = vunpack.c.l.b16 %v107
  %v461 = vunpack.c.h.b16 %v107
  %v462 = vunpack.c.l.b16 %v108
  %v463 = vunpack.c.h.b16 %v108
  %v464 = vunpack.c.l.b16 %v109
  %v465 = vunpack.c.h.b16 %v109
  %v466 = vunpack.c.l.b16 %v110
  %v467 = vunpack.c.h.b16 %v110
  %v468 = vunpack.c.l.b16 %v111
  %v469 = vunpack.c.h.b16 %v111
  %v470 = vunpack.c.l.b16 %v112
  %v471 = vunpack.c.h.b16 %v112
  %v472 = vunpack.c.l.b16 %v113
  %v473 = vunpack.c.h.b16 %v113
  %v474 = vunpack.c.l.b16 %v114
  %v475 = vunpack.c.h.b16 %v114
  %v476 = vunpack.c.l.b16 %v115
  %v477 = vunpack.c.h.b16 %v115
  %v478 = vunpack.c.l.b16 %v116
  %v479 = vunpack.c.h.b16 %v116
  %v480 = vunpack.c.l.b16 %v117
  %v481 = vunpack.c.h.b16 %v117
  %v482 = vunpack.c.l.b16 %v118
  %v483 = vunpack.c.h.b16 %v118
  %v484 = vpack.c.b16 %v292, %v288
  %v485 = vpack.c.b16 %v293, %v289
  %v486 = vpack.c.b16 %v294, %v290
  %v487 = vpack.c.b16 %v295, %v291
  %v488 = vpack.c.b16 %v300, %v296
  %v489 = vpack.c.b16 %v301, %v297
  %v490 = vpack.c.b16 %v302, %v298
  %v491 = vpack.c.b16 %v303, %v299
  %v492 = vpack.c.b16 %v308, %v304
  %v493 = vpack.c.b16 %v309, %v305
  %v494 = vpack.c.b16 %v310, %v306
  %v495 = vpack.c.b16 %v311, %v307
  %v496 = vpack.c.b16 %v316, %v312
  %v497 = vpack.c.b16 %v317, %v313
  %v498 = vpack.c.b16 %v318, %v314
  %v499 = vpack.c.b16 %v319, %v315
  %v500 = vpack.c.b16 %v324, %v320
  %v501 = vpack.c.b16 %v325, %v321
  %v502 = vpack.c.b16 %v326, %v322
  %v503 = vpack.c.b16 %v327, %v323
  %v504 = vpack.c.b16 %v332, %v328
  %v505 = vpack.c.b16 %v333, %v329
  %v506 = vpack.c.b16 %v334, %v330
  %v507 = vpack.c.b16 %v335, %v331
  %v508 = vpack.c.b16 %v340, %v336
  %v509 = vpack.c.b16 %v341, %v337
  %v510 = vpack.c.b16 %v342, %v338
  %v511 = vpack.c.b16 %v343, %v339
  %v512 = vpack.c.b16 %v348, %v344
  %v513 = vpack.c.b16 %v349, %v345
  %v514 = vpack.c.b16 %v350, %v346
  %v515 = vpack.c.b16 %v351, %v347
  %v516 = vpack.c.b16 %v356, %v352
  %v517 = vpack.c.b16 %v357, %v353
  %v518 = vpack.c.b16 %v358, %v354
  %v519 = vpack.c.b16 %v359, %v355
  %v520 = vpack.c.b16 %v364, %v360
  %v521 = vpack.c.b16 %v365, %v361
  %v522 = vpack.c.b16 %v366, %v362
  %v523 = vpack.c.b16 %v367, %v363
  %v524 = vpack.c.b16 %v372, %v368
  %v525 = vpack.c.b16 %v373, %v369
  %v526 = vpack.c.b16 %v374, %v370
  %v527 = vpack.c.b16 %v375, %v371
  %v528 = vpack.c.b16 %v380, %v376
  %v529 = vpack.c.b16 %v381, %v377
  %v530 = vpack.c.b16 %v382, %v378
  %v531 = vpack.c.b16 %v383, %v379
  %v532 = vpack.c.b16 %v388, %v384
  %v533 = vpack.c.b16 %v389, %v385
  %v534 = vpack.c.b16 %v390, %v386
  %v535 = vpack.c.b16 %v391, %v387
  %v536 = vpack.c.b16 %v396, %v392
  %v537 = vpack.c.b16 %v397, %v393
  %v538 = vpack.c.b16 %v398, %v394
  %v539 = vpack.c.b16 %v399, %v395
  %v540 = vpack.c.b16 %v404, %v400
  %v541 = vpack.c.b16 %v405, %v401
  %v542 = vpack.c.b16 %v406, %v402
  %v543 = vpack.c.b16 %v407, %v403
  %v544 = vpack.c.b16 %v412, %v408
  %v545 = vpack.c.b16 %v413, %v409
  %v546 = vpack.c.b16 %v414, %v410
  %v547 = vpack.c.b16 %v415, %v411
  %v548 = vpack.c.b16 %v420, %v416
  %v549 = vpack.c.b16 %v421, %v417
  %v550 = vpack.c.b16 %v422, %v418
  %v551 = vpack.c.b16 %v423, %v419
  %v552 = vpack.c.b16 %v428, %v424
  %v553 = vpack.c.b16 %v429, %v425
  %v554 = vpack.c.b16 %v430, %v426
  %v555 = vpack.c.b16 %v431, %v427
  %v556 = vpack.c.b16 %v436, %v432
  %v557 = vpack.c.b16 %v437, %v433
  %v558 = vpack.c.b16 %v438, %v434
  %v559 = vpack.c.b16 %v439, %v435
  %v560 = vpack.c.b16 %v444, %v440
  %v561 = vpack.c.b16 %v445, %v441
  %v562 = vpack.c.b16 %v446, %v442
  %v563 = vpack.c.b16 %v447, %v443
  %v564 = vpack.c.b16 %v452, %v448
  %v565 = vpack.c.b16 %v453, %v449
  %v566 = vpack.c.b16 %v454, %v450
  %v567 = vpack.c.b16 %v455, %v451
  %v568 = vpack.c.b16 %v460, %v456
  %v569 = vpack.c.b16 %v461, %v457
  %v570 = vpack.c.b16 %v462, %v458
  %v571 = vpack.c.b16 %v463, %v459
  %v572 = vpack.c.b16 %v468, %v464
  %v573 = vpack.c.b16 %v469, %v465
  %v574 = vpack.c.b16 %v470, %v466
  %v575 = vpack.c.b16 %v471, %v467
  %v576 = vpack.c.b16 %v476, %v472
  %v577 = vpack.c.b16 %v477, %v473
  %v578 = vpack.c.b16 %v478, %v474
  %v579 = vpack.c.b16 %v479, %v475
  %v580 = vpack.c.b16 %v480, %v480
  %v581 = vpack.c.b16 %v481, %v481
  %v582 = vpack.c.b16 %v482, %v482
  %v583 = vpack.c.b16 %v483, %v483
  %v748 = vunpack.c.l.b16 %v119
  %v749 = vunpack.c.l.b16 %v120
  %v750 = vunpack.c.l.b16 %v121
  %v751 = vunpack.c.l.b16 %v122
  %v752 = vunpack.c.l.b16 %v123
  %v753 = vunpack.c.l.b16 %v124
  %v754 = vunpack.c.l.b16 %v125
  %v755 = vunpack.c.l.b16 %v126
  %v756 = vunpack.c.l.b16 %v127
  %v757 = vunpack.c.l.b16 %v128
  %v758 = vunpack.c.l.b16 %v129
  %v759 = vunpack.c.l.b16 %v130
  %v760 = vunpack.c.l.b16 %v131
  %v761 = vunpack.c.l.b16 %v132
  %v762 = vunpack.c.l.b16 %v133
  %v763 = vunpack.c.l.b16 %v134
  %v764 = vunpack.c.l.b16 %v135
  %v765 = vunpack.c.l.b16 %v136
  %v766 = vunpack.c.l.b16 %v137
  %v767 = vunpack.c.l.b16 %v138
  %v768 = vunpack.c.l.b16 %v139
  %v769 = vunpack.c.l.b16 %v140
  %v770 = vunpack.c.l.b16 %v141
  %v771 = vunpack.c.l.b16 %v142
  %v772 = vunpack.c.l.b16 %v143
  %v773 = vunpack.c.l.b16 %v144
  %v774 = vunpack.c.l.b16 %v145
  %v775 = vunpack.c.l.b16 %v146
  %v776 = vunpack.c.l.b16 %v147
  %v777 = vunpack.c.l.b16 %v148
  %v778 = vunpack.c.l.b16 %v149
  %v779 = vunpack.c.l.b16 %v150
  %v780 = vunpack.c.l.b16 %v151
  %v781 = vunpack.c.l.b16 %v152
  %v782 = vunpack.c.l.b16 %v153
  %v783 = vunpack.c.l.b16 %v154
  %v784 = vunpack.c.l.b16 %v155
  %v785 = vunpack.c.l.b16 %v156
  %v786 = vunpack.c.l.b16 %v157
  %v787 = vunpack.c.l.b16 %v158
  %v788 = vunpack.c.l.b16 %v159
  %v789 = vunpack.c.l.b16 %v160
  %v790 = vunpack.c.l.b16 %v161
  %v791 = vunpack.c.l.b16 %v162
  %v792 = vunpack.c.l.b16 %v163
  %v793 = vunpack.c.l.b16 %v164
  %v794 = vunpack.c.l.b16 %v165
  %v795 = vunpack.c.l.b16 %v166
  %v796 = vunpack.c.l.b16 %v167
  %v797 = vunpack.c.l.b16 %v168
  %v798 = vunpack.c.l.b16 %v169
  %v799 = vunpack.c.l.b16 %v170
  %v800 = vunpack.c.l.b16 %v171
  %v801 = vunpack.c.l.b16 %v172
  %v802 = vunpack.c.l.b16 %v173
  %v803 = vunpack.c.l.b16 %v174
  %v804 = vunpack.c.l.b16 %v175
  %v805 = vunpack.c.l.b16 %v176
  %v806 = vunpack.c.l.b16 %v177
  %v807 = vunpack.c.l.b16 %v178
  %v808 = vunpack.c.l.b16 %v179
  %v809 = vunpack.c.l.b16 %v180
  %v810 = vunpack.c.l.b16 %v181
  %v811 = vunpack.c.l.b16 %v182
  %v812 = vpack.c.b16 %v749, %v748
  %v813 = vpack.c.b16 %v751, %v750
  %v814 = vpack.c.b16 %v753, %v752
  %v815 = vpack.c.b16 %v755, %v754
  %v816 = vpack.c.b16 %v757, %v756
  %v817 = vpack.c.b16 %v759, %v758
  %v818 = vpack.c.b16 %v761, %v760
  %v819 = vpack.c.b16 %v763, %v762
  %v820 = vpack.c.b16 %v765, %v764
  %v821 = vpack.c.b16 %v767, %v766
  %v822 = vpack.c.b16 %v769, %v768
  %v823 = vpack.c.b16 %v771, %v770
  %v824 = vpack.c.b16 %v773, %v772
  %v825 = vpack.c.b16 %v775, %v774
  %v826 = vpack.c.b16 %v777, %v776
  %v827 = vpack.c.b16 %v779, %v778
  %v828 = vpack.c.b16 %v781, %v780
  %v829 = vpack.c.b16 %v783, %v782
  %v830 = vpack.c.b16 %v785, %v784
  %v831 = vpack.c.b16 %v787, %v786
  %v832 = vpack.c.b16 %v789, %v788
  %v833 = vpack.c.b16 %v791, %v790
  %v834 = vpack.c.b16 %v793, %v792
  %v835 = vpack.c.b16 %v795, %v794
  %v836 = vpack.c.b16 %v797, %v796
  %v837 = vpack.c.b16 %v799, %v798
  %v838 = vpack.c.b16 %v801, %v800
  %v839 = vpack.c.b16 %v803, %v802
  %v840 = vpack.c.b16 %v805, %v804
  %v841 = vpack.c.b16 %v807, %v806
  %v842 = vpack.c.b16 %v809, %v808
  %v843 = vpack.c.b16 %v811, %v810
  %876 = vmatprep.subr.bf16.mxu0 0
  %877 = vmatpush1.bf16.msra.mxu0 %v819
  %878 = vmatprep.subr.bf16.mxu0 0
  %879 = vmatpush1.bf16.msra.mxu0 %v818
  %880 = vmatprep.subr.bf16.mxu0 0
  %881 = vmatpush1.bf16.msra.mxu0 %v817
  %882 = vmatprep.subr.bf16.mxu0 0
  %883 = vmatpush1.bf16.msra.mxu0 %v816
  %884 = vmatprep.subr.bf16.mxu0 0
  %885 = vmatpush1.bf16.msra.mxu0 %v815
  %886 = vmatprep.subr.bf16.mxu0 0
  %887 = vmatpush1.bf16.msra.mxu0 %v814
  %888 = vmatprep.subr.bf16.mxu0 0
  %889 = vmatpush1.bf16.msra.mxu0 %v813
  %890 = vmatprep.subr.bf16.mxu0 0
  %891 = vmatpush1.bf16.msra.mxu0 %v812
  %892 = vmatprep.subr.bf16.mxu0 0
  %893 = vmatpush2.bf16.msra.mxu0 %v827
  %894 = vmatprep.subr.bf16.mxu0 0
  %895 = vmatpush2.bf16.msra.mxu0 %v826
  %896 = vmatprep.subr.bf16.mxu0 0
  %897 = vmatpush2.bf16.msra.mxu0 %v825
  %898 = vmatprep.subr.bf16.mxu0 0
  %899 = vmatpush2.bf16.msra.mxu0 %v824
  %900 = vmatprep.subr.bf16.mxu0 0
  %901 = vmatpush2.bf16.msra.mxu0 %v823
  %902 = vmatprep.subr.bf16.mxu0 0
  %903 = vmatpush2.bf16.msra.mxu0 %v822
  %904 = vmatprep.subr.bf16.mxu0 0
  %905 = vmatpush2.bf16.msra.mxu0 %v821
  %906 = vmatprep.subr.bf16.mxu0 0
  %907 = vmatpush2.bf16.msra.mxu0 %v820
  %908 = vmatprep.mubr.bf16.mxu0 %v485
  %909 = vmatmul.mubr.bf16.gmra.mxu0 %v484
  %v910 = vpop.f32.mrf.mxu0
  %v911 = vadd.f32 %v188, %v910
  %v912 = vpop.f32.mrf.mxu0
  %v913 = vpop.f32.mrf.mxu0
  %v914 = vadd.f32 %v188, %v913
  %v915 = vpop.f32.mrf.mxu0
  %916 = vmatprep.mubr.bf16.mxu0 %v489
  %917 = vmatmul.mubr.bf16.gmra.mxu0 %v488
  %v918 = vpop.f32.mrf.mxu0
  %v919 = vadd.f32 %v188, %v918
  %v920 = vpop.f32.mrf.mxu0
  %v921 = vpop.f32.mrf.mxu0
  %v922 = vadd.f32 %v188, %v921
  %v923 = vpop.f32.mrf.mxu0
  %924 = vmatprep.mubr.bf16.mxu0 %v493
  %925 = vmatmul.mubr.bf16.gmra.mxu0 %v492
  %v926 = vpop.f32.mrf.mxu0
  %v927 = vadd.f32 %v188, %v926
  %v928 = vpop.f32.mrf.mxu0
  %v929 = vpop.f32.mrf.mxu0
  %v930 = vadd.f32 %v188, %v929
  %v931 = vpop.f32.mrf.mxu0
  %932 = vmatprep.mubr.bf16.mxu0 %v497
  %933 = vmatmul.mubr.bf16.gmra.mxu0 %v496
  %v934 = vpop.f32.mrf.mxu0
  %v935 = vadd.f32 %v188, %v934
  %v936 = vpop.f32.mrf.mxu0
  %v937 = vpop.f32.mrf.mxu0
  %v938 = vadd.f32 %v188, %v937
  %v939 = vpop.f32.mrf.mxu0
  %940 = vmatprep.mubr.bf16.mxu0 %v501
  %941 = vmatmul.mubr.bf16.gmra.mxu0 %v500
  %v942 = vpop.f32.mrf.mxu0
  %v943 = vadd.f32 %v188, %v942
  %v944 = vpop.f32.mrf.mxu0
  %v945 = vpop.f32.mrf.mxu0
  %v946 = vadd.f32 %v188, %v945
  %v947 = vpop.f32.mrf.mxu0
  %948 = vmatprep.mubr.bf16.mxu0 %v505
  %949 = vmatmul.mubr.bf16.gmra.mxu0 %v504
  %v950 = vpop.f32.mrf.mxu0
  %v951 = vadd.f32 %v188, %v950
  %v952 = vpop.f32.mrf.mxu0
  %v953 = vpop.f32.mrf.mxu0
  %v954 = vadd.f32 %v188, %v953
  %v955 = vpop.f32.mrf.mxu0
  %956 = vmatprep.mubr.bf16.mxu0 %v509
  %957 = vmatmul.mubr.bf16.gmra.mxu0 %v508
  %v958 = vpop.f32.mrf.mxu0
  %v959 = vadd.f32 %v188, %v958
  %v960 = vpop.f32.mrf.mxu0
  %v961 = vpop.f32.mrf.mxu0
  %v962 = vadd.f32 %v188, %v961
  %v963 = vpop.f32.mrf.mxu0
  %964 = vmatprep.mubr.bf16.mxu0 %v513
  %965 = vmatmul.mubr.bf16.gmra.mxu0 %v512
  %v966 = vpop.f32.mrf.mxu0
  %v967 = vadd.f32 %v188, %v966
  %v968 = vpop.f32.mrf.mxu0
  %v969 = vpop.f32.mrf.mxu0
  %v970 = vadd.f32 %v188, %v969
  %v971 = vpop.f32.mrf.mxu0
  %972 = vmatprep.mubr.bf16.mxu0 %v517
  %973 = vmatmul.mubr.bf16.gmra.mxu0 %v516
  %v974 = vpop.f32.mrf.mxu0
  %v975 = vadd.f32 %v188, %v974
  %v976 = vpop.f32.mrf.mxu0
  %v977 = vpop.f32.mrf.mxu0
  %v978 = vadd.f32 %v188, %v977
  %v979 = vpop.f32.mrf.mxu0
  %980 = vmatprep.mubr.bf16.mxu0 %v521
  %981 = vmatmul.mubr.bf16.gmra.mxu0 %v520
  %v982 = vpop.f32.mrf.mxu0
  %v983 = vadd.f32 %v188, %v982
  %v984 = vpop.f32.mrf.mxu0
  %v985 = vpop.f32.mrf.mxu0
  %v986 = vadd.f32 %v188, %v985
  %v987 = vpop.f32.mrf.mxu0
  %988 = vmatprep.mubr.bf16.mxu0 %v525
  %989 = vmatmul.mubr.bf16.gmra.mxu0 %v524
  %v990 = vpop.f32.mrf.mxu0
  %v991 = vadd.f32 %v188, %v990
  %v992 = vpop.f32.mrf.mxu0
  %v993 = vpop.f32.mrf.mxu0
  %v994 = vadd.f32 %v188, %v993
  %v995 = vpop.f32.mrf.mxu0
  %996 = vmatprep.mubr.bf16.mxu0 %v529
  %997 = vmatmul.mubr.bf16.gmra.mxu0 %v528
  %v998 = vpop.f32.mrf.mxu0
  %v999 = vadd.f32 %v188, %v998
  %v1000 = vpop.f32.mrf.mxu0
  %v1001 = vpop.f32.mrf.mxu0
  %v1002 = vadd.f32 %v188, %v1001
  %v1003 = vpop.f32.mrf.mxu0
  %1004 = vmatprep.mubr.bf16.mxu0 %v533
  %1005 = vmatmul.mubr.bf16.gmra.mxu0 %v532
  %v1006 = vpop.f32.mrf.mxu0
  %v1007 = vadd.f32 %v188, %v1006
  %v1008 = vpop.f32.mrf.mxu0
  %v1009 = vpop.f32.mrf.mxu0
  %v1010 = vadd.f32 %v188, %v1009
  %v1011 = vpop.f32.mrf.mxu0
  %1012 = vmatprep.mubr.bf16.mxu0 %v537
  %1013 = vmatmul.mubr.bf16.gmra.mxu0 %v536
  %v1014 = vpop.f32.mrf.mxu0
  %v1015 = vadd.f32 %v188, %v1014
  %v1016 = vpop.f32.mrf.mxu0
  %v1017 = vpop.f32.mrf.mxu0
  %v1018 = vadd.f32 %v188, %v1017
  %v1019 = vpop.f32.mrf.mxu0
  %1020 = vmatprep.mubr.bf16.mxu0 %v541
  %1021 = vmatmul.mubr.bf16.gmra.mxu0 %v540
  %v1022 = vpop.f32.mrf.mxu0
  %v1023 = vadd.f32 %v188, %v1022
  %v1024 = vpop.f32.mrf.mxu0
  %v1025 = vpop.f32.mrf.mxu0
  %v1026 = vadd.f32 %v188, %v1025
  %v1027 = vpop.f32.mrf.mxu0
  %1028 = vmatprep.mubr.bf16.mxu0 %v545
  %1029 = vmatmul.mubr.bf16.gmra.mxu0 %v544
  %v1030 = vpop.f32.mrf.mxu0
  %v1031 = vadd.f32 %v188, %v1030
  %v1032 = vpop.f32.mrf.mxu0
  %v1033 = vpop.f32.mrf.mxu0
  %v1034 = vadd.f32 %v188, %v1033
  %v1035 = vpop.f32.mrf.mxu0
  %1036 = vmatprep.mubr.bf16.mxu0 %v549
  %1037 = vmatmul.mubr.bf16.gmra.mxu0 %v548
  %v1038 = vpop.f32.mrf.mxu0
  %v1039 = vadd.f32 %v188, %v1038
  %v1040 = vpop.f32.mrf.mxu0
  %v1041 = vpop.f32.mrf.mxu0
  %v1042 = vadd.f32 %v188, %v1041
  %v1043 = vpop.f32.mrf.mxu0
  %1044 = vmatprep.mubr.bf16.mxu0 %v553
  %1045 = vmatmul.mubr.bf16.gmra.mxu0 %v552
  %v1046 = vpop.f32.mrf.mxu0
  %v1047 = vadd.f32 %v188, %v1046
  %v1048 = vpop.f32.mrf.mxu0
  %v1049 = vpop.f32.mrf.mxu0
  %v1050 = vadd.f32 %v188, %v1049
  %v1051 = vpop.f32.mrf.mxu0
  %1052 = vmatprep.mubr.bf16.mxu0 %v557
  %1053 = vmatmul.mubr.bf16.gmra.mxu0 %v556
  %v1054 = vpop.f32.mrf.mxu0
  %v1055 = vadd.f32 %v188, %v1054
  %v1056 = vpop.f32.mrf.mxu0
  %v1057 = vpop.f32.mrf.mxu0
  %v1058 = vadd.f32 %v188, %v1057
  %v1059 = vpop.f32.mrf.mxu0
  %1060 = vmatprep.mubr.bf16.mxu0 %v561
  %1061 = vmatmul.mubr.bf16.gmra.mxu0 %v560
  %v1062 = vpop.f32.mrf.mxu0
  %v1063 = vadd.f32 %v188, %v1062
  %v1064 = vpop.f32.mrf.mxu0
  %v1065 = vpop.f32.mrf.mxu0
  %v1066 = vadd.f32 %v188, %v1065
  %v1067 = vpop.f32.mrf.mxu0
  %1068 = vmatprep.mubr.bf16.mxu0 %v565
  %1069 = vmatmul.mubr.bf16.gmra.mxu0 %v564
  %v1070 = vpop.f32.mrf.mxu0
  %v1071 = vadd.f32 %v188, %v1070
  %v1072 = vpop.f32.mrf.mxu0
  %v1073 = vpop.f32.mrf.mxu0
  %v1074 = vadd.f32 %v188, %v1073
  %v1075 = vpop.f32.mrf.mxu0
  %1076 = vmatprep.mubr.bf16.mxu0 %v569
  %1077 = vmatmul.mubr.bf16.gmra.mxu0 %v568
  %v1078 = vpop.f32.mrf.mxu0
  %v1079 = vadd.f32 %v188, %v1078
  %v1080 = vpop.f32.mrf.mxu0
  %v1081 = vpop.f32.mrf.mxu0
  %v1082 = vadd.f32 %v188, %v1081
  %v1083 = vpop.f32.mrf.mxu0
  %1084 = vmatprep.mubr.bf16.mxu0 %v573
  %1085 = vmatmul.mubr.bf16.gmra.mxu0 %v572
  %v1086 = vpop.f32.mrf.mxu0
  %v1087 = vadd.f32 %v188, %v1086
  %v1088 = vpop.f32.mrf.mxu0
  %v1089 = vpop.f32.mrf.mxu0
  %v1090 = vadd.f32 %v188, %v1089
  %v1091 = vpop.f32.mrf.mxu0
  %1092 = vmatprep.mubr.bf16.mxu0 %v577
  %1093 = vmatmul.mubr.bf16.gmra.mxu0 %v576
  %v1094 = vpop.f32.mrf.mxu0
  %v1095 = vadd.f32 %v188, %v1094
  %v1096 = vpop.f32.mrf.mxu0
  %v1097 = vpop.f32.mrf.mxu0
  %v1098 = vadd.f32 %v188, %v1097
  %v1099 = vpop.f32.mrf.mxu0
  %1100 = vmatprep.mubr.bf16.mxu0 %v581
  %1101 = vmatmul.mubr.bf16.gmra.mxu0 %v580
  %v1102 = vpop.f32.mrf.mxu0
  %v1103 = vadd.f32 %v188, %v1102
  %v1104 = vpop.f32.mrf.mxu0
  %v1105 = vpop.f32.mrf.mxu0
  %v1106 = vpop.f32.mrf.mxu0
  %1107 = vdwg.mxu0
  %1108 = vmatprep.subr.bf16.mxu0 0
  %1109 = vmatpush1.bf16.msra.mxu0 %v835
  %1110 = vmatprep.subr.bf16.mxu0 0
  %1111 = vmatpush1.bf16.msra.mxu0 %v834
  %1112 = vmatprep.subr.bf16.mxu0 0
  %1113 = vmatpush1.bf16.msra.mxu0 %v833
  %1114 = vmatprep.subr.bf16.mxu0 0
  %1115 = vmatpush1.bf16.msra.mxu0 %v832
  %1116 = vmatprep.subr.bf16.mxu0 0
  %1117 = vmatpush1.bf16.msra.mxu0 %v831
  %1118 = vmatprep.subr.bf16.mxu0 0
  %1119 = vmatpush1.bf16.msra.mxu0 %v830
  %1120 = vmatprep.subr.bf16.mxu0 0
  %1121 = vmatpush1.bf16.msra.mxu0 %v829
  %1122 = vmatprep.subr.bf16.mxu0 0
  %1123 = vmatpush1.bf16.msra.mxu0 %v828
  %1124 = vmatprep.subr.bf16.mxu0 0
  %1125 = vmatpush2.bf16.msra.mxu0 %v843
  %1126 = vmatprep.subr.bf16.mxu0 0
  %1127 = vmatpush2.bf16.msra.mxu0 %v842
  %1128 = vmatprep.subr.bf16.mxu0 0
  %1129 = vmatpush2.bf16.msra.mxu0 %v841
  %1130 = vmatprep.subr.bf16.mxu0 0
  %1131 = vmatpush2.bf16.msra.mxu0 %v840
  %1132 = vmatprep.subr.bf16.mxu0 0
  %1133 = vmatpush2.bf16.msra.mxu0 %v839
  %1134 = vmatprep.subr.bf16.mxu0 0
  %1135 = vmatpush2.bf16.msra.mxu0 %v838
  %1136 = vmatprep.subr.bf16.mxu0 0
  %1137 = vmatpush2.bf16.msra.mxu0 %v837
  %1138 = vmatprep.subr.bf16.mxu0 0
  %1139 = vmatpush2.bf16.msra.mxu0 %v836
  %1140 = vmatprep.mubr.bf16.mxu0 %v487
  %1141 = vmatmul.mubr.bf16.gmra.mxu0 %v486
  %v1142 = vpop.f32.mrf.mxu0
  %v1143 = vadd.f32 %v911, %v1142
  %v1144 = vpop.f32.mrf.mxu0
  %v1145 = vpop.f32.mrf.mxu0
  %v1146 = vadd.f32 %v914, %v1145
  %v1147 = vpop.f32.mrf.mxu0
  %1148 = vmatprep.mubr.bf16.mxu0 %v491
  %1149 = vmatmul.mubr.bf16.gmra.mxu0 %v490
  %v1150 = vpop.f32.mrf.mxu0
  %v1151 = vadd.f32 %v919, %v1150
  %v1152 = vpop.f32.mrf.mxu0
  %v1153 = vpop.f32.mrf.mxu0
  %v1154 = vadd.f32 %v922, %v1153
  %v1155 = vpop.f32.mrf.mxu0
  %1156 = vmatprep.mubr.bf16.mxu0 %v495
  %1157 = vmatmul.mubr.bf16.gmra.mxu0 %v494
  %v1158 = vpop.f32.mrf.mxu0
  %v1159 = vadd.f32 %v927, %v1158
  %v1160 = vpop.f32.mrf.mxu0
  %v1161 = vpop.f32.mrf.mxu0
  %v1162 = vadd.f32 %v930, %v1161
  %v1163 = vpop.f32.mrf.mxu0
  %1164 = vmatprep.mubr.bf16.mxu0 %v499
  %1165 = vmatmul.mubr.bf16.gmra.mxu0 %v498
  %v1166 = vpop.f32.mrf.mxu0
  %v1167 = vadd.f32 %v935, %v1166
  %v1168 = vpop.f32.mrf.mxu0
  %v1169 = vpop.f32.mrf.mxu0
  %v1170 = vadd.f32 %v938, %v1169
  %v1171 = vpop.f32.mrf.mxu0
  %1172 = vmatprep.mubr.bf16.mxu0 %v503
  %1173 = vmatmul.mubr.bf16.gmra.mxu0 %v502
  %v1174 = vpop.f32.mrf.mxu0
  %v1175 = vadd.f32 %v943, %v1174
  %v1176 = vpop.f32.mrf.mxu0
  %v1177 = vpop.f32.mrf.mxu0
  %v1178 = vadd.f32 %v946, %v1177
  %v1179 = vpop.f32.mrf.mxu0
  %1180 = vmatprep.mubr.bf16.mxu0 %v507
  %1181 = vmatmul.mubr.bf16.gmra.mxu0 %v506
  %v1182 = vpop.f32.mrf.mxu0
  %v1183 = vadd.f32 %v951, %v1182
  %v1184 = vpop.f32.mrf.mxu0
  %v1185 = vpop.f32.mrf.mxu0
  %v1186 = vadd.f32 %v954, %v1185
  %v1187 = vpop.f32.mrf.mxu0
  %1188 = vmatprep.mubr.bf16.mxu0 %v511
  %1189 = vmatmul.mubr.bf16.gmra.mxu0 %v510
  %v1190 = vpop.f32.mrf.mxu0
  %v1191 = vadd.f32 %v959, %v1190
  %v1192 = vpop.f32.mrf.mxu0
  %v1193 = vpop.f32.mrf.mxu0
  %v1194 = vadd.f32 %v962, %v1193
  %v1195 = vpop.f32.mrf.mxu0
  %1196 = vmatprep.mubr.bf16.mxu0 %v515
  %1197 = vmatmul.mubr.bf16.gmra.mxu0 %v514
  %v1198 = vpop.f32.mrf.mxu0
  %v1199 = vadd.f32 %v967, %v1198
  %v1200 = vpop.f32.mrf.mxu0
  %v1201 = vpop.f32.mrf.mxu0
  %v1202 = vadd.f32 %v970, %v1201
  %v1203 = vpop.f32.mrf.mxu0
  %1204 = vmatprep.mubr.bf16.mxu0 %v519
  %1205 = vmatmul.mubr.bf16.gmra.mxu0 %v518
  %v1206 = vpop.f32.mrf.mxu0
  %v1207 = vadd.f32 %v975, %v1206
  %v1208 = vpop.f32.mrf.mxu0
  %v1209 = vpop.f32.mrf.mxu0
  %v1210 = vadd.f32 %v978, %v1209
  %v1211 = vpop.f32.mrf.mxu0
  %1212 = vmatprep.mubr.bf16.mxu0 %v523
  %1213 = vmatmul.mubr.bf16.gmra.mxu0 %v522
  %v1214 = vpop.f32.mrf.mxu0
  %v1215 = vadd.f32 %v983, %v1214
  %v1216 = vpop.f32.mrf.mxu0
  %v1217 = vpop.f32.mrf.mxu0
  %v1218 = vadd.f32 %v986, %v1217
  %v1219 = vpop.f32.mrf.mxu0
  %1220 = vmatprep.mubr.bf16.mxu0 %v527
  %1221 = vmatmul.mubr.bf16.gmra.mxu0 %v526
  %v1222 = vpop.f32.mrf.mxu0
  %v1223 = vadd.f32 %v991, %v1222
  %v1224 = vpop.f32.mrf.mxu0
  %v1225 = vpop.f32.mrf.mxu0
  %v1226 = vadd.f32 %v994, %v1225
  %v1227 = vpop.f32.mrf.mxu0
  %1228 = vmatprep.mubr.bf16.mxu0 %v531
  %1229 = vmatmul.mubr.bf16.gmra.mxu0 %v530
  %v1230 = vpop.f32.mrf.mxu0
  %v1231 = vadd.f32 %v999, %v1230
  %v1232 = vpop.f32.mrf.mxu0
  %v1233 = vpop.f32.mrf.mxu0
  %v1234 = vadd.f32 %v1002, %v1233
  %v1235 = vpop.f32.mrf.mxu0
  %1236 = vmatprep.mubr.bf16.mxu0 %v535
  %1237 = vmatmul.mubr.bf16.gmra.mxu0 %v534
  %v1238 = vpop.f32.mrf.mxu0
  %v1239 = vadd.f32 %v1007, %v1238
  %v1240 = vpop.f32.mrf.mxu0
  %v1241 = vpop.f32.mrf.mxu0
  %v1242 = vadd.f32 %v1010, %v1241
  %v1243 = vpop.f32.mrf.mxu0
  %1244 = vmatprep.mubr.bf16.mxu0 %v539
  %1245 = vmatmul.mubr.bf16.gmra.mxu0 %v538
  %v1246 = vpop.f32.mrf.mxu0
  %v1247 = vadd.f32 %v1015, %v1246
  %v1248 = vpop.f32.mrf.mxu0
  %v1249 = vpop.f32.mrf.mxu0
  %v1250 = vadd.f32 %v1018, %v1249
  %v1251 = vpop.f32.mrf.mxu0
  %1252 = vmatprep.mubr.bf16.mxu0 %v543
  %1253 = vmatmul.mubr.bf16.gmra.mxu0 %v542
  %v1254 = vpop.f32.mrf.mxu0
  %v1255 = vadd.f32 %v1023, %v1254
  %v1256 = vpop.f32.mrf.mxu0
  %v1257 = vpop.f32.mrf.mxu0
  %v1258 = vadd.f32 %v1026, %v1257
  %v1259 = vpop.f32.mrf.mxu0
  %1260 = vmatprep.mubr.bf16.mxu0 %v547
  %1261 = vmatmul.mubr.bf16.gmra.mxu0 %v546
  %v1262 = vpop.f32.mrf.mxu0
  %v1263 = vadd.f32 %v1031, %v1262
  %v1264 = vpop.f32.mrf.mxu0
  %v1265 = vpop.f32.mrf.mxu0
  %v1266 = vadd.f32 %v1034, %v1265
  %v1267 = vpop.f32.mrf.mxu0
  %1268 = vmatprep.mubr.bf16.mxu0 %v551
  %1269 = vmatmul.mubr.bf16.gmra.mxu0 %v550
  %v1270 = vpop.f32.mrf.mxu0
  %v1271 = vadd.f32 %v1039, %v1270
  %v1272 = vpop.f32.mrf.mxu0
  %v1273 = vpop.f32.mrf.mxu0
  %v1274 = vadd.f32 %v1042, %v1273
  %v1275 = vpop.f32.mrf.mxu0
  %1276 = vmatprep.mubr.bf16.mxu0 %v555
  %1277 = vmatmul.mubr.bf16.gmra.mxu0 %v554
  %v1278 = vpop.f32.mrf.mxu0
  %v1279 = vadd.f32 %v1047, %v1278
  %v1280 = vpop.f32.mrf.mxu0
  %v1281 = vpop.f32.mrf.mxu0
  %v1282 = vadd.f32 %v1050, %v1281
  %v1283 = vpop.f32.mrf.mxu0
  %1284 = vmatprep.mubr.bf16.mxu0 %v559
  %1285 = vmatmul.mubr.bf16.gmra.mxu0 %v558
  %v1286 = vpop.f32.mrf.mxu0
  %v1287 = vadd.f32 %v1055, %v1286
  %v1288 = vpop.f32.mrf.mxu0
  %v1289 = vpop.f32.mrf.mxu0
  %v1290 = vadd.f32 %v1058, %v1289
  %v1291 = vpop.f32.mrf.mxu0
  %1292 = vmatprep.mubr.bf16.mxu0 %v563
  %1293 = vmatmul.mubr.bf16.gmra.mxu0 %v562
  %v1294 = vpop.f32.mrf.mxu0
  %v1295 = vadd.f32 %v1063, %v1294
  %v1296 = vpop.f32.mrf.mxu0
  %v1297 = vpop.f32.mrf.mxu0
  %v1298 = vadd.f32 %v1066, %v1297
  %v1299 = vpop.f32.mrf.mxu0
  %1300 = vmatprep.mubr.bf16.mxu0 %v567
  %1301 = vmatmul.mubr.bf16.gmra.mxu0 %v566
  %v1302 = vpop.f32.mrf.mxu0
  %v1303 = vadd.f32 %v1071, %v1302
  %v1304 = vpop.f32.mrf.mxu0
  %v1305 = vpop.f32.mrf.mxu0
  %v1306 = vadd.f32 %v1074, %v1305
  %v1307 = vpop.f32.mrf.mxu0
  %1308 = vmatprep.mubr.bf16.mxu0 %v571
  %1309 = vmatmul.mubr.bf16.gmra.mxu0 %v570
  %v1310 = vpop.f32.mrf.mxu0
  %v1311 = vadd.f32 %v1079, %v1310
  %v1312 = vpop.f32.mrf.mxu0
  %v1313 = vpop.f32.mrf.mxu0
  %v1314 = vadd.f32 %v1082, %v1313
  %v1315 = vpop.f32.mrf.mxu0
  %1316 = vmatprep.mubr.bf16.mxu0 %v575
  %1317 = vmatmul.mubr.bf16.gmra.mxu0 %v574
  %v1318 = vpop.f32.mrf.mxu0
  %v1319 = vadd.f32 %v1087, %v1318
  %v1320 = vpop.f32.mrf.mxu0
  %v1321 = vpop.f32.mrf.mxu0
  %v1322 = vadd.f32 %v1090, %v1321
  %v1323 = vpop.f32.mrf.mxu0
  %1324 = vmatprep.mubr.bf16.mxu0 %v579
  %1325 = vmatmul.mubr.bf16.gmra.mxu0 %v578
  %v1326 = vpop.f32.mrf.mxu0
  %v1327 = vadd.f32 %v1095, %v1326
  %v1328 = vpop.f32.mrf.mxu0
  %v1329 = vpop.f32.mrf.mxu0
  %v1330 = vadd.f32 %v1098, %v1329
  %v1331 = vpop.f32.mrf.mxu0
  %1332 = vmatprep.mubr.bf16.mxu0 %v583
  %1333 = vmatmul.mubr.bf16.gmra.mxu0 %v582
  %v1334 = vpop.f32.mrf.mxu0
  %v1335 = vadd.f32 %v1103, %v1334
  %v1336 = vpop.f32.mrf.mxu0
  %v1337 = vpop.f32.mrf.mxu0
  %v1338 = vpop.f32.mrf.mxu0
  %1339 = vdwg.mxu0
  %v1340 = vld [vmem:[%s3] sm:$0x1]
  %v1341 = vld [vmem:[%s4] sm:$0x1]
  %vm1342 = vcmask 261120
  %v1343 = vsel %vm1342, %v1143, 0.0
  %v1344 = vsel %vm1342, %v1146, 0.0
  %v1345 = vadd.f32 %v1343, %v1344
  %v1346 = vsel %vm1342, %v1151, 0.0
  %v1347 = vadd.f32 %v1345, %v1346
  %v1348 = vsel %vm1342, %v1154, 0.0
  %v1349 = vadd.f32 %v1347, %v1348
  %v1350 = vsel %vm1342, %v1159, 0.0
  %v1351 = vadd.f32 %v1349, %v1350
  %v1352 = vsel %vm1342, %v1162, 0.0
  %v1353 = vadd.f32 %v1351, %v1352
  %v1354 = vsel %vm1342, %v1167, 0.0
  %v1355 = vadd.f32 %v1353, %v1354
  %v1356 = vsel %vm1342, %v1170, 0.0
  %v1357 = vadd.f32 %v1355, %v1356
  %v1358 = vsel %vm1342, %v1175, 0.0
  %v1359 = vadd.f32 %v1357, %v1358
  %v1360 = vsel %vm1342, %v1178, 0.0
  %v1361 = vadd.f32 %v1359, %v1360
  %v1362 = vsel %vm1342, %v1183, 0.0
  %v1363 = vadd.f32 %v1361, %v1362
  %v1364 = vsel %vm1342, %v1186, 0.0
  %v1365 = vadd.f32 %v1363, %v1364
  %v1366 = vsel %vm1342, %v1191, 0.0
  %v1367 = vadd.f32 %v1365, %v1366
  %v1368 = vsel %vm1342, %v1194, 0.0
  %v1369 = vadd.f32 %v1367, %v1368
  %v1370 = vsel %vm1342, %v1199, 0.0
  %v1371 = vadd.f32 %v1369, %v1370
  %v1372 = vsel %vm1342, %v1202, 0.0
  %v1373 = vadd.f32 %v1371, %v1372
  %v1374 = vsel %vm1342, %v1207, 0.0
  %v1375 = vadd.f32 %v1373, %v1374
  %v1376 = vsel %vm1342, %v1210, 0.0
  %v1377 = vadd.f32 %v1375, %v1376
  %v1378 = vsel %vm1342, %v1215, 0.0
  %v1379 = vadd.f32 %v1377, %v1378
  %v1380 = vsel %vm1342, %v1218, 0.0
  %v1381 = vadd.f32 %v1379, %v1380
  %v1382 = vsel %vm1342, %v1223, 0.0
  %v1383 = vadd.f32 %v1381, %v1382
  %v1384 = vsel %vm1342, %v1226, 0.0
  %v1385 = vadd.f32 %v1383, %v1384
  %v1386 = vsel %vm1342, %v1231, 0.0
  %v1387 = vadd.f32 %v1385, %v1386
  %v1388 = vsel %vm1342, %v1234, 0.0
  %v1389 = vadd.f32 %v1387, %v1388
  %v1390 = vsel %vm1342, %v1239, 0.0
  %v1391 = vadd.f32 %v1389, %v1390
  %v1392 = vsel %vm1342, %v1242, 0.0
  %v1393 = vadd.f32 %v1391, %v1392
  %v1394 = vsel %vm1342, %v1247, 0.0
  %v1395 = vadd.f32 %v1393, %v1394
  %v1396 = vsel %vm1342, %v1250, 0.0
  %v1397 = vadd.f32 %v1395, %v1396
  %v1398 = vsel %vm1342, %v1255, 0.0
  %v1399 = vadd.f32 %v1397, %v1398
  %v1400 = vsel %vm1342, %v1258, 0.0
  %v1401 = vadd.f32 %v1399, %v1400
  %v1402 = vsel %vm1342, %v1263, 0.0
  %v1403 = vadd.f32 %v1401, %v1402
  %v1404 = vsel %vm1342, %v1266, 0.0
  %v1405 = vadd.f32 %v1403, %v1404
  %v1406 = vsel %vm1342, %v1271, 0.0
  %v1407 = vadd.f32 %v1405, %v1406
  %v1408 = vsel %vm1342, %v1274, 0.0
  %v1409 = vadd.f32 %v1407, %v1408
  %v1410 = vsel %vm1342, %v1279, 0.0
  %v1411 = vadd.f32 %v1409, %v1410
  %v1412 = vsel %vm1342, %v1282, 0.0
  %v1413 = vadd.f32 %v1411, %v1412
  %v1414 = vsel %vm1342, %v1287, 0.0
  %v1415 = vadd.f32 %v1413, %v1414
  %v1416 = vsel %vm1342, %v1290, 0.0
  %v1417 = vadd.f32 %v1415, %v1416
  %v1418 = vsel %vm1342, %v1295, 0.0
  %v1419 = vadd.f32 %v1417, %v1418
  %v1420 = vsel %vm1342, %v1298, 0.0
  %v1421 = vadd.f32 %v1419, %v1420
  %v1422 = vsel %vm1342, %v1303, 0.0
  %v1423 = vadd.f32 %v1421, %v1422
  %v1424 = vsel %vm1342, %v1306, 0.0
  %v1425 = vadd.f32 %v1423, %v1424
  %v1426 = vsel %vm1342, %v1311, 0.0
  %v1427 = vadd.f32 %v1425, %v1426
  %v1428 = vsel %vm1342, %v1314, 0.0
  %v1429 = vadd.f32 %v1427, %v1428
  %v1430 = vsel %vm1342, %v1319, 0.0
  %v1431 = vadd.f32 %v1429, %v1430
  %v1432 = vsel %vm1342, %v1322, 0.0
  %v1433 = vadd.f32 %v1431, %v1432
  %v1434 = vsel %vm1342, %v1327, 0.0
  %v1435 = vadd.f32 %v1433, %v1434
  %v1436 = vsel %vm1342, %v1330, 0.0
  %v1437 = vadd.f32 %v1435, %v1436
  %v1438 = vsel %vm1342, %v1335, 0.0
  %v1439 = vadd.f32 %v1437, %v1438
  %v1440 = vrot.slane %v1439, 4
  %v1441 = vadd.f32 %v1439, %v1440
  %v1442 = vrot.slane %v1441, 2
  %v1443 = vadd.f32 %v1441, %v1442
  %v1444 = vrot.slane %v1443, 1
  %v1445 = vadd.f32 %v1443, %v1444
  %v1446 = vrcp.pop 392.0
  %v1447 = vmul.f32 %v1445, %v1446
  %v1448 = vsub.f32 %v1143, %v1447
  %v1449 = vsub.f32 %v1146, %v1447
  %v1450 = vsub.f32 %v1151, %v1447
  %v1451 = vsub.f32 %v1154, %v1447
  %v1452 = vsub.f32 %v1159, %v1447
  %v1453 = vsub.f32 %v1162, %v1447
  %v1454 = vsub.f32 %v1167, %v1447
  %v1455 = vsub.f32 %v1170, %v1447
  %v1456 = vsub.f32 %v1175, %v1447
  %v1457 = vsub.f32 %v1178, %v1447
  %v1458 = vsub.f32 %v1183, %v1447
  %v1459 = vsub.f32 %v1186, %v1447
  %v1460 = vsub.f32 %v1191, %v1447
  %v1461 = vsub.f32 %v1194, %v1447
  %v1462 = vsub.f32 %v1199, %v1447
  %v1463 = vsub.f32 %v1202, %v1447
  %v1464 = vsub.f32 %v1207, %v1447
  %v1465 = vsub.f32 %v1210, %v1447
  %v1466 = vsub.f32 %v1215, %v1447
  %v1467 = vsub.f32 %v1218, %v1447
  %v1468 = vsub.f32 %v1223, %v1447
  %v1469 = vsub.f32 %v1226, %v1447
  %v1470 = vsub.f32 %v1231, %v1447
  %v1471 = vsub.f32 %v1234, %v1447
  %v1472 = vsub.f32 %v1239, %v1447
  %v1473 = vsub.f32 %v1242, %v1447
  %v1474 = vsub.f32 %v1247, %v1447
  %v1475 = vsub.f32 %v1250, %v1447
  %v1476 = vsub.f32 %v1255, %v1447
  %v1477 = vsub.f32 %v1258, %v1447
  %v1478 = vsub.f32 %v1263, %v1447
  %v1479 = vsub.f32 %v1266, %v1447
  %v1480 = vsub.f32 %v1271, %v1447
  %v1481 = vsub.f32 %v1274, %v1447
  %v1482 = vsub.f32 %v1279, %v1447
  %v1483 = vsub.f32 %v1282, %v1447
  %v1484 = vsub.f32 %v1287, %v1447
  %v1485 = vsub.f32 %v1290, %v1447
  %v1486 = vsub.f32 %v1295, %v1447
  %v1487 = vsub.f32 %v1298, %v1447
  %v1488 = vsub.f32 %v1303, %v1447
  %v1489 = vsub.f32 %v1306, %v1447
  %v1490 = vsub.f32 %v1311, %v1447
  %v1491 = vsub.f32 %v1314, %v1447
  %v1492 = vsub.f32 %v1319, %v1447
  %v1493 = vsub.f32 %v1322, %v1447
  %v1494 = vsub.f32 %v1327, %v1447
  %v1495 = vsub.f32 %v1330, %v1447
  %v1496 = vsub.f32 %v1335, %v1447
  %v1497 = vmul.f32 %v1448, %v1448
  %v1498 = vmul.f32 %v1449, %v1449
  %v1499 = vmul.f32 %v1450, %v1450
  %v1500 = vmul.f32 %v1451, %v1451
  %v1501 = vmul.f32 %v1452, %v1452
  %v1502 = vmul.f32 %v1453, %v1453
  %v1503 = vmul.f32 %v1454, %v1454
  %v1504 = vmul.f32 %v1455, %v1455
  %v1505 = vmul.f32 %v1456, %v1456
  %v1506 = vmul.f32 %v1457, %v1457
  %v1507 = vmul.f32 %v1458, %v1458
  %v1508 = vmul.f32 %v1459, %v1459
  %v1509 = vmul.f32 %v1460, %v1460
  %v1510 = vmul.f32 %v1461, %v1461
  %v1511 = vmul.f32 %v1462, %v1462
  %v1512 = vmul.f32 %v1463, %v1463
  %v1513 = vmul.f32 %v1464, %v1464
  %v1514 = vmul.f32 %v1465, %v1465
  %v1515 = vmul.f32 %v1466, %v1466
  %v1516 = vmul.f32 %v1467, %v1467
  %v1517 = vmul.f32 %v1468, %v1468
  %v1518 = vmul.f32 %v1469, %v1469
  %v1519 = vmul.f32 %v1470, %v1470
  %v1520 = vmul.f32 %v1471, %v1471
  %v1521 = vmul.f32 %v1472, %v1472
  %v1522 = vmul.f32 %v1473, %v1473
  %v1523 = vmul.f32 %v1474, %v1474
  %v1524 = vmul.f32 %v1475, %v1475
  %v1525 = vmul.f32 %v1476, %v1476
  %v1526 = vmul.f32 %v1477, %v1477
  %v1527 = vmul.f32 %v1478, %v1478
  %v1528 = vmul.f32 %v1479, %v1479
  %v1529 = vmul.f32 %v1480, %v1480
  %v1530 = vmul.f32 %v1481, %v1481
  %v1531 = vmul.f32 %v1482, %v1482
  %v1532 = vmul.f32 %v1483, %v1483
  %v1533 = vmul.f32 %v1484, %v1484
  %v1534 = vmul.f32 %v1485, %v1485
  %v1535 = vmul.f32 %v1486, %v1486
  %v1536 = vmul.f32 %v1487, %v1487
  %v1537 = vmul.f32 %v1488, %v1488
  %v1538 = vmul.f32 %v1489, %v1489
  %v1539 = vmul.f32 %v1490, %v1490
  %v1540 = vmul.f32 %v1491, %v1491
  %v1541 = vmul.f32 %v1492, %v1492
  %v1542 = vmul.f32 %v1493, %v1493
  %v1543 = vmul.f32 %v1494, %v1494
  %v1544 = vmul.f32 %v1495, %v1495
  %v1545 = vmul.f32 %v1496, %v1496
  %v1546 = vsel %vm1342, %v1497, 0.0
  %v1547 = vsel %vm1342, %v1498, 0.0
  %v1548 = vadd.f32 %v1546, %v1547
  %v1549 = vsel %vm1342, %v1499, 0.0
  %v1550 = vadd.f32 %v1548, %v1549
  %v1551 = vsel %vm1342, %v1500, 0.0
  %v1552 = vadd.f32 %v1550, %v1551
  %v1553 = vsel %vm1342, %v1501, 0.0
  %v1554 = vadd.f32 %v1552, %v1553
  %v1555 = vsel %vm1342, %v1502, 0.0
  %v1556 = vadd.f32 %v1554, %v1555
  %v1557 = vsel %vm1342, %v1503, 0.0
  %v1558 = vadd.f32 %v1556, %v1557
  %v1559 = vsel %vm1342, %v1504, 0.0
  %v1560 = vadd.f32 %v1558, %v1559
  %v1561 = vsel %vm1342, %v1505, 0.0
  %v1562 = vadd.f32 %v1560, %v1561
  %v1563 = vsel %vm1342, %v1506, 0.0
  %v1564 = vadd.f32 %v1562, %v1563
  %v1565 = vsel %vm1342, %v1507, 0.0
  %v1566 = vadd.f32 %v1564, %v1565
  %v1567 = vsel %vm1342, %v1508, 0.0
  %v1568 = vadd.f32 %v1566, %v1567
  %v1569 = vsel %vm1342, %v1509, 0.0
  %v1570 = vadd.f32 %v1568, %v1569
  %v1571 = vsel %vm1342, %v1510, 0.0
  %v1572 = vadd.f32 %v1570, %v1571
  %v1573 = vsel %vm1342, %v1511, 0.0
  %v1574 = vadd.f32 %v1572, %v1573
  %v1575 = vsel %vm1342, %v1512, 0.0
  %v1576 = vadd.f32 %v1574, %v1575
  %v1577 = vsel %vm1342, %v1513, 0.0
  %v1578 = vadd.f32 %v1576, %v1577
  %v1579 = vsel %vm1342, %v1514, 0.0
  %v1580 = vadd.f32 %v1578, %v1579
  %v1581 = vsel %vm1342, %v1515, 0.0
  %v1582 = vadd.f32 %v1580, %v1581
  %v1583 = vsel %vm1342, %v1516, 0.0
  %v1584 = vadd.f32 %v1582, %v1583
  %v1585 = vsel %vm1342, %v1517, 0.0
  %v1586 = vadd.f32 %v1584, %v1585
  %v1587 = vsel %vm1342, %v1518, 0.0
  %v1588 = vadd.f32 %v1586, %v1587
  %v1589 = vsel %vm1342, %v1519, 0.0
  %v1590 = vadd.f32 %v1588, %v1589
  %v1591 = vsel %vm1342, %v1520, 0.0
  %v1592 = vadd.f32 %v1590, %v1591
  %v1593 = vsel %vm1342, %v1521, 0.0
  %v1594 = vadd.f32 %v1592, %v1593
  %v1595 = vsel %vm1342, %v1522, 0.0
  %v1596 = vadd.f32 %v1594, %v1595
  %v1597 = vsel %vm1342, %v1523, 0.0
  %v1598 = vadd.f32 %v1596, %v1597
  %v1599 = vsel %vm1342, %v1524, 0.0
  %v1600 = vadd.f32 %v1598, %v1599
  %v1601 = vsel %vm1342, %v1525, 0.0
  %v1602 = vadd.f32 %v1600, %v1601
  %v1603 = vsel %vm1342, %v1526, 0.0
  %v1604 = vadd.f32 %v1602, %v1603
  %v1605 = vsel %vm1342, %v1527, 0.0
  %v1606 = vadd.f32 %v1604, %v1605
  %v1607 = vsel %vm1342, %v1528, 0.0
  %v1608 = vadd.f32 %v1606, %v1607
  %v1609 = vsel %vm1342, %v1529, 0.0
  %v1610 = vadd.f32 %v1608, %v1609
  %v1611 = vsel %vm1342, %v1530, 0.0
  %v1612 = vadd.f32 %v1610, %v1611
  %v1613 = vsel %vm1342, %v1531, 0.0
  %v1614 = vadd.f32 %v1612, %v1613
  %v1615 = vsel %vm1342, %v1532, 0.0
  %v1616 = vadd.f32 %v1614, %v1615
  %v1617 = vsel %vm1342, %v1533, 0.0
  %v1618 = vadd.f32 %v1616, %v1617
  %v1619 = vsel %vm1342, %v1534, 0.0
  %v1620 = vadd.f32 %v1618, %v1619
  %v1621 = vsel %vm1342, %v1535, 0.0
  %v1622 = vadd.f32 %v1620, %v1621
  %v1623 = vsel %vm1342, %v1536, 0.0
  %v1624 = vadd.f32 %v1622, %v1623
  %v1625 = vsel %vm1342, %v1537, 0.0
  %v1626 = vadd.f32 %v1624, %v1625
  %v1627 = vsel %vm1342, %v1538, 0.0
  %v1628 = vadd.f32 %v1626, %v1627
  %v1629 = vsel %vm1342, %v1539, 0.0
  %v1630 = vadd.f32 %v1628, %v1629
  %v1631 = vsel %vm1342, %v1540, 0.0
  %v1632 = vadd.f32 %v1630, %v1631
  %v1633 = vsel %vm1342, %v1541, 0.0
  %v1634 = vadd.f32 %v1632, %v1633
  %v1635 = vsel %vm1342, %v1542, 0.0
  %v1636 = vadd.f32 %v1634, %v1635
  %v1637 = vsel %vm1342, %v1543, 0.0
  %v1638 = vadd.f32 %v1636, %v1637
  %v1639 = vsel %vm1342, %v1544, 0.0
  %v1640 = vadd.f32 %v1638, %v1639
  %v1641 = vsel %vm1342, %v1545, 0.0
  %v1642 = vadd.f32 %v1640, %v1641
  %v1643 = vrot.slane %v1642, 4
  %v1644 = vadd.f32 %v1642, %v1643
  %v1645 = vrot.slane %v1644, 2
  %v1646 = vadd.f32 %v1644, %v1645
  %v1647 = vrot.slane %v1646, 1
  %v1648 = vadd.f32 %v1646, %v1647
  %v1649 = vmul.f32 %v1648, %v1446
  %v1650 = vadd.f32 %v1649, 1e-05
  %v1651 = vrsqrt.pop %v1650
  %v1652 = vmul.f32 %v1448, %v1651
  %v1653 = vmul.f32 %v1449, %v1651
  %v1654 = vmul.f32 %v1450, %v1651
  %v1655 = vmul.f32 %v1451, %v1651
  %v1656 = vmul.f32 %v1452, %v1651
  %v1657 = vmul.f32 %v1453, %v1651
  %v1658 = vmul.f32 %v1454, %v1651
  %v1659 = vmul.f32 %v1455, %v1651
  %v1660 = vmul.f32 %v1456, %v1651
  %v1661 = vmul.f32 %v1457, %v1651
  %v1662 = vmul.f32 %v1458, %v1651
  %v1663 = vmul.f32 %v1459, %v1651
  %v1664 = vmul.f32 %v1460, %v1651
  %v1665 = vmul.f32 %v1461, %v1651
  %v1666 = vmul.f32 %v1462, %v1651
  %v1667 = vmul.f32 %v1463, %v1651
  %v1668 = vmul.f32 %v1464, %v1651
  %v1669 = vmul.f32 %v1465, %v1651
  %v1670 = vmul.f32 %v1466, %v1651
  %v1671 = vmul.f32 %v1467, %v1651
  %v1672 = vmul.f32 %v1468, %v1651
  %v1673 = vmul.f32 %v1469, %v1651
  %v1674 = vmul.f32 %v1470, %v1651
  %v1675 = vmul.f32 %v1471, %v1651
  %v1676 = vmul.f32 %v1472, %v1651
  %v1677 = vmul.f32 %v1473, %v1651
  %v1678 = vmul.f32 %v1474, %v1651
  %v1679 = vmul.f32 %v1475, %v1651
  %v1680 = vmul.f32 %v1476, %v1651
  %v1681 = vmul.f32 %v1477, %v1651
  %v1682 = vmul.f32 %v1478, %v1651
  %v1683 = vmul.f32 %v1479, %v1651
  %v1684 = vmul.f32 %v1480, %v1651
  %v1685 = vmul.f32 %v1481, %v1651
  %v1686 = vmul.f32 %v1482, %v1651
  %v1687 = vmul.f32 %v1483, %v1651
  %v1688 = vmul.f32 %v1484, %v1651
  %v1689 = vmul.f32 %v1485, %v1651
  %v1690 = vmul.f32 %v1486, %v1651
  %v1691 = vmul.f32 %v1487, %v1651
  %v1692 = vmul.f32 %v1488, %v1651
  %v1693 = vmul.f32 %v1489, %v1651
  %v1694 = vmul.f32 %v1490, %v1651
  %v1695 = vmul.f32 %v1491, %v1651
  %v1696 = vmul.f32 %v1492, %v1651
  %v1697 = vmul.f32 %v1493, %v1651
  %v1698 = vmul.f32 %v1494, %v1651
  %v1699 = vmul.f32 %v1495, %v1651
  %v1700 = vmul.f32 %v1496, %v1651
  %v1702 = vlaneseq
  %v1703 = vshrl.u32 %v1702, 7
  %v1704 = vsub.s32 0, %v1703
  %v1705 = vrot.slane %v1340, %v1704
  %v1707 = vmul.f32 %v1652, %v1705
  %v1708 = vmul.f32 %v1653, %v1705
  %v1709 = vmul.f32 %v1654, %v1705
  %v1710 = vmul.f32 %v1655, %v1705
  %v1711 = vmul.f32 %v1656, %v1705
  %v1712 = vmul.f32 %v1657, %v1705
  %v1713 = vmul.f32 %v1658, %v1705
  %v1714 = vmul.f32 %v1659, %v1705
  %v1715 = vmul.f32 %v1660, %v1705
  %v1716 = vmul.f32 %v1661, %v1705
  %v1717 = vmul.f32 %v1662, %v1705
  %v1718 = vmul.f32 %v1663, %v1705
  %v1719 = vmul.f32 %v1664, %v1705
  %v1720 = vmul.f32 %v1665, %v1705
  %v1721 = vmul.f32 %v1666, %v1705
  %v1722 = vmul.f32 %v1667, %v1705
  %v1723 = vmul.f32 %v1668, %v1705
  %v1724 = vmul.f32 %v1669, %v1705
  %v1725 = vmul.f32 %v1670, %v1705
  %v1726 = vmul.f32 %v1671, %v1705
  %v1727 = vmul.f32 %v1672, %v1705
  %v1728 = vmul.f32 %v1673, %v1705
  %v1729 = vmul.f32 %v1674, %v1705
  %v1730 = vmul.f32 %v1675, %v1705
  %v1731 = vmul.f32 %v1676, %v1705
  %v1732 = vmul.f32 %v1677, %v1705
  %v1733 = vmul.f32 %v1678, %v1705
  %v1734 = vmul.f32 %v1679, %v1705
  %v1735 = vmul.f32 %v1680, %v1705
  %v1736 = vmul.f32 %v1681, %v1705
  %v1737 = vmul.f32 %v1682, %v1705
  %v1738 = vmul.f32 %v1683, %v1705
  %v1739 = vmul.f32 %v1684, %v1705
  %v1740 = vmul.f32 %v1685, %v1705
  %v1741 = vmul.f32 %v1686, %v1705
  %v1742 = vmul.f32 %v1687, %v1705
  %v1743 = vmul.f32 %v1688, %v1705
  %v1744 = vmul.f32 %v1689, %v1705
  %v1745 = vmul.f32 %v1690, %v1705
  %v1746 = vmul.f32 %v1691, %v1705
  %v1747 = vmul.f32 %v1692, %v1705
  %v1748 = vmul.f32 %v1693, %v1705
  %v1749 = vmul.f32 %v1694, %v1705
  %v1750 = vmul.f32 %v1695, %v1705
  %v1751 = vmul.f32 %v1696, %v1705
  %v1752 = vmul.f32 %v1697, %v1705
  %v1753 = vmul.f32 %v1698, %v1705
  %v1754 = vmul.f32 %v1699, %v1705
  %v1755 = vmul.f32 %v1700, %v1705
  %v1757 = vlaneseq
  %v1758 = vshrl.u32 %v1757, 7
  %v1759 = vsub.s32 0, %v1758
  %v1760 = vrot.slane %v1341, %v1759
  %v1762 = vadd.f32 %v1707, %v1760
  %v1763 = vadd.f32 %v1708, %v1760
  %v1764 = vadd.f32 %v1709, %v1760
  %v1765 = vadd.f32 %v1710, %v1760
  %v1766 = vadd.f32 %v1711, %v1760
  %v1767 = vadd.f32 %v1712, %v1760
  %v1768 = vadd.f32 %v1713, %v1760
  %v1769 = vadd.f32 %v1714, %v1760
  %v1770 = vadd.f32 %v1715, %v1760
  %v1771 = vadd.f32 %v1716, %v1760
  %v1772 = vadd.f32 %v1717, %v1760
  %v1773 = vadd.f32 %v1718, %v1760
  %v1774 = vadd.f32 %v1719, %v1760
  %v1775 = vadd.f32 %v1720, %v1760
  %v1776 = vadd.f32 %v1721, %v1760
  %v1777 = vadd.f32 %v1722, %v1760
  %v1778 = vadd.f32 %v1723, %v1760
  %v1779 = vadd.f32 %v1724, %v1760
  %v1780 = vadd.f32 %v1725, %v1760
  %v1781 = vadd.f32 %v1726, %v1760
  %v1782 = vadd.f32 %v1727, %v1760
  %v1783 = vadd.f32 %v1728, %v1760
  %v1784 = vadd.f32 %v1729, %v1760
  %v1785 = vadd.f32 %v1730, %v1760
  %v1786 = vadd.f32 %v1731, %v1760
  %v1787 = vadd.f32 %v1732, %v1760
  %v1788 = vadd.f32 %v1733, %v1760
  %v1789 = vadd.f32 %v1734, %v1760
  %v1790 = vadd.f32 %v1735, %v1760
  %v1791 = vadd.f32 %v1736, %v1760
  %v1792 = vadd.f32 %v1737, %v1760
  %v1793 = vadd.f32 %v1738, %v1760
  %v1794 = vadd.f32 %v1739, %v1760
  %v1795 = vadd.f32 %v1740, %v1760
  %v1796 = vadd.f32 %v1741, %v1760
  %v1797 = vadd.f32 %v1742, %v1760
  %v1798 = vadd.f32 %v1743, %v1760
  %v1799 = vadd.f32 %v1744, %v1760
  %v1800 = vadd.f32 %v1745, %v1760
  %v1801 = vadd.f32 %v1746, %v1760
  %v1802 = vadd.f32 %v1747, %v1760
  %v1803 = vadd.f32 %v1748, %v1760
  %v1804 = vadd.f32 %v1749, %v1760
  %v1805 = vadd.f32 %v1750, %v1760
  %v1806 = vadd.f32 %v1751, %v1760
  %v1807 = vadd.f32 %v1752, %v1760
  %v1808 = vadd.f32 %v1753, %v1760
  %v1809 = vadd.f32 %v1754, %v1760
  %v1810 = vadd.f32 %v1755, %v1760
  %v1811 = vmax.f32 %v1762, 0.0
  %v1812 = vmax.f32 %v1763, 0.0
  %v1813 = vmax.f32 %v1764, 0.0
  %v1814 = vmax.f32 %v1765, 0.0
  %v1815 = vmax.f32 %v1766, 0.0
  %v1816 = vmax.f32 %v1767, 0.0
  %v1817 = vmax.f32 %v1768, 0.0
  %v1818 = vmax.f32 %v1769, 0.0
  %v1819 = vmax.f32 %v1770, 0.0
  %v1820 = vmax.f32 %v1771, 0.0
  %v1821 = vmax.f32 %v1772, 0.0
  %v1822 = vmax.f32 %v1773, 0.0
  %v1823 = vmax.f32 %v1774, 0.0
  %v1824 = vmax.f32 %v1775, 0.0
  %v1825 = vmax.f32 %v1776, 0.0
  %v1826 = vmax.f32 %v1777, 0.0
  %v1827 = vmax.f32 %v1778, 0.0
  %v1828 = vmax.f32 %v1779, 0.0
  %v1829 = vmax.f32 %v1780, 0.0
  %v1830 = vmax.f32 %v1781, 0.0
  %v1831 = vmax.f32 %v1782, 0.0
  %v1832 = vmax.f32 %v1783, 0.0
  %v1833 = vmax.f32 %v1784, 0.0
  %v1834 = vmax.f32 %v1785, 0.0
  %v1835 = vmax.f32 %v1786, 0.0
  %v1836 = vmax.f32 %v1787, 0.0
  %v1837 = vmax.f32 %v1788, 0.0
  %v1838 = vmax.f32 %v1789, 0.0
  %v1839 = vmax.f32 %v1790, 0.0
  %v1840 = vmax.f32 %v1791, 0.0
  %v1841 = vmax.f32 %v1792, 0.0
  %v1842 = vmax.f32 %v1793, 0.0
  %v1843 = vmax.f32 %v1794, 0.0
  %v1844 = vmax.f32 %v1795, 0.0
  %v1845 = vmax.f32 %v1796, 0.0
  %v1846 = vmax.f32 %v1797, 0.0
  %v1847 = vmax.f32 %v1798, 0.0
  %v1848 = vmax.f32 %v1799, 0.0
  %v1849 = vmax.f32 %v1800, 0.0
  %v1850 = vmax.f32 %v1801, 0.0
  %v1851 = vmax.f32 %v1802, 0.0
  %v1852 = vmax.f32 %v1803, 0.0
  %v1853 = vmax.f32 %v1804, 0.0
  %v1854 = vmax.f32 %v1805, 0.0
  %v1855 = vmax.f32 %v1806, 0.0
  %v1856 = vmax.f32 %v1807, 0.0
  %v1857 = vmax.f32 %v1808, 0.0
  %v1858 = vmax.f32 %v1809, 0.0
  %v1859 = vmax.f32 %v1810, 0.0
  %v1860 = vpack.c.bf16 %v1812, %v1811
  %v1861 = vpack.c.bf16 %v1814, %v1813
  %v1862 = vpack.c.bf16 %v1816, %v1815
  %v1863 = vpack.c.bf16 %v1818, %v1817
  %v1864 = vpack.c.bf16 %v1820, %v1819
  %v1865 = vpack.c.bf16 %v1822, %v1821
  %v1866 = vpack.c.bf16 %v1824, %v1823
  %v1867 = vpack.c.bf16 %v1826, %v1825
  %v1868 = vpack.c.bf16 %v1828, %v1827
  %v1869 = vpack.c.bf16 %v1830, %v1829
  %v1870 = vpack.c.bf16 %v1832, %v1831
  %v1871 = vpack.c.bf16 %v1834, %v1833
  %v1872 = vpack.c.bf16 %v1836, %v1835
  %v1873 = vpack.c.bf16 %v1838, %v1837
  %v1874 = vpack.c.bf16 %v1840, %v1839
  %v1875 = vpack.c.bf16 %v1842, %v1841
  %v1876 = vpack.c.bf16 %v1844, %v1843
  %v1877 = vpack.c.bf16 %v1846, %v1845
  %v1878 = vpack.c.bf16 %v1848, %v1847
  %v1879 = vpack.c.bf16 %v1850, %v1849
  %v1880 = vpack.c.bf16 %v1852, %v1851
  %v1881 = vpack.c.bf16 %v1854, %v1853
  %v1882 = vpack.c.bf16 %v1856, %v1855
  %v1883 = vpack.c.bf16 %v1858, %v1857
  %v1884 = vpack.c.bf16 %v1859, %v1859
  %v1910 = vunpack.c.l.b16 %v1860
  %v1911 = vunpack.c.h.b16 %v1860
  %v1912 = vunpack.c.l.b16 %v1861
  %v1913 = vunpack.c.h.b16 %v1861
  %v1914 = vunpack.c.l.b16 %v1862
  %v1915 = vunpack.c.h.b16 %v1862
  %v1916 = vunpack.c.l.b16 %v1863
  %v1917 = vunpack.c.h.b16 %v1863
  %v1918 = vunpack.c.l.b16 %v1864
  %v1919 = vunpack.c.h.b16 %v1864
  %v1920 = vunpack.c.l.b16 %v1865
  %v1921 = vunpack.c.h.b16 %v1865
  %v1922 = vunpack.c.l.b16 %v1866
  %v1923 = vunpack.c.h.b16 %v1866
  %v1924 = vunpack.c.l.b16 %v1867
  %v1925 = vunpack.c.h.b16 %v1867
  %v1926 = vunpack.c.l.b16 %v1868
  %v1927 = vunpack.c.h.b16 %v1868
  %v1928 = vunpack.c.l.b16 %v1869
  %v1929 = vunpack.c.h.b16 %v1869
  %v1930 = vunpack.c.l.b16 %v1870
  %v1931 = vunpack.c.h.b16 %v1870
  %v1932 = vunpack.c.l.b16 %v1871
  %v1933 = vunpack.c.h.b16 %v1871
  %v1934 = vunpack.c.l.b16 %v1872
  %v1935 = vunpack.c.h.b16 %v1872
  %v1936 = vunpack.c.l.b16 %v1873
  %v1937 = vunpack.c.h.b16 %v1873
  %v1938 = vunpack.c.l.b16 %v1874
  %v1939 = vunpack.c.h.b16 %v1874
  %v1940 = vunpack.c.l.b16 %v1875
  %v1941 = vunpack.c.h.b16 %v1875
  %v1942 = vunpack.c.l.b16 %v1876
  %v1943 = vunpack.c.h.b16 %v1876
  %v1944 = vunpack.c.l.b16 %v1877
  %v1945 = vunpack.c.h.b16 %v1877
  %v1946 = vunpack.c.l.b16 %v1878
  %v1947 = vunpack.c.h.b16 %v1878
  %v1948 = vunpack.c.l.b16 %v1879
  %v1949 = vunpack.c.h.b16 %v1879
  %v1950 = vunpack.c.l.b16 %v1880
  %v1951 = vunpack.c.h.b16 %v1880
  %v1952 = vunpack.c.l.b16 %v1881
  %v1953 = vunpack.c.h.b16 %v1881
  %v1954 = vunpack.c.l.b16 %v1882
  %v1955 = vunpack.c.h.b16 %v1882
  %v1956 = vunpack.c.l.b16 %v1883
  %v1957 = vunpack.c.h.b16 %v1883
  %v1958 = vunpack.c.l.b16 %v1884
  %v1959 = vpack.c.b16 %v1910, %v1910
  %v1960 = vpack.c.b16 %v1911, %v1911
  %v1961 = vpack.c.b16 %v1912, %v1912
  %v1962 = vpack.c.b16 %v1913, %v1913
  %v1963 = vpack.c.b16 %v1914, %v1914
  %v1964 = vpack.c.b16 %v1915, %v1915
  %v1965 = vpack.c.b16 %v1916, %v1916
  %v1966 = vpack.c.b16 %v1917, %v1917
  %v1967 = vpack.c.b16 %v1918, %v1918
  %v1968 = vpack.c.b16 %v1919, %v1919
  %v1969 = vpack.c.b16 %v1920, %v1920
  %v1970 = vpack.c.b16 %v1921, %v1921
  %v1971 = vpack.c.b16 %v1922, %v1922
  %v1972 = vpack.c.b16 %v1923, %v1923
  %v1973 = vpack.c.b16 %v1924, %v1924
  %v1974 = vpack.c.b16 %v1925, %v1925
  %v1975 = vpack.c.b16 %v1926, %v1926
  %v1976 = vpack.c.b16 %v1927, %v1927
  %v1977 = vpack.c.b16 %v1928, %v1928
  %v1978 = vpack.c.b16 %v1929, %v1929
  %v1979 = vpack.c.b16 %v1930, %v1930
  %v1980 = vpack.c.b16 %v1931, %v1931
  %v1981 = vpack.c.b16 %v1932, %v1932
  %v1982 = vpack.c.b16 %v1933, %v1933
  %v1983 = vpack.c.b16 %v1934, %v1934
  %v1984 = vpack.c.b16 %v1935, %v1935
  %v1985 = vpack.c.b16 %v1936, %v1936
  %v1986 = vpack.c.b16 %v1937, %v1937
  %v1987 = vpack.c.b16 %v1938, %v1938
  %v1988 = vpack.c.b16 %v1939, %v1939
  %v1989 = vpack.c.b16 %v1940, %v1940
  %v1990 = vpack.c.b16 %v1941, %v1941
  %v1991 = vpack.c.b16 %v1942, %v1942
  %v1992 = vpack.c.b16 %v1943, %v1943
  %v1993 = vpack.c.b16 %v1944, %v1944
  %v1994 = vpack.c.b16 %v1945, %v1945
  %v1995 = vpack.c.b16 %v1946, %v1946
  %v1996 = vpack.c.b16 %v1947, %v1947
  %v1997 = vpack.c.b16 %v1948, %v1948
  %v1998 = vpack.c.b16 %v1949, %v1949
  %v1999 = vpack.c.b16 %v1950, %v1950
  %v2000 = vpack.c.b16 %v1951, %v1951
  %v2001 = vpack.c.b16 %v1952, %v1952
  %v2002 = vpack.c.b16 %v1953, %v1953
  %v2003 = vpack.c.b16 %v1954, %v1954
  %v2004 = vpack.c.b16 %v1955, %v1955
  %v2005 = vpack.c.b16 %v1956, %v1956
  %v2006 = vpack.c.b16 %v1957, %v1957
  %v2007 = vpack.c.b16 %v1958, %v1958
  %vm2057 = vcmask 257024
  %2058 = vst.msk [vmem:[%s5] sm:$0xf] %vm2057, %v1959
  %2059 = vst.msk [vmem:[%s5 + $0x4] sm:$0xf] %vm2057, %v1960
  %2060 = vst.msk [vmem:[%s5 + $0x8] sm:$0xf] %vm2057, %v1961
  %2061 = vst.msk [vmem:[%s5 + $0xc] sm:$0xf] %vm2057, %v1962
  %2062 = vst.msk [vmem:[%s5 + $0x10] sm:$0xf] %vm2057, %v1963
  %2063 = vst.msk [vmem:[%s5 + $0x14] sm:$0xf] %vm2057, %v1964
  %2064 = vst.msk [vmem:[%s5 + $0x18] sm:$0xf] %vm2057, %v1965
  %2065 = vst.msk [vmem:[%s5 + $0x1c] sm:$0xf] %vm2057, %v1966
  %2066 = vst.msk [vmem:[%s5 + $0x20] sm:$0xf] %vm2057, %v1967
  %2067 = vst.msk [vmem:[%s5 + $0x24] sm:$0xf] %vm2057, %v1968
  %2068 = vst.msk [vmem:[%s5 + $0x28] sm:$0xf] %vm2057, %v1969
  %2069 = vst.msk [vmem:[%s5 + $0x2c] sm:$0xf] %vm2057, %v1970
  %2070 = vst.msk [vmem:[%s5 + $0x30] sm:$0xf] %vm2057, %v1971
  %2071 = vst.msk [vmem:[%s5 + $0x34] sm:$0xf] %vm2057, %v1972
  %2072 = vst.msk [vmem:[%s5 + $0x38] sm:$0xf] %vm2057, %v1973
  %2073 = vst.msk [vmem:[%s5 + $0x3c] sm:$0xf] %vm2057, %v1974
  %2074 = vst.msk [vmem:[%s5 + $0x40] sm:$0xf] %vm2057, %v1975
  %2075 = vst.msk [vmem:[%s5 + $0x44] sm:$0xf] %vm2057, %v1976
  %2076 = vst.msk [vmem:[%s5 + $0x48] sm:$0xf] %vm2057, %v1977
  %2077 = vst.msk [vmem:[%s5 + $0x4c] sm:$0xf] %vm2057, %v1978
  %2078 = vst.msk [vmem:[%s5 + $0x50] sm:$0xf] %vm2057, %v1979
  %2079 = vst.msk [vmem:[%s5 + $0x54] sm:$0xf] %vm2057, %v1980
  %2080 = vst.msk [vmem:[%s5 + $0x58] sm:$0xf] %vm2057, %v1981
  %2081 = vst.msk [vmem:[%s5 + $0x5c] sm:$0xf] %vm2057, %v1982
  %2082 = vst.msk [vmem:[%s5 + $0x60] sm:$0xf] %vm2057, %v1983
  %2083 = vst.msk [vmem:[%s5 + $0x64] sm:$0xf] %vm2057, %v1984
  %2084 = vst.msk [vmem:[%s5 + $0x68] sm:$0xf] %vm2057, %v1985
  %2085 = vst.msk [vmem:[%s5 + $0x6c] sm:$0xf] %vm2057, %v1986
  %2086 = vst.msk [vmem:[%s5 + $0x70] sm:$0xf] %vm2057, %v1987
  %2087 = vst.msk [vmem:[%s5 + $0x74] sm:$0xf] %vm2057, %v1988
  %2088 = vst.msk [vmem:[%s5 + $0x78] sm:$0xf] %vm2057, %v1989
  %2089 = vst.msk [vmem:[%s5 + $0x7c] sm:$0xf] %vm2057, %v1990
  %2090 = vst.msk [vmem:[%s5 + $0x80] sm:$0xf] %vm2057, %v1991
  %2091 = vst.msk [vmem:[%s5 + $0x84] sm:$0xf] %vm2057, %v1992
  %2092 = vst.msk [vmem:[%s5 + $0x88] sm:$0xf] %vm2057, %v1993
  %2093 = vst.msk [vmem:[%s5 + $0x8c] sm:$0xf] %vm2057, %v1994
  %2094 = vst.msk [vmem:[%s5 + $0x90] sm:$0xf] %vm2057, %v1995
  %2095 = vst.msk [vmem:[%s5 + $0x94] sm:$0xf] %vm2057, %v1996
  %2096 = vst.msk [vmem:[%s5 + $0x98] sm:$0xf] %vm2057, %v1997
  %2097 = vst.msk [vmem:[%s5 + $0x9c] sm:$0xf] %vm2057, %v1998
  %2098 = vst.msk [vmem:[%s5 + $0xa0] sm:$0xf] %vm2057, %v1999
  %2099 = vst.msk [vmem:[%s5 + $0xa4] sm:$0xf] %vm2057, %v2000
  %2100 = vst.msk [vmem:[%s5 + $0xa8] sm:$0xf] %vm2057, %v2001
  %2101 = vst.msk [vmem:[%s5 + $0xac] sm:$0xf] %vm2057, %v2002
  %2102 = vst.msk [vmem:[%s5 + $0xb0] sm:$0xf] %vm2057, %v2003
  %2103 = vst.msk [vmem:[%s5 + $0xb4] sm:$0xf] %vm2057, %v2004
  %2104 = vst.msk [vmem:[%s5 + $0xb8] sm:$0xf] %vm2057, %v2005
  %2105 = vst.msk [vmem:[%s5 + $0xbc] sm:$0xf] %vm2057, %v2006
  %2106 = vst.msk [vmem:[%s5 + $0xc0] sm:$0xf] %vm2057, %v2007
  // Predicated region
  $region22: #{discriminator28_forward.8} parent=0 // pred_check
    _
  $region23: #{discriminator28_forward.8} parent=0 // pred_check_branch
    %2108 = sbr.rel (0) target = $region25
  $region24: #{discriminator28_forward.8} parent=0 // pred_region
    _
  $region25: #{discriminator28_forward.8} parent=0 // pred_fallthru
    _
  // Predicated region
  $region26: #{discriminator28_forward.8} parent=0 // pred_check
    _
  $region27: #{discriminator28_forward.8} parent=0 // pred_check_branch
    %2110 = sbr.rel (0) target = $region29
  $region28: #{discriminator28_forward.8} parent=0 // pred_region
    _
  $region29: #{discriminator28_forward.8} parent=0 // pred_fallthru
    _

// kernel: discriminator28_forward.9
$region0: #{discriminator28_forward.9}
  #allocation0 [shape = 'u32[]', space=smem, size = 0x4, offset = 0x4, fixed_abs, tag = 'smem constant byte address 0x4 - core index']
  #allocation1 [shape = 'u32[144,128]{1,0:T(1,128)}', space=vmem, size = 0x12000, scoped, tag = 'internal scratch']
  %s0 = inlined_call_operand.vmem [shape: bf16[392,32], index: 0, kind: input, shape index: {}]
  %s1 = inlined_call_operand.vmem [shape: bf16[392,288], index: 1, kind: input, shape index: {}]
  %s2 = inlined_call_operand.vmem [shape: bf16[288,32], index: 2, kind: input, shape index: {}]
  %s3 = inlined_call_operand.vmem [shape: f32[1,32], index: 3, kind: input, shape index: {}]
  %s4 = inlined_call_operand.vmem [shape: f32[1,32], index: 4, kind: input, shape index: {}]
  %s5 = inlined_call_operand.vmem [shape: f32[1,32], index: 5, kind: input, shape index: {}]
  %s6 = inlined_call_operand.vmem [shape: bf16[32,32], index: 6, kind: input, shape index: {}]
  %s7 = inlined_call_operand.vmem [shape: f32[1,32], index: 7, kind: input, shape index: {}]
  %s8 = inlined_call_operand.vmem [shape: f32[1,32], index: 8, kind: input, shape index: {}]
  %s9 = inlined_call_operand.vmem [shape: f32[1,32], index: 9, kind: input, shape index: {}]
  %s10 = inlined_call_operand.vmem [shape: bf16[392,32], index: 10, kind: output, shape index: {}]
  %s11 = sld [smem:[#allocation0]]
  $region50: #{discriminator28_forward.9} parent=0
    _
  %s13 = ssub.s32 1, %s11
  %s14 = scalar_select 0, %s13, %s11
  // Predicated region
  $region2: #{discriminator28_forward.9} parent=0 // pred_check
    _
  $region3: #{discriminator28_forward.9} parent=0 // pred_check_branch
    %16 = sbr.rel (0) target = $region5
  $region4: #{discriminator28_forward.9} parent=0 // pred_region
    _
  $region5: #{discriminator28_forward.9} parent=0 // pred_fallthru
    _
  // Predicated region
  $region6: #{discriminator28_forward.9} parent=0 // pred_check
    _
  $region7: #{discriminator28_forward.9} parent=0 // pred_check_branch
    %18 = sbr.rel (0) target = $region9
  $region8: #{discriminator28_forward.9} parent=0 // pred_region
    _
  $region9: #{discriminator28_forward.9} parent=0 // pred_fallthru
    _
  // Predicated region
  $region10: #{discriminator28_forward.9} parent=0 // pred_check
    _
  $region11: #{discriminator28_forward.9} parent=0 // pred_check_branch
    %20 = sbr.rel (0) target = $region13
  $region12: #{discriminator28_forward.9} parent=0 // pred_region
    _
  $region13: #{discriminator28_forward.9} parent=0 // pred_fallthru
    _
  // Predicated region
  $region14: #{discriminator28_forward.9} parent=0 // pred_check
    _
  $region15: #{discriminator28_forward.9} parent=0 // pred_check_branch
    %22 = sbr.rel (0) target = $region17
  $region16: #{discriminator28_forward.9} parent=0 // pred_region
    _
  $region17: #{discriminator28_forward.9} parent=0 // pred_fallthru
    _
  // Predicated region
  $region18: #{discriminator28_forward.9} parent=0 // pred_check
    _
  $region19: #{discriminator28_forward.9} parent=0 // pred_check_branch
    %24 = sbr.rel (0) target = $region21
  $region20: #{discriminator28_forward.9} parent=0 // pred_region
    _
  $region21: #{discriminator28_forward.9} parent=0 // pred_fallthru
    _
  // Predicated region
  $region22: #{discriminator28_forward.9} parent=0 // pred_check
    _
  $region23: #{discriminator28_forward.9} parent=0 // pred_check_branch
    %26 = sbr.rel (0) target = $region25
  $region24: #{discriminator28_forward.9} parent=0 // pred_region
    _
  $region25: #{discriminator28_forward.9} parent=0 // pred_fallthru
    _
  // Predicated region
  $region26: #{discriminator28_forward.9} parent=0 // pred_check
    _
  $region27: #{discriminator28_forward.9} parent=0 // pred_check_branch
    %28 = sbr.rel (0) target = $region29
  $region28: #{discriminator28_forward.9} parent=0 // pred_region
    _
  $region29: #{discriminator28_forward.9} parent=0 // pred_fallthru
    _
  // Predicated region
  $region30: #{discriminator28_forward.9} parent=0 // pred_check
    _
  $region31: #{discriminator28_forward.9} parent=0 // pred_check_branch
    %30 = sbr.rel (0) target = $region33
  $region32: #{discriminator28_forward.9} parent=0 // pred_region
    _
  $region33: #{discriminator28_forward.9} parent=0 // pred_fallthru
    _
  // Predicated region
  $region34: #{discriminator28_forward.9} parent=0 // pred_check
    _
  $region35: #{discriminator28_forward.9} parent=0 // pred_check_branch
    %32 = sbr.rel (0) target = $region37
  $region36: #{discriminator28_forward.9} parent=0 // pred_region
    _
  $region37: #{discriminator28_forward.9} parent=0 // pred_fallthru
    _
  // Predicated region
  $region38: #{discriminator28_forward.9} parent=0 // pred_check
    _
  $region39: #{discriminator28_forward.9} parent=0 // pred_check_branch
    %34 = sbr.rel (0) target = $region41
  $region40: #{discriminator28_forward.9} parent=0 // pred_region
    _
  $region41: #{discriminator28_forward.9} parent=0 // pred_fallthru
    _
  %v36 = vld [vmem:[%s1] sm:$0xff]
  %v37 = vld [vmem:[%s1 + $0x8] sm:$0xf]
  %v38 = vld [vmem:[%s1 + $0xc] sm:$0xff]
  %v39 = vld [vmem:[%s1 + $0x14] sm:$0xf]
  %v40 = vld [vmem:[%s1 + $0x18] sm:$0xff]
  %v41 = vld [vmem:[%s1 + $0x20] sm:$0xf]
  %v42 = vld [vmem:[%s1 + $0x24] sm:$0xff]
  %v43 = vld [vmem:[%s1 + $0x2c] sm:$0xf]
  %v44 = vld [vmem:[%s1 + $0x30] sm:$0xff]
  %v45 = vld [vmem:[%s1 + $0x38] sm:$0xf]
  %v46 = vld [vmem:[%s1 + $0x3c] sm:$0xff]
  %v47 = vld [vmem:[%s1 + $0x44] sm:$0xf]
  %v48 = vld [vmem:[%s1 + $0x48] sm:$0xff]
  %v49 = vld [vmem:[%s1 + $0x50] sm:$0xf]
  %v50 = vld [vmem:[%s1 + $0x54] sm:$0xff]
  %v51 = vld [vmem:[%s1 + $0x5c] sm:$0xf]
  %v52 = vld [vmem:[%s1 + $0x60] sm:$0xff]
  %v53 = vld [vmem:[%s1 + $0x68] sm:$0xf]
  %v54 = vld [vmem:[%s1 + $0x6c] sm:$0xff]
  %v55 = vld [vmem:[%s1 + $0x74] sm:$0xf]
  %v56 = vld [vmem:[%s1 + $0x78] sm:$0xff]
  %v57 = vld [vmem:[%s1 + $0x80] sm:$0xf]
  %v58 = vld [vmem:[%s1 + $0x84] sm:$0xff]
  %v59 = vld [vmem:[%s1 + $0x8c] sm:$0xf]
  %v60 = vld [vmem:[%s1 + $0x90] sm:$0xff]
  %v61 = vld [vmem:[%s1 + $0x98] sm:$0xf]
  %v62 = vld [vmem:[%s1 + $0x9c] sm:$0xff]
  %v63 = vld [vmem:[%s1 + $0xa4] sm:$0xf]
  %v64 = vld [vmem:[%s1 + $0xa8] sm:$0xff]
  %v65 = vld [vmem:[%s1 + $0xb0] sm:$0xf]
  %v66 = vld [vmem:[%s1 + $0xb4] sm:$0xff]
  %v67 = vld [vmem:[%s1 + $0xbc] sm:$0xf]
  %v68 = vld [vmem:[%s1 + $0xc0] sm:$0xff]
  %v69 = vld [vmem:[%s1 + $0xc8] sm:$0xf]
  %v70 = vld [vmem:[%s1 + $0xcc] sm:$0xff]
  %v71 = vld [vmem:[%s1 + $0xd4] sm:$0xf]
  %v72 = vld [vmem:[%s1 + $0xd8] sm:$0xff]
  %v73 = vld [vmem:[%s1 + $0xe0] sm:$0xf]
  %v74 = vld [vmem:[%s1 + $0xe4] sm:$0xff]
  %v75 = vld [vmem:[%s1 + $0xec] sm:$0xf]
  %v76 = vld [vmem:[%s1 + $0xf0] sm:$0xff]
  %v77 = vld [vmem:[%s1 + $0xf8] sm:$0xf]
  %v78 = vld [vmem:[%s1 + $0xfc] sm:$0xff]
  %v79 = vld [vmem:[%s1 + $0x104] sm:$0xf]
  %v80 = vld [vmem:[%s1 + $0x108] sm:$0xff]
  %v81 = vld [vmem:[%s1 + $0x110] sm:$0xf]
  %v82 = vld [vmem:[%s1 + $0x114] sm:$0xff]
  %v83 = vld [vmem:[%s1 + $0x11c] sm:$0xf]
  %v84 = vld [vmem:[%s1 + $0x120] sm:$0xff]
  %v85 = vld [vmem:[%s1 + $0x128] sm:$0xf]
  %v86 = vld [vmem:[%s1 + $0x12c] sm:$0xff]
  %v87 = vld [vmem:[%s1 + $0x134] sm:$0xf]
  %v88 = vld [vmem:[%s1 + $0x138] sm:$0xff]
  %v89 = vld [vmem:[%s1 + $0x140] sm:$0xf]
  %v90 = vld [vmem:[%s1 + $0x144] sm:$0xff]
  %v91 = vld [vmem:[%s1 + $0x14c] sm:$0xf]
  %v92 = vld [vmem:[%s1 + $0x150] sm:$0xff]
  %v93 = vld [vmem:[%s1 + $0x158] sm:$0xf]
  %v94 = vld [vmem:[%s1 + $0x15c] sm:$0xff]
  %v95 = vld [vmem:[%s1 + $0x164] sm:$0xf]
  %v96 = vld [vmem:[%s1 + $0x168] sm:$0xff]
  %v97 = vld [vmem:[%s1 + $0x170] sm:$0xf]
  %v98 = vld [vmem:[%s1 + $0x174] sm:$0xff]
  %v99 = vld [vmem:[%s1 + $0x17c] sm:$0xf]
  %v100 = vld [vmem:[%s1 + $0x180] sm:$0xff]
  %v101 = vld [vmem:[%s1 + $0x188] sm:$0xf]
  %v102 = vld [vmem:[%s1 + $0x18c] sm:$0xff]
  %v103 = vld [vmem:[%s1 + $0x194] sm:$0xf]
  %v104 = vld [vmem:[%s1 + $0x198] sm:$0xff]
  %v105 = vld [vmem:[%s1 + $0x1a0] sm:$0xf]
  %v106 = vld [vmem:[%s1 + $0x1a4] sm:$0xff]
  %v107 = vld [vmem:[%s1 + $0x1ac] sm:$0xf]
  %v108 = vld [vmem:[%s1 + $0x1b0] sm:$0xff]
  %v109 = vld [vmem:[%s1 + $0x1b8] sm:$0xf]
  %v110 = vld [vmem:[%s1 + $0x1bc] sm:$0xff]
  %v111 = vld [vmem:[%s1 + $0x1c4] sm:$0xf]
  %v112 = vld [vmem:[%s1 + $0x1c8] sm:$0xff]
  %v113 = vld [vmem:[%s1 + $0x1d0] sm:$0xf]
  %v114 = vld [vmem:[%s1 + $0x1d4] sm:$0xff]
  %v115 = vld [vmem:[%s1 + $0x1dc] sm:$0xf]
  %v116 = vld [vmem:[%s1 + $0x1e0] sm:$0xff]
  %v117 = vld [vmem:[%s1 + $0x1e8] sm:$0xf]
  %v118 = vld [vmem:[%s1 + $0x1ec] sm:$0xff]
  %v119 = vld [vmem:[%s1 + $0x1f4] sm:$0xf]
  %v120 = vld [vmem:[%s1 + $0x1f8] sm:$0xff]
  %v121 = vld [vmem:[%s1 + $0x200] sm:$0xf]
  %v122 = vld [vmem:[%s1 + $0x204] sm:$0xff]
  %v123 = vld [vmem:[%s1 + $0x20c] sm:$0xf]
  %v124 = vld [vmem:[%s1 + $0x210] sm:$0xff]
  %v125 = vld [vmem:[%s1 + $0x218] sm:$0xf]
  %v126 = vld [vmem:[%s1 + $0x21c] sm:$0xff]
  %v127 = vld [vmem:[%s1 + $0x224] sm:$0xf]
  %v128 = vld [vmem:[%s1 + $0x228] sm:$0xff]
  %v129 = vld [vmem:[%s1 + $0x230] sm:$0xf]
  %v130 = vld [vmem:[%s1 + $0x234] sm:$0xff]
  %v131 = vld [vmem:[%s1 + $0x23c] sm:$0xf]
  %v132 = vld [vmem:[%s1 + $0x240] sm:$0xff]
  %v133 = vld [vmem:[%s1 + $0x248] sm:$0xf]
  %v134 = vld [vmem:[%s2] sm:$0xf]
  %v135 = vld [vmem:[%s2 + $0x4] sm:$0xf]
  %v136 = vld [vmem:[%s2 + $0x8] sm:$0xf]
  %v137 = vld [vmem:[%s2 + $0xc] sm:$0xf]
  %v138 = vld [vmem:[%s2 + $0x10] sm:$0xf]
  %v139 = vld [vmem:[%s2 + $0x14] sm:$0xf]
  %v140 = vld [vmem:[%s2 + $0x18] sm:$0xf]
  %v141 = vld [vmem:[%s2 + $0x1c] sm:$0xf]
  %v142 = vld [vmem:[%s2 + $0x20] sm:$0xf]
  %v143 = vld [vmem:[%s2 + $0x24] sm:$0xf]
  %v144 = vld [vmem:[%s2 + $0x28] sm:$0xf]
  %v145 = vld [vmem:[%s2 + $0x2c] sm:$0xf]
  %v146 = vld [vmem:[%s2 + $0x30] sm:$0xf]
  %v147 = vld [vmem:[%s2 + $0x34] sm:$0xf]
  %v148 = vld [vmem:[%s2 + $0x38] sm:$0xf]
  %v149 = vld [vmem:[%s2 + $0x3c] sm:$0xf]
  %v150 = vld [vmem:[%s2 + $0x40] sm:$0xf]
  %v151 = vld [vmem:[%s2 + $0x44] sm:$0xf]
  %v152 = vld [vmem:[%s2 + $0x48] sm:$0xf]
  %v153 = vld [vmem:[%s2 + $0x4c] sm:$0xf]
  %v154 = vld [vmem:[%s2 + $0x50] sm:$0xf]
  %v155 = vld [vmem:[%s2 + $0x54] sm:$0xf]
  %v156 = vld [vmem:[%s2 + $0x58] sm:$0xf]
  %v157 = vld [vmem:[%s2 + $0x5c] sm:$0xf]
  %v158 = vld [vmem:[%s2 + $0x60] sm:$0xf]
  %v159 = vld [vmem:[%s2 + $0x64] sm:$0xf]
  %v160 = vld [vmem:[%s2 + $0x68] sm:$0xf]
  %v161 = vld [vmem:[%s2 + $0x6c] sm:$0xf]
  %v162 = vld [vmem:[%s2 + $0x70] sm:$0xf]
  %v163 = vld [vmem:[%s2 + $0x74] sm:$0xf]
  %v164 = vld [vmem:[%s2 + $0x78] sm:$0xf]
  %v165 = vld [vmem:[%s2 + $0x7c] sm:$0xf]
  %v166 = vld [vmem:[%s2 + $0x80] sm:$0xf]
  %v167 = vld [vmem:[%s2 + $0x84] sm:$0xf]
  %v168 = vld [vmem:[%s2 + $0x88] sm:$0xf]
  %v169 = vld [vmem:[%s2 + $0x8c] sm:$0xf]
  %v170 = vld [vmem:[%s3] sm:$0x1]
  %v172 = vlaneseq
  %v173 = vshrl.u32 %v172, 7
  %v174 = vsub.s32 0, %v173
  %v175 = vrot.slane %v170, %v174
  %v275 = vunpack.c.l.b16 %v36
  %v276 = vunpack.c.h.b16 %v36
  %v277 = vunpack.c.l.b16 %v37
  %v278 = vunpack.c.l.b16 %v38
  %v279 = vunpack.c.h.b16 %v38
  %v280 = vunpack.c.l.b16 %v39
  %v281 = vunpack.c.l.b16 %v40
  %v282 = vunpack.c.h.b16 %v40
  %v283 = vunpack.c.l.b16 %v41
  %v284 = vunpack.c.l.b16 %v42
  %v285 = vunpack.c.h.b16 %v42
  %v286 = vunpack.c.l.b16 %v43
  %v287 = vunpack.c.l.b16 %v44
  %v288 = vunpack.c.h.b16 %v44
  %v289 = vunpack.c.l.b16 %v45
  %v290 = vunpack.c.l.b16 %v46
  %v291 = vunpack.c.h.b16 %v46
  %v292 = vunpack.c.l.b16 %v47
  %v293 = vunpack.c.l.b16 %v48
  %v294 = vunpack.c.h.b16 %v48
  %v295 = vunpack.c.l.b16 %v49
  %v296 = vunpack.c.l.b16 %v50
  %v297 = vunpack.c.h.b16 %v50
  %v298 = vunpack.c.l.b16 %v51
  %v299 = vunpack.c.l.b16 %v52
  %v300 = vunpack.c.h.b16 %v52
  %v301 = vunpack.c.l.b16 %v53
  %v302 = vunpack.c.l.b16 %v54
  %v303 = vunpack.c.h.b16 %v54
  %v304 = vunpack.c.l.b16 %v55
  %v305 = vunpack.c.l.b16 %v56
  %v306 = vunpack.c.h.b16 %v56
  %v307 = vunpack.c.l.b16 %v57
  %v308 = vunpack.c.l.b16 %v58
  %v309 = vunpack.c.h.b16 %v58
  %v310 = vunpack.c.l.b16 %v59
  %v311 = vunpack.c.l.b16 %v60
  %v312 = vunpack.c.h.b16 %v60
  %v313 = vunpack.c.l.b16 %v61
  %v314 = vunpack.c.l.b16 %v62
  %v315 = vunpack.c.h.b16 %v62
  %v316 = vunpack.c.l.b16 %v63
  %v317 = vunpack.c.l.b16 %v64
  %v318 = vunpack.c.h.b16 %v64
  %v319 = vunpack.c.l.b16 %v65
  %v320 = vunpack.c.l.b16 %v66
  %v321 = vunpack.c.h.b16 %v66
  %v322 = vunpack.c.l.b16 %v67
  %v323 = vunpack.c.l.b16 %v68
  %v324 = vunpack.c.h.b16 %v68
  %v325 = vunpack.c.l.b16 %v69
  %v326 = vunpack.c.l.b16 %v70
  %v327 = vunpack.c.h.b16 %v70
  %v328 = vunpack.c.l.b16 %v71
  %v329 = vunpack.c.l.b16 %v72
  %v330 = vunpack.c.h.b16 %v72
  %v331 = vunpack.c.l.b16 %v73
  %v332 = vunpack.c.l.b16 %v74
  %v333 = vunpack.c.h.b16 %v74
  %v334 = vunpack.c.l.b16 %v75
  %v335 = vunpack.c.l.b16 %v76
  %v336 = vunpack.c.h.b16 %v76
  %v337 = vunpack.c.l.b16 %v77
  %v338 = vunpack.c.l.b16 %v78
  %v339 = vunpack.c.h.b16 %v78
  %v340 = vunpack.c.l.b16 %v79
  %v341 = vunpack.c.l.b16 %v80
  %v342 = vunpack.c.h.b16 %v80
  %v343 = vunpack.c.l.b16 %v81
  %v344 = vunpack.c.l.b16 %v82
  %v345 = vunpack.c.h.b16 %v82
  %v346 = vunpack.c.l.b16 %v83
  %v347 = vunpack.c.l.b16 %v84
  %v348 = vunpack.c.h.b16 %v84
  %v349 = vunpack.c.l.b16 %v85
  %v350 = vunpack.c.l.b16 %v86
  %v351 = vunpack.c.h.b16 %v86
  %v352 = vunpack.c.l.b16 %v87
  %v353 = vunpack.c.l.b16 %v88
  %v354 = vunpack.c.h.b16 %v88
  %v355 = vunpack.c.l.b16 %v89
  %v356 = vunpack.c.l.b16 %v90
  %v357 = vunpack.c.h.b16 %v90
  %v358 = vunpack.c.l.b16 %v91
  %v359 = vunpack.c.l.b16 %v92
  %v360 = vunpack.c.h.b16 %v92
  %v361 = vunpack.c.l.b16 %v93
  %v362 = vunpack.c.l.b16 %v94
  %v363 = vunpack.c.h.b16 %v94
  %v364 = vunpack.c.l.b16 %v95
  %v365 = vunpack.c.l.b16 %v96
  %v366 = vunpack.c.h.b16 %v96
  %v367 = vunpack.c.l.b16 %v97
  %v368 = vunpack.c.l.b16 %v98
  %v369 = vunpack.c.h.b16 %v98
  %v370 = vunpack.c.l.b16 %v99
  %v371 = vunpack.c.l.b16 %v100
  %v372 = vunpack.c.h.b16 %v100
  %v373 = vunpack.c.l.b16 %v101
  %v374 = vunpack.c.l.b16 %v102
  %v375 = vunpack.c.h.b16 %v102
  %v376 = vunpack.c.l.b16 %v103
  %v377 = vunpack.c.l.b16 %v104
  %v378 = vunpack.c.h.b16 %v104
  %v379 = vunpack.c.l.b16 %v105
  %v380 = vunpack.c.l.b16 %v106
  %v381 = vunpack.c.h.b16 %v106
  %v382 = vunpack.c.l.b16 %v107
  %v383 = vunpack.c.l.b16 %v108
  %v384 = vunpack.c.h.b16 %v108
  %v385 = vunpack.c.l.b16 %v109
  %v386 = vunpack.c.l.b16 %v110
  %v387 = vunpack.c.h.b16 %v110
  %v388 = vunpack.c.l.b16 %v111
  %v389 = vunpack.c.l.b16 %v112
  %v390 = vunpack.c.h.b16 %v112
  %v391 = vunpack.c.l.b16 %v113
  %v392 = vunpack.c.l.b16 %v114
  %v393 = vunpack.c.h.b16 %v114
  %v394 = vunpack.c.l.b16 %v115
  %v395 = vunpack.c.l.b16 %v116
  %v396 = vunpack.c.h.b16 %v116
  %v397 = vunpack.c.l.b16 %v117
  %v398 = vunpack.c.l.b16 %v118
  %v399 = vunpack.c.h.b16 %v118
  %v400 = vunpack.c.l.b16 %v119
  %v401 = vunpack.c.l.b16 %v120
  %v402 = vunpack.c.h.b16 %v120
  %v403 = vunpack.c.l.b16 %v121
  %v404 = vunpack.c.l.b16 %v122
  %v405 = vunpack.c.h.b16 %v122
  %v406 = vunpack.c.l.b16 %v123
  %v407 = vunpack.c.l.b16 %v124
  %v408 = vunpack.c.h.b16 %v124
  %v409 = vunpack.c.l.b16 %v125
  %v410 = vunpack.c.l.b16 %v126
  %v411 = vunpack.c.h.b16 %v126
  %v412 = vunpack.c.l.b16 %v127
  %v413 = vunpack.c.l.b16 %v128
  %v414 = vunpack.c.h.b16 %v128
  %v415 = vunpack.c.l.b16 %v129
  %v416 = vunpack.c.l.b16 %v130
  %v417 = vunpack.c.h.b16 %v130
  %v418 = vunpack.c.l.b16 %v131
  %v419 = vunpack.c.l.b16 %v132
  %v420 = vunpack.c.h.b16 %v132
  %v421 = vunpack.c.l.b16 %v133
  %v422 = vpack.c.b16 %v278, %v275
  %v423 = vpack.c.b16 %v279, %v276
  %v424 = vpack.c.b16 %v280, %v277
  %v425 = vpack.c.b16 %v284, %v281
  %v426 = vpack.c.b16 %v285, %v282
  %v427 = vpack.c.b16 %v286, %v283
  %v428 = vpack.c.b16 %v290, %v287
  %v429 = vpack.c.b16 %v291, %v288
  %v430 = vpack.c.b16 %v292, %v289
  %v431 = vpack.c.b16 %v296, %v293
  %v432 = vpack.c.b16 %v297, %v294
  %v433 = vpack.c.b16 %v298, %v295
  %v434 = vpack.c.b16 %v302, %v299
  %v435 = vpack.c.b16 %v303, %v300
  %v436 = vpack.c.b16 %v304, %v301
  %v437 = vpack.c.b16 %v308, %v305
  %v438 = vpack.c.b16 %v309, %v306
  %v439 = vpack.c.b16 %v310, %v307
  %v440 = vpack.c.b16 %v314, %v311
  %v441 = vpack.c.b16 %v315, %v312
  %v442 = vpack.c.b16 %v316, %v313
  %v443 = vpack.c.b16 %v320, %v317
  %v444 = vpack.c.b16 %v321, %v318
  %v445 = vpack.c.b16 %v322, %v319
  %v446 = vpack.c.b16 %v326, %v323
  %v447 = vpack.c.b16 %v327, %v324
  %v448 = vpack.c.b16 %v328, %v325
  %v449 = vpack.c.b16 %v332, %v329
  %v450 = vpack.c.b16 %v333, %v330
  %v451 = vpack.c.b16 %v334, %v331
  %v452 = vpack.c.b16 %v338, %v335
  %v453 = vpack.c.b16 %v339, %v336
  %v454 = vpack.c.b16 %v340, %v337
  %v455 = vpack.c.b16 %v344, %v341
  %v456 = vpack.c.b16 %v345, %v342
  %v457 = vpack.c.b16 %v346, %v343
  %v458 = vpack.c.b16 %v350, %v347
  %v459 = vpack.c.b16 %v351, %v348
  %v460 = vpack.c.b16 %v352, %v349
  %v461 = vpack.c.b16 %v356, %v353
  %v462 = vpack.c.b16 %v357, %v354
  %v463 = vpack.c.b16 %v358, %v355
  %v464 = vpack.c.b16 %v362, %v359
  %v465 = vpack.c.b16 %v363, %v360
  %v466 = vpack.c.b16 %v364, %v361
  %v467 = vpack.c.b16 %v368, %v365
  %v468 = vpack.c.b16 %v369, %v366
  %v469 = vpack.c.b16 %v370, %v367
  %v470 = vpack.c.b16 %v374, %v371
  %v471 = vpack.c.b16 %v375, %v372
  %v472 = vpack.c.b16 %v376, %v373
  %v473 = vpack.c.b16 %v380, %v377
  %v474 = vpack.c.b16 %v381, %v378
  %v475 = vpack.c.b16 %v382, %v379
  %v476 = vpack.c.b16 %v386, %v383
  %v477 = vpack.c.b16 %v387, %v384
  %v478 = vpack.c.b16 %v388, %v385
  %v479 = vpack.c.b16 %v392, %v389
  %v480 = vpack.c.b16 %v393, %v390
  %v481 = vpack.c.b16 %v394, %v391
  %v482 = vpack.c.b16 %v398, %v395
  %v483 = vpack.c.b16 %v399, %v396
  %v484 = vpack.c.b16 %v400, %v397
  %v485 = vpack.c.b16 %v404, %v401
  %v486 = vpack.c.b16 %v405, %v402
  %v487 = vpack.c.b16 %v406, %v403
  %v488 = vpack.c.b16 %v410, %v407
  %v489 = vpack.c.b16 %v411, %v408
  %v490 = vpack.c.b16 %v412, %v409
  %v491 = vpack.c.b16 %v416, %v413
  %v492 = vpack.c.b16 %v417, %v414
  %v493 = vpack.c.b16 %v418, %v415
  %v494 = vpack.c.b16 %v419, %v419
  %v495 = vpack.c.b16 %v420, %v420
  %v496 = vpack.c.b16 %v421, %v421
  %v583 = vunpack.c.l.b16 %v134
  %v584 = vunpack.c.l.b16 %v135
  %v585 = vunpack.c.l.b16 %v136
  %v586 = vunpack.c.l.b16 %v137
  %v587 = vunpack.c.l.b16 %v138
  %v588 = vunpack.c.l.b16 %v139
  %v589 = vunpack.c.l.b16 %v140
  %v590 = vunpack.c.l.b16 %v141
  %v591 = vunpack.c.l.b16 %v142
  %v592 = vunpack.c.l.b16 %v143
  %v593 = vunpack.c.l.b16 %v144
  %v594 = vunpack.c.l.b16 %v145
  %v595 = vunpack.c.l.b16 %v146
  %v596 = vunpack.c.l.b16 %v147
  %v597 = vunpack.c.l.b16 %v148
  %v598 = vunpack.c.l.b16 %v149
  %v599 = vunpack.c.l.b16 %v150
  %v600 = vunpack.c.l.b16 %v151
  %v601 = vunpack.c.l.b16 %v152
  %v602 = vunpack.c.l.b16 %v153
  %v603 = vunpack.c.l.b16 %v154
  %v604 = vunpack.c.l.b16 %v155
  %v605 = vunpack.c.l.b16 %v156
  %v606 = vunpack.c.l.b16 %v157
  %v607 = vunpack.c.l.b16 %v158
  %v608 = vunpack.c.l.b16 %v159
  %v609 = vunpack.c.l.b16 %v160
  %v610 = vunpack.c.l.b16 %v161
  %v611 = vunpack.c.l.b16 %v162
  %v612 = vunpack.c.l.b16 %v163
  %v613 = vunpack.c.l.b16 %v164
  %v614 = vunpack.c.l.b16 %v165
  %v615 = vunpack.c.l.b16 %v166
  %v616 = vunpack.c.l.b16 %v167
  %v617 = vunpack.c.l.b16 %v168
  %v618 = vunpack.c.l.b16 %v169
  %v619 = vpack.c.b16 %v584, %v583
  %v620 = vpack.c.b16 %v586, %v585
  %v621 = vpack.c.b16 %v588, %v587
  %v622 = vpack.c.b16 %v590, %v589
  %v623 = vpack.c.b16 %v592, %v591
  %v624 = vpack.c.b16 %v594, %v593
  %v625 = vpack.c.b16 %v596, %v595
  %v626 = vpack.c.b16 %v598, %v597
  %v627 = vpack.c.b16 %v600, %v599
  %v628 = vpack.c.b16 %v602, %v601
  %v629 = vpack.c.b16 %v604, %v603
  %v630 = vpack.c.b16 %v606, %v605
  %v631 = vpack.c.b16 %v608, %v607
  %v632 = vpack.c.b16 %v610, %v609
  %v633 = vpack.c.b16 %v612, %v611
  %v634 = vpack.c.b16 %v614, %v613
  %v635 = vpack.c.b16 %v616, %v615
  %v636 = vpack.c.b16 %v618, %v617
  %vm655 = vcmask 261120
  %v657 = vsel %vm655, %v424, 0
  %v660 = vsel %vm655, %v427, 0
  %v663 = vsel %vm655, %v430, 0
  %v666 = vsel %vm655, %v433, 0
  %v669 = vsel %vm655, %v436, 0
  %v672 = vsel %vm655, %v439, 0
  %v675 = vsel %vm655, %v442, 0
  %v678 = vsel %vm655, %v445, 0
  %v681 = vsel %vm655, %v448, 0
  %v684 = vsel %vm655, %v451, 0
  %v687 = vsel %vm655, %v454, 0
  %v690 = vsel %vm655, %v457, 0
  %v693 = vsel %vm655, %v460, 0
  %v696 = vsel %vm655, %v463, 0
  %v699 = vsel %vm655, %v466, 0
  %v702 = vsel %vm655, %v469, 0
  %v705 = vsel %vm655, %v472, 0
  %v708 = vsel %vm655, %v475, 0
  %v711 = vsel %vm655, %v478, 0
  %v714 = vsel %vm655, %v481, 0
  %v717 = vsel %vm655, %v484, 0
  %v720 = vsel %vm655, %v487, 0
  %v723 = vsel %vm655, %v490, 0
  %v726 = vsel %vm655, %v493, 0
  %v729 = vsel %vm655, %v496, 0
  %731 = vmatprep.subr.bf16.mxu0 0
  %732 = vmatpush1.bf16.msra.mxu0 %v626
  %733 = vmatprep.subr.bf16.mxu0 0
  %734 = vmatpush1.bf16.msra.mxu0 %v625
  %735 = vmatprep.subr.bf16.mxu0 0
  %736 = vmatpush1.bf16.msra.mxu0 %v624
  %737 = vmatprep.subr.bf16.mxu0 0
  %738 = vmatpush1.bf16.msra.mxu0 %v623
  %739 = vmatprep.subr.bf16.mxu0 0
  %740 = vmatpush1.bf16.msra.mxu0 %v622
  %741 = vmatprep.subr.bf16.mxu0 0
  %742 = vmatpush1.bf16.msra.mxu0 %v621
  %743 = vmatprep.subr.bf16.mxu0 0
  %744 = vmatpush1.bf16.msra.mxu0 %v620
  %745 = vmatprep.subr.bf16.mxu0 0
  %746 = vmatpush1.bf16.msra.mxu0 %v619
  %747 = vmatprep.subr.bf16.mxu0 0
  %748 = vmatpush2.bf16.msra.mxu0 %v634
  %749 = vmatprep.subr.bf16.mxu0 0
  %750 = vmatpush2.bf16.msra.mxu0 %v633
  %751 = vmatprep.subr.bf16.mxu0 0
  %752 = vmatpush2.bf16.msra.mxu0 %v632
  %753 = vmatprep.subr.bf16.mxu0 0
  %754 = vmatpush2.bf16.msra.mxu0 %v631
  %755 = vmatprep.subr.bf16.mxu0 0
  %756 = vmatpush2.bf16.msra.mxu0 %v630
  %757 = vmatprep.subr.bf16.mxu0 0
  %758 = vmatpush2.bf16.msra.mxu0 %v629
  %759 = vmatprep.subr.bf16.mxu0 0
  %760 = vmatpush2.bf16.msra.mxu0 %v628
  %761 = vmatprep.subr.bf16.mxu0 0
  %762 = vmatpush2.bf16.msra.mxu0 %v627
  %763 = vmatprep.mubr.bf16.mxu0 %v423
  %764 = vmatmul.mubr.bf16.gmra.mxu0 %v422
  %v765 = vpop.f32.mrf.mxu0
  %v766 = vadd.f32 %v175, %v765
  %v767 = vpop.f32.mrf.mxu0
  %v768 = vpop.f32.mrf.mxu0
  %v769 = vadd.f32 %v175, %v768
  %v770 = vpop.f32.mrf.mxu0
  %771 = vmatprep.mubr.bf16.mxu0 %v426
  %772 = vmatmul.mubr.bf16.gmra.mxu0 %v425
  %v773 = vpop.f32.mrf.mxu0
  %v774 = vadd.f32 %v175, %v773
  %v775 = vpop.f32.mrf.mxu0
  %v776 = vpop.f32.mrf.mxu0
  %v777 = vadd.f32 %v175, %v776
  %v778 = vpop.f32.mrf.mxu0
  %779 = vmatprep.mubr.bf16.mxu0 %v429
  %780 = vmatmul.mubr.bf16.gmra.mxu0 %v428
  %v781 = vpop.f32.mrf.mxu0
  %v782 = vadd.f32 %v175, %v781
  %v783 = vpop.f32.mrf.mxu0
  %v784 = vpop.f32.mrf.mxu0
  %v785 = vadd.f32 %v175, %v784
  %v786 = vpop.f32.mrf.mxu0
  %787 = vmatprep.mubr.bf16.mxu0 %v432
  %788 = vmatmul.mubr.bf16.gmra.mxu0 %v431
  %v789 = vpop.f32.mrf.mxu0
  %v790 = vadd.f32 %v175, %v789
  %v791 = vpop.f32.mrf.mxu0
  %v792 = vpop.f32.mrf.mxu0
  %v793 = vadd.f32 %v175, %v792
  %v794 = vpop.f32.mrf.mxu0
  %795 = vmatprep.mubr.bf16.mxu0 %v435
  %796 = vmatmul.mubr.bf16.gmra.mxu0 %v434
  %v797 = vpop.f32.mrf.mxu0
  %v798 = vadd.f32 %v175, %v797
  %v799 = vpop.f32.mrf.mxu0
  %v800 = vpop.f32.mrf.mxu0
  %v801 = vadd.f32 %v175, %v800
  %v802 = vpop.f32.mrf.mxu0
  %803 = vmatprep.mubr.bf16.mxu0 %v438
  %804 = vmatmul.mubr.bf16.gmra.mxu0 %v437
  %v805 = vpop.f32.mrf.mxu0
  %v806 = vadd.f32 %v175, %v805
  %v807 = vpop.f32.mrf.mxu0
  %v808 = vpop.f32.mrf.mxu0
  %v809 = vadd.f32 %v175, %v808
  %v810 = vpop.f32.mrf.mxu0
  %811 = vmatprep.mubr.bf16.mxu0 %v441
  %812 = vmatmul.mubr.bf16.gmra.mxu0 %v440
  %v813 = vpop.f32.mrf.mxu0
  %v814 = vadd.f32 %v175, %v813
  %v815 = vpop.f32.mrf.mxu0
  %v816 = vpop.f32.mrf.mxu0
  %v817 = vadd.f32 %v175, %v816
  %v818 = vpop.f32.mrf.mxu0
  %819 = vmatprep.mubr.bf16.mxu0 %v444
  %820 = vmatmul.mubr.bf16.gmra.mxu0 %v443
  %v821 = vpop.f32.mrf.mxu0
  %v822 = vadd.f32 %v175, %v821
  %v823 = vpop.f32.mrf.mxu0
  %v824 = vpop.f32.mrf.mxu0
  %v825 = vadd.f32 %v175, %v824
  %v826 = vpop.f32.mrf.mxu0
  %827 = vmatprep.mubr.bf16.mxu0 %v447
  %828 = vmatmul.mubr.bf16.gmra.mxu0 %v446
  %v829 = vpop.f32.mrf.mxu0
  %v830 = vadd.f32 %v175, %v829
  %v831 = vpop.f32.mrf.mxu0
  %v832 = vpop.f32.mrf.mxu0
  %v833 = vadd.f32 %v175, %v832
  %v834 = vpop.f32.mrf.mxu0
  %835 = vmatprep.mubr.bf16.mxu0 %v450
  %836 = vmatmul.mubr.bf16.gmra.mxu0 %v449
  %v837 = vpop.f32.mrf.mxu0
  %v838 = vadd.f32 %v175, %v837
  %v839 = vpop.f32.mrf.mxu0
  %v840 = vpop.f32.mrf.mxu0
  %v841 = vadd.f32 %v175, %v840
  %v842 = vpop.f32.mrf.mxu0
  %843 = vmatprep.mubr.bf16.mxu0 %v453
  %844 = vmatmul.mubr.bf16.gmra.mxu0 %v452
  %v845 = vpop.f32.mrf.mxu0
  %v846 = vadd.f32 %v175, %v845
  %v847 = vpop.f32.mrf.mxu0
  %v848 = vpop.f32.mrf.mxu0
  %v849 = vadd.f32 %v175, %v848
  %v850 = vpop.f32.mrf.mxu0
  %851 = vmatprep.mubr.bf16.mxu0 %v456
  %852 = vmatmul.mubr.bf16.gmra.mxu0 %v455
  %v853 = vpop.f32.mrf.mxu0
  %v854 = vadd.f32 %v175, %v853
  %v855 = vpop.f32.mrf.mxu0
  %v856 = vpop.f32.mrf.mxu0
  %v857 = vadd.f32 %v175, %v856
  %v858 = vpop.f32.mrf.mxu0
  %859 = vmatprep.mubr.bf16.mxu0 %v459
  %860 = vmatmul.mubr.bf16.gmra.mxu0 %v458
  %v861 = vpop.f32.mrf.mxu0
  %v862 = vadd.f32 %v175, %v861
  %v863 = vpop.f32.mrf.mxu0
  %v864 = vpop.f32.mrf.mxu0
  %v865 = vadd.f32 %v175, %v864
  %v866 = vpop.f32.mrf.mxu0
  %867 = vmatprep.mubr.bf16.mxu0 %v462
  %868 = vmatmul.mubr.bf16.gmra.mxu0 %v461
  %v869 = vpop.f32.mrf.mxu0
  %v870 = vadd.f32 %v175, %v869
  %v871 = vpop.f32.mrf.mxu0
  %v872 = vpop.f32.mrf.mxu0
  %v873 = vadd.f32 %v175, %v872
  %v874 = vpop.f32.mrf.mxu0
  %875 = vmatprep.mubr.bf16.mxu0 %v465
  %876 = vmatmul.mubr.bf16.gmra.mxu0 %v464
  %v877 = vpop.f32.mrf.mxu0
  %v878 = vadd.f32 %v175, %v877
  %v879 = vpop.f32.mrf.mxu0
  %v880 = vpop.f32.mrf.mxu0
  %v881 = vadd.f32 %v175, %v880
  %v882 = vpop.f32.mrf.mxu0
  %883 = vmatprep.mubr.bf16.mxu0 %v468
  %884 = vmatmul.mubr.bf16.gmra.mxu0 %v467
  %v885 = vpop.f32.mrf.mxu0
  %v886 = vadd.f32 %v175, %v885
  %v887 = vpop.f32.mrf.mxu0
  %v888 = vpop.f32.mrf.mxu0
  %v889 = vadd.f32 %v175, %v888
  %v890 = vpop.f32.mrf.mxu0
  %891 = vmatprep.mubr.bf16.mxu0 %v471
  %892 = vmatmul.mubr.bf16.gmra.mxu0 %v470
  %v893 = vpop.f32.mrf.mxu0
  %v894 = vadd.f32 %v175, %v893
  %v895 = vpop.f32.mrf.mxu0
  %v896 = vpop.f32.mrf.mxu0
  %v897 = vadd.f32 %v175, %v896
  %v898 = vpop.f32.mrf.mxu0
  %899 = vmatprep.mubr.bf16.mxu0 %v474
  %900 = vmatmul.mubr.bf16.gmra.mxu0 %v473
  %v901 = vpop.f32.mrf.mxu0
  %v902 = vadd.f32 %v175, %v901
  %v903 = vpop.f32.mrf.mxu0
  %v904 = vpop.f32.mrf.mxu0
  %v905 = vadd.f32 %v175, %v904
  %v906 = vpop.f32.mrf.mxu0
  %907 = vmatprep.mubr.bf16.mxu0 %v477
  %908 = vmatmul.mubr.bf16.gmra.mxu0 %v476
  %v909 = vpop.f32.mrf.mxu0
  %v910 = vadd.f32 %v175, %v909
  %v911 = vpop.f32.mrf.mxu0
  %v912 = vpop.f32.mrf.mxu0
  %v913 = vadd.f32 %v175, %v912
  %v914 = vpop.f32.mrf.mxu0
  %915 = vmatprep.mubr.bf16.mxu0 %v480
  %916 = vmatmul.mubr.bf16.gmra.mxu0 %v479
  %v917 = vpop.f32.mrf.mxu0
  %v918 = vadd.f32 %v175, %v917
  %v919 = vpop.f32.mrf.mxu0
  %v920 = vpop.f32.mrf.mxu0
  %v921 = vadd.f32 %v175, %v920
  %v922 = vpop.f32.mrf.mxu0
  %923 = vmatprep.mubr.bf16.mxu0 %v483
  %924 = vmatmul.mubr.bf16.gmra.mxu0 %v482
  %v925 = vpop.f32.mrf.mxu0
  %v926 = vadd.f32 %v175, %v925
  %v927 = vpop.f32.mrf.mxu0
  %v928 = vpop.f32.mrf.mxu0
  %v929 = vadd.f32 %v175, %v928
  %v930 = vpop.f32.mrf.mxu0
  %931 = vmatprep.mubr.bf16.mxu0 %v486
  %932 = vmatmul.mubr.bf16.gmra.mxu0 %v485
  %v933 = vpop.f32.mrf.mxu0
  %v934 = vadd.f32 %v175, %v933
  %v935 = vpop.f32.mrf.mxu0
  %v936 = vpop.f32.mrf.mxu0
  %v937 = vadd.f32 %v175, %v936
  %v938 = vpop.f32.mrf.mxu0
  %939 = vmatprep.mubr.bf16.mxu0 %v489
  %940 = vmatmul.mubr.bf16.gmra.mxu0 %v488
  %v941 = vpop.f32.mrf.mxu0
  %v942 = vadd.f32 %v175, %v941
  %v943 = vpop.f32.mrf.mxu0
  %v944 = vpop.f32.mrf.mxu0
  %v945 = vadd.f32 %v175, %v944
  %v946 = vpop.f32.mrf.mxu0
  %947 = vmatprep.mubr.bf16.mxu0 %v492
  %948 = vmatmul.mubr.bf16.gmra.mxu0 %v491
  %v949 = vpop.f32.mrf.mxu0
  %v950 = vadd.f32 %v175, %v949
  %v951 = vpop.f32.mrf.mxu0
  %v952 = vpop.f32.mrf.mxu0
  %v953 = vadd.f32 %v175, %v952
  %v954 = vpop.f32.mrf.mxu0
  %955 = vmatprep.mubr.bf16.mxu0 %v495
  %956 = vmatmul.mubr.bf16.gmra.mxu0 %v494
  %v957 = vpop.f32.mrf.mxu0
  %v958 = vadd.f32 %v175, %v957
  %v959 = vpop.f32.mrf.mxu0
  %v960 = vpop.f32.mrf.mxu0
  %v961 = vpop.f32.mrf.mxu0
  %962 = vdwg.mxu0
  %963 = vmatprep.subr.bf16.mxu0 0
  %964 = vmatpush1.bf16.msra.mxu0 0
  %965 = vmatprep.subr.bf16.mxu0 0
  %966 = vmatpush1.bf16.msra.mxu0 0
  %967 = vmatprep.subr.bf16.mxu0 0
  %968 = vmatpush1.bf16.msra.mxu0 0
  %969 = vmatprep.subr.bf16.mxu0 0
  %970 = vmatpush1.bf16.msra.mxu0 0
  %971 = vmatprep.subr.bf16.mxu0 0
  %972 = vmatpush1.bf16.msra.mxu0 0
  %973 = vmatprep.subr.bf16.mxu0 0
  %974 = vmatpush1.bf16.msra.mxu0 0
  %975 = vmatprep.subr.bf16.mxu0 0
  %976 = vmatpush1.bf16.msra.mxu0 %v636
  %977 = vmatprep.subr.bf16.mxu0 0
  %978 = vmatpush1.bf16.msra.mxu0 %v635
  %979 = vmatprep.subr.bf16.mxu0 0
  %980 = vmatpush2.bf16.msra.mxu0 0
  %981 = vmatprep.subr.bf16.mxu0 0
  %982 = vmatpush2.bf16.msra.mxu0 0
  %983 = vmatprep.subr.bf16.mxu0 0
  %984 = vmatpush2.bf16.msra.mxu0 0
  %985 = vmatprep.subr.bf16.mxu0 0
  %986 = vmatpush2.bf16.msra.mxu0 0
  %987 = vmatprep.subr.bf16.mxu0 0
  %988 = vmatpush2.bf16.msra.mxu0 0
  %989 = vmatprep.subr.bf16.mxu0 0
  %990 = vmatpush2.bf16.msra.mxu0 0
  %991 = vmatprep.subr.bf16.mxu0 0
  %992 = vmatpush2.bf16.msra.mxu0 0
  %993 = vmatprep.subr.bf16.mxu0 0
  %994 = vmatpush2.bf16.msra.mxu0 0
  %995 = vmatprep.mubr.bf16.mxu0 0
  %996 = vmatmul.mubr.bf16.gmra.mxu0 %v657
  %v997 = vpop.f32.mrf.mxu0
  %v998 = vadd.f32 %v766, %v997
  %v999 = vpop.f32.mrf.mxu0
  %v1000 = vpop.f32.mrf.mxu0
  %v1001 = vadd.f32 %v769, %v1000
  %v1002 = vpop.f32.mrf.mxu0
  %1003 = vmatprep.mubr.bf16.mxu0 0
  %1004 = vmatmul.mubr.bf16.gmra.mxu0 %v660
  %v1005 = vpop.f32.mrf.mxu0
  %v1006 = vadd.f32 %v774, %v1005
  %v1007 = vpop.f32.mrf.mxu0
  %v1008 = vpop.f32.mrf.mxu0
  %v1009 = vadd.f32 %v777, %v1008
  %v1010 = vpop.f32.mrf.mxu0
  %1011 = vmatprep.mubr.bf16.mxu0 0
  %1012 = vmatmul.mubr.bf16.gmra.mxu0 %v663
  %v1013 = vpop.f32.mrf.mxu0
  %v1014 = vadd.f32 %v782, %v1013
  %v1015 = vpop.f32.mrf.mxu0
  %v1016 = vpop.f32.mrf.mxu0
  %v1017 = vadd.f32 %v785, %v1016
  %v1018 = vpop.f32.mrf.mxu0
  %1019 = vmatprep.mubr.bf16.mxu0 0
  %1020 = vmatmul.mubr.bf16.gmra.mxu0 %v666
  %v1021 = vpop.f32.mrf.mxu0
  %v1022 = vadd.f32 %v790, %v1021
  %v1023 = vpop.f32.mrf.mxu0
  %v1024 = vpop.f32.mrf.mxu0
  %v1025 = vadd.f32 %v793, %v1024
  %v1026 = vpop.f32.mrf.mxu0
  %1027 = vmatprep.mubr.bf16.mxu0 0
  %1028 = vmatmul.mubr.bf16.gmra.mxu0 %v669
  %v1029 = vpop.f32.mrf.mxu0
  %v1030 = vadd.f32 %v798, %v1029
  %v1031 = vpop.f32.mrf.mxu0
  %v1032 = vpop.f32.mrf.mxu0
  %v1033 = vadd.f32 %v801, %v1032
  %v1034 = vpop.f32.mrf.mxu0
  %1035 = vmatprep.mubr.bf16.mxu0 0
  %1036 = vmatmul.mubr.bf16.gmra.mxu0 %v672
  %v1037 = vpop.f32.mrf.mxu0
  %v1038 = vadd.f32 %v806, %v1037
  %v1039 = vpop.f32.mrf.mxu0
  %v1040 = vpop.f32.mrf.mxu0
  %v1041 = vadd.f32 %v809, %v1040
  %v1042 = vpop.f32.mrf.mxu0
  %1043 = vmatprep.mubr.bf16.mxu0 0
  %1044 = vmatmul.mubr.bf16.gmra.mxu0 %v675
  %v1045 = vpop.f32.mrf.mxu0
  %v1046 = vadd.f32 %v814, %v1045
  %v1047 = vpop.f32.mrf.mxu0
  %v1048 = vpop.f32.mrf.mxu0
  %v1049 = vadd.f32 %v817, %v1048
  %v1050 = vpop.f32.mrf.mxu0
  %1051 = vmatprep.mubr.bf16.mxu0 0
  %1052 = vmatmul.mubr.bf16.gmra.mxu0 %v678
  %v1053 = vpop.f32.mrf.mxu0
  %v1054 = vadd.f32 %v822, %v1053
  %v1055 = vpop.f32.mrf.mxu0
  %v1056 = vpop.f32.mrf.mxu0
  %v1057 = vadd.f32 %v825, %v1056
  %v1058 = vpop.f32.mrf.mxu0
  %1059 = vmatprep.mubr.bf16.mxu0 0
  %1060 = vmatmul.mubr.bf16.gmra.mxu0 %v681
  %v1061 = vpop.f32.mrf.mxu0
  %v1062 = vadd.f32 %v830, %v1061
  %v1063 = vpop.f32.mrf.mxu0
  %v1064 = vpop.f32.mrf.mxu0
  %v1065 = vadd.f32 %v833, %v1064
  %v1066 = vpop.f32.mrf.mxu0
  %1067 = vmatprep.mubr.bf16.mxu0 0
  %1068 = vmatmul.mubr.bf16.gmra.mxu0 %v684
  %v1069 = vpop.f32.mrf.mxu0
  %v1070 = vadd.f32 %v838, %v1069
  %v1071 = vpop.f32.mrf.mxu0
  %v1072 = vpop.f32.mrf.mxu0
  %v1073 = vadd.f32 %v841, %v1072
  %v1074 = vpop.f32.mrf.mxu0
  %1075 = vmatprep.mubr.bf16.mxu0 0
  %1076 = vmatmul.mubr.bf16.gmra.mxu0 %v687
  %v1077 = vpop.f32.mrf.mxu0
  %v1078 = vadd.f32 %v846, %v1077
  %v1079 = vpop.f32.mrf.mxu0
  %v1080 = vpop.f32.mrf.mxu0
  %v1081 = vadd.f32 %v849, %v1080
  %v1082 = vpop.f32.mrf.mxu0
  %1083 = vmatprep.mubr.bf16.mxu0 0
  %1084 = vmatmul.mubr.bf16.gmra.mxu0 %v690
  %v1085 = vpop.f32.mrf.mxu0
  %v1086 = vadd.f32 %v854, %v1085
  %v1087 = vpop.f32.mrf.mxu0
  %v1088 = vpop.f32.mrf.mxu0
  %v1089 = vadd.f32 %v857, %v1088
  %v1090 = vpop.f32.mrf.mxu0
  %1091 = vmatprep.mubr.bf16.mxu0 0
  %1092 = vmatmul.mubr.bf16.gmra.mxu0 %v693
  %v1093 = vpop.f32.mrf.mxu0
  %v1094 = vadd.f32 %v862, %v1093
  %v1095 = vpop.f32.mrf.mxu0
  %v1096 = vpop.f32.mrf.mxu0
  %v1097 = vadd.f32 %v865, %v1096
  %v1098 = vpop.f32.mrf.mxu0
  %1099 = vmatprep.mubr.bf16.mxu0 0
  %1100 = vmatmul.mubr.bf16.gmra.mxu0 %v696
  %v1101 = vpop.f32.mrf.mxu0
  %v1102 = vadd.f32 %v870, %v1101
  %v1103 = vpop.f32.mrf.mxu0
  %v1104 = vpop.f32.mrf.mxu0
  %v1105 = vadd.f32 %v873, %v1104
  %v1106 = vpop.f32.mrf.mxu0
  %1107 = vmatprep.mubr.bf16.mxu0 0
  %1108 = vmatmul.mubr.bf16.gmra.mxu0 %v699
  %v1109 = vpop.f32.mrf.mxu0
  %v1110 = vadd.f32 %v878, %v1109
  %v1111 = vpop.f32.mrf.mxu0
  %v1112 = vpop.f32.mrf.mxu0
  %v1113 = vadd.f32 %v881, %v1112
  %v1114 = vpop.f32.mrf.mxu0
  %1115 = vmatprep.mubr.bf16.mxu0 0
  %1116 = vmatmul.mubr.bf16.gmra.mxu0 %v702
  %v1117 = vpop.f32.mrf.mxu0
  %v1118 = vadd.f32 %v886, %v1117
  %v1119 = vpop.f32.mrf.mxu0
  %v1120 = vpop.f32.mrf.mxu0
  %v1121 = vadd.f32 %v889, %v1120
  %v1122 = vpop.f32.mrf.mxu0
  %1123 = vmatprep.mubr.bf16.mxu0 0
  %1124 = vmatmul.mubr.bf16.gmra.mxu0 %v705
  %v1125 = vpop.f32.mrf.mxu0
  %v1126 = vadd.f32 %v894, %v1125
  %v1127 = vpop.f32.mrf.mxu0
  %v1128 = vpop.f32.mrf.mxu0
  %v1129 = vadd.f32 %v897, %v1128
  %v1130 = vpop.f32.mrf.mxu0
  %1131 = vmatprep.mubr.bf16.mxu0 0
  %1132 = vmatmul.mubr.bf16.gmra.mxu0 %v708
  %v1133 = vpop.f32.mrf.mxu0
  %v1134 = vadd.f32 %v902, %v1133
  %v1135 = vpop.f32.mrf.mxu0
  %v1136 = vpop.f32.mrf.mxu0
  %v1137 = vadd.f32 %v905, %v1136
  %v1138 = vpop.f32.mrf.mxu0
  %1139 = vmatprep.mubr.bf16.mxu0 0
  %1140 = vmatmul.mubr.bf16.gmra.mxu0 %v711
  %v1141 = vpop.f32.mrf.mxu0
  %v1142 = vadd.f32 %v910, %v1141
  %v1143 = vpop.f32.mrf.mxu0
  %v1144 = vpop.f32.mrf.mxu0
  %v1145 = vadd.f32 %v913, %v1144
  %v1146 = vpop.f32.mrf.mxu0
  %1147 = vmatprep.mubr.bf16.mxu0 0
  %1148 = vmatmul.mubr.bf16.gmra.mxu0 %v714
  %v1149 = vpop.f32.mrf.mxu0
  %v1150 = vadd.f32 %v918, %v1149
  %v1151 = vpop.f32.mrf.mxu0
  %v1152 = vpop.f32.mrf.mxu0
  %v1153 = vadd.f32 %v921, %v1152
  %v1154 = vpop.f32.mrf.mxu0
  %1155 = vmatprep.mubr.bf16.mxu0 0
  %1156 = vmatmul.mubr.bf16.gmra.mxu0 %v717
  %v1157 = vpop.f32.mrf.mxu0
  %v1158 = vadd.f32 %v926, %v1157
  %v1159 = vpop.f32.mrf.mxu0
  %v1160 = vpop.f32.mrf.mxu0
  %v1161 = vadd.f32 %v929, %v1160
  %v1162 = vpop.f32.mrf.mxu0
  %1163 = vmatprep.mubr.bf16.mxu0 0
  %1164 = vmatmul.mubr.bf16.gmra.mxu0 %v720
  %v1165 = vpop.f32.mrf.mxu0
  %v1166 = vadd.f32 %v934, %v1165
  %v1167 = vpop.f32.mrf.mxu0
  %v1168 = vpop.f32.mrf.mxu0
  %v1169 = vadd.f32 %v937, %v1168
  %v1170 = vpop.f32.mrf.mxu0
  %1171 = vmatprep.mubr.bf16.mxu0 0
  %1172 = vmatmul.mubr.bf16.gmra.mxu0 %v723
  %v1173 = vpop.f32.mrf.mxu0
  %v1174 = vadd.f32 %v942, %v1173
  %v1175 = vpop.f32.mrf.mxu0
  %v1176 = vpop.f32.mrf.mxu0
  %v1177 = vadd.f32 %v945, %v1176
  %v1178 = vpop.f32.mrf.mxu0
  %1179 = vmatprep.mubr.bf16.mxu0 0
  %1180 = vmatmul.mubr.bf16.gmra.mxu0 %v726
  %v1181 = vpop.f32.mrf.mxu0
  %v1182 = vadd.f32 %v950, %v1181
  %v1183 = vpop.f32.mrf.mxu0
  %v1184 = vpop.f32.mrf.mxu0
  %v1185 = vadd.f32 %v953, %v1184
  %v1186 = vpop.f32.mrf.mxu0
  %1187 = vmatprep.mubr.bf16.mxu0 0
  %1188 = vmatmul.mubr.bf16.gmra.mxu0 %v729
  %v1189 = vpop.f32.mrf.mxu0
  %v1190 = vadd.f32 %v958, %v1189
  %v1191 = vpop.f32.mrf.mxu0
  %v1192 = vpop.f32.mrf.mxu0
  %v1193 = vpop.f32.mrf.mxu0
  %1194 = vdwg.mxu0
  %v1195 = vld [vmem:[%s4] sm:$0x1]
  %v1196 = vld [vmem:[%s5] sm:$0x1]
  %v1197 = vsel %vm655, %v998, 0.0
  %v1198 = vsel %vm655, %v1001, 0.0
  %v1199 = vadd.f32 %v1197, %v1198
  %v1200 = vsel %vm655, %v1006, 0.0
  %v1201 = vadd.f32 %v1199, %v1200
  %v1202 = vsel %vm655, %v1009, 0.0
  %v1203 = vadd.f32 %v1201, %v1202
  %v1204 = vsel %vm655, %v1014, 0.0
  %v1205 = vadd.f32 %v1203, %v1204
  %v1206 = vsel %vm655, %v1017, 0.0
  %v1207 = vadd.f32 %v1205, %v1206
  %v1208 = vsel %vm655, %v1022, 0.0
  %v1209 = vadd.f32 %v1207, %v1208
  %v1210 = vsel %vm655, %v1025, 0.0
  %v1211 = vadd.f32 %v1209, %v1210
  %v1212 = vsel %vm655, %v1030, 0.0
  %v1213 = vadd.f32 %v1211, %v1212
  %v1214 = vsel %vm655, %v1033, 0.0
  %v1215 = vadd.f32 %v1213, %v1214
  %v1216 = vsel %vm655, %v1038, 0.0
  %v1217 = vadd.f32 %v1215, %v1216
  %v1218 = vsel %vm655, %v1041, 0.0
  %v1219 = vadd.f32 %v1217, %v1218
  %v1220 = vsel %vm655, %v1046, 0.0
  %v1221 = vadd.f32 %v1219, %v1220
  %v1222 = vsel %vm655, %v1049, 0.0
  %v1223 = vadd.f32 %v1221, %v1222
  %v1224 = vsel %vm655, %v1054, 0.0
  %v1225 = vadd.f32 %v1223, %v1224
  %v1226 = vsel %vm655, %v1057, 0.0
  %v1227 = vadd.f32 %v1225, %v1226
  %v1228 = vsel %vm655, %v1062, 0.0
  %v1229 = vadd.f32 %v1227, %v1228
  %v1230 = vsel %vm655, %v1065, 0.0
  %v1231 = vadd.f32 %v1229, %v1230
  %v1232 = vsel %vm655, %v1070, 0.0
  %v1233 = vadd.f32 %v1231, %v1232
  %v1234 = vsel %vm655, %v1073, 0.0
  %v1235 = vadd.f32 %v1233, %v1234
  %v1236 = vsel %vm655, %v1078, 0.0
  %v1237 = vadd.f32 %v1235, %v1236
  %v1238 = vsel %vm655, %v1081, 0.0
  %v1239 = vadd.f32 %v1237, %v1238
  %v1240 = vsel %vm655, %v1086, 0.0
  %v1241 = vadd.f32 %v1239, %v1240
  %v1242 = vsel %vm655, %v1089, 0.0
  %v1243 = vadd.f32 %v1241, %v1242
  %v1244 = vsel %vm655, %v1094, 0.0
  %v1245 = vadd.f32 %v1243, %v1244
  %v1246 = vsel %vm655, %v1097, 0.0
  %v1247 = vadd.f32 %v1245, %v1246
  %v1248 = vsel %vm655, %v1102, 0.0
  %v1249 = vadd.f32 %v1247, %v1248
  %v1250 = vsel %vm655, %v1105, 0.0
  %v1251 = vadd.f32 %v1249, %v1250
  %v1252 = vsel %vm655, %v1110, 0.0
  %v1253 = vadd.f32 %v1251, %v1252
  %v1254 = vsel %vm655, %v1113, 0.0
  %v1255 = vadd.f32 %v1253, %v1254
  %v1256 = vsel %vm655, %v1118, 0.0
  %v1257 = vadd.f32 %v1255, %v1256
  %v1258 = vsel %vm655, %v1121, 0.0
  %v1259 = vadd.f32 %v1257, %v1258
  %v1260 = vsel %vm655, %v1126, 0.0
  %v1261 = vadd.f32 %v1259, %v1260
  %v1262 = vsel %vm655, %v1129, 0.0
  %v1263 = vadd.f32 %v1261, %v1262
  %v1264 = vsel %vm655, %v1134, 0.0
  %v1265 = vadd.f32 %v1263, %v1264
  %v1266 = vsel %vm655, %v1137, 0.0
  %v1267 = vadd.f32 %v1265, %v1266
  %v1268 = vsel %vm655, %v1142, 0.0
  %v1269 = vadd.f32 %v1267, %v1268
  %v1270 = vsel %vm655, %v1145, 0.0
  %v1271 = vadd.f32 %v1269, %v1270
  %v1272 = vsel %vm655, %v1150, 0.0
  %v1273 = vadd.f32 %v1271, %v1272
  %v1274 = vsel %vm655, %v1153, 0.0
  %v1275 = vadd.f32 %v1273, %v1274
  %v1276 = vsel %vm655, %v1158, 0.0
  %v1277 = vadd.f32 %v1275, %v1276
  %v1278 = vsel %vm655, %v1161, 0.0
  %v1279 = vadd.f32 %v1277, %v1278
  %v1280 = vsel %vm655, %v1166, 0.0
  %v1281 = vadd.f32 %v1279, %v1280
  %v1282 = vsel %vm655, %v1169, 0.0
  %v1283 = vadd.f32 %v1281, %v1282
  %v1284 = vsel %vm655, %v1174, 0.0
  %v1285 = vadd.f32 %v1283, %v1284
  %v1286 = vsel %vm655, %v1177, 0.0
  %v1287 = vadd.f32 %v1285, %v1286
  %v1288 = vsel %vm655, %v1182, 0.0
  %v1289 = vadd.f32 %v1287, %v1288
  %v1290 = vsel %vm655, %v1185, 0.0
  %v1291 = vadd.f32 %v1289, %v1290
  %v1292 = vsel %vm655, %v1190, 0.0
  %v1293 = vadd.f32 %v1291, %v1292
  %v1294 = vrot.slane %v1293, 4
  %v1295 = vadd.f32 %v1293, %v1294
  %v1296 = vrot.slane %v1295, 2
  %v1297 = vadd.f32 %v1295, %v1296
  %v1298 = vrot.slane %v1297, 1
  %v1299 = vadd.f32 %v1297, %v1298
  %v1300 = vrcp.pop 392.0
  %v1301 = vmul.f32 %v1299, %v1300
  %v1302 = vsub.f32 %v998, %v1301
  %v1303 = vsub.f32 %v1001, %v1301
  %v1304 = vsub.f32 %v1006, %v1301
  %v1305 = vsub.f32 %v1009, %v1301
  %v1306 = vsub.f32 %v1014, %v1301
  %v1307 = vsub.f32 %v1017, %v1301
  %v1308 = vsub.f32 %v1022, %v1301
  %v1309 = vsub.f32 %v1025, %v1301
  %v1310 = vsub.f32 %v1030, %v1301
  %v1311 = vsub.f32 %v1033, %v1301
  %v1312 = vsub.f32 %v1038, %v1301
  %v1313 = vsub.f32 %v1041, %v1301
  %v1314 = vsub.f32 %v1046, %v1301
  %v1315 = vsub.f32 %v1049, %v1301
  %v1316 = vsub.f32 %v1054, %v1301
  %v1317 = vsub.f32 %v1057, %v1301
  %v1318 = vsub.f32 %v1062, %v1301
  %v1319 = vsub.f32 %v1065, %v1301
  %v1320 = vsub.f32 %v1070, %v1301
  %v1321 = vsub.f32 %v1073, %v1301
  %v1322 = vsub.f32 %v1078, %v1301
  %v1323 = vsub.f32 %v1081, %v1301
  %v1324 = vsub.f32 %v1086, %v1301
  %v1325 = vsub.f32 %v1089, %v1301
  %v1326 = vsub.f32 %v1094, %v1301
  %v1327 = vsub.f32 %v1097, %v1301
  %v1328 = vsub.f32 %v1102, %v1301
  %v1329 = vsub.f32 %v1105, %v1301
  %v1330 = vsub.f32 %v1110, %v1301
  %v1331 = vsub.f32 %v1113, %v1301
  %v1332 = vsub.f32 %v1118, %v1301
  %v1333 = vsub.f32 %v1121, %v1301
  %v1334 = vsub.f32 %v1126, %v1301
  %v1335 = vsub.f32 %v1129, %v1301
  %v1336 = vsub.f32 %v1134, %v1301
  %v1337 = vsub.f32 %v1137, %v1301
  %v1338 = vsub.f32 %v1142, %v1301
  %v1339 = vsub.f32 %v1145, %v1301
  %v1340 = vsub.f32 %v1150, %v1301
  %v1341 = vsub.f32 %v1153, %v1301
  %v1342 = vsub.f32 %v1158, %v1301
  %v1343 = vsub.f32 %v1161, %v1301
  %v1344 = vsub.f32 %v1166, %v1301
  %v1345 = vsub.f32 %v1169, %v1301
  %v1346 = vsub.f32 %v1174, %v1301
  %v1347 = vsub.f32 %v1177, %v1301
  %v1348 = vsub.f32 %v1182, %v1301
  %v1349 = vsub.f32 %v1185, %v1301
  %v1350 = vsub.f32 %v1190, %v1301
  %v1351 = vmul.f32 %v1302, %v1302
  %v1352 = vmul.f32 %v1303, %v1303
  %v1353 = vmul.f32 %v1304, %v1304
  %v1354 = vmul.f32 %v1305, %v1305
  %v1355 = vmul.f32 %v1306, %v1306
  %v1356 = vmul.f32 %v1307, %v1307
  %v1357 = vmul.f32 %v1308, %v1308
  %v1358 = vmul.f32 %v1309, %v1309
  %v1359 = vmul.f32 %v1310, %v1310
  %v1360 = vmul.f32 %v1311, %v1311
  %v1361 = vmul.f32 %v1312, %v1312
  %v1362 = vmul.f32 %v1313, %v1313
  %v1363 = vmul.f32 %v1314, %v1314
  %v1364 = vmul.f32 %v1315, %v1315
  %v1365 = vmul.f32 %v1316, %v1316
  %v1366 = vmul.f32 %v1317, %v1317
  %v1367 = vmul.f32 %v1318, %v1318
  %v1368 = vmul.f32 %v1319, %v1319
  %v1369 = vmul.f32 %v1320, %v1320
  %v1370 = vmul.f32 %v1321, %v1321
  %v1371 = vmul.f32 %v1322, %v1322
  %v1372 = vmul.f32 %v1323, %v1323
  %v1373 = vmul.f32 %v1324, %v1324
  %v1374 = vmul.f32 %v1325, %v1325
  %v1375 = vmul.f32 %v1326, %v1326
  %v1376 = vmul.f32 %v1327, %v1327
  %v1377 = vmul.f32 %v1328, %v1328
  %v1378 = vmul.f32 %v1329, %v1329
  %v1379 = vmul.f32 %v1330, %v1330
  %v1380 = vmul.f32 %v1331, %v1331
  %v1381 = vmul.f32 %v1332, %v1332
  %v1382 = vmul.f32 %v1333, %v1333
  %v1383 = vmul.f32 %v1334, %v1334
  %v1384 = vmul.f32 %v1335, %v1335
  %v1385 = vmul.f32 %v1336, %v1336
  %v1386 = vmul.f32 %v1337, %v1337
  %v1387 = vmul.f32 %v1338, %v1338
  %v1388 = vmul.f32 %v1339, %v1339
  %v1389 = vmul.f32 %v1340, %v1340
  %v1390 = vmul.f32 %v1341, %v1341
  %v1391 = vmul.f32 %v1342, %v1342
  %v1392 = vmul.f32 %v1343, %v1343
  %v1393 = vmul.f32 %v1344, %v1344
  %v1394 = vmul.f32 %v1345, %v1345
  %v1395 = vmul.f32 %v1346, %v1346
  %v1396 = vmul.f32 %v1347, %v1347
  %v1397 = vmul.f32 %v1348, %v1348
  %v1398 = vmul.f32 %v1349, %v1349
  %v1399 = vmul.f32 %v1350, %v1350
  %v1400 = vsel %vm655, %v1351, 0.0
  %v1401 = vsel %vm655, %v1352, 0.0
  %v1402 = vadd.f32 %v1400, %v1401
  %v1403 = vsel %vm655, %v1353, 0.0
  %v1404 = vadd.f32 %v1402, %v1403
  %v1405 = vsel %vm655, %v1354, 0.0
  %v1406 = vadd.f32 %v1404, %v1405
  %v1407 = vsel %vm655, %v1355, 0.0
  %v1408 = vadd.f32 %v1406, %v1407
  %v1409 = vsel %vm655, %v1356, 0.0
  %v1410 = vadd.f32 %v1408, %v1409
  %v1411 = vsel %vm655, %v1357, 0.0
  %v1412 = vadd.f32 %v1410, %v1411
  %v1413 = vsel %vm655, %v1358, 0.0
  %v1414 = vadd.f32 %v1412, %v1413
  %v1415 = vsel %vm655, %v1359, 0.0
  %v1416 = vadd.f32 %v1414, %v1415
  %v1417 = vsel %vm655, %v1360, 0.0
  %v1418 = vadd.f32 %v1416, %v1417
  %v1419 = vsel %vm655, %v1361, 0.0
  %v1420 = vadd.f32 %v1418, %v1419
  %v1421 = vsel %vm655, %v1362, 0.0
  %v1422 = vadd.f32 %v1420, %v1421
  %v1423 = vsel %vm655, %v1363, 0.0
  %v1424 = vadd.f32 %v1422, %v1423
  %v1425 = vsel %vm655, %v1364, 0.0
  %v1426 = vadd.f32 %v1424, %v1425
  %v1427 = vsel %vm655, %v1365, 0.0
  %v1428 = vadd.f32 %v1426, %v1427
  %v1429 = vsel %vm655, %v1366, 0.0
  %v1430 = vadd.f32 %v1428, %v1429
  %v1431 = vsel %vm655, %v1367, 0.0
  %v1432 = vadd.f32 %v1430, %v1431
  %v1433 = vsel %vm655, %v1368, 0.0
  %v1434 = vadd.f32 %v1432, %v1433
  %v1435 = vsel %vm655, %v1369, 0.0
  %v1436 = vadd.f32 %v1434, %v1435
  %v1437 = vsel %vm655, %v1370, 0.0
  %v1438 = vadd.f32 %v1436, %v1437
  %v1439 = vsel %vm655, %v1371, 0.0
  %v1440 = vadd.f32 %v1438, %v1439
  %v1441 = vsel %vm655, %v1372, 0.0
  %v1442 = vadd.f32 %v1440, %v1441
  %v1443 = vsel %vm655, %v1373, 0.0
  %v1444 = vadd.f32 %v1442, %v1443
  %v1445 = vsel %vm655, %v1374, 0.0
  %v1446 = vadd.f32 %v1444, %v1445
  %v1447 = vsel %vm655, %v1375, 0.0
  %v1448 = vadd.f32 %v1446, %v1447
  %v1449 = vsel %vm655, %v1376, 0.0
  %v1450 = vadd.f32 %v1448, %v1449
  %v1451 = vsel %vm655, %v1377, 0.0
  %v1452 = vadd.f32 %v1450, %v1451
  %v1453 = vsel %vm655, %v1378, 0.0
  %v1454 = vadd.f32 %v1452, %v1453
  %v1455 = vsel %vm655, %v1379, 0.0
  %v1456 = vadd.f32 %v1454, %v1455
  %v1457 = vsel %vm655, %v1380, 0.0
  %v1458 = vadd.f32 %v1456, %v1457
  %v1459 = vsel %vm655, %v1381, 0.0
  %v1460 = vadd.f32 %v1458, %v1459
  %v1461 = vsel %vm655, %v1382, 0.0
  %v1462 = vadd.f32 %v1460, %v1461
  %v1463 = vsel %vm655, %v1383, 0.0
  %v1464 = vadd.f32 %v1462, %v1463
  %v1465 = vsel %vm655, %v1384, 0.0
  %v1466 = vadd.f32 %v1464, %v1465
  %v1467 = vsel %vm655, %v1385, 0.0
  %v1468 = vadd.f32 %v1466, %v1467
  %v1469 = vsel %vm655, %v1386, 0.0
  %v1470 = vadd.f32 %v1468, %v1469
  %v1471 = vsel %vm655, %v1387, 0.0
  %v1472 = vadd.f32 %v1470, %v1471
  %v1473 = vsel %vm655, %v1388, 0.0
  %v1474 = vadd.f32 %v1472, %v1473
  %v1475 = vsel %vm655, %v1389, 0.0
  %v1476 = vadd.f32 %v1474, %v1475
  %v1477 = vsel %vm655, %v1390, 0.0
  %v1478 = vadd.f32 %v1476, %v1477
  %v1479 = vsel %vm655, %v1391, 0.0
  %v1480 = vadd.f32 %v1478, %v1479
  %v1481 = vsel %vm655, %v1392, 0.0
  %v1482 = vadd.f32 %v1480, %v1481
  %v1483 = vsel %vm655, %v1393, 0.0
  %v1484 = vadd.f32 %v1482, %v1483
  %v1485 = vsel %vm655, %v1394, 0.0
  %v1486 = vadd.f32 %v1484, %v1485
  %v1487 = vsel %vm655, %v1395, 0.0
  %v1488 = vadd.f32 %v1486, %v1487
  %v1489 = vsel %vm655, %v1396, 0.0
  %v1490 = vadd.f32 %v1488, %v1489
  %v1491 = vsel %vm655, %v1397, 0.0
  %v1492 = vadd.f32 %v1490, %v1491
  %v1493 = vsel %vm655, %v1398, 0.0
  %v1494 = vadd.f32 %v1492, %v1493
  %v1495 = vsel %vm655, %v1399, 0.0
  %v1496 = vadd.f32 %v1494, %v1495
  %v1497 = vrot.slane %v1496, 4
  %v1498 = vadd.f32 %v1496, %v1497
  %v1499 = vrot.slane %v1498, 2
  %v1500 = vadd.f32 %v1498, %v1499
  %v1501 = vrot.slane %v1500, 1
  %v1502 = vadd.f32 %v1500, %v1501
  %v1503 = vmul.f32 %v1502, %v1300
  %v1504 = vadd.f32 %v1503, 1e-05
  %v1505 = vrsqrt.pop %v1504
  %v1506 = vmul.f32 %v1302, %v1505
  %v1507 = vmul.f32 %v1303, %v1505
  %v1508 = vmul.f32 %v1304, %v1505
  %v1509 = vmul.f32 %v1305, %v1505
  %v1510 = vmul.f32 %v1306, %v1505
  %v1511 = vmul.f32 %v1307, %v1505
  %v1512 = vmul.f32 %v1308, %v1505
  %v1513 = vmul.f32 %v1309, %v1505
  %v1514 = vmul.f32 %v1310, %v1505
  %v1515 = vmul.f32 %v1311, %v1505
  %v1516 = vmul.f32 %v1312, %v1505
  %v1517 = vmul.f32 %v1313, %v1505
  %v1518 = vmul.f32 %v1314, %v1505
  %v1519 = vmul.f32 %v1315, %v1505
  %v1520 = vmul.f32 %v1316, %v1505
  %v1521 = vmul.f32 %v1317, %v1505
  %v1522 = vmul.f32 %v1318, %v1505
  %v1523 = vmul.f32 %v1319, %v1505
  %v1524 = vmul.f32 %v1320, %v1505
  %v1525 = vmul.f32 %v1321, %v1505
  %v1526 = vmul.f32 %v1322, %v1505
  %v1527 = vmul.f32 %v1323, %v1505
  %v1528 = vmul.f32 %v1324, %v1505
  %v1529 = vmul.f32 %v1325, %v1505
  %v1530 = vmul.f32 %v1326, %v1505
  %v1531 = vmul.f32 %v1327, %v1505
  %v1532 = vmul.f32 %v1328, %v1505
  %v1533 = vmul.f32 %v1329, %v1505
  %v1534 = vmul.f32 %v1330, %v1505
  %v1535 = vmul.f32 %v1331, %v1505
  %v1536 = vmul.f32 %v1332, %v1505
  %v1537 = vmul.f32 %v1333, %v1505
  %v1538 = vmul.f32 %v1334, %v1505
  %v1539 = vmul.f32 %v1335, %v1505
  %v1540 = vmul.f32 %v1336, %v1505
  %v1541 = vmul.f32 %v1337, %v1505
  %v1542 = vmul.f32 %v1338, %v1505
  %v1543 = vmul.f32 %v1339, %v1505
  %v1544 = vmul.f32 %v1340, %v1505
  %v1545 = vmul.f32 %v1341, %v1505
  %v1546 = vmul.f32 %v1342, %v1505
  %v1547 = vmul.f32 %v1343, %v1505
  %v1548 = vmul.f32 %v1344, %v1505
  %v1549 = vmul.f32 %v1345, %v1505
  %v1550 = vmul.f32 %v1346, %v1505
  %v1551 = vmul.f32 %v1347, %v1505
  %v1552 = vmul.f32 %v1348, %v1505
  %v1553 = vmul.f32 %v1349, %v1505
  %v1554 = vmul.f32 %v1350, %v1505
  %v1556 = vlaneseq
  %v1557 = vshrl.u32 %v1556, 7
  %v1558 = vsub.s32 0, %v1557
  %v1559 = vrot.slane %v1195, %v1558
  %v1561 = vmul.f32 %v1506, %v1559
  %v1562 = vmul.f32 %v1507, %v1559
  %v1563 = vmul.f32 %v1508, %v1559
  %v1564 = vmul.f32 %v1509, %v1559
  %v1565 = vmul.f32 %v1510, %v1559
  %v1566 = vmul.f32 %v1511, %v1559
  %v1567 = vmul.f32 %v1512, %v1559
  %v1568 = vmul.f32 %v1513, %v1559
  %v1569 = vmul.f32 %v1514, %v1559
  %v1570 = vmul.f32 %v1515, %v1559
  %v1571 = vmul.f32 %v1516, %v1559
  %v1572 = vmul.f32 %v1517, %v1559
  %v1573 = vmul.f32 %v1518, %v1559
  %v1574 = vmul.f32 %v1519, %v1559
  %v1575 = vmul.f32 %v1520, %v1559
  %v1576 = vmul.f32 %v1521, %v1559
  %v1577 = vmul.f32 %v1522, %v1559
  %v1578 = vmul.f32 %v1523, %v1559
  %v1579 = vmul.f32 %v1524, %v1559
  %v1580 = vmul.f32 %v1525, %v1559
  %v1581 = vmul.f32 %v1526, %v1559
  %v1582 = vmul.f32 %v1527, %v1559
  %v1583 = vmul.f32 %v1528, %v1559
  %v1584 = vmul.f32 %v1529, %v1559
  %v1585 = vmul.f32 %v1530, %v1559
  %v1586 = vmul.f32 %v1531, %v1559
  %v1587 = vmul.f32 %v1532, %v1559
  %v1588 = vmul.f32 %v1533, %v1559
  %v1589 = vmul.f32 %v1534, %v1559
  %v1590 = vmul.f32 %v1535, %v1559
  %v1591 = vmul.f32 %v1536, %v1559
  %v1592 = vmul.f32 %v1537, %v1559
  %v1593 = vmul.f32 %v1538, %v1559
  %v1594 = vmul.f32 %v1539, %v1559
  %v1595 = vmul.f32 %v1540, %v1559
  %v1596 = vmul.f32 %v1541, %v1559
  %v1597 = vmul.f32 %v1542, %v1559
  %v1598 = vmul.f32 %v1543, %v1559
  %v1599 = vmul.f32 %v1544, %v1559
  %v1600 = vmul.f32 %v1545, %v1559
  %v1601 = vmul.f32 %v1546, %v1559
  %v1602 = vmul.f32 %v1547, %v1559
  %v1603 = vmul.f32 %v1548, %v1559
  %v1604 = vmul.f32 %v1549, %v1559
  %v1605 = vmul.f32 %v1550, %v1559
  %v1606 = vmul.f32 %v1551, %v1559
  %v1607 = vmul.f32 %v1552, %v1559
  %v1608 = vmul.f32 %v1553, %v1559
  %v1609 = vmul.f32 %v1554, %v1559
  %v1611 = vlaneseq
  %v1612 = vshrl.u32 %v1611, 7
  %v1613 = vsub.s32 0, %v1612
  %v1614 = vrot.slane %v1196, %v1613
  %v1616 = vadd.f32 %v1561, %v1614
  %v1617 = vadd.f32 %v1562, %v1614
  %v1618 = vadd.f32 %v1563, %v1614
  %v1619 = vadd.f32 %v1564, %v1614
  %v1620 = vadd.f32 %v1565, %v1614
  %v1621 = vadd.f32 %v1566, %v1614
  %v1622 = vadd.f32 %v1567, %v1614
  %v1623 = vadd.f32 %v1568, %v1614
  %v1624 = vadd.f32 %v1569, %v1614
  %v1625 = vadd.f32 %v1570, %v1614
  %v1626 = vadd.f32 %v1571, %v1614
  %v1627 = vadd.f32 %v1572, %v1614
  %v1628 = vadd.f32 %v1573, %v1614
  %v1629 = vadd.f32 %v1574, %v1614
  %v1630 = vadd.f32 %v1575, %v1614
  %v1631 = vadd.f32 %v1576, %v1614
  %v1632 = vadd.f32 %v1577, %v1614
  %v1633 = vadd.f32 %v1578, %v1614
  %v1634 = vadd.f32 %v1579, %v1614
  %v1635 = vadd.f32 %v1580, %v1614
  %v1636 = vadd.f32 %v1581, %v1614
  %v1637 = vadd.f32 %v1582, %v1614
  %v1638 = vadd.f32 %v1583, %v1614
  %v1639 = vadd.f32 %v1584, %v1614
  %v1640 = vadd.f32 %v1585, %v1614
  %v1641 = vadd.f32 %v1586, %v1614
  %v1642 = vadd.f32 %v1587, %v1614
  %v1643 = vadd.f32 %v1588, %v1614
  %v1644 = vadd.f32 %v1589, %v1614
  %v1645 = vadd.f32 %v1590, %v1614
  %v1646 = vadd.f32 %v1591, %v1614
  %v1647 = vadd.f32 %v1592, %v1614
  %v1648 = vadd.f32 %v1593, %v1614
  %v1649 = vadd.f32 %v1594, %v1614
  %v1650 = vadd.f32 %v1595, %v1614
  %v1651 = vadd.f32 %v1596, %v1614
  %v1652 = vadd.f32 %v1597, %v1614
  %v1653 = vadd.f32 %v1598, %v1614
  %v1654 = vadd.f32 %v1599, %v1614
  %v1655 = vadd.f32 %v1600, %v1614
  %v1656 = vadd.f32 %v1601, %v1614
  %v1657 = vadd.f32 %v1602, %v1614
  %v1658 = vadd.f32 %v1603, %v1614
  %v1659 = vadd.f32 %v1604, %v1614
  %v1660 = vadd.f32 %v1605, %v1614
  %v1661 = vadd.f32 %v1606, %v1614
  %v1662 = vadd.f32 %v1607, %v1614
  %v1663 = vadd.f32 %v1608, %v1614
  %v1664 = vadd.f32 %v1609, %v1614
  %v1665 = vmax.f32 %v1616, 0.0
  %v1666 = vmax.f32 %v1617, 0.0
  %v1667 = vmax.f32 %v1618, 0.0
  %v1668 = vmax.f32 %v1619, 0.0
  %v1669 = vmax.f32 %v1620, 0.0
  %v1670 = vmax.f32 %v1621, 0.0
  %v1671 = vmax.f32 %v1622, 0.0
  %v1672 = vmax.f32 %v1623, 0.0
  %v1673 = vmax.f32 %v1624, 0.0
  %v1674 = vmax.f32 %v1625, 0.0
  %v1675 = vmax.f32 %v1626, 0.0
  %v1676 = vmax.f32 %v1627, 0.0
  %v1677 = vmax.f32 %v1628, 0.0
  %v1678 = vmax.f32 %v1629, 0.0
  %v1679 = vmax.f32 %v1630, 0.0
  %v1680 = vmax.f32 %v1631, 0.0
  %v1681 = vmax.f32 %v1632, 0.0
  %v1682 = vmax.f32 %v1633, 0.0
  %v1683 = vmax.f32 %v1634, 0.0
  %v1684 = vmax.f32 %v1635, 0.0
  %v1685 = vmax.f32 %v1636, 0.0
  %v1686 = vmax.f32 %v1637, 0.0
  %v1687 = vmax.f32 %v1638, 0.0
  %v1688 = vmax.f32 %v1639, 0.0
  %v1689 = vmax.f32 %v1640, 0.0
  %v1690 = vmax.f32 %v1641, 0.0
  %v1691 = vmax.f32 %v1642, 0.0
  %v1692 = vmax.f32 %v1643, 0.0
  %v1693 = vmax.f32 %v1644, 0.0
  %v1694 = vmax.f32 %v1645, 0.0
  %v1695 = vmax.f32 %v1646, 0.0
  %v1696 = vmax.f32 %v1647, 0.0
  %v1697 = vmax.f32 %v1648, 0.0
  %v1698 = vmax.f32 %v1649, 0.0
  %v1699 = vmax.f32 %v1650, 0.0
  %v1700 = vmax.f32 %v1651, 0.0
  %v1701 = vmax.f32 %v1652, 0.0
  %v1702 = vmax.f32 %v1653, 0.0
  %v1703 = vmax.f32 %v1654, 0.0
  %v1704 = vmax.f32 %v1655, 0.0
  %v1705 = vmax.f32 %v1656, 0.0
  %v1706 = vmax.f32 %v1657, 0.0
  %v1707 = vmax.f32 %v1658, 0.0
  %v1708 = vmax.f32 %v1659, 0.0
  %v1709 = vmax.f32 %v1660, 0.0
  %v1710 = vmax.f32 %v1661, 0.0
  %v1711 = vmax.f32 %v1662, 0.0
  %v1712 = vmax.f32 %v1663, 0.0
  %v1713 = vmax.f32 %v1664, 0.0
  %v1714 = vpack.c.bf16 %v1666, %v1665
  %v1715 = vpack.c.bf16 %v1668, %v1667
  %v1716 = vpack.c.bf16 %v1670, %v1669
  %v1717 = vpack.c.bf16 %v1672, %v1671
  %v1718 = vpack.c.bf16 %v1674, %v1673
  %v1719 = vpack.c.bf16 %v1676, %v1675
  %v1720 = vpack.c.bf16 %v1678, %v1677
  %v1721 = vpack.c.bf16 %v1680, %v1679
  %v1722 = vpack.c.bf16 %v1682, %v1681
  %v1723 = vpack.c.bf16 %v1684, %v1683
  %v1724 = vpack.c.bf16 %v1686, %v1685
  %v1725 = vpack.c.bf16 %v1688, %v1687
  %v1726 = vpack.c.bf16 %v1690, %v1689
  %v1727 = vpack.c.bf16 %v1692, %v1691
  %v1728 = vpack.c.bf16 %v1694, %v1693
  %v1729 = vpack.c.bf16 %v1696, %v1695
  %v1730 = vpack.c.bf16 %v1698, %v1697
  %v1731 = vpack.c.bf16 %v1700, %v1699
  %v1732 = vpack.c.bf16 %v1702, %v1701
  %v1733 = vpack.c.bf16 %v1704, %v1703
  %v1734 = vpack.c.bf16 %v1706, %v1705
  %v1735 = vpack.c.bf16 %v1708, %v1707
  %v1736 = vpack.c.bf16 %v1710, %v1709
  %v1737 = vpack.c.bf16 %v1712, %v1711
  %v1738 = vpack.c.bf16 %v1713, %v1713
  %v1739 = vld [vmem:[%s6] sm:$0xf]
  %v1740 = vld [vmem:[%s6 + $0x4] sm:$0xf]
  %v1741 = vld [vmem:[%s6 + $0x8] sm:$0xf]
  %v1742 = vld [vmem:[%s6 + $0xc] sm:$0xf]
  %v1743 = vld [vmem:[%s7] sm:$0x1]
  %v1745 = vlaneseq
  %v1746 = vshrl.u32 %v1745, 7
  %v1747 = vsub.s32 0, %v1746
  %v1748 = vrot.slane %v1743, %v1747
  %v1754 = vunpack.c.l.b16 %v1739
  %v1755 = vunpack.c.l.b16 %v1740
  %v1756 = vunpack.c.l.b16 %v1741
  %v1757 = vunpack.c.l.b16 %v1742
  %v1758 = vpack.c.b16 %v1755, %v1754
  %v1759 = vpack.c.b16 %v1757, %v1756
  %v1763 = vsel %vm655, %v1714, 0
  %v1766 = vsel %vm655, %v1715, 0
  %v1769 = vsel %vm655, %v1716, 0
  %v1772 = vsel %vm655, %v1717, 0
  %v1775 = vsel %vm655, %v1718, 0
  %v1778 = vsel %vm655, %v1719, 0
  %v1781 = vsel %vm655, %v1720, 0
  %v1784 = vsel %vm655, %v1721, 0
  %v1787 = vsel %vm655, %v1722, 0
  %v1790 = vsel %vm655, %v1723, 0
  %v1793 = vsel %vm655, %v1724, 0
  %v1796 = vsel %vm655, %v1725, 0
  %v1799 = vsel %vm655, %v1726, 0
  %v1802 = vsel %vm655, %v1727, 0
  %v1805 = vsel %vm655, %v1728, 0
  %v1808 = vsel %vm655, %v1729, 0
  %v1811 = vsel %vm655, %v1730, 0
  %v1814 = vsel %vm655, %v1731, 0
  %v1817 = vsel %vm655, %v1732, 0
  %v1820 = vsel %vm655, %v1733, 0
  %v1823 = vsel %vm655, %v1734, 0
  %v1826 = vsel %vm655, %v1735, 0
  %v1829 = vsel %vm655, %v1736, 0
  %v1832 = vsel %vm655, %v1737, 0
  %v1835 = vsel %vm655, %v1738, 0
  %1837 = vmatprep.subr.bf16.mxu0 0
  %1838 = vmatpush1.bf16.msra.mxu0 0
  %1839 = vmatprep.subr.bf16.mxu0 0
  %1840 = vmatpush1.bf16.msra.mxu0 0
  %1841 = vmatprep.subr.bf16.mxu0 0
  %1842 = vmatpush1.bf16.msra.mxu0 0
  %1843 = vmatprep.subr.bf16.mxu0 0
  %1844 = vmatpush1.bf16.msra.mxu0 0
  %1845 = vmatprep.subr.bf16.mxu0 0
  %1846 = vmatpush1.bf16.msra.mxu0 0
  %1847 = vmatprep.subr.bf16.mxu0 0
  %1848 = vmatpush1.bf16.msra.mxu0 0
  %1849 = vmatprep.subr.bf16.mxu0 0
  %1850 = vmatpush1.bf16.msra.mxu0 %v1759
  %1851 = vmatprep.subr.bf16.mxu0 0
  %1852 = vmatpush1.bf16.msra.mxu0 %v1758
  %1853 = vmatprep.subr.bf16.mxu0 0
  %1854 = vmatpush2.bf16.msra.mxu0 0
  %1855 = vmatprep.subr.bf16.mxu0 0
  %1856 = vmatpush2.bf16.msra.mxu0 0
  %1857 = vmatprep.subr.bf16.mxu0 0
  %1858 = vmatpush2.bf16.msra.mxu0 0
  %1859 = vmatprep.subr.bf16.mxu0 0
  %1860 = vmatpush2.bf16.msra.mxu0 0
  %1861 = vmatprep.subr.bf16.mxu0 0
  %1862 = vmatpush2.bf16.msra.mxu0 0
  %1863 = vmatprep.subr.bf16.mxu0 0
  %1864 = vmatpush2.bf16.msra.mxu0 0
  %1865 = vmatprep.subr.bf16.mxu0 0
  %1866 = vmatpush2.bf16.msra.mxu0 0
  %1867 = vmatprep.subr.bf16.mxu0 0
  %1868 = vmatpush2.bf16.msra.mxu0 0
  %1869 = vmatprep.mubr.bf16.mxu0 0
  %1870 = vmatmul.mubr.bf16.gmra.mxu0 %v1763
  %v1871 = vpop.f32.mrf.mxu0
  %v1872 = vadd.f32 %v1748, %v1871
  %v1873 = vpop.f32.mrf.mxu0
  %v1874 = vpop.f32.mrf.mxu0
  %v1875 = vadd.f32 %v1748, %v1874
  %v1876 = vpop.f32.mrf.mxu0
  %1877 = vmatprep.mubr.bf16.mxu0 0
  %1878 = vmatmul.mubr.bf16.gmra.mxu0 %v1766
  %v1879 = vpop.f32.mrf.mxu0
  %v1880 = vadd.f32 %v1748, %v1879
  %v1881 = vpop.f32.mrf.mxu0
  %v1882 = vpop.f32.mrf.mxu0
  %v1883 = vadd.f32 %v1748, %v1882
  %v1884 = vpop.f32.mrf.mxu0
  %1885 = vmatprep.mubr.bf16.mxu0 0
  %1886 = vmatmul.mubr.bf16.gmra.mxu0 %v1769
  %v1887 = vpop.f32.mrf.mxu0
  %v1888 = vadd.f32 %v1748, %v1887
  %v1889 = vpop.f32.mrf.mxu0
  %v1890 = vpop.f32.mrf.mxu0
  %v1891 = vadd.f32 %v1748, %v1890
  %v1892 = vpop.f32.mrf.mxu0
  %1893 = vmatprep.mubr.bf16.mxu0 0
  %1894 = vmatmul.mubr.bf16.gmra.mxu0 %v1772
  %v1895 = vpop.f32.mrf.mxu0
  %v1896 = vadd.f32 %v1748, %v1895
  %v1897 = vpop.f32.mrf.mxu0
  %v1898 = vpop.f32.mrf.mxu0
  %v1899 = vadd.f32 %v1748, %v1898
  %v1900 = vpop.f32.mrf.mxu0
  %1901 = vmatprep.mubr.bf16.mxu0 0
  %1902 = vmatmul.mubr.bf16.gmra.mxu0 %v1775
  %v1903 = vpop.f32.mrf.mxu0
  %v1904 = vadd.f32 %v1748, %v1903
  %v1905 = vpop.f32.mrf.mxu0
  %v1906 = vpop.f32.mrf.mxu0
  %v1907 = vadd.f32 %v1748, %v1906
  %v1908 = vpop.f32.mrf.mxu0
  %1909 = vmatprep.mubr.bf16.mxu0 0
  %1910 = vmatmul.mubr.bf16.gmra.mxu0 %v1778
  %v1911 = vpop.f32.mrf.mxu0
  %v1912 = vadd.f32 %v1748, %v1911
  %v1913 = vpop.f32.mrf.mxu0
  %v1914 = vpop.f32.mrf.mxu0
  %v1915 = vadd.f32 %v1748, %v1914
  %v1916 = vpop.f32.mrf.mxu0
  %1917 = vmatprep.mubr.bf16.mxu0 0
  %1918 = vmatmul.mubr.bf16.gmra.mxu0 %v1781
  %v1919 = vpop.f32.mrf.mxu0
  %v1920 = vadd.f32 %v1748, %v1919
  %v1921 = vpop.f32.mrf.mxu0
  %v1922 = vpop.f32.mrf.mxu0
  %v1923 = vadd.f32 %v1748, %v1922
  %v1924 = vpop.f32.mrf.mxu0
  %1925 = vmatprep.mubr.bf16.mxu0 0
  %1926 = vmatmul.mubr.bf16.gmra.mxu0 %v1784
  %v1927 = vpop.f32.mrf.mxu0
  %v1928 = vadd.f32 %v1748, %v1927
  %v1929 = vpop.f32.mrf.mxu0
  %v1930 = vpop.f32.mrf.mxu0
  %v1931 = vadd.f32 %v1748, %v1930
  %v1932 = vpop.f32.mrf.mxu0
  %1933 = vmatprep.mubr.bf16.mxu0 0
  %1934 = vmatmul.mubr.bf16.gmra.mxu0 %v1787
  %v1935 = vpop.f32.mrf.mxu0
  %v1936 = vadd.f32 %v1748, %v1935
  %v1937 = vpop.f32.mrf.mxu0
  %v1938 = vpop.f32.mrf.mxu0
  %v1939 = vadd.f32 %v1748, %v1938
  %v1940 = vpop.f32.mrf.mxu0
  %1941 = vmatprep.mubr.bf16.mxu0 0
  %1942 = vmatmul.mubr.bf16.gmra.mxu0 %v1790
  %v1943 = vpop.f32.mrf.mxu0
  %v1944 = vadd.f32 %v1748, %v1943
  %v1945 = vpop.f32.mrf.mxu0
  %v1946 = vpop.f32.mrf.mxu0
  %v1947 = vadd.f32 %v1748, %v1946
  %v1948 = vpop.f32.mrf.mxu0
  %1949 = vmatprep.mubr.bf16.mxu0 0
  %1950 = vmatmul.mubr.bf16.gmra.mxu0 %v1793
  %v1951 = vpop.f32.mrf.mxu0
  %v1952 = vadd.f32 %v1748, %v1951
  %v1953 = vpop.f32.mrf.mxu0
  %v1954 = vpop.f32.mrf.mxu0
  %v1955 = vadd.f32 %v1748, %v1954
  %v1956 = vpop.f32.mrf.mxu0
  %1957 = vmatprep.mubr.bf16.mxu0 0
  %1958 = vmatmul.mubr.bf16.gmra.mxu0 %v1796
  %v1959 = vpop.f32.mrf.mxu0
  %v1960 = vadd.f32 %v1748, %v1959
  %v1961 = vpop.f32.mrf.mxu0
  %v1962 = vpop.f32.mrf.mxu0
  %v1963 = vadd.f32 %v1748, %v1962
  %v1964 = vpop.f32.mrf.mxu0
  %1965 = vmatprep.mubr.bf16.mxu0 0
  %1966 = vmatmul.mubr.bf16.gmra.mxu0 %v1799
  %v1967 = vpop.f32.mrf.mxu0
  %v1968 = vadd.f32 %v1748, %v1967
  %v1969 = vpop.f32.mrf.mxu0
  %v1970 = vpop.f32.mrf.mxu0
  %v1971 = vadd.f32 %v1748, %v1970
  %v1972 = vpop.f32.mrf.mxu0
  %1973 = vmatprep.mubr.bf16.mxu0 0
  %1974 = vmatmul.mubr.bf16.gmra.mxu0 %v1802
  %v1975 = vpop.f32.mrf.mxu0
  %v1976 = vadd.f32 %v1748, %v1975
  %v1977 = vpop.f32.mrf.mxu0
  %v1978 = vpop.f32.mrf.mxu0
  %v1979 = vadd.f32 %v1748, %v1978
  %v1980 = vpop.f32.mrf.mxu0
  %1981 = vmatprep.mubr.bf16.mxu0 0
  %1982 = vmatmul.mubr.bf16.gmra.mxu0 %v1805
  %v1983 = vpop.f32.mrf.mxu0
  %v1984 = vadd.f32 %v1748, %v1983
  %v1985 = vpop.f32.mrf.mxu0
  %v1986 = vpop.f32.mrf.mxu0
  %v1987 = vadd.f32 %v1748, %v1986
  %v1988 = vpop.f32.mrf.mxu0
  %1989 = vmatprep.mubr.bf16.mxu0 0
  %1990 = vmatmul.mubr.bf16.gmra.mxu0 %v1808
  %v1991 = vpop.f32.mrf.mxu0
  %v1992 = vadd.f32 %v1748, %v1991
  %v1993 = vpop.f32.mrf.mxu0
  %v1994 = vpop.f32.mrf.mxu0
  %v1995 = vadd.f32 %v1748, %v1994
  %v1996 = vpop.f32.mrf.mxu0
  %1997 = vmatprep.mubr.bf16.mxu0 0
  %1998 = vmatmul.mubr.bf16.gmra.mxu0 %v1811
  %v1999 = vpop.f32.mrf.mxu0
  %v2000 = vadd.f32 %v1748, %v1999
  %v2001 = vpop.f32.mrf.mxu0
  %v2002 = vpop.f32.mrf.mxu0
  %v2003 = vadd.f32 %v1748, %v2002
  %v2004 = vpop.f32.mrf.mxu0
  %2005 = vmatprep.mubr.bf16.mxu0 0
  %2006 = vmatmul.mubr.bf16.gmra.mxu0 %v1814
  %v2007 = vpop.f32.mrf.mxu0
  %v2008 = vadd.f32 %v1748, %v2007
  %v2009 = vpop.f32.mrf.mxu0
  %v2010 = vpop.f32.mrf.mxu0
  %v2011 = vadd.f32 %v1748, %v2010
  %v2012 = vpop.f32.mrf.mxu0
  %2013 = vmatprep.mubr.bf16.mxu0 0
  %2014 = vmatmul.mubr.bf16.gmra.mxu0 %v1817
  %v2015 = vpop.f32.mrf.mxu0
  %v2016 = vadd.f32 %v1748, %v2015
  %v2017 = vpop.f32.mrf.mxu0
  %v2018 = vpop.f32.mrf.mxu0
  %v2019 = vadd.f32 %v1748, %v2018
  %v2020 = vpop.f32.mrf.mxu0
  %2021 = vmatprep.mubr.bf16.mxu0 0
  %2022 = vmatmul.mubr.bf16.gmra.mxu0 %v1820
  %v2023 = vpop.f32.mrf.mxu0
  %v2024 = vadd.f32 %v1748, %v2023
  %v2025 = vpop.f32.mrf.mxu0
  %v2026 = vpop.f32.mrf.mxu0
  %v2027 = vadd.f32 %v1748, %v2026
  %v2028 = vpop.f32.mrf.mxu0
  %2029 = vmatprep.mubr.bf16.mxu0 0
  %2030 = vmatmul.mubr.bf16.gmra.mxu0 %v1823
  %v2031 = vpop.f32.mrf.mxu0
  %v2032 = vadd.f32 %v1748, %v2031
  %v2033 = vpop.f32.mrf.mxu0
  %v2034 = vpop.f32.mrf.mxu0
  %v2035 = vadd.f32 %v1748, %v2034
  %v2036 = vpop.f32.mrf.mxu0
  %2037 = vmatprep.mubr.bf16.mxu0 0
  %2038 = vmatmul.mubr.bf16.gmra.mxu0 %v1826
  %v2039 = vpop.f32.mrf.mxu0
  %v2040 = vadd.f32 %v1748, %v2039
  %v2041 = vpop.f32.mrf.mxu0
  %v2042 = vpop.f32.mrf.mxu0
  %v2043 = vadd.f32 %v1748, %v2042
  %v2044 = vpop.f32.mrf.mxu0
  %2045 = vmatprep.mubr.bf16.mxu0 0
  %2046 = vmatmul.mubr.bf16.gmra.mxu0 %v1829
  %v2047 = vpop.f32.mrf.mxu0
  %v2048 = vadd.f32 %v1748, %v2047
  %v2049 = vpop.f32.mrf.mxu0
  %v2050 = vpop.f32.mrf.mxu0
  %v2051 = vadd.f32 %v1748, %v2050
  %v2052 = vpop.f32.mrf.mxu0
  %2053 = vmatprep.mubr.bf16.mxu0 0
  %2054 = vmatmul.mubr.bf16.gmra.mxu0 %v1832
  %v2055 = vpop.f32.mrf.mxu0
  %v2056 = vadd.f32 %v1748, %v2055
  %v2057 = vpop.f32.mrf.mxu0
  %v2058 = vpop.f32.mrf.mxu0
  %v2059 = vadd.f32 %v1748, %v2058
  %v2060 = vpop.f32.mrf.mxu0
  %2061 = vmatprep.mubr.bf16.mxu0 0
  %2062 = vmatmul.mubr.bf16.gmra.mxu0 %v1835
  %v2063 = vpop.f32.mrf.mxu0
  %v2064 = vadd.f32 %v1748, %v2063
  %v2065 = vpop.f32.mrf.mxu0
  %v2066 = vpop.f32.mrf.mxu0
  %v2067 = vpop.f32.mrf.mxu0
  %2068 = vdwg.mxu0
  %v2069 = vld [vmem:[%s8] sm:$0x1]
  %v2070 = vld [vmem:[%s9] sm:$0x1]
  %v2071 = vsel %vm655, %v1872, 0.0
  %v2072 = vsel %vm655, %v1875, 0.0
  %v2073 = vadd.f32 %v2071, %v2072
  %v2074 = vsel %vm655, %v1880, 0.0
  %v2075 = vadd.f32 %v2073, %v2074
  %v2076 = vsel %vm655, %v1883, 0.0
  %v2077 = vadd.f32 %v2075, %v2076
  %v2078 = vsel %vm655, %v1888, 0.0
  %v2079 = vadd.f32 %v2077, %v2078
  %v2080 = vsel %vm655, %v1891, 0.0
  %v2081 = vadd.f32 %v2079, %v2080
  %v2082 = vsel %vm655, %v1896, 0.0
  %v2083 = vadd.f32 %v2081, %v2082
  %v2084 = vsel %vm655, %v1899, 0.0
  %v2085 = vadd.f32 %v2083, %v2084
  %v2086 = vsel %vm655, %v1904, 0.0
  %v2087 = vadd.f32 %v2085, %v2086
  %v2088 = vsel %vm655, %v1907, 0.0
  %v2089 = vadd.f32 %v2087, %v2088
  %v2090 = vsel %vm655, %v1912, 0.0
  %v2091 = vadd.f32 %v2089, %v2090
  %v2092 = vsel %vm655, %v1915, 0.0
  %v2093 = vadd.f32 %v2091, %v2092
  %v2094 = vsel %vm655, %v1920, 0.0
  %v2095 = vadd.f32 %v2093, %v2094
  %v2096 = vsel %vm655, %v1923, 0.0
  %v2097 = vadd.f32 %v2095, %v2096
  %v2098 = vsel %vm655, %v1928, 0.0
  %v2099 = vadd.f32 %v2097, %v2098
  %v2100 = vsel %vm655, %v1931, 0.0
  %v2101 = vadd.f32 %v2099, %v2100
  %v2102 = vsel %vm655, %v1936, 0.0
  %v2103 = vadd.f32 %v2101, %v2102
  %v2104 = vsel %vm655, %v1939, 0.0
  %v2105 = vadd.f32 %v2103, %v2104
  %v2106 = vsel %vm655, %v1944, 0.0
  %v2107 = vadd.f32 %v2105, %v2106
  %v2108 = vsel %vm655, %v1947, 0.0
  %v2109 = vadd.f32 %v2107, %v2108
  %v2110 = vsel %vm655, %v1952, 0.0
  %v2111 = vadd.f32 %v2109, %v2110
  %v2112 = vsel %vm655, %v1955, 0.0
  %v2113 = vadd.f32 %v2111, %v2112
  %v2114 = vsel %vm655, %v1960, 0.0
  %v2115 = vadd.f32 %v2113, %v2114
  %v2116 = vsel %vm655, %v1963, 0.0
  %v2117 = vadd.f32 %v2115, %v2116
  %v2118 = vsel %vm655, %v1968, 0.0
  %v2119 = vadd.f32 %v2117, %v2118
  %v2120 = vsel %vm655, %v1971, 0.0
  %v2121 = vadd.f32 %v2119, %v2120
  %v2122 = vsel %vm655, %v1976, 0.0
  %v2123 = vadd.f32 %v2121, %v2122
  %v2124 = vsel %vm655, %v1979, 0.0
  %v2125 = vadd.f32 %v2123, %v2124
  %v2126 = vsel %vm655, %v1984, 0.0
  %v2127 = vadd.f32 %v2125, %v2126
  %v2128 = vsel %vm655, %v1987, 0.0
  %v2129 = vadd.f32 %v2127, %v2128
  %v2130 = vsel %vm655, %v1992, 0.0
  %v2131 = vadd.f32 %v2129, %v2130
  %v2132 = vsel %vm655, %v1995, 0.0
  %v2133 = vadd.f32 %v2131, %v2132
  %v2134 = vsel %vm655, %v2000, 0.0
  %v2135 = vadd.f32 %v2133, %v2134
  %v2136 = vsel %vm655, %v2003, 0.0
  %v2137 = vadd.f32 %v2135, %v2136
  %v2138 = vsel %vm655, %v2008, 0.0
  %v2139 = vadd.f32 %v2137, %v2138
  %v2140 = vsel %vm655, %v2011, 0.0
  %v2141 = vadd.f32 %v2139, %v2140
  %v2142 = vsel %vm655, %v2016, 0.0
  %v2143 = vadd.f32 %v2141, %v2142
  %v2144 = vsel %vm655, %v2019, 0.0
  %v2145 = vadd.f32 %v2143, %v2144
  %v2146 = vsel %vm655, %v2024, 0.0
  %v2147 = vadd.f32 %v2145, %v2146
  %v2148 = vsel %vm655, %v2027, 0.0
  %v2149 = vadd.f32 %v2147, %v2148
  %v2150 = vsel %vm655, %v2032, 0.0
  %v2151 = vadd.f32 %v2149, %v2150
  %v2152 = vsel %vm655, %v2035, 0.0
  %v2153 = vadd.f32 %v2151, %v2152
  %v2154 = vsel %vm655, %v2040, 0.0
  %v2155 = vadd.f32 %v2153, %v2154
  %v2156 = vsel %vm655, %v2043, 0.0
  %v2157 = vadd.f32 %v2155, %v2156
  %v2158 = vsel %vm655, %v2048, 0.0
  %v2159 = vadd.f32 %v2157, %v2158
  %v2160 = vsel %vm655, %v2051, 0.0
  %v2161 = vadd.f32 %v2159, %v2160
  %v2162 = vsel %vm655, %v2056, 0.0
  %v2163 = vadd.f32 %v2161, %v2162
  %v2164 = vsel %vm655, %v2059, 0.0
  %v2165 = vadd.f32 %v2163, %v2164
  %v2166 = vsel %vm655, %v2064, 0.0
  %v2167 = vadd.f32 %v2165, %v2166
  %v2168 = vrot.slane %v2167, 4
  %v2169 = vadd.f32 %v2167, %v2168
  %v2170 = vrot.slane %v2169, 2
  %v2171 = vadd.f32 %v2169, %v2170
  %v2172 = vrot.slane %v2171, 1
  %v2173 = vadd.f32 %v2171, %v2172
  %v2174 = vmul.f32 %v2173, %v1300
  %v2175 = vsub.f32 %v1872, %v2174
  %v2176 = vsub.f32 %v1875, %v2174
  %v2177 = vsub.f32 %v1880, %v2174
  %v2178 = vsub.f32 %v1883, %v2174
  %v2179 = vsub.f32 %v1888, %v2174
  %v2180 = vsub.f32 %v1891, %v2174
  %v2181 = vsub.f32 %v1896, %v2174
  %v2182 = vsub.f32 %v1899, %v2174
  %v2183 = vsub.f32 %v1904, %v2174
  %v2184 = vsub.f32 %v1907, %v2174
  %v2185 = vsub.f32 %v1912, %v2174
  %v2186 = vsub.f32 %v1915, %v2174
  %v2187 = vsub.f32 %v1920, %v2174
  %v2188 = vsub.f32 %v1923, %v2174
  %v2189 = vsub.f32 %v1928, %v2174
  %v2190 = vsub.f32 %v1931, %v2174
  %v2191 = vsub.f32 %v1936, %v2174
  %v2192 = vsub.f32 %v1939, %v2174
  %v2193 = vsub.f32 %v1944, %v2174
  %v2194 = vsub.f32 %v1947, %v2174
  %v2195 = vsub.f32 %v1952, %v2174
  %v2196 = vsub.f32 %v1955, %v2174
  %v2197 = vsub.f32 %v1960, %v2174
  %v2198 = vsub.f32 %v1963, %v2174
  %v2199 = vsub.f32 %v1968, %v2174
  %v2200 = vsub.f32 %v1971, %v2174
  %v2201 = vsub.f32 %v1976, %v2174
  %v2202 = vsub.f32 %v1979, %v2174
  %v2203 = vsub.f32 %v1984, %v2174
  %v2204 = vsub.f32 %v1987, %v2174
  %v2205 = vsub.f32 %v1992, %v2174
  %v2206 = vsub.f32 %v1995, %v2174
  %v2207 = vsub.f32 %v2000, %v2174
  %v2208 = vsub.f32 %v2003, %v2174
  %v2209 = vsub.f32 %v2008, %v2174
  %v2210 = vsub.f32 %v2011, %v2174
  %v2211 = vsub.f32 %v2016, %v2174
  %v2212 = vsub.f32 %v2019, %v2174
  %v2213 = vsub.f32 %v2024, %v2174
  %v2214 = vsub.f32 %v2027, %v2174
  %v2215 = vsub.f32 %v2032, %v2174
  %v2216 = vsub.f32 %v2035, %v2174
  %v2217 = vsub.f32 %v2040, %v2174
  %v2218 = vsub.f32 %v2043, %v2174
  %v2219 = vsub.f32 %v2048, %v2174
  %v2220 = vsub.f32 %v2051, %v2174
  %v2221 = vsub.f32 %v2056, %v2174
  %v2222 = vsub.f32 %v2059, %v2174
  %v2223 = vsub.f32 %v2064, %v2174
  %v2224 = vmul.f32 %v2175, %v2175
  %v2225 = vmul.f32 %v2176, %v2176
  %v2226 = vmul.f32 %v2177, %v2177
  %v2227 = vmul.f32 %v2178, %v2178
  %v2228 = vmul.f32 %v2179, %v2179
  %v2229 = vmul.f32 %v2180, %v2180
  %v2230 = vmul.f32 %v2181, %v2181
  %v2231 = vmul.f32 %v2182, %v2182
  %v2232 = vmul.f32 %v2183, %v2183
  %v2233 = vmul.f32 %v2184, %v2184
  %v2234 = vmul.f32 %v2185, %v2185
  %v2235 = vmul.f32 %v2186, %v2186
  %v2236 = vmul.f32 %v2187, %v2187
  %v2237 = vmul.f32 %v2188, %v2188
  %v2238 = vmul.f32 %v2189, %v2189
  %v2239 = vmul.f32 %v2190, %v2190
  %v2240 = vmul.f32 %v2191, %v2191
  %v2241 = vmul.f32 %v2192, %v2192
  %v2242 = vmul.f32 %v2193, %v2193
  %v2243 = vmul.f32 %v2194, %v2194
  %v2244 = vmul.f32 %v2195, %v2195
  %v2245 = vmul.f32 %v2196, %v2196
  %v2246 = vmul.f32 %v2197, %v2197
  %v2247 = vmul.f32 %v2198, %v2198
  %v2248 = vmul.f32 %v2199, %v2199
  %v2249 = vmul.f32 %v2200, %v2200
  %v2250 = vmul.f32 %v2201, %v2201
  %v2251 = vmul.f32 %v2202, %v2202
  %v2252 = vmul.f32 %v2203, %v2203
  %v2253 = vmul.f32 %v2204, %v2204
  %v2254 = vmul.f32 %v2205, %v2205
  %v2255 = vmul.f32 %v2206, %v2206
  %v2256 = vmul.f32 %v2207, %v2207
  %v2257 = vmul.f32 %v2208, %v2208
  %v2258 = vmul.f32 %v2209, %v2209
  %v2259 = vmul.f32 %v2210, %v2210
  %v2260 = vmul.f32 %v2211, %v2211
  %v2261 = vmul.f32 %v2212, %v2212
  %v2262 = vmul.f32 %v2213, %v2213
  %v2263 = vmul.f32 %v2214, %v2214
  %v2264 = vmul.f32 %v2215, %v2215
  %v2265 = vmul.f32 %v2216, %v2216
  %v2266 = vmul.f32 %v2217, %v2217
  %v2267 = vmul.f32 %v2218, %v2218
  %v2268 = vmul.f32 %v2219, %v2219
  %v2269 = vmul.f32 %v2220, %v2220
  %v2270 = vmul.f32 %v2221, %v2221
  %v2271 = vmul.f32 %v2222, %v2222
  %v2272 = vmul.f32 %v2223, %v2223
  %v2273 = vsel %vm655, %v2224, 0.0
  %v2274 = vsel %vm655, %v2225, 0.0
  %v2275 = vadd.f32 %v2273, %v2274
  %v2276 = vsel %vm655, %v2226, 0.0
  %v2277 = vadd.f32 %v2275, %v2276
  %v2278 = vsel %vm655, %v2227, 0.0
  %v2279 = vadd.f32 %v2277, %v2278
  %v2280 = vsel %vm655, %v2228, 0.0
  %v2281 = vadd.f32 %v2279, %v2280
  %v2282 = vsel %vm655, %v2229, 0.0
  %v2283 = vadd.f32 %v2281, %v2282
  %v2284 = vsel %vm655, %v2230, 0.0
  %v2285 = vadd.f32 %v2283, %v2284
  %v2286 = vsel %vm655, %v2231, 0.0
  %v2287 = vadd.f32 %v2285, %v2286
  %v2288 = vsel %vm655, %v2232, 0.0
  %v2289 = vadd.f32 %v2287, %v2288
  %v2290 = vsel %vm655, %v2233, 0.0
  %v2291 = vadd.f32 %v2289, %v2290
  %v2292 = vsel %vm655, %v2234, 0.0
  %v2293 = vadd.f32 %v2291, %v2292
  %v2294 = vsel %vm655, %v2235, 0.0
  %v2295 = vadd.f32 %v2293, %v2294
  %v2296 = vsel %vm655, %v2236, 0.0
  %v2297 = vadd.f32 %v2295, %v2296
  %v2298 = vsel %vm655, %v2237, 0.0
  %v2299 = vadd.f32 %v2297, %v2298
  %v2300 = vsel %vm655, %v2238, 0.0
  %v2301 = vadd.f32 %v2299, %v2300
  %v2302 = vsel %vm655, %v2239, 0.0
  %v2303 = vadd.f32 %v2301, %v2302
  %v2304 = vsel %vm655, %v2240, 0.0
  %v2305 = vadd.f32 %v2303, %v2304
  %v2306 = vsel %vm655, %v2241, 0.0
  %v2307 = vadd.f32 %v2305, %v2306
  %v2308 = vsel %vm655, %v2242, 0.0
  %v2309 = vadd.f32 %v2307, %v2308
  %v2310 = vsel %vm655, %v2243, 0.0
  %v2311 = vadd.f32 %v2309, %v2310
  %v2312 = vsel %vm655, %v2244, 0.0
  %v2313 = vadd.f32 %v2311, %v2312
  %v2314 = vsel %vm655, %v2245, 0.0
  %v2315 = vadd.f32 %v2313, %v2314
  %v2316 = vsel %vm655, %v2246, 0.0
  %v2317 = vadd.f32 %v2315, %v2316
  %v2318 = vsel %vm655, %v2247, 0.0
  %v2319 = vadd.f32 %v2317, %v2318
  %v2320 = vsel %vm655, %v2248, 0.0
  %v2321 = vadd.f32 %v2319, %v2320
  %v2322 = vsel %vm655, %v2249, 0.0
  %v2323 = vadd.f32 %v2321, %v2322
  %v2324 = vsel %vm655, %v2250, 0.0
  %v2325 = vadd.f32 %v2323, %v2324
  %v2326 = vsel %vm655, %v2251, 0.0
  %v2327 = vadd.f32 %v2325, %v2326
  %v2328 = vsel %vm655, %v2252, 0.0
  %v2329 = vadd.f32 %v2327, %v2328
  %v2330 = vsel %vm655, %v2253, 0.0
  %v2331 = vadd.f32 %v2329, %v2330
  %v2332 = vsel %vm655, %v2254, 0.0
  %v2333 = vadd.f32 %v2331, %v2332
  %v2334 = vsel %vm655, %v2255, 0.0
  %v2335 = vadd.f32 %v2333, %v2334
  %v2336 = vsel %vm655, %v2256, 0.0
  %v2337 = vadd.f32 %v2335, %v2336
  %v2338 = vsel %vm655, %v2257, 0.0
  %v2339 = vadd.f32 %v2337, %v2338
  %v2340 = vsel %vm655, %v2258, 0.0
  %v2341 = vadd.f32 %v2339, %v2340
  %v2342 = vsel %vm655, %v2259, 0.0
  %v2343 = vadd.f32 %v2341, %v2342
  %v2344 = vsel %vm655, %v2260, 0.0
  %v2345 = vadd.f32 %v2343, %v2344
  %v2346 = vsel %vm655, %v2261, 0.0
  %v2347 = vadd.f32 %v2345, %v2346
  %v2348 = vsel %vm655, %v2262, 0.0
  %v2349 = vadd.f32 %v2347, %v2348
  %v2350 = vsel %vm655, %v2263, 0.0
  %v2351 = vadd.f32 %v2349, %v2350
  %v2352 = vsel %vm655, %v2264, 0.0
  %v2353 = vadd.f32 %v2351, %v2352
  %v2354 = vsel %vm655, %v2265, 0.0
  %v2355 = vadd.f32 %v2353, %v2354
  %v2356 = vsel %vm655, %v2266, 0.0
  %v2357 = vadd.f32 %v2355, %v2356
  %v2358 = vsel %vm655, %v2267, 0.0
  %v2359 = vadd.f32 %v2357, %v2358
  %v2360 = vsel %vm655, %v2268, 0.0
  %v2361 = vadd.f32 %v2359, %v2360
  %v2362 = vsel %vm655, %v2269, 0.0
  %v2363 = vadd.f32 %v2361, %v2362
  %v2364 = vsel %vm655, %v2270, 0.0
  %v2365 = vadd.f32 %v2363, %v2364
  %v2366 = vsel %vm655, %v2271, 0.0
  %v2367 = vadd.f32 %v2365, %v2366
  %v2368 = vsel %vm655, %v2272, 0.0
  %v2369 = vadd.f32 %v2367, %v2368
  %v2370 = vrot.slane %v2369, 4
  %v2371 = vadd.f32 %v2369, %v2370
  %v2372 = vrot.slane %v2371, 2
  %v2373 = vadd.f32 %v2371, %v2372
  %v2374 = vrot.slane %v2373, 1
  %v2375 = vadd.f32 %v2373, %v2374
  %v2376 = vmul.f32 %v2375, %v1300
  %v2377 = vadd.f32 %v2376, 1e-05
  %v2378 = vrsqrt.pop %v2377
  %v2379 = vmul.f32 %v2175, %v2378
  %v2380 = vmul.f32 %v2176, %v2378
  %v2381 = vmul.f32 %v2177, %v2378
  %v2382 = vmul.f32 %v2178, %v2378
  %v2383 = vmul.f32 %v2179, %v2378
  %v2384 = vmul.f32 %v2180, %v2378
  %v2385 = vmul.f32 %v2181, %v2378
  %v2386 = vmul.f32 %v2182, %v2378
  %v2387 = vmul.f32 %v2183, %v2378
  %v2388 = vmul.f32 %v2184, %v2378
  %v2389 = vmul.f32 %v2185, %v2378
  %v2390 = vmul.f32 %v2186, %v2378
  %v2391 = vmul.f32 %v2187, %v2378
  %v2392 = vmul.f32 %v2188, %v2378
  %v2393 = vmul.f32 %v2189, %v2378
  %v2394 = vmul.f32 %v2190, %v2378
  %v2395 = vmul.f32 %v2191, %v2378
  %v2396 = vmul.f32 %v2192, %v2378
  %v2397 = vmul.f32 %v2193, %v2378
  %v2398 = vmul.f32 %v2194, %v2378
  %v2399 = vmul.f32 %v2195, %v2378
  %v2400 = vmul.f32 %v2196, %v2378
  %v2401 = vmul.f32 %v2197, %v2378
  %v2402 = vmul.f32 %v2198, %v2378
  %v2403 = vmul.f32 %v2199, %v2378
  %v2404 = vmul.f32 %v2200, %v2378
  %v2405 = vmul.f32 %v2201, %v2378
  %v2406 = vmul.f32 %v2202, %v2378
  %v2407 = vmul.f32 %v2203, %v2378
  %v2408 = vmul.f32 %v2204, %v2378
  %v2409 = vmul.f32 %v2205, %v2378
  %v2410 = vmul.f32 %v2206, %v2378
  %v2411 = vmul.f32 %v2207, %v2378
  %v2412 = vmul.f32 %v2208, %v2378
  %v2413 = vmul.f32 %v2209, %v2378
  %v2414 = vmul.f32 %v2210, %v2378
  %v2415 = vmul.f32 %v2211, %v2378
  %v2416 = vmul.f32 %v2212, %v2378
  %v2417 = vmul.f32 %v2213, %v2378
  %v2418 = vmul.f32 %v2214, %v2378
  %v2419 = vmul.f32 %v2215, %v2378
  %v2420 = vmul.f32 %v2216, %v2378
  %v2421 = vmul.f32 %v2217, %v2378
  %v2422 = vmul.f32 %v2218, %v2378
  %v2423 = vmul.f32 %v2219, %v2378
  %v2424 = vmul.f32 %v2220, %v2378
  %v2425 = vmul.f32 %v2221, %v2378
  %v2426 = vmul.f32 %v2222, %v2378
  %v2427 = vmul.f32 %v2223, %v2378
  %v2429 = vlaneseq
  %v2430 = vshrl.u32 %v2429, 7
  %v2431 = vsub.s32 0, %v2430
  %v2432 = vrot.slane %v2069, %v2431
  %v2434 = vmul.f32 %v2379, %v2432
  %v2435 = vmul.f32 %v2380, %v2432
  %v2436 = vmul.f32 %v2381, %v2432
  %v2437 = vmul.f32 %v2382, %v2432
  %v2438 = vmul.f32 %v2383, %v2432
  %v2439 = vmul.f32 %v2384, %v2432
  %v2440 = vmul.f32 %v2385, %v2432
  %v2441 = vmul.f32 %v2386, %v2432
  %v2442 = vmul.f32 %v2387, %v2432
  %v2443 = vmul.f32 %v2388, %v2432
  %v2444 = vmul.f32 %v2389, %v2432
  %v2445 = vmul.f32 %v2390, %v2432
  %v2446 = vmul.f32 %v2391, %v2432
  %v2447 = vmul.f32 %v2392, %v2432
  %v2448 = vmul.f32 %v2393, %v2432
  %v2449 = vmul.f32 %v2394, %v2432
  %v2450 = vmul.f32 %v2395, %v2432
  %v2451 = vmul.f32 %v2396, %v2432
  %v2452 = vmul.f32 %v2397, %v2432
  %v2453 = vmul.f32 %v2398, %v2432
  %v2454 = vmul.f32 %v2399, %v2432
  %v2455 = vmul.f32 %v2400, %v2432
  %v2456 = vmul.f32 %v2401, %v2432
  %v2457 = vmul.f32 %v2402, %v2432
  %v2458 = vmul.f32 %v2403, %v2432
  %v2459 = vmul.f32 %v2404, %v2432
  %v2460 = vmul.f32 %v2405, %v2432
  %v2461 = vmul.f32 %v2406, %v2432
  %v2462 = vmul.f32 %v2407, %v2432
  %v2463 = vmul.f32 %v2408, %v2432
  %v2464 = vmul.f32 %v2409, %v2432
  %v2465 = vmul.f32 %v2410, %v2432
  %v2466 = vmul.f32 %v2411, %v2432
  %v2467 = vmul.f32 %v2412, %v2432
  %v2468 = vmul.f32 %v2413, %v2432
  %v2469 = vmul.f32 %v2414, %v2432
  %v2470 = vmul.f32 %v2415, %v2432
  %v2471 = vmul.f32 %v2416, %v2432
  %v2472 = vmul.f32 %v2417, %v2432
  %v2473 = vmul.f32 %v2418, %v2432
  %v2474 = vmul.f32 %v2419, %v2432
  %v2475 = vmul.f32 %v2420, %v2432
  %v2476 = vmul.f32 %v2421, %v2432
  %v2477 = vmul.f32 %v2422, %v2432
  %v2478 = vmul.f32 %v2423, %v2432
  %v2479 = vmul.f32 %v2424, %v2432
  %v2480 = vmul.f32 %v2425, %v2432
  %v2481 = vmul.f32 %v2426, %v2432
  %v2482 = vmul.f32 %v2427, %v2432
  %v2484 = vlaneseq
  %v2485 = vshrl.u32 %v2484, 7
  %v2486 = vsub.s32 0, %v2485
  %v2487 = vrot.slane %v2070, %v2486
  %v2489 = vadd.f32 %v2434, %v2487
  %v2490 = vadd.f32 %v2435, %v2487
  %v2491 = vadd.f32 %v2436, %v2487
  %v2492 = vadd.f32 %v2437, %v2487
  %v2493 = vadd.f32 %v2438, %v2487
  %v2494 = vadd.f32 %v2439, %v2487
  %v2495 = vadd.f32 %v2440, %v2487
  %v2496 = vadd.f32 %v2441, %v2487
  %v2497 = vadd.f32 %v2442, %v2487
  %v2498 = vadd.f32 %v2443, %v2487
  %v2499 = vadd.f32 %v2444, %v2487
  %v2500 = vadd.f32 %v2445, %v2487
  %v2501 = vadd.f32 %v2446, %v2487
  %v2502 = vadd.f32 %v2447, %v2487
  %v2503 = vadd.f32 %v2448, %v2487
  %v2504 = vadd.f32 %v2449, %v2487
  %v2505 = vadd.f32 %v2450, %v2487
  %v2506 = vadd.f32 %v2451, %v2487
  %v2507 = vadd.f32 %v2452, %v2487
  %v2508 = vadd.f32 %v2453, %v2487
  %v2509 = vadd.f32 %v2454, %v2487
  %v2510 = vadd.f32 %v2455, %v2487
  %v2511 = vadd.f32 %v2456, %v2487
  %v2512 = vadd.f32 %v2457, %v2487
  %v2513 = vadd.f32 %v2458, %v2487
  %v2514 = vadd.f32 %v2459, %v2487
  %v2515 = vadd.f32 %v2460, %v2487
  %v2516 = vadd.f32 %v2461, %v2487
  %v2517 = vadd.f32 %v2462, %v2487
  %v2518 = vadd.f32 %v2463, %v2487
  %v2519 = vadd.f32 %v2464, %v2487
  %v2520 = vadd.f32 %v2465, %v2487
  %v2521 = vadd.f32 %v2466, %v2487
  %v2522 = vadd.f32 %v2467, %v2487
  %v2523 = vadd.f32 %v2468, %v2487
  %v2524 = vadd.f32 %v2469, %v2487
  %v2525 = vadd.f32 %v2470, %v2487
  %v2526 = vadd.f32 %v2471, %v2487
  %v2527 = vadd.f32 %v2472, %v2487
  %v2528 = vadd.f32 %v2473, %v2487
  %v2529 = vadd.f32 %v2474, %v2487
  %v2530 = vadd.f32 %v2475, %v2487
  %v2531 = vadd.f32 %v2476, %v2487
  %v2532 = vadd.f32 %v2477, %v2487
  %v2533 = vadd.f32 %v2478, %v2487
  %v2534 = vadd.f32 %v2479, %v2487
  %v2535 = vadd.f32 %v2480, %v2487
  %v2536 = vadd.f32 %v2481, %v2487
  %v2537 = vadd.f32 %v2482, %v2487
  %v2538 = vld [vmem:[%s0] sm:$0xf]
  %v2539 = vld [vmem:[%s0 + $0x4] sm:$0xf]
  %v2540 = vld [vmem:[%s0 + $0x8] sm:$0xf]
  %v2541 = vld [vmem:[%s0 + $0xc] sm:$0xf]
  %v2542 = vld [vmem:[%s0 + $0x10] sm:$0xf]
  %v2543 = vld [vmem:[%s0 + $0x14] sm:$0xf]
  %v2544 = vld [vmem:[%s0 + $0x18] sm:$0xf]
  %v2545 = vld [vmem:[%s0 + $0x1c] sm:$0xf]
  %v2546 = vld [vmem:[%s0 + $0x20] sm:$0xf]
  %v2547 = vld [vmem:[%s0 + $0x24] sm:$0xf]
  %v2548 = vld [vmem:[%s0 + $0x28] sm:$0xf]
  %v2549 = vld [vmem:[%s0 + $0x2c] sm:$0xf]
  %v2550 = vld [vmem:[%s0 + $0x30] sm:$0xf]
  %v2551 = vld [vmem:[%s0 + $0x34] sm:$0xf]
  %v2552 = vld [vmem:[%s0 + $0x38] sm:$0xf]
  %v2553 = vld [vmem:[%s0 + $0x3c] sm:$0xf]
  %v2554 = vld [vmem:[%s0 + $0x40] sm:$0xf]
  %v2555 = vld [vmem:[%s0 + $0x44] sm:$0xf]
  %v2556 = vld [vmem:[%s0 + $0x48] sm:$0xf]
  %v2557 = vld [vmem:[%s0 + $0x4c] sm:$0xf]
  %v2558 = vld [vmem:[%s0 + $0x50] sm:$0xf]
  %v2559 = vld [vmem:[%s0 + $0x54] sm:$0xf]
  %v2560 = vld [vmem:[%s0 + $0x58] sm:$0xf]
  %v2561 = vld [vmem:[%s0 + $0x5c] sm:$0xf]
  %v2562 = vld [vmem:[%s0 + $0x60] sm:$0xf]
  %v2563 = vld [vmem:[%s0 + $0x64] sm:$0xf]
  %v2564 = vld [vmem:[%s0 + $0x68] sm:$0xf]
  %v2565 = vld [vmem:[%s0 + $0x6c] sm:$0xf]
  %v2566 = vld [vmem:[%s0 + $0x70] sm:$0xf]
  %v2567 = vld [vmem:[%s0 + $0x74] sm:$0xf]
  %v2568 = vld [vmem:[%s0 + $0x78] sm:$0xf]
  %v2569 = vld [vmem:[%s0 + $0x7c] sm:$0xf]
  %v2570 = vld [vmem:[%s0 + $0x80] sm:$0xf]
  %v2571 = vld [vmem:[%s0 + $0x84] sm:$0xf]
  %v2572 = vld [vmem:[%s0 + $0x88] sm:$0xf]
  %v2573 = vld [vmem:[%s0 + $0x8c] sm:$0xf]
  %v2574 = vld [vmem:[%s0 + $0x90] sm:$0xf]
  %v2575 = vld [vmem:[%s0 + $0x94] sm:$0xf]
  %v2576 = vld [vmem:[%s0 + $0x98] sm:$0xf]
  %v2577 = vld [vmem:[%s0 + $0x9c] sm:$0xf]
  %v2578 = vld [vmem:[%s0 + $0xa0] sm:$0xf]
  %v2579 = vld [vmem:[%s0 + $0xa4] sm:$0xf]
  %v2580 = vld [vmem:[%s0 + $0xa8] sm:$0xf]
  %v2581 = vld [vmem:[%s0 + $0xac] sm:$0xf]
  %v2582 = vld [vmem:[%s0 + $0xb0] sm:$0xf]
  %v2583 = vld [vmem:[%s0 + $0xb4] sm:$0xf]
  %v2584 = vld [vmem:[%s0 + $0xb8] sm:$0xf]
  %v2585 = vld [vmem:[%s0 + $0xbc] sm:$0xf]
  %v2586 = vld [vmem:[%s0 + $0xc0] sm:$0xf]
  %v2587 = vunpack.c.l.bf16 %v2538
  %v2588 = vunpack.c.l.bf16 %v2539
  %v2589 = vunpack.c.l.bf16 %v2540
  %v2590 = vunpack.c.l.bf16 %v2541
  %v2591 = vunpack.c.l.bf16 %v2542
  %v2592 = vunpack.c.l.bf16 %v2543
  %v2593 = vunpack.c.l.bf16 %v2544
  %v2594 = vunpack.c.l.bf16 %v2545
  %v2595 = vunpack.c.l.bf16 %v2546
  %v2596 = vunpack.c.l.bf16 %v2547
  %v2597 = vunpack.c.l.bf16 %v2548
  %v2598 = vunpack.c.l.bf16 %v2549
  %v2599 = vunpack.c.l.bf16 %v2550
  %v2600 = vunpack.c.l.bf16 %v2551
  %v2601 = vunpack.c.l.bf16 %v2552
  %v2602 = vunpack.c.l.bf16 %v2553
  %v2603 = vunpack.c.l.bf16 %v2554
  %v2604 = vunpack.c.l.bf16 %v2555
  %v2605 = vunpack.c.l.bf16 %v2556
  %v2606 = vunpack.c.l.bf16 %v2557
  %v2607 = vunpack.c.l.bf16 %v2558
  %v2608 = vunpack.c.l.bf16 %v2559
  %v2609 = vunpack.c.l.bf16 %v2560
  %v2610 = vunpack.c.l.bf16 %v2561
  %v2611 = vunpack.c.l.bf16 %v2562
  %v2612 = vunpack.c.l.bf16 %v2563
  %v2613 = vunpack.c.l.bf16 %v2564
  %v2614 = vunpack.c.l.bf16 %v2565
  %v2615 = vunpack.c.l.bf16 %v2566
  %v2616 = vunpack.c.l.bf16 %v2567
  %v2617 = vunpack.c.l.bf16 %v2568
  %v2618 = vunpack.c.l.bf16 %v2569
  %v2619 = vunpack.c.l.bf16 %v2570
  %v2620 = vunpack.c.l.bf16 %v2571
  %v2621 = vunpack.c.l.bf16 %v2572
  %v2622 = vunpack.c.l.bf16 %v2573
  %v2623 = vunpack.c.l.bf16 %v2574
  %v2624 = vunpack.c.l.bf16 %v2575
  %v2625 = vunpack.c.l.bf16 %v2576
  %v2626 = vunpack.c.l.bf16 %v2577
  %v2627 = vunpack.c.l.bf16 %v2578
  %v2628 = vunpack.c.l.bf16 %v2579
  %v2629 = vunpack.c.l.bf16 %v2580
  %v2630 = vunpack.c.l.bf16 %v2581
  %v2631 = vunpack.c.l.bf16 %v2582
  %v2632 = vunpack.c.l.bf16 %v2583
  %v2633 = vunpack.c.l.bf16 %v2584
  %v2634 = vunpack.c.l.bf16 %v2585
  %v2635 = vunpack.c.l.bf16 %v2586
  %v2636 = vadd.f32 %v2587, %v2489
  %v2637 = vadd.f32 %v2588, %v2490
  %v2638 = vadd.f32 %v2589, %v2491
  %v2639 = vadd.f32 %v2590, %v2492
  %v2640 = vadd.f32 %v2591, %v2493
  %v2641 = vadd.f32 %v2592, %v2494
  %v2642 = vadd.f32 %v2593, %v2495
  %v2643 = vadd.f32 %v2594, %v2496
  %v2644 = vadd.f32 %v2595, %v2497
  %v2645 = vadd.f32 %v2596, %v2498
  %v2646 = vadd.f32 %v2597, %v2499
  %v2647 = vadd.f32 %v2598, %v2500
  %v2648 = vadd.f32 %v2599, %v2501
  %v2649 = vadd.f32 %v2600, %v2502
  %v2650 = vadd.f32 %v2601, %v2503
  %v2651 = vadd.f32 %v2602, %v2504
  %v2652 = vadd.f32 %v2603, %v2505
  %v2653 = vadd.f32 %v2604, %v2506
  %v2654 = vadd.f32 %v2605, %v2507
  %v2655 = vadd.f32 %v2606, %v2508
  %v2656 = vadd.f32 %v2607, %v2509
  %v2657 = vadd.f32 %v2608, %v2510
  %v2658 = vadd.f32 %v2609, %v2511
  %v2659 = vadd.f32 %v2610, %v2512
  %v2660 = vadd.f32 %v2611, %v2513
  %v2661 = vadd.f32 %v2612, %v2514
  %v2662 = vadd.f32 %v2613, %v2515
  %v2663 = vadd.f32 %v2614, %v2516
  %v2664 = vadd.f32 %v2615, %v2517
  %v2665 = vadd.f32 %v2616, %v2518
  %v2666 = vadd.f32 %v2617, %v2519
  %v2667 = vadd.f32 %v2618, %v2520
  %v2668 = vadd.f32 %v2619, %v2521
  %v2669 = vadd.f32 %v2620, %v2522
  %v2670 = vadd.f32 %v2621, %v2523
  %v2671 = vadd.f32 %v2622, %v2524
  %v2672 = vadd.f32 %v2623, %v2525
  %v2673 = vadd.f32 %v2624, %v2526
  %v2674 = vadd.f32 %v2625, %v2527
  %v2675 = vadd.f32 %v2626, %v2528
  %v2676 = vadd.f32 %v2627, %v2529
  %v2677 = vadd.f32 %v2628, %v2530
  %v2678 = vadd.f32 %v2629, %v2531
  %v2679 = vadd.f32 %v2630, %v2532
  %v2680 = vadd.f32 %v2631, %v2533
  %v2681 = vadd.f32 %v2632, %v2534
  %v2682 = vadd.f32 %v2633, %v2535
  %v2683 = vadd.f32 %v2634, %v2536
  %v2684 = vadd.f32 %v2635, %v2537
  %v2685 = vmax.f32 %v2636, 0.0
  %v2686 = vmax.f32 %v2637, 0.0
  %v2687 = vmax.f32 %v2638, 0.0
  %v2688 = vmax.f32 %v2639, 0.0
  %v2689 = vmax.f32 %v2640, 0.0
  %v2690 = vmax.f32 %v2641, 0.0
  %v2691 = vmax.f32 %v2642, 0.0
  %v2692 = vmax.f32 %v2643, 0.0
  %v2693 = vmax.f32 %v2644, 0.0
  %v2694 = vmax.f32 %v2645, 0.0
  %v2695 = vmax.f32 %v2646, 0.0
  %v2696 = vmax.f32 %v2647, 0.0
  %v2697 = vmax.f32 %v2648, 0.0
  %v2698 = vmax.f32 %v2649, 0.0
  %v2699 = vmax.f32 %v2650, 0.0
  %v2700 = vmax.f32 %v2651, 0.0
  %v2701 = vmax.f32 %v2652, 0.0
  %v2702 = vmax.f32 %v2653, 0.0
  %v2703 = vmax.f32 %v2654, 0.0
  %v2704 = vmax.f32 %v2655, 0.0
  %v2705 = vmax.f32 %v2656, 0.0
  %v2706 = vmax.f32 %v2657, 0.0
  %v2707 = vmax.f32 %v2658, 0.0
  %v2708 = vmax.f32 %v2659, 0.0
  %v2709 = vmax.f32 %v2660, 0.0
  %v2710 = vmax.f32 %v2661, 0.0
  %v2711 = vmax.f32 %v2662, 0.0
  %v2712 = vmax.f32 %v2663, 0.0
  %v2713 = vmax.f32 %v2664, 0.0
  %v2714 = vmax.f32 %v2665, 0.0
  %v2715 = vmax.f32 %v2666, 0.0
  %v2716 = vmax.f32 %v2667, 0.0
  %v2717 = vmax.f32 %v2668, 0.0
  %v2718 = vmax.f32 %v2669, 0.0
  %v2719 = vmax.f32 %v2670, 0.0
  %v2720 = vmax.f32 %v2671, 0.0
  %v2721 = vmax.f32 %v2672, 0.0
  %v2722 = vmax.f32 %v2673, 0.0
  %v2723 = vmax.f32 %v2674, 0.0
  %v2724 = vmax.f32 %v2675, 0.0
  %v2725 = vmax.f32 %v2676, 0.0
  %v2726 = vmax.f32 %v2677, 0.0
  %v2727 = vmax.f32 %v2678, 0.0
  %v2728 = vmax.f32 %v2679, 0.0
  %v2729 = vmax.f32 %v2680, 0.0
  %v2730 = vmax.f32 %v2681, 0.0
  %v2731 = vmax.f32 %v2682, 0.0
  %v2732 = vmax.f32 %v2683, 0.0
  %v2733 = vmax.f32 %v2684, 0.0
  %v2734 = vpack.c.bf16 %v2686, %v2685
  %v2735 = vpack.c.bf16 %v2688, %v2687
  %v2736 = vpack.c.bf16 %v2690, %v2689
  %v2737 = vpack.c.bf16 %v2692, %v2691
  %v2738 = vpack.c.bf16 %v2694, %v2693
  %v2739 = vpack.c.bf16 %v2696, %v2695
  %v2740 = vpack.c.bf16 %v2698, %v2697
  %v2741 = vpack.c.bf16 %v2700, %v2699
  %v2742 = vpack.c.bf16 %v2702, %v2701
  %v2743 = vpack.c.bf16 %v2704, %v2703
  %v2744 = vpack.c.bf16 %v2706, %v2705
  %v2745 = vpack.c.bf16 %v2708, %v2707
  %v2746 = vpack.c.bf16 %v2710, %v2709
  %v2747 = vpack.c.bf16 %v2712, %v2711
  %v2748 = vpack.c.bf16 %v2714, %v2713
  %v2749 = vpack.c.bf16 %v2716, %v2715
  %v2750 = vpack.c.bf16 %v2718, %v2717
  %v2751 = vpack.c.bf16 %v2720, %v2719
  %v2752 = vpack.c.bf16 %v2722, %v2721
  %v2753 = vpack.c.bf16 %v2724, %v2723
  %v2754 = vpack.c.bf16 %v2726, %v2725
  %v2755 = vpack.c.bf16 %v2728, %v2727
  %v2756 = vpack.c.bf16 %v2730, %v2729
  %v2757 = vpack.c.bf16 %v2732, %v2731
  %v2758 = vpack.c.bf16 %v2733, %v2733
  %v2784 = vunpack.c.l.b16 %v2734
  %v2785 = vunpack.c.h.b16 %v2734
  %v2786 = vunpack.c.l.b16 %v2735
  %v2787 = vunpack.c.h.b16 %v2735
  %v2788 = vunpack.c.l.b16 %v2736
  %v2789 = vunpack.c.h.b16 %v2736
  %v2790 = vunpack.c.l.b16 %v2737
  %v2791 = vunpack.c.h.b16 %v2737
  %v2792 = vunpack.c.l.b16 %v2738
  %v2793 = vunpack.c.h.b16 %v2738
  %v2794 = vunpack.c.l.b16 %v2739
  %v2795 = vunpack.c.h.b16 %v2739
  %v2796 = vunpack.c.l.b16 %v2740
  %v2797 = vunpack.c.h.b16 %v2740
  %v2798 = vunpack.c.l.b16 %v2741
  %v2799 = vunpack.c.h.b16 %v2741
  %v2800 = vunpack.c.l.b16 %v2742
  %v2801 = vunpack.c.h.b16 %v2742
  %v2802 = vunpack.c.l.b16 %v2743
  %v2803 = vunpack.c.h.b16 %v2743
  %v2804 = vunpack.c.l.b16 %v2744
  %v2805 = vunpack.c.h.b16 %v2744
  %v2806 = vunpack.c.l.b16 %v2745
  %v2807 = vunpack.c.h.b16 %v2745
  %v2808 = vunpack.c.l.b16 %v2746
  %v2809 = vunpack.c.h.b16 %v2746
  %v2810 = vunpack.c.l.b16 %v2747
  %v2811 = vunpack.c.h.b16 %v2747
  %v2812 = vunpack.c.l.b16 %v2748
  %v2813 = vunpack.c.h.b16 %v2748
  %v2814 = vunpack.c.l.b16 %v2749
  %v2815 = vunpack.c.h.b16 %v2749
  %v2816 = vunpack.c.l.b16 %v2750
  %v2817 = vunpack.c.h.b16 %v2750
  %v2818 = vunpack.c.l.b16 %v2751
  %v2819 = vunpack.c.h.b16 %v2751
  %v2820 = vunpack.c.l.b16 %v2752
  %v2821 = vunpack.c.h.b16 %v2752
  %v2822 = vunpack.c.l.b16 %v2753
  %v2823 = vunpack.c.h.b16 %v2753
  %v2824 = vunpack.c.l.b16 %v2754
  %v2825 = vunpack.c.h.b16 %v2754
  %v2826 = vunpack.c.l.b16 %v2755
  %v2827 = vunpack.c.h.b16 %v2755
  %v2828 = vunpack.c.l.b16 %v2756
  %v2829 = vunpack.c.h.b16 %v2756
  %v2830 = vunpack.c.l.b16 %v2757
  %v2831 = vunpack.c.h.b16 %v2757
  %v2832 = vunpack.c.l.b16 %v2758
  %v2833 = vpack.c.b16 %v2784, %v2784
  %v2834 = vpack.c.b16 %v2785, %v2785
  %v2835 = vpack.c.b16 %v2786, %v2786
  %v2836 = vpack.c.b16 %v2787, %v2787
  %v2837 = vpack.c.b16 %v2788, %v2788
  %v2838 = vpack.c.b16 %v2789, %v2789
  %v2839 = vpack.c.b16 %v2790, %v2790
  %v2840 = vpack.c.b16 %v2791, %v2791
  %v2841 = vpack.c.b16 %v2792, %v2792
  %v2842 = vpack.c.b16 %v2793, %v2793
  %v2843 = vpack.c.b16 %v2794, %v2794
  %v2844 = vpack.c.b16 %v2795, %v2795
  %v2845 = vpack.c.b16 %v2796, %v2796
  %v2846 = vpack.c.b16 %v2797, %v2797
  %v2847 = vpack.c.b16 %v2798, %v2798
  %v2848 = vpack.c.b16 %v2799, %v2799
  %v2849 = vpack.c.b16 %v2800, %v2800
  %v2850 = vpack.c.b16 %v2801, %v2801
  %v2851 = vpack.c.b16 %v2802, %v2802
  %v2852 = vpack.c.b16 %v2803, %v2803
  %v2853 = vpack.c.b16 %v2804, %v2804
  %v2854 = vpack.c.b16 %v2805, %v2805
  %v2855 = vpack.c.b16 %v2806, %v2806
  %v2856 = vpack.c.b16 %v2807, %v2807
  %v2857 = vpack.c.b16 %v2808, %v2808
  %v2858 = vpack.c.b16 %v2809, %v2809
  %v2859 = vpack.c.b16 %v2810, %v2810
  %v2860 = vpack.c.b16 %v2811, %v2811
  %v2861 = vpack.c.b16 %v2812, %v2812
  %v2862 = vpack.c.b16 %v2813, %v2813
  %v2863 = vpack.c.b16 %v2814, %v2814
  %v2864 = vpack.c.b16 %v2815, %v2815
  %v2865 = vpack.c.b16 %v2816, %v2816
  %v2866 = vpack.c.b16 %v2817, %v2817
  %v2867 = vpack.c.b16 %v2818, %v2818
  %v2868 = vpack.c.b16 %v2819, %v2819
  %v2869 = vpack.c.b16 %v2820, %v2820
  %v2870 = vpack.c.b16 %v2821, %v2821
  %v2871 = vpack.c.b16 %v2822, %v2822
  %v2872 = vpack.c.b16 %v2823, %v2823
  %v2873 = vpack.c.b16 %v2824, %v2824
  %v2874 = vpack.c.b16 %v2825, %v2825
  %v2875 = vpack.c.b16 %v2826, %v2826
  %v2876 = vpack.c.b16 %v2827, %v2827
  %v2877 = vpack.c.b16 %v2828, %v2828
  %v2878 = vpack.c.b16 %v2829, %v2829
  %v2879 = vpack.c.b16 %v2830, %v2830
  %v2880 = vpack.c.b16 %v2831, %v2831
  %v2881 = vpack.c.b16 %v2832, %v2832
  %vm2931 = vcmask 257024
  %2932 = vst.msk [vmem:[%s10] sm:$0xf] %vm2931, %v2833
  %2933 = vst.msk [vmem:[%s10 + $0x4] sm:$0xf] %vm2931, %v2834
  %2934 = vst.msk [vmem:[%s10 + $0x8] sm:$0xf] %vm2931, %v2835
  %2935 = vst.msk [vmem:[%s10 + $0xc] sm:$0xf] %vm2931, %v2836
  %2936 = vst.msk [vmem:[%s10 + $0x10] sm:$0xf] %vm2931, %v2837
  %2937 = vst.msk [vmem:[%s10 + $0x14] sm:$0xf] %vm2931, %v2838
  %2938 = vst.msk [vmem:[%s10 + $0x18] sm:$0xf] %vm2931, %v2839
  %2939 = vst.msk [vmem:[%s10 + $0x1c] sm:$0xf] %vm2931, %v2840
  %2940 = vst.msk [vmem:[%s10 + $0x20] sm:$0xf] %vm2931, %v2841
  %2941 = vst.msk [vmem:[%s10 + $0x24] sm:$0xf] %vm2931, %v2842
  %2942 = vst.msk [vmem:[%s10 + $0x28] sm:$0xf] %vm2931, %v2843
  %2943 = vst.msk [vmem:[%s10 + $0x2c] sm:$0xf] %vm2931, %v2844
  %2944 = vst.msk [vmem:[%s10 + $0x30] sm:$0xf] %vm2931, %v2845
  %2945 = vst.msk [vmem:[%s10 + $0x34] sm:$0xf] %vm2931, %v2846
  %2946 = vst.msk [vmem:[%s10 + $0x38] sm:$0xf] %vm2931, %v2847
  %2947 = vst.msk [vmem:[%s10 + $0x3c] sm:$0xf] %vm2931, %v2848
  %2948 = vst.msk [vmem:[%s10 + $0x40] sm:$0xf] %vm2931, %v2849
  %2949 = vst.msk [vmem:[%s10 + $0x44] sm:$0xf] %vm2931, %v2850
  %2950 = vst.msk [vmem:[%s10 + $0x48] sm:$0xf] %vm2931, %v2851
  %2951 = vst.msk [vmem:[%s10 + $0x4c] sm:$0xf] %vm2931, %v2852
  %2952 = vst.msk [vmem:[%s10 + $0x50] sm:$0xf] %vm2931, %v2853
  %2953 = vst.msk [vmem:[%s10 + $0x54] sm:$0xf] %vm2931, %v2854
  %2954 = vst.msk [vmem:[%s10 + $0x58] sm:$0xf] %vm2931, %v2855
  %2955 = vst.msk [vmem:[%s10 + $0x5c] sm:$0xf] %vm2931, %v2856
  %2956 = vst.msk [vmem:[%s10 + $0x60] sm:$0xf] %vm2931, %v2857
  %2957 = vst.msk [vmem:[%s10 + $0x64] sm:$0xf] %vm2931, %v2858
  %2958 = vst.msk [vmem:[%s10 + $0x68] sm:$0xf] %vm2931, %v2859
  %2959 = vst.msk [vmem:[%s10 + $0x6c] sm:$0xf] %vm2931, %v2860
  %2960 = vst.msk [vmem:[%s10 + $0x70] sm:$0xf] %vm2931, %v2861
  %2961 = vst.msk [vmem:[%s10 + $0x74] sm:$0xf] %vm2931, %v2862
  %2962 = vst.msk [vmem:[%s10 + $0x78] sm:$0xf] %vm2931, %v2863
  %2963 = vst.msk [vmem:[%s10 + $0x7c] sm:$0xf] %vm2931, %v2864
  %2964 = vst.msk [vmem:[%s10 + $0x80] sm:$0xf] %vm2931, %v2865
  %2965 = vst.msk [vmem:[%s10 + $0x84] sm:$0xf] %vm2931, %v2866
  %2966 = vst.msk [vmem:[%s10 + $0x88] sm:$0xf] %vm2931, %v2867
  %2967 = vst.msk [vmem:[%s10 + $0x8c] sm:$0xf] %vm2931, %v2868
  %2968 = vst.msk [vmem:[%s10 + $0x90] sm:$0xf] %vm2931, %v2869
  %2969 = vst.msk [vmem:[%s10 + $0x94] sm:$0xf] %vm2931, %v2870
  %2970 = vst.msk [vmem:[%s10 + $0x98] sm:$0xf] %vm2931, %v2871
  %2971 = vst.msk [vmem:[%s10 + $0x9c] sm:$0xf] %vm2931, %v2872
  %2972 = vst.msk [vmem:[%s10 + $0xa0] sm:$0xf] %vm2931, %v2873
  %2973 = vst.msk [vmem:[%s10 + $0xa4] sm:$0xf] %vm2931, %v2874
  %2974 = vst.msk [vmem:[%s10 + $0xa8] sm:$0xf] %vm2931, %v2875
  %2975 = vst.msk [vmem:[%s10 + $0xac] sm:$0xf] %vm2931, %v2876
  %2976 = vst.msk [vmem:[%s10 + $0xb0] sm:$0xf] %vm2931, %v2877
  %2977 = vst.msk [vmem:[%s10 + $0xb4] sm:$0xf] %vm2931, %v2878
  %2978 = vst.msk [vmem:[%s10 + $0xb8] sm:$0xf] %vm2931, %v2879
  %2979 = vst.msk [vmem:[%s10 + $0xbc] sm:$0xf] %vm2931, %v2880
  %2980 = vst.msk [vmem:[%s10 + $0xc0] sm:$0xf] %vm2931, %v2881
  // Predicated region
  $region42: #{discriminator28_forward.9} parent=0 // pred_check
    _
  $region43: #{discriminator28_forward.9} parent=0 // pred_check_branch
    %2982 = sbr.rel (0) target = $region45
  $region44: #{discriminator28_forward.9} parent=0 // pred_region
    _
  $region45: #{discriminator28_forward.9} parent=0 // pred_fallthru
    _
  // Predicated region
  $region46: #{discriminator28_forward.9} parent=0 // pred_check
    _
  $region47: #{discriminator28_forward.9} parent=0 // pred_check_branch
    %2984 = sbr.rel (0) target = $region49
  $region48: #{discriminator28_forward.9} parent=0 // pred_region
    _
  $region49: #{discriminator28_forward.9} parent=0 // pred_fallthru
    _

// kernel: discriminator28_forward.10
$region0: #{discriminator28_forward.10}
  #allocation0 [shape = 'u32[]', space=smem, size = 0x4, offset = 0x4, fixed_abs, tag = 'smem constant byte address 0x4 - core index']
  #allocation1 [shape = 'u32[144,128]{1,0:T(1,128)}', space=vmem, size = 0x12000, scoped, tag = 'internal scratch']
  %s0 = inlined_call_operand.vmem [shape: bf16[98,512], index: 0, kind: input, shape index: {}]
  %s1 = inlined_call_operand.vmem [shape: bf16[512,32], index: 1, kind: input, shape index: {}]
  %s2 = inlined_call_operand.vmem [shape: f32[1,32], index: 2, kind: input, shape index: {}]
  %s3 = inlined_call_operand.vmem [shape: f32[1,32], index: 3, kind: input, shape index: {}]
  %s4 = inlined_call_operand.vmem [shape: f32[1,32], index: 4, kind: input, shape index: {}]
  %s5 = inlined_call_operand.vmem [shape: bf16[98,32], index: 5, kind: output, shape index: {}]
  %s6 = sld [smem:[#allocation0]]
  $region30: #{discriminator28_forward.10} parent=0
    _
  %s8 = ssub.s32 1, %s6
  %s9 = scalar_select 0, %s8, %s6
  // Predicated region
  $region2: #{discriminator28_forward.10} parent=0 // pred_check
    _
  $region3: #{discriminator28_forward.10} parent=0 // pred_check_branch
    %11 = sbr.rel (0) target = $region5
  $region4: #{discriminator28_forward.10} parent=0 // pred_region
    _
  $region5: #{discriminator28_forward.10} parent=0 // pred_fallthru
    _
  // Predicated region
  $region6: #{discriminator28_forward.10} parent=0 // pred_check
    _
  $region7: #{discriminator28_forward.10} parent=0 // pred_check_branch
    %13 = sbr.rel (0) target = $region9
  $region8: #{discriminator28_forward.10} parent=0 // pred_region
    _
  $region9: #{discriminator28_forward.10} parent=0 // pred_fallthru
    _
  // Predicated region
  $region10: #{discriminator28_forward.10} parent=0 // pred_check
    _
  $region11: #{discriminator28_forward.10} parent=0 // pred_check_branch
    %15 = sbr.rel (0) target = $region13
  $region12: #{discriminator28_forward.10} parent=0 // pred_region
    _
  $region13: #{discriminator28_forward.10} parent=0 // pred_fallthru
    _
  // Predicated region
  $region14: #{discriminator28_forward.10} parent=0 // pred_check
    _
  $region15: #{discriminator28_forward.10} parent=0 // pred_check_branch
    %17 = sbr.rel (0) target = $region17
  $region16: #{discriminator28_forward.10} parent=0 // pred_region
    _
  $region17: #{discriminator28_forward.10} parent=0 // pred_fallthru
    _
  // Predicated region
  $region18: #{discriminator28_forward.10} parent=0 // pred_check
    _
  $region19: #{discriminator28_forward.10} parent=0 // pred_check_branch
    %19 = sbr.rel (0) target = $region21
  $region20: #{discriminator28_forward.10} parent=0 // pred_region
    _
  $region21: #{discriminator28_forward.10} parent=0 // pred_fallthru
    _
  %v21 = vld [vmem:[%s0] sm:$0xff]
  %v22 = vld [vmem:[%s0 + $0x8] sm:$0xff]
  %v23 = vld [vmem:[%s0 + $0x10] sm:$0xff]
  %v24 = vld [vmem:[%s0 + $0x18] sm:$0xff]
  %v25 = vld [vmem:[%s0 + $0x20] sm:$0xff]
  %v26 = vld [vmem:[%s0 + $0x28] sm:$0xff]
  %v27 = vld [vmem:[%s0 + $0x30] sm:$0xff]
  %v28 = vld [vmem:[%s0 + $0x38] sm:$0xff]
  %v29 = vld [vmem:[%s0 + $0x40] sm:$0xff]
  %v30 = vld [vmem:[%s0 + $0x48] sm:$0xff]
  %v31 = vld [vmem:[%s0 + $0x50] sm:$0xff]
  %v32 = vld [vmem:[%s0 + $0x58] sm:$0xff]
  %v33 = vld [vmem:[%s0 + $0x60] sm:$0xff]
  %v34 = vld [vmem:[%s0 + $0x68] sm:$0xff]
  %v35 = vld [vmem:[%s0 + $0x70] sm:$0xff]
  %v36 = vld [vmem:[%s0 + $0x78] sm:$0xff]
  %v37 = vld [vmem:[%s0 + $0x80] sm:$0xff]
  %v38 = vld [vmem:[%s0 + $0x88] sm:$0xff]
  %v39 = vld [vmem:[%s0 + $0x90] sm:$0xff]
  %v40 = vld [vmem:[%s0 + $0x98] sm:$0xff]
  %v41 = vld [vmem:[%s0 + $0xa0] sm:$0xff]
  %v42 = vld [vmem:[%s0 + $0xa8] sm:$0xff]
  %v43 = vld [vmem:[%s0 + $0xb0] sm:$0xff]
  %v44 = vld [vmem:[%s0 + $0xb8] sm:$0xff]
  %v45 = vld [vmem:[%s0 + $0xc0] sm:$0x11]
  %v46 = vld [vmem:[%s0 + $0xc8] sm:$0x11]
  %v47 = vld [vmem:[%s1] sm:$0xf]
  %v48 = vld [vmem:[%s1 + $0x4] sm:$0xf]
  %v49 = vld [vmem:[%s1 + $0x8] sm:$0xf]
  %v50 = vld [vmem:[%s1 + $0xc] sm:$0xf]
  %v51 = vld [vmem:[%s1 + $0x10] sm:$0xf]
  %v52 = vld [vmem:[%s1 + $0x14] sm:$0xf]
  %v53 = vld [vmem:[%s1 + $0x18] sm:$0xf]
  %v54 = vld [vmem:[%s1 + $0x1c] sm:$0xf]
  %v55 = vld [vmem:[%s1 + $0x20] sm:$0xf]
  %v56 = vld [vmem:[%s1 + $0x24] sm:$0xf]
  %v57 = vld [vmem:[%s1 + $0x28] sm:$0xf]
  %v58 = vld [vmem:[%s1 + $0x2c] sm:$0xf]
  %v59 = vld [vmem:[%s1 + $0x30] sm:$0xf]
  %v60 = vld [vmem:[%s1 + $0x34] sm:$0xf]
  %v61 = vld [vmem:[%s1 + $0x38] sm:$0xf]
  %v62 = vld [vmem:[%s1 + $0x3c] sm:$0xf]
  %v63 = vld [vmem:[%s1 + $0x40] sm:$0xf]
  %v64 = vld [vmem:[%s1 + $0x44] sm:$0xf]
  %v65 = vld [vmem:[%s1 + $0x48] sm:$0xf]
  %v66 = vld [vmem:[%s1 + $0x4c] sm:$0xf]
  %v67 = vld [vmem:[%s1 + $0x50] sm:$0xf]
  %v68 = vld [vmem:[%s1 + $0x54] sm:$0xf]
  %v69 = vld [vmem:[%s1 + $0x58] sm:$0xf]
  %v70 = vld [vmem:[%s1 + $0x5c] sm:$0xf]
  %v71 = vld [vmem:[%s1 + $0x60] sm:$0xf]
  %v72 = vld [vmem:[%s1 + $0x64] sm:$0xf]
  %v73 = vld [vmem:[%s1 + $0x68] sm:$0xf]
  %v74 = vld [vmem:[%s1 + $0x6c] sm:$0xf]
  %v75 = vld [vmem:[%s1 + $0x70] sm:$0xf]
  %v76 = vld [vmem:[%s1 + $0x74] sm:$0xf]
  %v77 = vld [vmem:[%s1 + $0x78] sm:$0xf]
  %v78 = vld [vmem:[%s1 + $0x7c] sm:$0xf]
  %v79 = vld [vmem:[%s1 + $0x80] sm:$0xf]
  %v80 = vld [vmem:[%s1 + $0x84] sm:$0xf]
  %v81 = vld [vmem:[%s1 + $0x88] sm:$0xf]
  %v82 = vld [vmem:[%s1 + $0x8c] sm:$0xf]
  %v83 = vld [vmem:[%s1 + $0x90] sm:$0xf]
  %v84 = vld [vmem:[%s1 + $0x94] sm:$0xf]
  %v85 = vld [vmem:[%s1 + $0x98] sm:$0xf]
  %v86 = vld [vmem:[%s1 + $0x9c] sm:$0xf]
  %v87 = vld [vmem:[%s1 + $0xa0] sm:$0xf]
  %v88 = vld [vmem:[%s1 + $0xa4] sm:$0xf]
  %v89 = vld [vmem:[%s1 + $0xa8] sm:$0xf]
  %v90 = vld [vmem:[%s1 + $0xac] sm:$0xf]
  %v91 = vld [vmem:[%s1 + $0xb0] sm:$0xf]
  %v92 = vld [vmem:[%s1 + $0xb4] sm:$0xf]
  %v93 = vld [vmem:[%s1 + $0xb8] sm:$0xf]
  %v94 = vld [vmem:[%s1 + $0xbc] sm:$0xf]
  %v95 = vld [vmem:[%s1 + $0xc0] sm:$0xf]
  %v96 = vld [vmem:[%s1 + $0xc4] sm:$0xf]
  %v97 = vld [vmem:[%s1 + $0xc8] sm:$0xf]
  %v98 = vld [vmem:[%s1 + $0xcc] sm:$0xf]
  %v99 = vld [vmem:[%s1 + $0xd0] sm:$0xf]
  %v100 = vld [vmem:[%s1 + $0xd4] sm:$0xf]
  %v101 = vld [vmem:[%s1 + $0xd8] sm:$0xf]
  %v102 = vld [vmem:[%s1 + $0xdc] sm:$0xf]
  %v103 = vld [vmem:[%s1 + $0xe0] sm:$0xf]
  %v104 = vld [vmem:[%s1 + $0xe4] sm:$0xf]
  %v105 = vld [vmem:[%s1 + $0xe8] sm:$0xf]
  %v106 = vld [vmem:[%s1 + $0xec] sm:$0xf]
  %v107 = vld [vmem:[%s1 + $0xf0] sm:$0xf]
  %v108 = vld [vmem:[%s1 + $0xf4] sm:$0xf]
  %v109 = vld [vmem:[%s1 + $0xf8] sm:$0xf]
  %v110 = vld [vmem:[%s1 + $0xfc] sm:$0xf]
  %v111 = vld [vmem:[%s2] sm:$0x1]
  %v113 = vlaneseq
  %v114 = vshrl.u32 %v113, 7
  %v115 = vsub.s32 0, %v114
  %v116 = vrot.slane %v111, %v115
  %v144 = vunpack.c.l.b16 %v21
  %v145 = vunpack.c.h.b16 %v21
  %v146 = vunpack.c.l.b16 %v22
  %v147 = vunpack.c.h.b16 %v22
  %v148 = vunpack.c.l.b16 %v23
  %v149 = vunpack.c.h.b16 %v23
  %v150 = vunpack.c.l.b16 %v24
  %v151 = vunpack.c.h.b16 %v24
  %v152 = vunpack.c.l.b16 %v25
  %v153 = vunpack.c.h.b16 %v25
  %v154 = vunpack.c.l.b16 %v26
  %v155 = vunpack.c.h.b16 %v26
  %v156 = vunpack.c.l.b16 %v27
  %v157 = vunpack.c.h.b16 %v27
  %v158 = vunpack.c.l.b16 %v28
  %v159 = vunpack.c.h.b16 %v28
  %v160 = vunpack.c.l.b16 %v29
  %v161 = vunpack.c.h.b16 %v29
  %v162 = vunpack.c.l.b16 %v30
  %v163 = vunpack.c.h.b16 %v30
  %v164 = vunpack.c.l.b16 %v31
  %v165 = vunpack.c.h.b16 %v31
  %v166 = vunpack.c.l.b16 %v32
  %v167 = vunpack.c.h.b16 %v32
  %v168 = vunpack.c.l.b16 %v33
  %v169 = vunpack.c.h.b16 %v33
  %v170 = vunpack.c.l.b16 %v34
  %v171 = vunpack.c.h.b16 %v34
  %v172 = vunpack.c.l.b16 %v35
  %v173 = vunpack.c.h.b16 %v35
  %v174 = vunpack.c.l.b16 %v36
  %v175 = vunpack.c.h.b16 %v36
  %v176 = vunpack.c.l.b16 %v37
  %v177 = vunpack.c.h.b16 %v37
  %v178 = vunpack.c.l.b16 %v38
  %v179 = vunpack.c.h.b16 %v38
  %v180 = vunpack.c.l.b16 %v39
  %v181 = vunpack.c.h.b16 %v39
  %v182 = vunpack.c.l.b16 %v40
  %v183 = vunpack.c.h.b16 %v40
  %v184 = vunpack.c.l.b16 %v41
  %v185 = vunpack.c.h.b16 %v41
  %v186 = vunpack.c.l.b16 %v42
  %v187 = vunpack.c.h.b16 %v42
  %v188 = vunpack.c.l.b16 %v43
  %v189 = vunpack.c.h.b16 %v43
  %v190 = vunpack.c.l.b16 %v44
  %v191 = vunpack.c.h.b16 %v44
  %v192 = vunpack.c.l.b16 %v45
  %v193 = vunpack.c.h.b16 %v45
  %v194 = vunpack.c.l.b16 %v46
  %v195 = vunpack.c.h.b16 %v46
  %v196 = vpack.c.b16 %v148, %v144
  %v197 = vpack.c.b16 %v149, %v145
  %v198 = vpack.c.b16 %v150, %v146
  %v199 = vpack.c.b16 %v151, %v147
  %v200 = vpack.c.b16 %v156, %v152
  %v201 = vpack.c.b16 %v157, %v153
  %v202 = vpack.c.b16 %v158, %v154
  %v203 = vpack.c.b16 %v159, %v155
  %v204 = vpack.c.b16 %v164, %v160
  %v205 = vpack.c.b16 %v165, %v161
  %v206 = vpack.c.b16 %v166, %v162
  %v207 = vpack.c.b16 %v167, %v163
  %v208 = vpack.c.b16 %v172, %v168
  %v209 = vpack.c.b16 %v173, %v169
  %v210 = vpack.c.b16 %v174, %v170
  %v211 = vpack.c.b16 %v175, %v171
  %v212 = vpack.c.b16 %v180, %v176
  %v213 = vpack.c.b16 %v181, %v177
  %v214 = vpack.c.b16 %v182, %v178
  %v215 = vpack.c.b16 %v183, %v179
  %v216 = vpack.c.b16 %v188, %v184
  %v217 = vpack.c.b16 %v189, %v185
  %v218 = vpack.c.b16 %v190, %v186
  %v219 = vpack.c.b16 %v191, %v187
  %v220 = vpack.c.b16 %v192, %v192
  %v221 = vpack.c.b16 %v193, %v193
  %v222 = vpack.c.b16 %v194, %v194
  %v223 = vpack.c.b16 %v195, %v195
  %v316 = vunpack.c.l.b16 %v47
  %v317 = vunpack.c.l.b16 %v48
  %v318 = vunpack.c.l.b16 %v49
  %v319 = vunpack.c.l.b16 %v50
  %v320 = vunpack.c.l.b16 %v51
  %v321 = vunpack.c.l.b16 %v52
  %v322 = vunpack.c.l.b16 %v53
  %v323 = vunpack.c.l.b16 %v54
  %v324 = vunpack.c.l.b16 %v55
  %v325 = vunpack.c.l.b16 %v56
  %v326 = vunpack.c.l.b16 %v57
  %v327 = vunpack.c.l.b16 %v58
  %v328 = vunpack.c.l.b16 %v59
  %v329 = vunpack.c.l.b16 %v60
  %v330 = vunpack.c.l.b16 %v61
  %v331 = vunpack.c.l.b16 %v62
  %v332 = vunpack.c.l.b16 %v63
  %v333 = vunpack.c.l.b16 %v64
  %v334 = vunpack.c.l.b16 %v65
  %v335 = vunpack.c.l.b16 %v66
  %v336 = vunpack.c.l.b16 %v67
  %v337 = vunpack.c.l.b16 %v68
  %v338 = vunpack.c.l.b16 %v69
  %v339 = vunpack.c.l.b16 %v70
  %v340 = vunpack.c.l.b16 %v71
  %v341 = vunpack.c.l.b16 %v72
  %v342 = vunpack.c.l.b16 %v73
  %v343 = vunpack.c.l.b16 %v74
  %v344 = vunpack.c.l.b16 %v75
  %v345 = vunpack.c.l.b16 %v76
  %v346 = vunpack.c.l.b16 %v77
  %v347 = vunpack.c.l.b16 %v78
  %v348 = vunpack.c.l.b16 %v79
  %v349 = vunpack.c.l.b16 %v80
  %v350 = vunpack.c.l.b16 %v81
  %v351 = vunpack.c.l.b16 %v82
  %v352 = vunpack.c.l.b16 %v83
  %v353 = vunpack.c.l.b16 %v84
  %v354 = vunpack.c.l.b16 %v85
  %v355 = vunpack.c.l.b16 %v86
  %v356 = vunpack.c.l.b16 %v87
  %v357 = vunpack.c.l.b16 %v88
  %v358 = vunpack.c.l.b16 %v89
  %v359 = vunpack.c.l.b16 %v90
  %v360 = vunpack.c.l.b16 %v91
  %v361 = vunpack.c.l.b16 %v92
  %v362 = vunpack.c.l.b16 %v93
  %v363 = vunpack.c.l.b16 %v94
  %v364 = vunpack.c.l.b16 %v95
  %v365 = vunpack.c.l.b16 %v96
  %v366 = vunpack.c.l.b16 %v97
  %v367 = vunpack.c.l.b16 %v98
  %v368 = vunpack.c.l.b16 %v99
  %v369 = vunpack.c.l.b16 %v100
  %v370 = vunpack.c.l.b16 %v101
  %v371 = vunpack.c.l.b16 %v102
  %v372 = vunpack.c.l.b16 %v103
  %v373 = vunpack.c.l.b16 %v104
  %v374 = vunpack.c.l.b16 %v105
  %v375 = vunpack.c.l.b16 %v106
  %v376 = vunpack.c.l.b16 %v107
  %v377 = vunpack.c.l.b16 %v108
  %v378 = vunpack.c.l.b16 %v109
  %v379 = vunpack.c.l.b16 %v110
  %v380 = vpack.c.b16 %v317, %v316
  %v381 = vpack.c.b16 %v319, %v318
  %v382 = vpack.c.b16 %v321, %v320
  %v383 = vpack.c.b16 %v323, %v322
  %v384 = vpack.c.b16 %v325, %v324
  %v385 = vpack.c.b16 %v327, %v326
  %v386 = vpack.c.b16 %v329, %v328
  %v387 = vpack.c.b16 %v331, %v330
  %v388 = vpack.c.b16 %v333, %v332
  %v389 = vpack.c.b16 %v335, %v334
  %v390 = vpack.c.b16 %v337, %v336
  %v391 = vpack.c.b16 %v339, %v338
  %v392 = vpack.c.b16 %v341, %v340
  %v393 = vpack.c.b16 %v343, %v342
  %v394 = vpack.c.b16 %v345, %v344
  %v395 = vpack.c.b16 %v347, %v346
  %v396 = vpack.c.b16 %v349, %v348
  %v397 = vpack.c.b16 %v351, %v350
  %v398 = vpack.c.b16 %v353, %v352
  %v399 = vpack.c.b16 %v355, %v354
  %v400 = vpack.c.b16 %v357, %v356
  %v401 = vpack.c.b16 %v359, %v358
  %v402 = vpack.c.b16 %v361, %v360
  %v403 = vpack.c.b16 %v363, %v362
  %v404 = vpack.c.b16 %v365, %v364
  %v405 = vpack.c.b16 %v367, %v366
  %v406 = vpack.c.b16 %v369, %v368
  %v407 = vpack.c.b16 %v371, %v370
  %v408 = vpack.c.b16 %v373, %v372
  %v409 = vpack.c.b16 %v375, %v374
  %v410 = vpack.c.b16 %v377, %v376
  %v411 = vpack.c.b16 %v379, %v378
  %444 = vmatprep.subr.bf16.mxu0 0
  %445 = vmatpush1.bf16.msra.mxu0 %v387
  %446 = vmatprep.subr.bf16.mxu0 0
  %447 = vmatpush1.bf16.msra.mxu0 %v386
  %448 = vmatprep.subr.bf16.mxu0 0
  %449 = vmatpush1.bf16.msra.mxu0 %v385
  %450 = vmatprep.subr.bf16.mxu0 0
  %451 = vmatpush1.bf16.msra.mxu0 %v384
  %452 = vmatprep.subr.bf16.mxu0 0
  %453 = vmatpush1.bf16.msra.mxu0 %v383
  %454 = vmatprep.subr.bf16.mxu0 0
  %455 = vmatpush1.bf16.msra.mxu0 %v382
  %456 = vmatprep.subr.bf16.mxu0 0
  %457 = vmatpush1.bf16.msra.mxu0 %v381
  %458 = vmatprep.subr.bf16.mxu0 0
  %459 = vmatpush1.bf16.msra.mxu0 %v380
  %460 = vmatprep.subr.bf16.mxu0 0
  %461 = vmatpush2.bf16.msra.mxu0 %v395
  %462 = vmatprep.subr.bf16.mxu0 0
  %463 = vmatpush2.bf16.msra.mxu0 %v394
  %464 = vmatprep.subr.bf16.mxu0 0
  %465 = vmatpush2.bf16.msra.mxu0 %v393
  %466 = vmatprep.subr.bf16.mxu0 0
  %467 = vmatpush2.bf16.msra.mxu0 %v392
  %468 = vmatprep.subr.bf16.mxu0 0
  %469 = vmatpush2.bf16.msra.mxu0 %v391
  %470 = vmatprep.subr.bf16.mxu0 0
  %471 = vmatpush2.bf16.msra.mxu0 %v390
  %472 = vmatprep.subr.bf16.mxu0 0
  %473 = vmatpush2.bf16.msra.mxu0 %v389
  %474 = vmatprep.subr.bf16.mxu0 0
  %475 = vmatpush2.bf16.msra.mxu0 %v388
  %476 = vmatprep.mubr.bf16.mxu0 %v197
  %477 = vmatmul.mubr.bf16.gmra.mxu0 %v196
  %v478 = vpop.f32.mrf.mxu0
  %v479 = vadd.f32 %v116, %v478
  %v480 = vpop.f32.mrf.mxu0
  %v481 = vpop.f32.mrf.mxu0
  %v482 = vadd.f32 %v116, %v481
  %v483 = vpop.f32.mrf.mxu0
  %484 = vmatprep.mubr.bf16.mxu0 %v201
  %485 = vmatmul.mubr.bf16.gmra.mxu0 %v200
  %v486 = vpop.f32.mrf.mxu0
  %v487 = vadd.f32 %v116, %v486
  %v488 = vpop.f32.mrf.mxu0
  %v489 = vpop.f32.mrf.mxu0
  %v490 = vadd.f32 %v116, %v489
  %v491 = vpop.f32.mrf.mxu0
  %492 = vmatprep.mubr.bf16.mxu0 %v205
  %493 = vmatmul.mubr.bf16.gmra.mxu0 %v204
  %v494 = vpop.f32.mrf.mxu0
  %v495 = vadd.f32 %v116, %v494
  %v496 = vpop.f32.mrf.mxu0
  %v497 = vpop.f32.mrf.mxu0
  %v498 = vadd.f32 %v116, %v497
  %v499 = vpop.f32.mrf.mxu0
  %500 = vmatprep.mubr.bf16.mxu0 %v209
  %501 = vmatmul.mubr.bf16.gmra.mxu0 %v208
  %v502 = vpop.f32.mrf.mxu0
  %v503 = vadd.f32 %v116, %v502
  %v504 = vpop.f32.mrf.mxu0
  %v505 = vpop.f32.mrf.mxu0
  %v506 = vadd.f32 %v116, %v505
  %v507 = vpop.f32.mrf.mxu0
  %508 = vmatprep.mubr.bf16.mxu0 %v213
  %509 = vmatmul.mubr.bf16.gmra.mxu0 %v212
  %v510 = vpop.f32.mrf.mxu0
  %v511 = vadd.f32 %v116, %v510
  %v512 = vpop.f32.mrf.mxu0
  %v513 = vpop.f32.mrf.mxu0
  %v514 = vadd.f32 %v116, %v513
  %v515 = vpop.f32.mrf.mxu0
  %516 = vmatprep.mubr.bf16.mxu0 %v217
  %517 = vmatmul.mubr.bf16.gmra.mxu0 %v216
  %v518 = vpop.f32.mrf.mxu0
  %v519 = vadd.f32 %v116, %v518
  %v520 = vpop.f32.mrf.mxu0
  %v521 = vpop.f32.mrf.mxu0
  %v522 = vadd.f32 %v116, %v521
  %v523 = vpop.f32.mrf.mxu0
  %524 = vmatprep.mubr.bf16.mxu0 %v221
  %525 = vmatmul.mubr.bf16.gmra.mxu0 %v220
  %v526 = vpop.f32.mrf.mxu0
  %v527 = vadd.f32 %v116, %v526
  %v528 = vpop.f32.mrf.mxu0
  %v529 = vpop.f32.mrf.mxu0
  %v530 = vpop.f32.mrf.mxu0
  %531 = vdwg.mxu0
  %532 = vmatprep.subr.bf16.mxu0 0
  %533 = vmatpush1.bf16.msra.mxu0 %v403
  %534 = vmatprep.subr.bf16.mxu0 0
  %535 = vmatpush1.bf16.msra.mxu0 %v402
  %536 = vmatprep.subr.bf16.mxu0 0
  %537 = vmatpush1.bf16.msra.mxu0 %v401
  %538 = vmatprep.subr.bf16.mxu0 0
  %539 = vmatpush1.bf16.msra.mxu0 %v400
  %540 = vmatprep.subr.bf16.mxu0 0
  %541 = vmatpush1.bf16.msra.mxu0 %v399
  %542 = vmatprep.subr.bf16.mxu0 0
  %543 = vmatpush1.bf16.msra.mxu0 %v398
  %544 = vmatprep.subr.bf16.mxu0 0
  %545 = vmatpush1.bf16.msra.mxu0 %v397
  %546 = vmatprep.subr.bf16.mxu0 0
  %547 = vmatpush1.bf16.msra.mxu0 %v396
  %548 = vmatprep.subr.bf16.mxu0 0
  %549 = vmatpush2.bf16.msra.mxu0 %v411
  %550 = vmatprep.subr.bf16.mxu0 0
  %551 = vmatpush2.bf16.msra.mxu0 %v410
  %552 = vmatprep.subr.bf16.mxu0 0
  %553 = vmatpush2.bf16.msra.mxu0 %v409
  %554 = vmatprep.subr.bf16.mxu0 0
  %555 = vmatpush2.bf16.msra.mxu0 %v408
  %556 = vmatprep.subr.bf16.mxu0 0
  %557 = vmatpush2.bf16.msra.mxu0 %v407
  %558 = vmatprep.subr.bf16.mxu0 0
  %559 = vmatpush2.bf16.msra.mxu0 %v406
  %560 = vmatprep.subr.bf16.mxu0 0
  %561 = vmatpush2.bf16.msra.mxu0 %v405
  %562 = vmatprep.subr.bf16.mxu0 0
  %563 = vmatpush2.bf16.msra.mxu0 %v404
  %564 = vmatprep.mubr.bf16.mxu0 %v199
  %565 = vmatmul.mubr.bf16.gmra.mxu0 %v198
  %v566 = vpop.f32.mrf.mxu0
  %v567 = vadd.f32 %v479, %v566
  %v568 = vpop.f32.mrf.mxu0
  %v569 = vpop.f32.mrf.mxu0
  %v570 = vadd.f32 %v482, %v569
  %v571 = vpop.f32.mrf.mxu0
  %572 = vmatprep.mubr.bf16.mxu0 %v203
  %573 = vmatmul.mubr.bf16.gmra.mxu0 %v202
  %v574 = vpop.f32.mrf.mxu0
  %v575 = vadd.f32 %v487, %v574
  %v576 = vpop.f32.mrf.mxu0
  %v577 = vpop.f32.mrf.mxu0
  %v578 = vadd.f32 %v490, %v577
  %v579 = vpop.f32.mrf.mxu0
  %580 = vmatprep.mubr.bf16.mxu0 %v207
  %581 = vmatmul.mubr.bf16.gmra.mxu0 %v206
  %v582 = vpop.f32.mrf.mxu0
  %v583 = vadd.f32 %v495, %v582
  %v584 = vpop.f32.mrf.mxu0
  %v585 = vpop.f32.mrf.mxu0
  %v586 = vadd.f32 %v498, %v585
  %v587 = vpop.f32.mrf.mxu0
  %588 = vmatprep.mubr.bf16.mxu0 %v211
  %589 = vmatmul.mubr.bf16.gmra.mxu0 %v210
  %v590 = vpop.f32.mrf.mxu0
  %v591 = vadd.f32 %v503, %v590
  %v592 = vpop.f32.mrf.mxu0
  %v593 = vpop.f32.mrf.mxu0
  %v594 = vadd.f32 %v506, %v593
  %v595 = vpop.f32.mrf.mxu0
  %596 = vmatprep.mubr.bf16.mxu0 %v215
  %597 = vmatmul.mubr.bf16.gmra.mxu0 %v214
  %v598 = vpop.f32.mrf.mxu0
  %v599 = vadd.f32 %v511, %v598
  %v600 = vpop.f32.mrf.mxu0
  %v601 = vpop.f32.mrf.mxu0
  %v602 = vadd.f32 %v514, %v601
  %v603 = vpop.f32.mrf.mxu0
  %604 = vmatprep.mubr.bf16.mxu0 %v219
  %605 = vmatmul.mubr.bf16.gmra.mxu0 %v218
  %v606 = vpop.f32.mrf.mxu0
  %v607 = vadd.f32 %v519, %v606
  %v608 = vpop.f32.mrf.mxu0
  %v609 = vpop.f32.mrf.mxu0
  %v610 = vadd.f32 %v522, %v609
  %v611 = vpop.f32.mrf.mxu0
  %612 = vmatprep.mubr.bf16.mxu0 %v223
  %613 = vmatmul.mubr.bf16.gmra.mxu0 %v222
  %v614 = vpop.f32.mrf.mxu0
  %v615 = vadd.f32 %v527, %v614
  %v616 = vpop.f32.mrf.mxu0
  %v617 = vpop.f32.mrf.mxu0
  %v618 = vpop.f32.mrf.mxu0
  %619 = vdwg.mxu0
  %v620 = vld [vmem:[%s3] sm:$0x1]
  %v621 = vld [vmem:[%s4] sm:$0x1]
  %vm622 = vcmask 261120
  %v623 = vsel %vm622, %v567, 0.0
  %v624 = vsel %vm622, %v570, 0.0
  %v625 = vadd.f32 %v623, %v624
  %v626 = vsel %vm622, %v575, 0.0
  %v627 = vadd.f32 %v625, %v626
  %v628 = vsel %vm622, %v578, 0.0
  %v629 = vadd.f32 %v627, %v628
  %v630 = vsel %vm622, %v583, 0.0
  %v631 = vadd.f32 %v629, %v630
  %v632 = vsel %vm622, %v586, 0.0
  %v633 = vadd.f32 %v631, %v632
  %v634 = vsel %vm622, %v591, 0.0
  %v635 = vadd.f32 %v633, %v634
  %v636 = vsel %vm622, %v594, 0.0
  %v637 = vadd.f32 %v635, %v636
  %v638 = vsel %vm622, %v599, 0.0
  %v639 = vadd.f32 %v637, %v638
  %v640 = vsel %vm622, %v602, 0.0
  %v641 = vadd.f32 %v639, %v640
  %v642 = vsel %vm622, %v607, 0.0
  %v643 = vadd.f32 %v641, %v642
  %v644 = vsel %vm622, %v610, 0.0
  %v645 = vadd.f32 %v643, %v644
  %vm646 = vcmask 254976
  %v647 = vsel %vm646, %v615, 0.0
  %v648 = vadd.f32 %v645, %v647
  %v649 = vrot.slane %v648, 4
  %v650 = vadd.f32 %v648, %v649
  %v651 = vrot.slane %v650, 2
  %v652 = vadd.f32 %v650, %v651
  %v653 = vrot.slane %v652, 1
  %v654 = vadd.f32 %v652, %v653
  %v655 = vrcp.pop 98.0
  %v656 = vmul.f32 %v654, %v655
  %v657 = vsub.f32 %v567, %v656
  %v658 = vsub.f32 %v570, %v656
  %v659 = vsub.f32 %v575, %v656
  %v660 = vsub.f32 %v578, %v656
  %v661 = vsub.f32 %v583, %v656
  %v662 = vsub.f32 %v586, %v656
  %v663 = vsub.f32 %v591, %v656
  %v664 = vsub.f32 %v594, %v656
  %v665 = vsub.f32 %v599, %v656
  %v666 = vsub.f32 %v602, %v656
  %v667 = vsub.f32 %v607, %v656
  %v668 = vsub.f32 %v610, %v656
  %v669 = vsub.f32 %v615, %v656
  %v670 = vmul.f32 %v657, %v657
  %v671 = vmul.f32 %v658, %v658
  %v672 = vmul.f32 %v659, %v659
  %v673 = vmul.f32 %v660, %v660
  %v674 = vmul.f32 %v661, %v661
  %v675 = vmul.f32 %v662, %v662
  %v676 = vmul.f32 %v663, %v663
  %v677 = vmul.f32 %v664, %v664
  %v678 = vmul.f32 %v665, %v665
  %v679 = vmul.f32 %v666, %v666
  %v680 = vmul.f32 %v667, %v667
  %v681 = vmul.f32 %v668, %v668
  %v682 = vmul.f32 %v669, %v669
  %v683 = vsel %vm622, %v670, 0.0
  %v684 = vsel %vm622, %v671, 0.0
  %v685 = vadd.f32 %v683, %v684
  %v686 = vsel %vm622, %v672, 0.0
  %v687 = vadd.f32 %v685, %v686
  %v688 = vsel %vm622, %v673, 0.0
  %v689 = vadd.f32 %v687, %v688
  %v690 = vsel %vm622, %v674, 0.0
  %v691 = vadd.f32 %v689, %v690
  %v692 = vsel %vm622, %v675, 0.0
  %v693 = vadd.f32 %v691, %v692
  %v694 = vsel %vm622, %v676, 0.0
  %v695 = vadd.f32 %v693, %v694
  %v696 = vsel %vm622, %v677, 0.0
  %v697 = vadd.f32 %v695, %v696
  %v698 = vsel %vm622, %v678, 0.0
  %v699 = vadd.f32 %v697, %v698
  %v700 = vsel %vm622, %v679, 0.0
  %v701 = vadd.f32 %v699, %v700
  %v702 = vsel %vm622, %v680, 0.0
  %v703 = vadd.f32 %v701, %v702
  %v704 = vsel %vm622, %v681, 0.0
  %v705 = vadd.f32 %v703, %v704
  %v706 = vsel %vm646, %v682, 0.0
  %v707 = vadd.f32 %v705, %v706
  %v708 = vrot.slane %v707, 4
  %v709 = vadd.f32 %v707, %v708
  %v710 = vrot.slane %v709, 2
  %v711 = vadd.f32 %v709, %v710
  %v712 = vrot.slane %v711, 1
  %v713 = vadd.f32 %v711, %v712
  %v714 = vmul.f32 %v713, %v655
  %v715 = vadd.f32 %v714, 1e-05
  %v716 = vrsqrt.pop %v715
  %v717 = vmul.f32 %v657, %v716
  %v718 = vmul.f32 %v658, %v716
  %v719 = vmul.f32 %v659, %v716
  %v720 = vmul.f32 %v660, %v716
  %v721 = vmul.f32 %v661, %v716
  %v722 = vmul.f32 %v662, %v716
  %v723 = vmul.f32 %v663, %v716
  %v724 = vmul.f32 %v664, %v716
  %v725 = vmul.f32 %v665, %v716
  %v726 = vmul.f32 %v666, %v716
  %v727 = vmul.f32 %v667, %v716
  %v728 = vmul.f32 %v668, %v716
  %v729 = vmul.f32 %v669, %v716
  %v731 = vlaneseq
  %v732 = vshrl.u32 %v731, 7
  %v733 = vsub.s32 0, %v732
  %v734 = vrot.slane %v620, %v733
  %v736 = vmul.f32 %v717, %v734
  %v737 = vmul.f32 %v718, %v734
  %v738 = vmul.f32 %v719, %v734
  %v739 = vmul.f32 %v720, %v734
  %v740 = vmul.f32 %v721, %v734
  %v741 = vmul.f32 %v722, %v734
  %v742 = vmul.f32 %v723, %v734
  %v743 = vmul.f32 %v724, %v734
  %v744 = vmul.f32 %v725, %v734
  %v745 = vmul.f32 %v726, %v734
  %v746 = vmul.f32 %v727, %v734
  %v747 = vmul.f32 %v728, %v734
  %v748 = vmul.f32 %v729, %v734
  %v750 = vlaneseq
  %v751 = vshrl.u32 %v750, 7
  %v752 = vsub.s32 0, %v751
  %v753 = vrot.slane %v621, %v752
  %v755 = vadd.f32 %v736, %v753
  %v756 = vadd.f32 %v737, %v753
  %v757 = vadd.f32 %v738, %v753
  %v758 = vadd.f32 %v739, %v753
  %v759 = vadd.f32 %v740, %v753
  %v760 = vadd.f32 %v741, %v753
  %v761 = vadd.f32 %v742, %v753
  %v762 = vadd.f32 %v743, %v753
  %v763 = vadd.f32 %v744, %v753
  %v764 = vadd.f32 %v745, %v753
  %v765 = vadd.f32 %v746, %v753
  %v766 = vadd.f32 %v747, %v753
  %v767 = vadd.f32 %v748, %v753
  %v768 = vmax.f32 %v755, 0.0
  %v769 = vmax.f32 %v756, 0.0
  %v770 = vmax.f32 %v757, 0.0
  %v771 = vmax.f32 %v758, 0.0
  %v772 = vmax.f32 %v759, 0.0
  %v773 = vmax.f32 %v760, 0.0
  %v774 = vmax.f32 %v761, 0.0
  %v775 = vmax.f32 %v762, 0.0
  %v776 = vmax.f32 %v763, 0.0
  %v777 = vmax.f32 %v764, 0.0
  %v778 = vmax.f32 %v765, 0.0
  %v779 = vmax.f32 %v766, 0.0
  %v780 = vmax.f32 %v767, 0.0
  %v781 = vpack.c.bf16 %v769, %v768
  %v782 = vpack.c.bf16 %v771, %v770
  %v783 = vpack.c.bf16 %v773, %v772
  %v784 = vpack.c.bf16 %v775, %v774
  %v785 = vpack.c.bf16 %v777, %v776
  %v786 = vpack.c.bf16 %v779, %v778
  %v787 = vpack.c.bf16 %v780, %v780
  %v795 = vunpack.c.l.b16 %v781
  %v796 = vunpack.c.h.b16 %v781
  %v797 = vunpack.c.l.b16 %v782
  %v798 = vunpack.c.h.b16 %v782
  %v799 = vunpack.c.l.b16 %v783
  %v800 = vunpack.c.h.b16 %v783
  %v801 = vunpack.c.l.b16 %v784
  %v802 = vunpack.c.h.b16 %v784
  %v803 = vunpack.c.l.b16 %v785
  %v804 = vunpack.c.h.b16 %v785
  %v805 = vunpack.c.l.b16 %v786
  %v806 = vunpack.c.h.b16 %v786
  %v807 = vunpack.c.l.b16 %v787
  %v808 = vpack.c.b16 %v795, %v795
  %v809 = vpack.c.b16 %v796, %v796
  %v810 = vpack.c.b16 %v797, %v797
  %v811 = vpack.c.b16 %v798, %v798
  %v812 = vpack.c.b16 %v799, %v799
  %v813 = vpack.c.b16 %v800, %v800
  %v814 = vpack.c.b16 %v801, %v801
  %v815 = vpack.c.b16 %v802, %v802
  %v816 = vpack.c.b16 %v803, %v803
  %v817 = vpack.c.b16 %v804, %v804
  %v818 = vpack.c.b16 %v805, %v805
  %v819 = vpack.c.b16 %v806, %v806
  %v820 = vpack.c.b16 %v807, %v807
  %vm834 = vcmask 257024
  %835 = vst.msk [vmem:[%s5] sm:$0xf] %vm834, %v808
  %836 = vst.msk [vmem:[%s5 + $0x4] sm:$0xf] %vm834, %v809
  %837 = vst.msk [vmem:[%s5 + $0x8] sm:$0xf] %vm834, %v810
  %838 = vst.msk [vmem:[%s5 + $0xc] sm:$0xf] %vm834, %v811
  %839 = vst.msk [vmem:[%s5 + $0x10] sm:$0xf] %vm834, %v812
  %840 = vst.msk [vmem:[%s5 + $0x14] sm:$0xf] %vm834, %v813
  %841 = vst.msk [vmem:[%s5 + $0x18] sm:$0xf] %vm834, %v814
  %842 = vst.msk [vmem:[%s5 + $0x1c] sm:$0xf] %vm834, %v815
  %843 = vst.msk [vmem:[%s5 + $0x20] sm:$0xf] %vm834, %v816
  %844 = vst.msk [vmem:[%s5 + $0x24] sm:$0xf] %vm834, %v817
  %845 = vst.msk [vmem:[%s5 + $0x28] sm:$0xf] %vm834, %v818
  %846 = vst.msk [vmem:[%s5 + $0x2c] sm:$0xf] %vm834, %v819
  %vm847 = vcmask 253952
  %848 = vst.msk [vmem:[%s5 + $0x30] sm:$0x1] %vm847, %v820
  // Predicated region
  $region22: #{discriminator28_forward.10} parent=0 // pred_check
    _
  $region23: #{discriminator28_forward.10} parent=0 // pred_check_branch
    %850 = sbr.rel (0) target = $region25
  $region24: #{discriminator28_forward.10} parent=0 // pred_region
    _
  $region25: #{discriminator28_forward.10} parent=0 // pred_fallthru
    _
  // Predicated region
  $region26: #{discriminator28_forward.10} parent=0 // pred_check
    _
  $region27: #{discriminator28_forward.10} parent=0 // pred_check_branch
    %852 = sbr.rel (0) target = $region29
  $region28: #{discriminator28_forward.10} parent=0 // pred_region
    _
  $region29: #{discriminator28_forward.10} parent=0 // pred_fallthru
    _

// kernel: discriminator28_forward.11
$region0: #{discriminator28_forward.11}
  #allocation0 [shape = 'u32[]', space=smem, size = 0x4, offset = 0x4, fixed_abs, tag = 'smem constant byte address 0x4 - core index']
  #allocation1 [shape = 'u32[144,128]{1,0:T(1,128)}', space=vmem, size = 0x12000, scoped, tag = 'internal scratch']
  %s0 = inlined_call_operand.vmem [shape: bf16[98,32], index: 0, kind: input, shape index: {}]
  %s1 = inlined_call_operand.vmem [shape: bf16[98,288], index: 1, kind: input, shape index: {}]
  %s2 = inlined_call_operand.vmem [shape: bf16[288,32], index: 2, kind: input, shape index: {}]
  %s3 = inlined_call_operand.vmem [shape: f32[1,32], index: 3, kind: input, shape index: {}]
  %s4 = inlined_call_operand.vmem [shape: f32[1,32], index: 4, kind: input, shape index: {}]
  %s5 = inlined_call_operand.vmem [shape: f32[1,32], index: 5, kind: input, shape index: {}]
  %s6 = inlined_call_operand.vmem [shape: bf16[32,32], index: 6, kind: input, shape index: {}]
  %s7 = inlined_call_operand.vmem [shape: f32[1,32], index: 7, kind: input, shape index: {}]
  %s8 = inlined_call_operand.vmem [shape: f32[1,32], index: 8, kind: input, shape index: {}]
  %s9 = inlined_call_operand.vmem [shape: f32[1,32], index: 9, kind: input, shape index: {}]
  %s10 = inlined_call_operand.vmem [shape: bf16[98,32], index: 10, kind: output, shape index: {}]
  %s11 = sld [smem:[#allocation0]]
  $region50: #{discriminator28_forward.11} parent=0
    _
  %s13 = ssub.s32 1, %s11
  %s14 = scalar_select 0, %s13, %s11
  // Predicated region
  $region2: #{discriminator28_forward.11} parent=0 // pred_check
    _
  $region3: #{discriminator28_forward.11} parent=0 // pred_check_branch
    %16 = sbr.rel (0) target = $region5
  $region4: #{discriminator28_forward.11} parent=0 // pred_region
    _
  $region5: #{discriminator28_forward.11} parent=0 // pred_fallthru
    _
  // Predicated region
  $region6: #{discriminator28_forward.11} parent=0 // pred_check
    _
  $region7: #{discriminator28_forward.11} parent=0 // pred_check_branch
    %18 = sbr.rel (0) target = $region9
  $region8: #{discriminator28_forward.11} parent=0 // pred_region
    _
  $region9: #{discriminator28_forward.11} parent=0 // pred_fallthru
    _
  // Predicated region
  $region10: #{discriminator28_forward.11} parent=0 // pred_check
    _
  $region11: #{discriminator28_forward.11} parent=0 // pred_check_branch
    %20 = sbr.rel (0) target = $region13
  $region12: #{discriminator28_forward.11} parent=0 // pred_region
    _
  $region13: #{discriminator28_forward.11} parent=0 // pred_fallthru
    _
  // Predicated region
  $region14: #{discriminator28_forward.11} parent=0 // pred_check
    _
  $region15: #{discriminator28_forward.11} parent=0 // pred_check_branch
    %22 = sbr.rel (0) target = $region17
  $region16: #{discriminator28_forward.11} parent=0 // pred_region
    _
  $region17: #{discriminator28_forward.11} parent=0 // pred_fallthru
    _
  // Predicated region
  $region18: #{discriminator28_forward.11} parent=0 // pred_check
    _
  $region19: #{discriminator28_forward.11} parent=0 // pred_check_branch
    %24 = sbr.rel (0) target = $region21
  $region20: #{discriminator28_forward.11} parent=0 // pred_region
    _
  $region21: #{discriminator28_forward.11} parent=0 // pred_fallthru
    _
  // Predicated region
  $region22: #{discriminator28_forward.11} parent=0 // pred_check
    _
  $region23: #{discriminator28_forward.11} parent=0 // pred_check_branch
    %26 = sbr.rel (0) target = $region25
  $region24: #{discriminator28_forward.11} parent=0 // pred_region
    _
  $region25: #{discriminator28_forward.11} parent=0 // pred_fallthru
    _
  // Predicated region
  $region26: #{discriminator28_forward.11} parent=0 // pred_check
    _
  $region27: #{discriminator28_forward.11} parent=0 // pred_check_branch
    %28 = sbr.rel (0) target = $region29
  $region28: #{discriminator28_forward.11} parent=0 // pred_region
    _
  $region29: #{discriminator28_forward.11} parent=0 // pred_fallthru
    _
  // Predicated region
  $region30: #{discriminator28_forward.11} parent=0 // pred_check
    _
  $region31: #{discriminator28_forward.11} parent=0 // pred_check_branch
    %30 = sbr.rel (0) target = $region33
  $region32: #{discriminator28_forward.11} parent=0 // pred_region
    _
  $region33: #{discriminator28_forward.11} parent=0 // pred_fallthru
    _
  // Predicated region
  $region34: #{discriminator28_forward.11} parent=0 // pred_check
    _
  $region35: #{discriminator28_forward.11} parent=0 // pred_check_branch
    %32 = sbr.rel (0) target = $region37
  $region36: #{discriminator28_forward.11} parent=0 // pred_region
    _
  $region37: #{discriminator28_forward.11} parent=0 // pred_fallthru
    _
  // Predicated region
  $region38: #{discriminator28_forward.11} parent=0 // pred_check
    _
  $region39: #{discriminator28_forward.11} parent=0 // pred_check_branch
    %34 = sbr.rel (0) target = $region41
  $region40: #{discriminator28_forward.11} parent=0 // pred_region
    _
  $region41: #{discriminator28_forward.11} parent=0 // pred_fallthru
    _
  %v36 = vld [vmem:[%s1] sm:$0xff]
  %v37 = vld [vmem:[%s1 + $0x8] sm:$0xf]
  %v38 = vld [vmem:[%s1 + $0xc] sm:$0xff]
  %v39 = vld [vmem:[%s1 + $0x14] sm:$0xf]
  %v40 = vld [vmem:[%s1 + $0x18] sm:$0xff]
  %v41 = vld [vmem:[%s1 + $0x20] sm:$0xf]
  %v42 = vld [vmem:[%s1 + $0x24] sm:$0xff]
  %v43 = vld [vmem:[%s1 + $0x2c] sm:$0xf]
  %v44 = vld [vmem:[%s1 + $0x30] sm:$0xff]
  %v45 = vld [vmem:[%s1 + $0x38] sm:$0xf]
  %v46 = vld [vmem:[%s1 + $0x3c] sm:$0xff]
  %v47 = vld [vmem:[%s1 + $0x44] sm:$0xf]
  %v48 = vld [vmem:[%s1 + $0x48] sm:$0xff]
  %v49 = vld [vmem:[%s1 + $0x50] sm:$0xf]
  %v50 = vld [vmem:[%s1 + $0x54] sm:$0xff]
  %v51 = vld [vmem:[%s1 + $0x5c] sm:$0xf]
  %v52 = vld [vmem:[%s1 + $0x60] sm:$0xff]
  %v53 = vld [vmem:[%s1 + $0x68] sm:$0xf]
  %v54 = vld [vmem:[%s1 + $0x6c] sm:$0xff]
  %v55 = vld [vmem:[%s1 + $0x74] sm:$0xf]
  %v56 = vld [vmem:[%s1 + $0x78] sm:$0xff]
  %v57 = vld [vmem:[%s1 + $0x80] sm:$0xf]
  %v58 = vld [vmem:[%s1 + $0x84] sm:$0xff]
  %v59 = vld [vmem:[%s1 + $0x8c] sm:$0xf]
  %v60 = vld [vmem:[%s1 + $0x90] sm:$0x11]
  %v61 = vld [vmem:[%s1 + $0x98] sm:$0x1]
  %v62 = vld [vmem:[%s2] sm:$0xf]
  %v63 = vld [vmem:[%s2 + $0x4] sm:$0xf]
  %v64 = vld [vmem:[%s2 + $0x8] sm:$0xf]
  %v65 = vld [vmem:[%s2 + $0xc] sm:$0xf]
  %v66 = vld [vmem:[%s2 + $0x10] sm:$0xf]
  %v67 = vld [vmem:[%s2 + $0x14] sm:$0xf]
  %v68 = vld [vmem:[%s2 + $0x18] sm:$0xf]
  %v69 = vld [vmem:[%s2 + $0x1c] sm:$0xf]
  %v70 = vld [vmem:[%s2 + $0x20] sm:$0xf]
  %v71 = vld [vmem:[%s2 + $0x24] sm:$0xf]
  %v72 = vld [vmem:[%s2 + $0x28] sm:$0xf]
  %v73 = vld [vmem:[%s2 + $0x2c] sm:$0xf]
  %v74 = vld [vmem:[%s2 + $0x30] sm:$0xf]
  %v75 = vld [vmem:[%s2 + $0x34] sm:$0xf]
  %v76 = vld [vmem:[%s2 + $0x38] sm:$0xf]
  %v77 = vld [vmem:[%s2 + $0x3c] sm:$0xf]
  %v78 = vld [vmem:[%s2 + $0x40] sm:$0xf]
  %v79 = vld [vmem:[%s2 + $0x44] sm:$0xf]
  %v80 = vld [vmem:[%s2 + $0x48] sm:$0xf]
  %v81 = vld [vmem:[%s2 + $0x4c] sm:$0xf]
  %v82 = vld [vmem:[%s2 + $0x50] sm:$0xf]
  %v83 = vld [vmem:[%s2 + $0x54] sm:$0xf]
  %v84 = vld [vmem:[%s2 + $0x58] sm:$0xf]
  %v85 = vld [vmem:[%s2 + $0x5c] sm:$0xf]
  %v86 = vld [vmem:[%s2 + $0x60] sm:$0xf]
  %v87 = vld [vmem:[%s2 + $0x64] sm:$0xf]
  %v88 = vld [vmem:[%s2 + $0x68] sm:$0xf]
  %v89 = vld [vmem:[%s2 + $0x6c] sm:$0xf]
  %v90 = vld [vmem:[%s2 + $0x70] sm:$0xf]
  %v91 = vld [vmem:[%s2 + $0x74] sm:$0xf]
  %v92 = vld [vmem:[%s2 + $0x78] sm:$0xf]
  %v93 = vld [vmem:[%s2 + $0x7c] sm:$0xf]
  %v94 = vld [vmem:[%s2 + $0x80] sm:$0xf]
  %v95 = vld [vmem:[%s2 + $0x84] sm:$0xf]
  %v96 = vld [vmem:[%s2 + $0x88] sm:$0xf]
  %v97 = vld [vmem:[%s2 + $0x8c] sm:$0xf]
  %v98 = vld [vmem:[%s3] sm:$0x1]
  %v100 = vlaneseq
  %v101 = vshrl.u32 %v100, 7
  %v102 = vsub.s32 0, %v101
  %v103 = vrot.slane %v98, %v102
  %v131 = vunpack.c.l.b16 %v36
  %v132 = vunpack.c.h.b16 %v36
  %v133 = vunpack.c.l.b16 %v37
  %v134 = vunpack.c.l.b16 %v38
  %v135 = vunpack.c.h.b16 %v38
  %v136 = vunpack.c.l.b16 %v39
  %v137 = vunpack.c.l.b16 %v40
  %v138 = vunpack.c.h.b16 %v40
  %v139 = vunpack.c.l.b16 %v41
  %v140 = vunpack.c.l.b16 %v42
  %v141 = vunpack.c.h.b16 %v42
  %v142 = vunpack.c.l.b16 %v43
  %v143 = vunpack.c.l.b16 %v44
  %v144 = vunpack.c.h.b16 %v44
  %v145 = vunpack.c.l.b16 %v45
  %v146 = vunpack.c.l.b16 %v46
  %v147 = vunpack.c.h.b16 %v46
  %v148 = vunpack.c.l.b16 %v47
  %v149 = vunpack.c.l.b16 %v48
  %v150 = vunpack.c.h.b16 %v48
  %v151 = vunpack.c.l.b16 %v49
  %v152 = vunpack.c.l.b16 %v50
  %v153 = vunpack.c.h.b16 %v50
  %v154 = vunpack.c.l.b16 %v51
  %v155 = vunpack.c.l.b16 %v52
  %v156 = vunpack.c.h.b16 %v52
  %v157 = vunpack.c.l.b16 %v53
  %v158 = vunpack.c.l.b16 %v54
  %v159 = vunpack.c.h.b16 %v54
  %v160 = vunpack.c.l.b16 %v55
  %v161 = vunpack.c.l.b16 %v56
  %v162 = vunpack.c.h.b16 %v56
  %v163 = vunpack.c.l.b16 %v57
  %v164 = vunpack.c.l.b16 %v58
  %v165 = vunpack.c.h.b16 %v58
  %v166 = vunpack.c.l.b16 %v59
  %v167 = vunpack.c.l.b16 %v60
  %v168 = vunpack.c.h.b16 %v60
  %v169 = vunpack.c.l.b16 %v61
  %v170 = vpack.c.b16 %v134, %v131
  %v171 = vpack.c.b16 %v135, %v132
  %v172 = vpack.c.b16 %v136, %v133
  %v173 = vpack.c.b16 %v140, %v137
  %v174 = vpack.c.b16 %v141, %v138
  %v175 = vpack.c.b16 %v142, %v139
  %v176 = vpack.c.b16 %v146, %v143
  %v177 = vpack.c.b16 %v147, %v144
  %v178 = vpack.c.b16 %v148, %v145
  %v179 = vpack.c.b16 %v152, %v149
  %v180 = vpack.c.b16 %v153, %v150
  %v181 = vpack.c.b16 %v154, %v151
  %v182 = vpack.c.b16 %v158, %v155
  %v183 = vpack.c.b16 %v159, %v156
  %v184 = vpack.c.b16 %v160, %v157
  %v185 = vpack.c.b16 %v164, %v161
  %v186 = vpack.c.b16 %v165, %v162
  %v187 = vpack.c.b16 %v166, %v163
  %v188 = vpack.c.b16 %v167, %v167
  %v189 = vpack.c.b16 %v168, %v168
  %v190 = vpack.c.b16 %v169, %v169
  %v241 = vunpack.c.l.b16 %v62
  %v242 = vunpack.c.l.b16 %v63
  %v243 = vunpack.c.l.b16 %v64
  %v244 = vunpack.c.l.b16 %v65
  %v245 = vunpack.c.l.b16 %v66
  %v246 = vunpack.c.l.b16 %v67
  %v247 = vunpack.c.l.b16 %v68
  %v248 = vunpack.c.l.b16 %v69
  %v249 = vunpack.c.l.b16 %v70
  %v250 = vunpack.c.l.b16 %v71
  %v251 = vunpack.c.l.b16 %v72
  %v252 = vunpack.c.l.b16 %v73
  %v253 = vunpack.c.l.b16 %v74
  %v254 = vunpack.c.l.b16 %v75
  %v255 = vunpack.c.l.b16 %v76
  %v256 = vunpack.c.l.b16 %v77
  %v257 = vunpack.c.l.b16 %v78
  %v258 = vunpack.c.l.b16 %v79
  %v259 = vunpack.c.l.b16 %v80
  %v260 = vunpack.c.l.b16 %v81
  %v261 = vunpack.c.l.b16 %v82
  %v262 = vunpack.c.l.b16 %v83
  %v263 = vunpack.c.l.b16 %v84
  %v264 = vunpack.c.l.b16 %v85
  %v265 = vunpack.c.l.b16 %v86
  %v266 = vunpack.c.l.b16 %v87
  %v267 = vunpack.c.l.b16 %v88
  %v268 = vunpack.c.l.b16 %v89
  %v269 = vunpack.c.l.b16 %v90
  %v270 = vunpack.c.l.b16 %v91
  %v271 = vunpack.c.l.b16 %v92
  %v272 = vunpack.c.l.b16 %v93
  %v273 = vunpack.c.l.b16 %v94
  %v274 = vunpack.c.l.b16 %v95
  %v275 = vunpack.c.l.b16 %v96
  %v276 = vunpack.c.l.b16 %v97
  %v277 = vpack.c.b16 %v242, %v241
  %v278 = vpack.c.b16 %v244, %v243
  %v279 = vpack.c.b16 %v246, %v245
  %v280 = vpack.c.b16 %v248, %v247
  %v281 = vpack.c.b16 %v250, %v249
  %v282 = vpack.c.b16 %v252, %v251
  %v283 = vpack.c.b16 %v254, %v253
  %v284 = vpack.c.b16 %v256, %v255
  %v285 = vpack.c.b16 %v258, %v257
  %v286 = vpack.c.b16 %v260, %v259
  %v287 = vpack.c.b16 %v262, %v261
  %v288 = vpack.c.b16 %v264, %v263
  %v289 = vpack.c.b16 %v266, %v265
  %v290 = vpack.c.b16 %v268, %v267
  %v291 = vpack.c.b16 %v270, %v269
  %v292 = vpack.c.b16 %v272, %v271
  %v293 = vpack.c.b16 %v274, %v273
  %v294 = vpack.c.b16 %v276, %v275
  %vm313 = vcmask 261120
  %v315 = vsel %vm313, %v172, 0
  %v318 = vsel %vm313, %v175, 0
  %v321 = vsel %vm313, %v178, 0
  %v324 = vsel %vm313, %v181, 0
  %v327 = vsel %vm313, %v184, 0
  %v330 = vsel %vm313, %v187, 0
  %v333 = vsel %vm313, %v190, 0
  %335 = vmatprep.subr.bf16.mxu0 0
  %336 = vmatpush1.bf16.msra.mxu0 %v284
  %337 = vmatprep.subr.bf16.mxu0 0
  %338 = vmatpush1.bf16.msra.mxu0 %v283
  %339 = vmatprep.subr.bf16.mxu0 0
  %340 = vmatpush1.bf16.msra.mxu0 %v282
  %341 = vmatprep.subr.bf16.mxu0 0
  %342 = vmatpush1.bf16.msra.mxu0 %v281
  %343 = vmatprep.subr.bf16.mxu0 0
  %344 = vmatpush1.bf16.msra.mxu0 %v280
  %345 = vmatprep.subr.bf16.mxu0 0
  %346 = vmatpush1.bf16.msra.mxu0 %v279
  %347 = vmatprep.subr.bf16.mxu0 0
  %348 = vmatpush1.bf16.msra.mxu0 %v278
  %349 = vmatprep.subr.bf16.mxu0 0
  %350 = vmatpush1.bf16.msra.mxu0 %v277
  %351 = vmatprep.subr.bf16.mxu0 0
  %352 = vmatpush2.bf16.msra.mxu0 %v292
  %353 = vmatprep.subr.bf16.mxu0 0
  %354 = vmatpush2.bf16.msra.mxu0 %v291
  %355 = vmatprep.subr.bf16.mxu0 0
  %356 = vmatpush2.bf16.msra.mxu0 %v290
  %357 = vmatprep.subr.bf16.mxu0 0
  %358 = vmatpush2.bf16.msra.mxu0 %v289
  %359 = vmatprep.subr.bf16.mxu0 0
  %360 = vmatpush2.bf16.msra.mxu0 %v288
  %361 = vmatprep.subr.bf16.mxu0 0
  %362 = vmatpush2.bf16.msra.mxu0 %v287
  %363 = vmatprep.subr.bf16.mxu0 0
  %364 = vmatpush2.bf16.msra.mxu0 %v286
  %365 = vmatprep.subr.bf16.mxu0 0
  %366 = vmatpush2.bf16.msra.mxu0 %v285
  %367 = vmatprep.mubr.bf16.mxu0 %v171
  %368 = vmatmul.mubr.bf16.gmra.mxu0 %v170
  %v369 = vpop.f32.mrf.mxu0
  %v370 = vadd.f32 %v103, %v369
  %v371 = vpop.f32.mrf.mxu0
  %v372 = vpop.f32.mrf.mxu0
  %v373 = vadd.f32 %v103, %v372
  %v374 = vpop.f32.mrf.mxu0
  %375 = vmatprep.mubr.bf16.mxu0 %v174
  %376 = vmatmul.mubr.bf16.gmra.mxu0 %v173
  %v377 = vpop.f32.mrf.mxu0
  %v378 = vadd.f32 %v103, %v377
  %v379 = vpop.f32.mrf.mxu0
  %v380 = vpop.f32.mrf.mxu0
  %v381 = vadd.f32 %v103, %v380
  %v382 = vpop.f32.mrf.mxu0
  %383 = vmatprep.mubr.bf16.mxu0 %v177
  %384 = vmatmul.mubr.bf16.gmra.mxu0 %v176
  %v385 = vpop.f32.mrf.mxu0
  %v386 = vadd.f32 %v103, %v385
  %v387 = vpop.f32.mrf.mxu0
  %v388 = vpop.f32.mrf.mxu0
  %v389 = vadd.f32 %v103, %v388
  %v390 = vpop.f32.mrf.mxu0
  %391 = vmatprep.mubr.bf16.mxu0 %v180
  %392 = vmatmul.mubr.bf16.gmra.mxu0 %v179
  %v393 = vpop.f32.mrf.mxu0
  %v394 = vadd.f32 %v103, %v393
  %v395 = vpop.f32.mrf.mxu0
  %v396 = vpop.f32.mrf.mxu0
  %v397 = vadd.f32 %v103, %v396
  %v398 = vpop.f32.mrf.mxu0
  %399 = vmatprep.mubr.bf16.mxu0 %v183
  %400 = vmatmul.mubr.bf16.gmra.mxu0 %v182
  %v401 = vpop.f32.mrf.mxu0
  %v402 = vadd.f32 %v103, %v401
  %v403 = vpop.f32.mrf.mxu0
  %v404 = vpop.f32.mrf.mxu0
  %v405 = vadd.f32 %v103, %v404
  %v406 = vpop.f32.mrf.mxu0
  %407 = vmatprep.mubr.bf16.mxu0 %v186
  %408 = vmatmul.mubr.bf16.gmra.mxu0 %v185
  %v409 = vpop.f32.mrf.mxu0
  %v410 = vadd.f32 %v103, %v409
  %v411 = vpop.f32.mrf.mxu0
  %v412 = vpop.f32.mrf.mxu0
  %v413 = vadd.f32 %v103, %v412
  %v414 = vpop.f32.mrf.mxu0
  %415 = vmatprep.mubr.bf16.mxu0 %v189
  %416 = vmatmul.mubr.bf16.gmra.mxu0 %v188
  %v417 = vpop.f32.mrf.mxu0
  %v418 = vadd.f32 %v103, %v417
  %v419 = vpop.f32.mrf.mxu0
  %v420 = vpop.f32.mrf.mxu0
  %v421 = vpop.f32.mrf.mxu0
  %422 = vdwg.mxu0
  %423 = vmatprep.subr.bf16.mxu0 0
  %424 = vmatpush1.bf16.msra.mxu0 0
  %425 = vmatprep.subr.bf16.mxu0 0
  %426 = vmatpush1.bf16.msra.mxu0 0
  %427 = vmatprep.subr.bf16.mxu0 0
  %428 = vmatpush1.bf16.msra.mxu0 0
  %429 = vmatprep.subr.bf16.mxu0 0
  %430 = vmatpush1.bf16.msra.mxu0 0
  %431 = vmatprep.subr.bf16.mxu0 0
  %432 = vmatpush1.bf16.msra.mxu0 0
  %433 = vmatprep.subr.bf16.mxu0 0
  %434 = vmatpush1.bf16.msra.mxu0 0
  %435 = vmatprep.subr.bf16.mxu0 0
  %436 = vmatpush1.bf16.msra.mxu0 %v294
  %437 = vmatprep.subr.bf16.mxu0 0
  %438 = vmatpush1.bf16.msra.mxu0 %v293
  %439 = vmatprep.subr.bf16.mxu0 0
  %440 = vmatpush2.bf16.msra.mxu0 0
  %441 = vmatprep.subr.bf16.mxu0 0
  %442 = vmatpush2.bf16.msra.mxu0 0
  %443 = vmatprep.subr.bf16.mxu0 0
  %444 = vmatpush2.bf16.msra.mxu0 0
  %445 = vmatprep.subr.bf16.mxu0 0
  %446 = vmatpush2.bf16.msra.mxu0 0
  %447 = vmatprep.subr.bf16.mxu0 0
  %448 = vmatpush2.bf16.msra.mxu0 0
  %449 = vmatprep.subr.bf16.mxu0 0
  %450 = vmatpush2.bf16.msra.mxu0 0
  %451 = vmatprep.subr.bf16.mxu0 0
  %452 = vmatpush2.bf16.msra.mxu0 0
  %453 = vmatprep.subr.bf16.mxu0 0
  %454 = vmatpush2.bf16.msra.mxu0 0
  %455 = vmatprep.mubr.bf16.mxu0 0
  %456 = vmatmul.mubr.bf16.gmra.mxu0 %v315
  %v457 = vpop.f32.mrf.mxu0
  %v458 = vadd.f32 %v370, %v457
  %v459 = vpop.f32.mrf.mxu0
  %v460 = vpop.f32.mrf.mxu0
  %v461 = vadd.f32 %v373, %v460
  %v462 = vpop.f32.mrf.mxu0
  %463 = vmatprep.mubr.bf16.mxu0 0
  %464 = vmatmul.mubr.bf16.gmra.mxu0 %v318
  %v465 = vpop.f32.mrf.mxu0
  %v466 = vadd.f32 %v378, %v465
  %v467 = vpop.f32.mrf.mxu0
  %v468 = vpop.f32.mrf.mxu0
  %v469 = vadd.f32 %v381, %v468
  %v470 = vpop.f32.mrf.mxu0
  %471 = vmatprep.mubr.bf16.mxu0 0
  %472 = vmatmul.mubr.bf16.gmra.mxu0 %v321
  %v473 = vpop.f32.mrf.mxu0
  %v474 = vadd.f32 %v386, %v473
  %v475 = vpop.f32.mrf.mxu0
  %v476 = vpop.f32.mrf.mxu0
  %v477 = vadd.f32 %v389, %v476
  %v478 = vpop.f32.mrf.mxu0
  %479 = vmatprep.mubr.bf16.mxu0 0
  %480 = vmatmul.mubr.bf16.gmra.mxu0 %v324
  %v481 = vpop.f32.mrf.mxu0
  %v482 = vadd.f32 %v394, %v481
  %v483 = vpop.f32.mrf.mxu0
  %v484 = vpop.f32.mrf.mxu0
  %v485 = vadd.f32 %v397, %v484
  %v486 = vpop.f32.mrf.mxu0
  %487 = vmatprep.mubr.bf16.mxu0 0
  %488 = vmatmul.mubr.bf16.gmra.mxu0 %v327
  %v489 = vpop.f32.mrf.mxu0
  %v490 = vadd.f32 %v402, %v489
  %v491 = vpop.f32.mrf.mxu0
  %v492 = vpop.f32.mrf.mxu0
  %v493 = vadd.f32 %v405, %v492
  %v494 = vpop.f32.mrf.mxu0
  %495 = vmatprep.mubr.bf16.mxu0 0
  %496 = vmatmul.mubr.bf16.gmra.mxu0 %v330
  %v497 = vpop.f32.mrf.mxu0
  %v498 = vadd.f32 %v410, %v497
  %v499 = vpop.f32.mrf.mxu0
  %v500 = vpop.f32.mrf.mxu0
  %v501 = vadd.f32 %v413, %v500
  %v502 = vpop.f32.mrf.mxu0
  %503 = vmatprep.mubr.bf16.mxu0 0
  %504 = vmatmul.mubr.bf16.gmra.mxu0 %v333
  %v505 = vpop.f32.mrf.mxu0
  %v506 = vadd.f32 %v418, %v505
  %v507 = vpop.f32.mrf.mxu0
  %v508 = vpop.f32.mrf.mxu0
  %v509 = vpop.f32.mrf.mxu0
  %510 = vdwg.mxu0
  %v511 = vld [vmem:[%s4] sm:$0x1]
  %v512 = vld [vmem:[%s5] sm:$0x1]
  %v513 = vsel %vm313, %v458, 0.0
  %v514 = vsel %vm313, %v461, 0.0
  %v515 = vadd.f32 %v513, %v514
  %v516 = vsel %vm313, %v466, 0.0
  %v517 = vadd.f32 %v515, %v516
  %v518 = vsel %vm313, %v469, 0.0
  %v519 = vadd.f32 %v517, %v518
  %v520 = vsel %vm313, %v474, 0.0
  %v521 = vadd.f32 %v519, %v520
  %v522 = vsel %vm313, %v477, 0.0
  %v523 = vadd.f32 %v521, %v522
  %v524 = vsel %vm313, %v482, 0.0
  %v525 = vadd.f32 %v523, %v524
  %v526 = vsel %vm313, %v485, 0.0
  %v527 = vadd.f32 %v525, %v526
  %v528 = vsel %vm313, %v490, 0.0
  %v529 = vadd.f32 %v527, %v528
  %v530 = vsel %vm313, %v493, 0.0
  %v531 = vadd.f32 %v529, %v530
  %v532 = vsel %vm313, %v498, 0.0
  %v533 = vadd.f32 %v531, %v532
  %v534 = vsel %vm313, %v501, 0.0
  %v535 = vadd.f32 %v533, %v534
  %vm536 = vcmask 254976
  %v537 = vsel %vm536, %v506, 0.0
  %v538 = vadd.f32 %v535, %v537
  %v539 = vrot.slane %v538, 4
  %v540 = vadd.f32 %v538, %v539
  %v541 = vrot.slane %v540, 2
  %v542 = vadd.f32 %v540, %v541
  %v543 = vrot.slane %v542, 1
  %v544 = vadd.f32 %v542, %v543
  %v545 = vrcp.pop 98.0
  %v546 = vmul.f32 %v544, %v545
  %v547 = vsub.f32 %v458, %v546
  %v548 = vsub.f32 %v461, %v546
  %v549 = vsub.f32 %v466, %v546
  %v550 = vsub.f32 %v469, %v546
  %v551 = vsub.f32 %v474, %v546
  %v552 = vsub.f32 %v477, %v546
  %v553 = vsub.f32 %v482, %v546
  %v554 = vsub.f32 %v485, %v546
  %v555 = vsub.f32 %v490, %v546
  %v556 = vsub.f32 %v493, %v546
  %v557 = vsub.f32 %v498, %v546
  %v558 = vsub.f32 %v501, %v546
  %v559 = vsub.f32 %v506, %v546
  %v560 = vmul.f32 %v547, %v547
  %v561 = vmul.f32 %v548, %v548
  %v562 = vmul.f32 %v549, %v549
  %v563 = vmul.f32 %v550, %v550
  %v564 = vmul.f32 %v551, %v551
  %v565 = vmul.f32 %v552, %v552
  %v566 = vmul.f32 %v553, %v553
  %v567 = vmul.f32 %v554, %v554
  %v568 = vmul.f32 %v555, %v555
  %v569 = vmul.f32 %v556, %v556
  %v570 = vmul.f32 %v557, %v557
  %v571 = vmul.f32 %v558, %v558
  %v572 = vmul.f32 %v559, %v559
  %v573 = vsel %vm313, %v560, 0.0
  %v574 = vsel %vm313, %v561, 0.0
  %v575 = vadd.f32 %v573, %v574
  %v576 = vsel %vm313, %v562, 0.0
  %v577 = vadd.f32 %v575, %v576
  %v578 = vsel %vm313, %v563, 0.0
  %v579 = vadd.f32 %v577, %v578
  %v580 = vsel %vm313, %v564, 0.0
  %v581 = vadd.f32 %v579, %v580
  %v582 = vsel %vm313, %v565, 0.0
  %v583 = vadd.f32 %v581, %v582
  %v584 = vsel %vm313, %v566, 0.0
  %v585 = vadd.f32 %v583, %v584
  %v586 = vsel %vm313, %v567, 0.0
  %v587 = vadd.f32 %v585, %v586
  %v588 = vsel %vm313, %v568, 0.0
  %v589 = vadd.f32 %v587, %v588
  %v590 = vsel %vm313, %v569, 0.0
  %v591 = vadd.f32 %v589, %v590
  %v592 = vsel %vm313, %v570, 0.0
  %v593 = vadd.f32 %v591, %v592
  %v594 = vsel %vm313, %v571, 0.0
  %v595 = vadd.f32 %v593, %v594
  %v596 = vsel %vm536, %v572, 0.0
  %v597 = vadd.f32 %v595, %v596
  %v598 = vrot.slane %v597, 4
  %v599 = vadd.f32 %v597, %v598
  %v600 = vrot.slane %v599, 2
  %v601 = vadd.f32 %v599, %v600
  %v602 = vrot.slane %v601, 1
  %v603 = vadd.f32 %v601, %v602
  %v604 = vmul.f32 %v603, %v545
  %v605 = vadd.f32 %v604, 1e-05
  %v606 = vrsqrt.pop %v605
  %v607 = vmul.f32 %v547, %v606
  %v608 = vmul.f32 %v548, %v606
  %v609 = vmul.f32 %v549, %v606
  %v610 = vmul.f32 %v550, %v606
  %v611 = vmul.f32 %v551, %v606
  %v612 = vmul.f32 %v552, %v606
  %v613 = vmul.f32 %v553, %v606
  %v614 = vmul.f32 %v554, %v606
  %v615 = vmul.f32 %v555, %v606
  %v616 = vmul.f32 %v556, %v606
  %v617 = vmul.f32 %v557, %v606
  %v618 = vmul.f32 %v558, %v606
  %v619 = vmul.f32 %v559, %v606
  %v621 = vlaneseq
  %v622 = vshrl.u32 %v621, 7
  %v623 = vsub.s32 0, %v622
  %v624 = vrot.slane %v511, %v623
  %v626 = vmul.f32 %v607, %v624
  %v627 = vmul.f32 %v608, %v624
  %v628 = vmul.f32 %v609, %v624
  %v629 = vmul.f32 %v610, %v624
  %v630 = vmul.f32 %v611, %v624
  %v631 = vmul.f32 %v612, %v624
  %v632 = vmul.f32 %v613, %v624
  %v633 = vmul.f32 %v614, %v624
  %v634 = vmul.f32 %v615, %v624
  %v635 = vmul.f32 %v616, %v624
  %v636 = vmul.f32 %v617, %v624
  %v637 = vmul.f32 %v618, %v624
  %v638 = vmul.f32 %v619, %v624
  %v640 = vlaneseq
  %v641 = vshrl.u32 %v640, 7
  %v642 = vsub.s32 0, %v641
  %v643 = vrot.slane %v512, %v642
  %v645 = vadd.f32 %v626, %v643
  %v646 = vadd.f32 %v627, %v643
  %v647 = vadd.f32 %v628, %v643
  %v648 = vadd.f32 %v629, %v643
  %v649 = vadd.f32 %v630, %v643
  %v650 = vadd.f32 %v631, %v643
  %v651 = vadd.f32 %v632, %v643
  %v652 = vadd.f32 %v633, %v643
  %v653 = vadd.f32 %v634, %v643
  %v654 = vadd.f32 %v635, %v643
  %v655 = vadd.f32 %v636, %v643
  %v656 = vadd.f32 %v637, %v643
  %v657 = vadd.f32 %v638, %v643
  %v658 = vmax.f32 %v645, 0.0
  %v659 = vmax.f32 %v646, 0.0
  %v660 = vmax.f32 %v647, 0.0
  %v661 = vmax.f32 %v648, 0.0
  %v662 = vmax.f32 %v649, 0.0
  %v663 = vmax.f32 %v650, 0.0
  %v664 = vmax.f32 %v651, 0.0
  %v665 = vmax.f32 %v652, 0.0
  %v666 = vmax.f32 %v653, 0.0
  %v667 = vmax.f32 %v654, 0.0
  %v668 = vmax.f32 %v655, 0.0
  %v669 = vmax.f32 %v656, 0.0
  %v670 = vmax.f32 %v657, 0.0
  %v671 = vpack.c.bf16 %v659, %v658
  %v672 = vpack.c.bf16 %v661, %v660
  %v673 = vpack.c.bf16 %v663, %v662
  %v674 = vpack.c.bf16 %v665, %v664
  %v675 = vpack.c.bf16 %v667, %v666
  %v676 = vpack.c.bf16 %v669, %v668
  %v677 = vpack.c.bf16 %v670, %v670
  %v678 = vld [vmem:[%s6] sm:$0xf]
  %v679 = vld [vmem:[%s6 + $0x4] sm:$0xf]
  %v680 = vld [vmem:[%s6 + $0x8] sm:$0xf]
  %v681 = vld [vmem:[%s6 + $0xc] sm:$0xf]
  %v682 = vld [vmem:[%s7] sm:$0x1]
  %v684 = vlaneseq
  %v685 = vshrl.u32 %v684, 7
  %v686 = vsub.s32 0, %v685
  %v687 = vrot.slane %v682, %v686
  %v693 = vunpack.c.l.b16 %v678
  %v694 = vunpack.c.l.b16 %v679
  %v695 = vunpack.c.l.b16 %v680
  %v696 = vunpack.c.l.b16 %v681
  %v697 = vpack.c.b16 %v694, %v693
  %v698 = vpack.c.b16 %v696, %v695
  %v702 = vsel %vm313, %v671, 0
  %v705 = vsel %vm313, %v672, 0
  %v708 = vsel %vm313, %v673, 0
  %v711 = vsel %vm313, %v674, 0
  %v714 = vsel %vm313, %v675, 0
  %v717 = vsel %vm313, %v676, 0
  %v720 = vsel %vm313, %v677, 0
  %722 = vmatprep.subr.bf16.mxu0 0
  %723 = vmatpush1.bf16.msra.mxu0 0
  %724 = vmatprep.subr.bf16.mxu0 0
  %725 = vmatpush1.bf16.msra.mxu0 0
  %726 = vmatprep.subr.bf16.mxu0 0
  %727 = vmatpush1.bf16.msra.mxu0 0
  %728 = vmatprep.subr.bf16.mxu0 0
  %729 = vmatpush1.bf16.msra.mxu0 0
  %730 = vmatprep.subr.bf16.mxu0 0
  %731 = vmatpush1.bf16.msra.mxu0 0
  %732 = vmatprep.subr.bf16.mxu0 0
  %733 = vmatpush1.bf16.msra.mxu0 0
  %734 = vmatprep.subr.bf16.mxu0 0
  %735 = vmatpush1.bf16.msra.mxu0 %v698
  %736 = vmatprep.subr.bf16.mxu0 0
  %737 = vmatpush1.bf16.msra.mxu0 %v697
  %738 = vmatprep.subr.bf16.mxu0 0
  %739 = vmatpush2.bf16.msra.mxu0 0
  %740 = vmatprep.subr.bf16.mxu0 0
  %741 = vmatpush2.bf16.msra.mxu0 0
  %742 = vmatprep.subr.bf16.mxu0 0
  %743 = vmatpush2.bf16.msra.mxu0 0
  %744 = vmatprep.subr.bf16.mxu0 0
  %745 = vmatpush2.bf16.msra.mxu0 0
  %746 = vmatprep.subr.bf16.mxu0 0
  %747 = vmatpush2.bf16.msra.mxu0 0
  %748 = vmatprep.subr.bf16.mxu0 0
  %749 = vmatpush2.bf16.msra.mxu0 0
  %750 = vmatprep.subr.bf16.mxu0 0
  %751 = vmatpush2.bf16.msra.mxu0 0
  %752 = vmatprep.subr.bf16.mxu0 0
  %753 = vmatpush2.bf16.msra.mxu0 0
  %754 = vmatprep.mubr.bf16.mxu0 0
  %755 = vmatmul.mubr.bf16.gmra.mxu0 %v702
  %v756 = vpop.f32.mrf.mxu0
  %v757 = vadd.f32 %v687, %v756
  %v758 = vpop.f32.mrf.mxu0
  %v759 = vpop.f32.mrf.mxu0
  %v760 = vadd.f32 %v687, %v759
  %v761 = vpop.f32.mrf.mxu0
  %762 = vmatprep.mubr.bf16.mxu0 0
  %763 = vmatmul.mubr.bf16.gmra.mxu0 %v705
  %v764 = vpop.f32.mrf.mxu0
  %v765 = vadd.f32 %v687, %v764
  %v766 = vpop.f32.mrf.mxu0
  %v767 = vpop.f32.mrf.mxu0
  %v768 = vadd.f32 %v687, %v767
  %v769 = vpop.f32.mrf.mxu0
  %770 = vmatprep.mubr.bf16.mxu0 0
  %771 = vmatmul.mubr.bf16.gmra.mxu0 %v708
  %v772 = vpop.f32.mrf.mxu0
  %v773 = vadd.f32 %v687, %v772
  %v774 = vpop.f32.mrf.mxu0
  %v775 = vpop.f32.mrf.mxu0
  %v776 = vadd.f32 %v687, %v775
  %v777 = vpop.f32.mrf.mxu0
  %778 = vmatprep.mubr.bf16.mxu0 0
  %779 = vmatmul.mubr.bf16.gmra.mxu0 %v711
  %v780 = vpop.f32.mrf.mxu0
  %v781 = vadd.f32 %v687, %v780
  %v782 = vpop.f32.mrf.mxu0
  %v783 = vpop.f32.mrf.mxu0
  %v784 = vadd.f32 %v687, %v783
  %v785 = vpop.f32.mrf.mxu0
  %786 = vmatprep.mubr.bf16.mxu0 0
  %787 = vmatmul.mubr.bf16.gmra.mxu0 %v714
  %v788 = vpop.f32.mrf.mxu0
  %v789 = vadd.f32 %v687, %v788
  %v790 = vpop.f32.mrf.mxu0
  %v791 = vpop.f32.mrf.mxu0
  %v792 = vadd.f32 %v687, %v791
  %v793 = vpop.f32.mrf.mxu0
  %794 = vmatprep.mubr.bf16.mxu0 0
  %795 = vmatmul.mubr.bf16.gmra.mxu0 %v717
  %v796 = vpop.f32.mrf.mxu0
  %v797 = vadd.f32 %v687, %v796
  %v798 = vpop.f32.mrf.mxu0
  %v799 = vpop.f32.mrf.mxu0
  %v800 = vadd.f32 %v687, %v799
  %v801 = vpop.f32.mrf.mxu0
  %802 = vmatprep.mubr.bf16.mxu0 0
  %803 = vmatmul.mubr.bf16.gmra.mxu0 %v720
  %v804 = vpop.f32.mrf.mxu0
  %v805 = vadd.f32 %v687, %v804
  %v806 = vpop.f32.mrf.mxu0
  %v807 = vpop.f32.mrf.mxu0
  %v808 = vpop.f32.mrf.mxu0
  %809 = vdwg.mxu0
  %v810 = vld [vmem:[%s8] sm:$0x1]
  %v811 = vld [vmem:[%s9] sm:$0x1]
  %v812 = vsel %vm313, %v757, 0.0
  %v813 = vsel %vm313, %v760, 0.0
  %v814 = vadd.f32 %v812, %v813
  %v815 = vsel %vm313, %v765, 0.0
  %v816 = vadd.f32 %v814, %v815
  %v817 = vsel %vm313, %v768, 0.0
  %v818 = vadd.f32 %v816, %v817
  %v819 = vsel %vm313, %v773, 0.0
  %v820 = vadd.f32 %v818, %v819
  %v821 = vsel %vm313, %v776, 0.0
  %v822 = vadd.f32 %v820, %v821
  %v823 = vsel %vm313, %v781, 0.0
  %v824 = vadd.f32 %v822, %v823
  %v825 = vsel %vm313, %v784, 0.0
  %v826 = vadd.f32 %v824, %v825
  %v827 = vsel %vm313, %v789, 0.0
  %v828 = vadd.f32 %v826, %v827
  %v829 = vsel %vm313, %v792, 0.0
  %v830 = vadd.f32 %v828, %v829
  %v831 = vsel %vm313, %v797, 0.0
  %v832 = vadd.f32 %v830, %v831
  %v833 = vsel %vm313, %v800, 0.0
  %v834 = vadd.f32 %v832, %v833
  %v835 = vsel %vm536, %v805, 0.0
  %v836 = vadd.f32 %v834, %v835
  %v837 = vrot.slane %v836, 4
  %v838 = vadd.f32 %v836, %v837
  %v839 = vrot.slane %v838, 2
  %v840 = vadd.f32 %v838, %v839
  %v841 = vrot.slane %v840, 1
  %v842 = vadd.f32 %v840, %v841
  %v843 = vmul.f32 %v842, %v545
  %v844 = vsub.f32 %v757, %v843
  %v845 = vsub.f32 %v760, %v843
  %v846 = vsub.f32 %v765, %v843
  %v847 = vsub.f32 %v768, %v843
  %v848 = vsub.f32 %v773, %v843
  %v849 = vsub.f32 %v776, %v843
  %v850 = vsub.f32 %v781, %v843
  %v851 = vsub.f32 %v784, %v843
  %v852 = vsub.f32 %v789, %v843
  %v853 = vsub.f32 %v792, %v843
  %v854 = vsub.f32 %v797, %v843
  %v855 = vsub.f32 %v800, %v843
  %v856 = vsub.f32 %v805, %v843
  %v857 = vmul.f32 %v844, %v844
  %v858 = vmul.f32 %v845, %v845
  %v859 = vmul.f32 %v846, %v846
  %v860 = vmul.f32 %v847, %v847
  %v861 = vmul.f32 %v848, %v848
  %v862 = vmul.f32 %v849, %v849
  %v863 = vmul.f32 %v850, %v850
  %v864 = vmul.f32 %v851, %v851
  %v865 = vmul.f32 %v852, %v852
  %v866 = vmul.f32 %v853, %v853
  %v867 = vmul.f32 %v854, %v854
  %v868 = vmul.f32 %v855, %v855
  %v869 = vmul.f32 %v856, %v856
  %v870 = vsel %vm313, %v857, 0.0
  %v871 = vsel %vm313, %v858, 0.0
  %v872 = vadd.f32 %v870, %v871
  %v873 = vsel %vm313, %v859, 0.0
  %v874 = vadd.f32 %v872, %v873
  %v875 = vsel %vm313, %v860, 0.0
  %v876 = vadd.f32 %v874, %v875
  %v877 = vsel %vm313, %v861, 0.0
  %v878 = vadd.f32 %v876, %v877
  %v879 = vsel %vm313, %v862, 0.0
  %v880 = vadd.f32 %v878, %v879
  %v881 = vsel %vm313, %v863, 0.0
  %v882 = vadd.f32 %v880, %v881
  %v883 = vsel %vm313, %v864, 0.0
  %v884 = vadd.f32 %v882, %v883
  %v885 = vsel %vm313, %v865, 0.0
  %v886 = vadd.f32 %v884, %v885
  %v887 = vsel %vm313, %v866, 0.0
  %v888 = vadd.f32 %v886, %v887
  %v889 = vsel %vm313, %v867, 0.0
  %v890 = vadd.f32 %v888, %v889
  %v891 = vsel %vm313, %v868, 0.0
  %v892 = vadd.f32 %v890, %v891
  %v893 = vsel %vm536, %v869, 0.0
  %v894 = vadd.f32 %v892, %v893
  %v895 = vrot.slane %v894, 4
  %v896 = vadd.f32 %v894, %v895
  %v897 = vrot.slane %v896, 2
  %v898 = vadd.f32 %v896, %v897
  %v899 = vrot.slane %v898, 1
  %v900 = vadd.f32 %v898, %v899
  %v901 = vmul.f32 %v900, %v545
  %v902 = vadd.f32 %v901, 1e-05
  %v903 = vrsqrt.pop %v902
  %v904 = vmul.f32 %v844, %v903
  %v905 = vmul.f32 %v845, %v903
  %v906 = vmul.f32 %v846, %v903
  %v907 = vmul.f32 %v847, %v903
  %v908 = vmul.f32 %v848, %v903
  %v909 = vmul.f32 %v849, %v903
  %v910 = vmul.f32 %v850, %v903
  %v911 = vmul.f32 %v851, %v903
  %v912 = vmul.f32 %v852, %v903
  %v913 = vmul.f32 %v853, %v903
  %v914 = vmul.f32 %v854, %v903
  %v915 = vmul.f32 %v855, %v903
  %v916 = vmul.f32 %v856, %v903
  %v918 = vlaneseq
  %v919 = vshrl.u32 %v918, 7
  %v920 = vsub.s32 0, %v919
  %v921 = vrot.slane %v810, %v920
  %v923 = vmul.f32 %v904, %v921
  %v924 = vmul.f32 %v905, %v921
  %v925 = vmul.f32 %v906, %v921
  %v926 = vmul.f32 %v907, %v921
  %v927 = vmul.f32 %v908, %v921
  %v928 = vmul.f32 %v909, %v921
  %v929 = vmul.f32 %v910, %v921
  %v930 = vmul.f32 %v911, %v921
  %v931 = vmul.f32 %v912, %v921
  %v932 = vmul.f32 %v913, %v921
  %v933 = vmul.f32 %v914, %v921
  %v934 = vmul.f32 %v915, %v921
  %v935 = vmul.f32 %v916, %v921
  %v937 = vlaneseq
  %v938 = vshrl.u32 %v937, 7
  %v939 = vsub.s32 0, %v938
  %v940 = vrot.slane %v811, %v939
  %v942 = vadd.f32 %v923, %v940
  %v943 = vadd.f32 %v924, %v940
  %v944 = vadd.f32 %v925, %v940
  %v945 = vadd.f32 %v926, %v940
  %v946 = vadd.f32 %v927, %v940
  %v947 = vadd.f32 %v928, %v940
  %v948 = vadd.f32 %v929, %v940
  %v949 = vadd.f32 %v930, %v940
  %v950 = vadd.f32 %v931, %v940
  %v951 = vadd.f32 %v932, %v940
  %v952 = vadd.f32 %v933, %v940
  %v953 = vadd.f32 %v934, %v940
  %v954 = vadd.f32 %v935, %v940
  %v955 = vld [vmem:[%s0] sm:$0xf]
  %v956 = vld [vmem:[%s0 + $0x4] sm:$0xf]
  %v957 = vld [vmem:[%s0 + $0x8] sm:$0xf]
  %v958 = vld [vmem:[%s0 + $0xc] sm:$0xf]
  %v959 = vld [vmem:[%s0 + $0x10] sm:$0xf]
  %v960 = vld [vmem:[%s0 + $0x14] sm:$0xf]
  %v961 = vld [vmem:[%s0 + $0x18] sm:$0xf]
  %v962 = vld [vmem:[%s0 + $0x1c] sm:$0xf]
  %v963 = vld [vmem:[%s0 + $0x20] sm:$0xf]
  %v964 = vld [vmem:[%s0 + $0x24] sm:$0xf]
  %v965 = vld [vmem:[%s0 + $0x28] sm:$0xf]
  %v966 = vld [vmem:[%s0 + $0x2c] sm:$0xf]
  %v967 = vld [vmem:[%s0 + $0x30] sm:$0x1]
  %v968 = vunpack.c.l.bf16 %v955
  %v969 = vunpack.c.l.bf16 %v956
  %v970 = vunpack.c.l.bf16 %v957
  %v971 = vunpack.c.l.bf16 %v958
  %v972 = vunpack.c.l.bf16 %v959
  %v973 = vunpack.c.l.bf16 %v960
  %v974 = vunpack.c.l.bf16 %v961
  %v975 = vunpack.c.l.bf16 %v962
  %v976 = vunpack.c.l.bf16 %v963
  %v977 = vunpack.c.l.bf16 %v964
  %v978 = vunpack.c.l.bf16 %v965
  %v979 = vunpack.c.l.bf16 %v966
  %v980 = vunpack.c.l.bf16 %v967
  %v981 = vadd.f32 %v968, %v942
  %v982 = vadd.f32 %v969, %v943
  %v983 = vadd.f32 %v970, %v944
  %v984 = vadd.f32 %v971, %v945
  %v985 = vadd.f32 %v972, %v946
  %v986 = vadd.f32 %v973, %v947
  %v987 = vadd.f32 %v974, %v948
  %v988 = vadd.f32 %v975, %v949
  %v989 = vadd.f32 %v976, %v950
  %v990 = vadd.f32 %v977, %v951
  %v991 = vadd.f32 %v978, %v952
  %v992 = vadd.f32 %v979, %v953
  %v993 = vadd.f32 %v980, %v954
  %v994 = vmax.f32 %v981, 0.0
  %v995 = vmax.f32 %v982, 0.0
  %v996 = vmax.f32 %v983, 0.0
  %v997 = vmax.f32 %v984, 0.0
  %v998 = vmax.f32 %v985, 0.0
  %v999 = vmax.f32 %v986, 0.0
  %v1000 = vmax.f32 %v987, 0.0
  %v1001 = vmax.f32 %v988, 0.0
  %v1002 = vmax.f32 %v989, 0.0
  %v1003 = vmax.f32 %v990, 0.0
  %v1004 = vmax.f32 %v991, 0.0
  %v1005 = vmax.f32 %v992, 0.0
  %v1006 = vmax.f32 %v993, 0.0
  %v1007 = vpack.c.bf16 %v995, %v994
  %v1008 = vpack.c.bf16 %v997, %v996
  %v1009 = vpack.c.bf16 %v999, %v998
  %v1010 = vpack.c.bf16 %v1001, %v1000
  %v1011 = vpack.c.bf16 %v1003, %v1002
  %v1012 = vpack.c.bf16 %v1005, %v1004
  %v1013 = vpack.c.bf16 %v1006, %v1006
  %v1021 = vunpack.c.l.b16 %v1007
  %v1022 = vunpack.c.h.b16 %v1007
  %v1023 = vunpack.c.l.b16 %v1008
  %v1024 = vunpack.c.h.b16 %v1008
  %v1025 = vunpack.c.l.b16 %v1009
  %v1026 = vunpack.c.h.b16 %v1009
  %v1027 = vunpack.c.l.b16 %v1010
  %v1028 = vunpack.c.h.b16 %v1010
  %v1029 = vunpack.c.l.b16 %v1011
  %v1030 = vunpack.c.h.b16 %v1011
  %v1031 = vunpack.c.l.b16 %v1012
  %v1032 = vunpack.c.h.b16 %v1012
  %v1033 = vunpack.c.l.b16 %v1013
  %v1034 = vpack.c.b16 %v1021, %v1021
  %v1035 = vpack.c.b16 %v1022, %v1022
  %v1036 = vpack.c.b16 %v1023, %v1023
  %v1037 = vpack.c.b16 %v1024, %v1024
  %v1038 = vpack.c.b16 %v1025, %v1025
  %v1039 = vpack.c.b16 %v1026, %v1026
  %v1040 = vpack.c.b16 %v1027, %v1027
  %v1041 = vpack.c.b16 %v1028, %v1028
  %v1042 = vpack.c.b16 %v1029, %v1029
  %v1043 = vpack.c.b16 %v1030, %v1030
  %v1044 = vpack.c.b16 %v1031, %v1031
  %v1045 = vpack.c.b16 %v1032, %v1032
  %v1046 = vpack.c.b16 %v1033, %v1033
  %vm1060 = vcmask 257024
  %1061 = vst.msk [vmem:[%s10] sm:$0xf] %vm1060, %v1034
  %1062 = vst.msk [vmem:[%s10 + $0x4] sm:$0xf] %vm1060, %v1035
  %1063 = vst.msk [vmem:[%s10 + $0x8] sm:$0xf] %vm1060, %v1036
  %1064 = vst.msk [vmem:[%s10 + $0xc] sm:$0xf] %vm1060, %v1037
  %1065 = vst.msk [vmem:[%s10 + $0x10] sm:$0xf] %vm1060, %v1038
  %1066 = vst.msk [vmem:[%s10 + $0x14] sm:$0xf] %vm1060, %v1039
  %1067 = vst.msk [vmem:[%s10 + $0x18] sm:$0xf] %vm1060, %v1040
  %1068 = vst.msk [vmem:[%s10 + $0x1c] sm:$0xf] %vm1060, %v1041
  %1069 = vst.msk [vmem:[%s10 + $0x20] sm:$0xf] %vm1060, %v1042
  %1070 = vst.msk [vmem:[%s10 + $0x24] sm:$0xf] %vm1060, %v1043
  %1071 = vst.msk [vmem:[%s10 + $0x28] sm:$0xf] %vm1060, %v1044
  %1072 = vst.msk [vmem:[%s10 + $0x2c] sm:$0xf] %vm1060, %v1045
  %vm1073 = vcmask 253952
  %1074 = vst.msk [vmem:[%s10 + $0x30] sm:$0x1] %vm1073, %v1046
  // Predicated region
  $region42: #{discriminator28_forward.11} parent=0 // pred_check
    _
  $region43: #{discriminator28_forward.11} parent=0 // pred_check_branch
    %1076 = sbr.rel (0) target = $region45
  $region44: #{discriminator28_forward.11} parent=0 // pred_region
    _
  $region45: #{discriminator28_forward.11} parent=0 // pred_fallthru
    _
  // Predicated region
  $region46: #{discriminator28_forward.11} parent=0 // pred_check
    _
  $region47: #{discriminator28_forward.11} parent=0 // pred_check_branch
    %1078 = sbr.rel (0) target = $region49
  $region48: #{discriminator28_forward.11} parent=0 // pred_region
    _
  $region49: #{discriminator28_forward.11} parent=0 // pred_fallthru
    _

// kernel: discriminator28_forward.12
$region0: #{discriminator28_forward.12}
  #allocation0 [shape = 'u32[]', space=smem, size = 0x4, offset = 0x4, fixed_abs, tag = 'smem constant byte address 0x4 - core index']
  #allocation1 [shape = 'u32[144,128]{1,0:T(1,128)}', space=vmem, size = 0x12000, scoped, tag = 'internal scratch']
  %s0 = inlined_call_operand.vmem [shape: bf16[50,288], index: 0, kind: input, shape index: {}]
  %s1 = inlined_call_operand.vmem [shape: bf16[288,32], index: 1, kind: input, shape index: {}]
  %s2 = inlined_call_operand.vmem [shape: f32[1,32], index: 2, kind: input, shape index: {}]
  %s3 = inlined_call_operand.vmem [shape: bf16[50,32], index: 3, kind: output, shape index: {}]
  %s4 = sld [smem:[#allocation0]]
  $region22: #{discriminator28_forward.12} parent=0
    _
  %s6 = ssub.s32 1, %s4
  %s7 = scalar_select 0, %s6, %s4
  // Predicated region
  $region2: #{discriminator28_forward.12} parent=0 // pred_check
    _
  $region3: #{discriminator28_forward.12} parent=0 // pred_check_branch
    %9 = sbr.rel (0) target = $region5
  $region4: #{discriminator28_forward.12} parent=0 // pred_region
    _
  $region5: #{discriminator28_forward.12} parent=0 // pred_fallthru
    _
  // Predicated region
  $region6: #{discriminator28_forward.12} parent=0 // pred_check
    _
  $region7: #{discriminator28_forward.12} parent=0 // pred_check_branch
    %11 = sbr.rel (0) target = $region9
  $region8: #{discriminator28_forward.12} parent=0 // pred_region
    _
  $region9: #{discriminator28_forward.12} parent=0 // pred_fallthru
    _
  // Predicated region
  $region10: #{discriminator28_forward.12} parent=0 // pred_check
    _
  $region11: #{discriminator28_forward.12} parent=0 // pred_check_branch
    %13 = sbr.rel (0) target = $region13
  $region12: #{discriminator28_forward.12} parent=0 // pred_region
    _
  $region13: #{discriminator28_forward.12} parent=0 // pred_fallthru
    _
  %v15 = vld [vmem:[%s0] sm:$0xff]
  %v16 = vld [vmem:[%s0 + $0x8] sm:$0xf]
  %v17 = vld [vmem:[%s0 + $0xc] sm:$0xff]
  %v18 = vld [vmem:[%s0 + $0x14] sm:$0xf]
  %v19 = vld [vmem:[%s0 + $0x18] sm:$0xff]
  %v20 = vld [vmem:[%s0 + $0x20] sm:$0xf]
  %v21 = vld [vmem:[%s0 + $0x24] sm:$0xff]
  %v22 = vld [vmem:[%s0 + $0x2c] sm:$0xf]
  %v23 = vld [vmem:[%s0 + $0x30] sm:$0xff]
  %v24 = vld [vmem:[%s0 + $0x38] sm:$0xf]
  %v25 = vld [vmem:[%s0 + $0x3c] sm:$0xff]
  %v26 = vld [vmem:[%s0 + $0x44] sm:$0xf]
  %v27 = vld [vmem:[%s0 + $0x48] sm:$0x11]
  %v28 = vld [vmem:[%s0 + $0x50] sm:$0x1]
  %v29 = vld [vmem:[%s1] sm:$0xf]
  %v30 = vld [vmem:[%s1 + $0x4] sm:$0xf]
  %v31 = vld [vmem:[%s1 + $0x8] sm:$0xf]
  %v32 = vld [vmem:[%s1 + $0xc] sm:$0xf]
  %v33 = vld [vmem:[%s1 + $0x10] sm:$0xf]
  %v34 = vld [vmem:[%s1 + $0x14] sm:$0xf]
  %v35 = vld [vmem:[%s1 + $0x18] sm:$0xf]
  %v36 = vld [vmem:[%s1 + $0x1c] sm:$0xf]
  %v37 = vld [vmem:[%s1 + $0x20] sm:$0xf]
  %v38 = vld [vmem:[%s1 + $0x24] sm:$0xf]
  %v39 = vld [vmem:[%s1 + $0x28] sm:$0xf]
  %v40 = vld [vmem:[%s1 + $0x2c] sm:$0xf]
  %v41 = vld [vmem:[%s1 + $0x30] sm:$0xf]
  %v42 = vld [vmem:[%s1 + $0x34] sm:$0xf]
  %v43 = vld [vmem:[%s1 + $0x38] sm:$0xf]
  %v44 = vld [vmem:[%s1 + $0x3c] sm:$0xf]
  %v45 = vld [vmem:[%s1 + $0x40] sm:$0xf]
  %v46 = vld [vmem:[%s1 + $0x44] sm:$0xf]
  %v47 = vld [vmem:[%s1 + $0x48] sm:$0xf]
  %v48 = vld [vmem:[%s1 + $0x4c] sm:$0xf]
  %v49 = vld [vmem:[%s1 + $0x50] sm:$0xf]
  %v50 = vld [vmem:[%s1 + $0x54] sm:$0xf]
  %v51 = vld [vmem:[%s1 + $0x58] sm:$0xf]
  %v52 = vld [vmem:[%s1 + $0x5c] sm:$0xf]
  %v53 = vld [vmem:[%s1 + $0x60] sm:$0xf]
  %v54 = vld [vmem:[%s1 + $0x64] sm:$0xf]
  %v55 = vld [vmem:[%s1 + $0x68] sm:$0xf]
  %v56 = vld [vmem:[%s1 + $0x6c] sm:$0xf]
  %v57 = vld [vmem:[%s1 + $0x70] sm:$0xf]
  %v58 = vld [vmem:[%s1 + $0x74] sm:$0xf]
  %v59 = vld [vmem:[%s1 + $0x78] sm:$0xf]
  %v60 = vld [vmem:[%s1 + $0x7c] sm:$0xf]
  %v61 = vld [vmem:[%s1 + $0x80] sm:$0xf]
  %v62 = vld [vmem:[%s1 + $0x84] sm:$0xf]
  %v63 = vld [vmem:[%s1 + $0x88] sm:$0xf]
  %v64 = vld [vmem:[%s1 + $0x8c] sm:$0xf]
  %v65 = vld [vmem:[%s2] sm:$0x1]
  %v67 = vlaneseq
  %v68 = vshrl.u32 %v67, 7
  %v69 = vsub.s32 0, %v68
  %v70 = vrot.slane %v65, %v69
  %v86 = vunpack.c.l.b16 %v15
  %v87 = vunpack.c.h.b16 %v15
  %v88 = vunpack.c.l.b16 %v16
  %v89 = vunpack.c.l.b16 %v17
  %v90 = vunpack.c.h.b16 %v17
  %v91 = vunpack.c.l.b16 %v18
  %v92 = vunpack.c.l.b16 %v19
  %v93 = vunpack.c.h.b16 %v19
  %v94 = vunpack.c.l.b16 %v20
  %v95 = vunpack.c.l.b16 %v21
  %v96 = vunpack.c.h.b16 %v21
  %v97 = vunpack.c.l.b16 %v22
  %v98 = vunpack.c.l.b16 %v23
  %v99 = vunpack.c.h.b16 %v23
  %v100 = vunpack.c.l.b16 %v24
  %v101 = vunpack.c.l.b16 %v25
  %v102 = vunpack.c.h.b16 %v25
  %v103 = vunpack.c.l.b16 %v26
  %v104 = vunpack.c.l.b16 %v27
  %v105 = vunpack.c.h.b16 %v27
  %v106 = vunpack.c.l.b16 %v28
  %v107 = vpack.c.b16 %v89, %v86
  %v108 = vpack.c.b16 %v90, %v87
  %v109 = vpack.c.b16 %v91, %v88
  %v110 = vpack.c.b16 %v95, %v92
  %v111 = vpack.c.b16 %v96, %v93
  %v112 = vpack.c.b16 %v97, %v94
  %v113 = vpack.c.b16 %v101, %v98
  %v114 = vpack.c.b16 %v102, %v99
  %v115 = vpack.c.b16 %v103, %v100
  %v116 = vpack.c.b16 %v104, %v104
  %v117 = vpack.c.b16 %v105, %v105
  %v118 = vpack.c.b16 %v106, %v106
  %v163 = vunpack.c.l.b16 %v29
  %v164 = vunpack.c.l.b16 %v30
  %v165 = vunpack.c.l.b16 %v31
  %v166 = vunpack.c.l.b16 %v32
  %v167 = vunpack.c.l.b16 %v33
  %v168 = vunpack.c.l.b16 %v34
  %v169 = vunpack.c.l.b16 %v35
  %v170 = vunpack.c.l.b16 %v36
  %v171 = vunpack.c.l.b16 %v37
  %v172 = vunpack.c.l.b16 %v38
  %v173 = vunpack.c.l.b16 %v39
  %v174 = vunpack.c.l.b16 %v40
  %v175 = vunpack.c.l.b16 %v41
  %v176 = vunpack.c.l.b16 %v42
  %v177 = vunpack.c.l.b16 %v43
  %v178 = vunpack.c.l.b16 %v44
  %v179 = vunpack.c.l.b16 %v45
  %v180 = vunpack.c.l.b16 %v46
  %v181 = vunpack.c.l.b16 %v47
  %v182 = vunpack.c.l.b16 %v48
  %v183 = vunpack.c.l.b16 %v49
  %v184 = vunpack.c.l.b16 %v50
  %v185 = vunpack.c.l.b16 %v51
  %v186 = vunpack.c.l.b16 %v52
  %v187 = vunpack.c.l.b16 %v53
  %v188 = vunpack.c.l.b16 %v54
  %v189 = vunpack.c.l.b16 %v55
  %v190 = vunpack.c.l.b16 %v56
  %v191 = vunpack.c.l.b16 %v57
  %v192 = vunpack.c.l.b16 %v58
  %v193 = vunpack.c.l.b16 %v59
  %v194 = vunpack.c.l.b16 %v60
  %v195 = vunpack.c.l.b16 %v61
  %v196 = vunpack.c.l.b16 %v62
  %v197 = vunpack.c.l.b16 %v63
  %v198 = vunpack.c.l.b16 %v64
  %v199 = vpack.c.b16 %v164, %v163
  %v200 = vpack.c.b16 %v166, %v165
  %v201 = vpack.c.b16 %v168, %v167
  %v202 = vpack.c.b16 %v170, %v169
  %v203 = vpack.c.b16 %v172, %v171
  %v204 = vpack.c.b16 %v174, %v173
  %v205 = vpack.c.b16 %v176, %v175
  %v206 = vpack.c.b16 %v178, %v177
  %v207 = vpack.c.b16 %v180, %v179
  %v208 = vpack.c.b16 %v182, %v181
  %v209 = vpack.c.b16 %v184, %v183
  %v210 = vpack.c.b16 %v186, %v185
  %v211 = vpack.c.b16 %v188, %v187
  %v212 = vpack.c.b16 %v190, %v189
  %v213 = vpack.c.b16 %v192, %v191
  %v214 = vpack.c.b16 %v194, %v193
  %v215 = vpack.c.b16 %v196, %v195
  %v216 = vpack.c.b16 %v198, %v197
  %vm235 = vcmask 261120
  %v237 = vsel %vm235, %v109, 0
  %v240 = vsel %vm235, %v112, 0
  %v243 = vsel %vm235, %v115, 0
  %v246 = vsel %vm235, %v118, 0
  %248 = vmatprep.subr.bf16.mxu0 0
  %249 = vmatpush1.bf16.msra.mxu0 %v206
  %250 = vmatprep.subr.bf16.mxu0 0
  %251 = vmatpush1.bf16.msra.mxu0 %v205
  %252 = vmatprep.subr.bf16.mxu0 0
  %253 = vmatpush1.bf16.msra.mxu0 %v204
  %254 = vmatprep.subr.bf16.mxu0 0
  %255 = vmatpush1.bf16.msra.mxu0 %v203
  %256 = vmatprep.subr.bf16.mxu0 0
  %257 = vmatpush1.bf16.msra.mxu0 %v202
  %258 = vmatprep.subr.bf16.mxu0 0
  %259 = vmatpush1.bf16.msra.mxu0 %v201
  %260 = vmatprep.subr.bf16.mxu0 0
  %261 = vmatpush1.bf16.msra.mxu0 %v200
  %262 = vmatprep.subr.bf16.mxu0 0
  %263 = vmatpush1.bf16.msra.mxu0 %v199
  %264 = vmatprep.subr.bf16.mxu0 0
  %265 = vmatpush2.bf16.msra.mxu0 %v214
  %266 = vmatprep.subr.bf16.mxu0 0
  %267 = vmatpush2.bf16.msra.mxu0 %v213
  %268 = vmatprep.subr.bf16.mxu0 0
  %269 = vmatpush2.bf16.msra.mxu0 %v212
  %270 = vmatprep.subr.bf16.mxu0 0
  %271 = vmatpush2.bf16.msra.mxu0 %v211
  %272 = vmatprep.subr.bf16.mxu0 0
  %273 = vmatpush2.bf16.msra.mxu0 %v210
  %274 = vmatprep.subr.bf16.mxu0 0
  %275 = vmatpush2.bf16.msra.mxu0 %v209
  %276 = vmatprep.subr.bf16.mxu0 0
  %277 = vmatpush2.bf16.msra.mxu0 %v208
  %278 = vmatprep.subr.bf16.mxu0 0
  %279 = vmatpush2.bf16.msra.mxu0 %v207
  %280 = vmatprep.mubr.bf16.mxu0 %v108
  %281 = vmatmul.mubr.bf16.gmra.mxu0 %v107
  %v282 = vpop.f32.mrf.mxu0
  %v283 = vadd.f32 %v70, %v282
  %v284 = vpop.f32.mrf.mxu0
  %v285 = vpop.f32.mrf.mxu0
  %v286 = vadd.f32 %v70, %v285
  %v287 = vpop.f32.mrf.mxu0
  %288 = vmatprep.mubr.bf16.mxu0 %v111
  %289 = vmatmul.mubr.bf16.gmra.mxu0 %v110
  %v290 = vpop.f32.mrf.mxu0
  %v291 = vadd.f32 %v70, %v290
  %v292 = vpop.f32.mrf.mxu0
  %v293 = vpop.f32.mrf.mxu0
  %v294 = vadd.f32 %v70, %v293
  %v295 = vpop.f32.mrf.mxu0
  %296 = vmatprep.mubr.bf16.mxu0 %v114
  %297 = vmatmul.mubr.bf16.gmra.mxu0 %v113
  %v298 = vpop.f32.mrf.mxu0
  %v299 = vadd.f32 %v70, %v298
  %v300 = vpop.f32.mrf.mxu0
  %v301 = vpop.f32.mrf.mxu0
  %v302 = vadd.f32 %v70, %v301
  %v303 = vpop.f32.mrf.mxu0
  %304 = vmatprep.mubr.bf16.mxu0 %v117
  %305 = vmatmul.mubr.bf16.gmra.mxu0 %v116
  %v306 = vpop.f32.mrf.mxu0
  %v307 = vadd.f32 %v70, %v306
  %v308 = vpop.f32.mrf.mxu0
  %v309 = vpop.f32.mrf.mxu0
  %v310 = vpop.f32.mrf.mxu0
  %311 = vdwg.mxu0
  %312 = vmatprep.subr.bf16.mxu0 0
  %313 = vmatpush1.bf16.msra.mxu0 0
  %314 = vmatprep.subr.bf16.mxu0 0
  %315 = vmatpush1.bf16.msra.mxu0 0
  %316 = vmatprep.subr.bf16.mxu0 0
  %317 = vmatpush1.bf16.msra.mxu0 0
  %318 = vmatprep.subr.bf16.mxu0 0
  %319 = vmatpush1.bf16.msra.mxu0 0
  %320 = vmatprep.subr.bf16.mxu0 0
  %321 = vmatpush1.bf16.msra.mxu0 0
  %322 = vmatprep.subr.bf16.mxu0 0
  %323 = vmatpush1.bf16.msra.mxu0 0
  %324 = vmatprep.subr.bf16.mxu0 0
  %325 = vmatpush1.bf16.msra.mxu0 %v216
  %326 = vmatprep.subr.bf16.mxu0 0
  %327 = vmatpush1.bf16.msra.mxu0 %v215
  %328 = vmatprep.subr.bf16.mxu0 0
  %329 = vmatpush2.bf16.msra.mxu0 0
  %330 = vmatprep.subr.bf16.mxu0 0
  %331 = vmatpush2.bf16.msra.mxu0 0
  %332 = vmatprep.subr.bf16.mxu0 0
  %333 = vmatpush2.bf16.msra.mxu0 0
  %334 = vmatprep.subr.bf16.mxu0 0
  %335 = vmatpush2.bf16.msra.mxu0 0
  %336 = vmatprep.subr.bf16.mxu0 0
  %337 = vmatpush2.bf16.msra.mxu0 0
  %338 = vmatprep.subr.bf16.mxu0 0
  %339 = vmatpush2.bf16.msra.mxu0 0
  %340 = vmatprep.subr.bf16.mxu0 0
  %341 = vmatpush2.bf16.msra.mxu0 0
  %342 = vmatprep.subr.bf16.mxu0 0
  %343 = vmatpush2.bf16.msra.mxu0 0
  %344 = vmatprep.mubr.bf16.mxu0 0
  %345 = vmatmul.mubr.bf16.gmra.mxu0 %v237
  %v346 = vpop.f32.mrf.mxu0
  %v347 = vadd.f32 %v283, %v346
  %v348 = vpop.f32.mrf.mxu0
  %v349 = vpop.f32.mrf.mxu0
  %v350 = vadd.f32 %v286, %v349
  %v351 = vpop.f32.mrf.mxu0
  %352 = vmatprep.mubr.bf16.mxu0 0
  %353 = vmatmul.mubr.bf16.gmra.mxu0 %v240
  %v354 = vpop.f32.mrf.mxu0
  %v355 = vadd.f32 %v291, %v354
  %v356 = vpop.f32.mrf.mxu0
  %v357 = vpop.f32.mrf.mxu0
  %v358 = vadd.f32 %v294, %v357
  %v359 = vpop.f32.mrf.mxu0
  %360 = vmatprep.mubr.bf16.mxu0 0
  %361 = vmatmul.mubr.bf16.gmra.mxu0 %v243
  %v362 = vpop.f32.mrf.mxu0
  %v363 = vadd.f32 %v299, %v362
  %v364 = vpop.f32.mrf.mxu0
  %v365 = vpop.f32.mrf.mxu0
  %v366 = vadd.f32 %v302, %v365
  %v367 = vpop.f32.mrf.mxu0
  %368 = vmatprep.mubr.bf16.mxu0 0
  %369 = vmatmul.mubr.bf16.gmra.mxu0 %v246
  %v370 = vpop.f32.mrf.mxu0
  %v371 = vadd.f32 %v307, %v370
  %v372 = vpop.f32.mrf.mxu0
  %v373 = vpop.f32.mrf.mxu0
  %v374 = vpop.f32.mrf.mxu0
  %375 = vdwg.mxu0
  %v376 = vmax.f32 %v347, 0.0
  %v377 = vmax.f32 %v350, 0.0
  %v378 = vmax.f32 %v355, 0.0
  %v379 = vmax.f32 %v358, 0.0
  %v380 = vmax.f32 %v363, 0.0
  %v381 = vmax.f32 %v366, 0.0
  %v382 = vmax.f32 %v371, 0.0
  %v383 = vpack.c.bf16 %v377, %v376
  %v384 = vpack.c.bf16 %v379, %v378
  %v385 = vpack.c.bf16 %v381, %v380
  %v386 = vpack.c.bf16 %v382, %v382
  %v391 = vunpack.c.l.b16 %v383
  %v392 = vunpack.c.h.b16 %v383
  %v393 = vunpack.c.l.b16 %v384
  %v394 = vunpack.c.h.b16 %v384
  %v395 = vunpack.c.l.b16 %v385
  %v396 = vunpack.c.h.b16 %v385
  %v397 = vunpack.c.l.b16 %v386
  %v398 = vpack.c.b16 %v391, %v391
  %v399 = vpack.c.b16 %v392, %v392
  %v400 = vpack.c.b16 %v393, %v393
  %v401 = vpack.c.b16 %v394, %v394
  %v402 = vpack.c.b16 %v395, %v395
  %v403 = vpack.c.b16 %v396, %v396
  %v404 = vpack.c.b16 %v397, %v397
  %vm412 = vcmask 257024
  %413 = vst.msk [vmem:[%s3] sm:$0xf] %vm412, %v398
  %414 = vst.msk [vmem:[%s3 + $0x4] sm:$0xf] %vm412, %v399
  %415 = vst.msk [vmem:[%s3 + $0x8] sm:$0xf] %vm412, %v400
  %416 = vst.msk [vmem:[%s3 + $0xc] sm:$0xf] %vm412, %v401
  %417 = vst.msk [vmem:[%s3 + $0x10] sm:$0xf] %vm412, %v402
  %418 = vst.msk [vmem:[%s3 + $0x14] sm:$0xf] %vm412, %v403
  %vm419 = vcmask 253952
  %420 = vst.msk [vmem:[%s3 + $0x18] sm:$0x1] %vm419, %v404
  // Predicated region
  $region14: #{discriminator28_forward.12} parent=0 // pred_check
    _
  $region15: #{discriminator28_forward.12} parent=0 // pred_check_branch
    %422 = sbr.rel (0) target = $region17
  $region16: #{discriminator28_forward.12} parent=0 // pred_region
    _
  $region17: #{discriminator28_forward.12} parent=0 // pred_fallthru
    _
  // Predicated region
  $region18: #{discriminator28_forward.12} parent=0 // pred_check
    _
  $region19: #{discriminator28_forward.12} parent=0 // pred_check_branch
    %424 = sbr.rel (0) target = $region21
  $region20: #{discriminator28_forward.12} parent=0 // pred_region
    _
  $region21: #{discriminator28_forward.12} parent=0 // pred_fallthru
    _

// kernel: discriminator28_forward.13
$region0: #{discriminator28_forward.13}
  #allocation0 [shape = 'u32[]', space=smem, size = 0x4, offset = 0x4, fixed_abs, tag = 'smem constant byte address 0x4 - core index']
  #allocation1 [shape = 'u32[144,128]{1,0:T(1,128)}', space=vmem, size = 0x12000, scoped, tag = 'internal scratch']
  #allocation2 [shape = 'f32[1,1]{1,0:T(1,128)S(1)}', space=vmem, size = 0x200, scoped, tag = 'scoped memory for discriminator28_forward.13']
  %s0 = inlined_call_operand.vmem [shape: bf16[18,288], index: 0, kind: input, shape index: {}]
  %s1 = inlined_call_operand.vmem [shape: bf16[288,32], index: 1, kind: input, shape index: {}]
  %s2 = inlined_call_operand.vmem [shape: f32[1,32], index: 2, kind: input, shape index: {}]
  %s3 = inlined_call_operand.vmem [shape: f32[2,18], index: 3, kind: input, shape index: {}]
  %s4 = inlined_call_operand.vmem [shape: f32[32,1], index: 4, kind: input, shape index: {}]
  %s5 = inlined_call_operand.<no memory space> [shape: f32[1,1], index: 5, kind: input, shape index: {}]
  %s6 = inlined_call_operand.vmem [shape: f32[2,1], index: 6, kind: output, shape index: {}]
  %s7 = sld [smem:[#allocation0]]
  $region34: #{discriminator28_forward.13} parent=0
    _
  %s9 = ssub.s32 1, %s7
  %s10 = scalar_select 0, %s9, %s7
  %v11 = vstv %s5
  %12 = vst [vmem:[#allocation2] sm:$0x1] %v11
  // Predicated region
  $region2: #{discriminator28_forward.13} parent=0 // pred_check
    _
  $region3: #{discriminator28_forward.13} parent=0 // pred_check_branch
    %14 = sbr.rel (0) target = $region5
  $region4: #{discriminator28_forward.13} parent=0 // pred_region
    _
  $region5: #{discriminator28_forward.13} parent=0 // pred_fallthru
    _
  // Predicated region
  $region6: #{discriminator28_forward.13} parent=0 // pred_check
    _
  $region7: #{discriminator28_forward.13} parent=0 // pred_check_branch
    %16 = sbr.rel (0) target = $region9
  $region8: #{discriminator28_forward.13} parent=0 // pred_region
    _
  $region9: #{discriminator28_forward.13} parent=0 // pred_fallthru
    _
  // Predicated region
  $region10: #{discriminator28_forward.13} parent=0 // pred_check
    _
  $region11: #{discriminator28_forward.13} parent=0 // pred_check_branch
    %18 = sbr.rel (0) target = $region13
  $region12: #{discriminator28_forward.13} parent=0 // pred_region
    _
  $region13: #{discriminator28_forward.13} parent=0 // pred_fallthru
    _
  // Predicated region
  $region14: #{discriminator28_forward.13} parent=0 // pred_check
    _
  $region15: #{discriminator28_forward.13} parent=0 // pred_check_branch
    %20 = sbr.rel (0) target = $region17
  $region16: #{discriminator28_forward.13} parent=0 // pred_region
    _
  $region17: #{discriminator28_forward.13} parent=0 // pred_fallthru
    _
  // Predicated region
  $region18: #{discriminator28_forward.13} parent=0 // pred_check
    _
  $region19: #{discriminator28_forward.13} parent=0 // pred_check_branch
    %22 = sbr.rel (0) target = $region21
  $region20: #{discriminator28_forward.13} parent=0 // pred_region
    _
  $region21: #{discriminator28_forward.13} parent=0 // pred_fallthru
    _
  // Predicated region
  $region22: #{discriminator28_forward.13} parent=0 // pred_check
    _
  $region23: #{discriminator28_forward.13} parent=0 // pred_check_branch
    %24 = sbr.rel (0) target = $region25
  $region24: #{discriminator28_forward.13} parent=0 // pred_region
    _
  $region25: #{discriminator28_forward.13} parent=0 // pred_fallthru
    _
  %v26 = vld [vmem:[%s0] sm:$0xff]
  %v27 = vld [vmem:[%s0 + $0x8] sm:$0xf]
  %v28 = vld [vmem:[%s0 + $0xc] sm:$0xff]
  %v29 = vld [vmem:[%s0 + $0x14] sm:$0xf]
  %v30 = vld [vmem:[%s0 + $0x18] sm:$0x11]
  %v31 = vld [vmem:[%s0 + $0x20] sm:$0x1]
  %v32 = vld [vmem:[%s1] sm:$0xf]
  %v33 = vld [vmem:[%s1 + $0x4] sm:$0xf]
  %v34 = vld [vmem:[%s1 + $0x8] sm:$0xf]
  %v35 = vld [vmem:[%s1 + $0xc] sm:$0xf]
  %v36 = vld [vmem:[%s1 + $0x10] sm:$0xf]
  %v37 = vld [vmem:[%s1 + $0x14] sm:$0xf]
  %v38 = vld [vmem:[%s1 + $0x18] sm:$0xf]
  %v39 = vld [vmem:[%s1 + $0x1c] sm:$0xf]
  %v40 = vld [vmem:[%s1 + $0x20] sm:$0xf]
  %v41 = vld [vmem:[%s1 + $0x24] sm:$0xf]
  %v42 = vld [vmem:[%s1 + $0x28] sm:$0xf]
  %v43 = vld [vmem:[%s1 + $0x2c] sm:$0xf]
  %v44 = vld [vmem:[%s1 + $0x30] sm:$0xf]
  %v45 = vld [vmem:[%s1 + $0x34] sm:$0xf]
  %v46 = vld [vmem:[%s1 + $0x38] sm:$0xf]
  %v47 = vld [vmem:[%s1 + $0x3c] sm:$0xf]
  %v48 = vld [vmem:[%s1 + $0x40] sm:$0xf]
  %v49 = vld [vmem:[%s1 + $0x44] sm:$0xf]
  %v50 = vld [vmem:[%s1 + $0x48] sm:$0xf]
  %v51 = vld [vmem:[%s1 + $0x4c] sm:$0xf]
  %v52 = vld [vmem:[%s1 + $0x50] sm:$0xf]
  %v53 = vld [vmem:[%s1 + $0x54] sm:$0xf]
  %v54 = vld [vmem:[%s1 + $0x58] sm:$0xf]
  %v55 = vld [vmem:[%s1 + $0x5c] sm:$0xf]
  %v56 = vld [vmem:[%s1 + $0x60] sm:$0xf]
  %v57 = vld [vmem:[%s1 + $0x64] sm:$0xf]
  %v58 = vld [vmem:[%s1 + $0x68] sm:$0xf]
  %v59 = vld [vmem:[%s1 + $0x6c] sm:$0xf]
  %v60 = vld [vmem:[%s1 + $0x70] sm:$0xf]
  %v61 = vld [vmem:[%s1 + $0x74] sm:$0xf]
  %v62 = vld [vmem:[%s1 + $0x78] sm:$0xf]
  %v63 = vld [vmem:[%s1 + $0x7c] sm:$0xf]
  %v64 = vld [vmem:[%s1 + $0x80] sm:$0xf]
  %v65 = vld [vmem:[%s1 + $0x84] sm:$0xf]
  %v66 = vld [vmem:[%s1 + $0x88] sm:$0xf]
  %v67 = vld [vmem:[%s1 + $0x8c] sm:$0xf]
  %v68 = vld [vmem:[%s2] sm:$0x1]
  %v70 = vlaneseq
  %v71 = vshrl.u32 %v70, 7
  %v72 = vsub.s32 0, %v71
  %v73 = vrot.slane %v68, %v72
  %v81 = vunpack.c.l.b16 %v26
  %v82 = vunpack.c.h.b16 %v26
  %v83 = vunpack.c.l.b16 %v27
  %v84 = vunpack.c.l.b16 %v28
  %v85 = vunpack.c.h.b16 %v28
  %v86 = vunpack.c.l.b16 %v29
  %v87 = vunpack.c.l.b16 %v30
  %v88 = vunpack.c.h.b16 %v30
  %v89 = vunpack.c.l.b16 %v31
  %v90 = vpack.c.b16 %v84, %v81
  %v91 = vpack.c.b16 %v85, %v82
  %v92 = vpack.c.b16 %v86, %v83
  %v93 = vpack.c.b16 %v87, %v87
  %v94 = vpack.c.b16 %v88, %v88
  %v95 = vpack.c.b16 %v89, %v89
  %v136 = vunpack.c.l.b16 %v32
  %v137 = vunpack.c.l.b16 %v33
  %v138 = vunpack.c.l.b16 %v34
  %v139 = vunpack.c.l.b16 %v35
  %v140 = vunpack.c.l.b16 %v36
  %v141 = vunpack.c.l.b16 %v37
  %v142 = vunpack.c.l.b16 %v38
  %v143 = vunpack.c.l.b16 %v39
  %v144 = vunpack.c.l.b16 %v40
  %v145 = vunpack.c.l.b16 %v41
  %v146 = vunpack.c.l.b16 %v42
  %v147 = vunpack.c.l.b16 %v43
  %v148 = vunpack.c.l.b16 %v44
  %v149 = vunpack.c.l.b16 %v45
  %v150 = vunpack.c.l.b16 %v46
  %v151 = vunpack.c.l.b16 %v47
  %v152 = vunpack.c.l.b16 %v48
  %v153 = vunpack.c.l.b16 %v49
  %v154 = vunpack.c.l.b16 %v50
  %v155 = vunpack.c.l.b16 %v51
  %v156 = vunpack.c.l.b16 %v52
  %v157 = vunpack.c.l.b16 %v53
  %v158 = vunpack.c.l.b16 %v54
  %v159 = vunpack.c.l.b16 %v55
  %v160 = vunpack.c.l.b16 %v56
  %v161 = vunpack.c.l.b16 %v57
  %v162 = vunpack.c.l.b16 %v58
  %v163 = vunpack.c.l.b16 %v59
  %v164 = vunpack.c.l.b16 %v60
  %v165 = vunpack.c.l.b16 %v61
  %v166 = vunpack.c.l.b16 %v62
  %v167 = vunpack.c.l.b16 %v63
  %v168 = vunpack.c.l.b16 %v64
  %v169 = vunpack.c.l.b16 %v65
  %v170 = vunpack.c.l.b16 %v66
  %v171 = vunpack.c.l.b16 %v67
  %v172 = vpack.c.b16 %v137, %v136
  %v173 = vpack.c.b16 %v139, %v138
  %v174 = vpack.c.b16 %v141, %v140
  %v175 = vpack.c.b16 %v143, %v142
  %v176 = vpack.c.b16 %v145, %v144
  %v177 = vpack.c.b16 %v147, %v146
  %v178 = vpack.c.b16 %v149, %v148
  %v179 = vpack.c.b16 %v151, %v150
  %v180 = vpack.c.b16 %v153, %v152
  %v181 = vpack.c.b16 %v155, %v154
  %v182 = vpack.c.b16 %v157, %v156
  %v183 = vpack.c.b16 %v159, %v158
  %v184 = vpack.c.b16 %v161, %v160
  %v185 = vpack.c.b16 %v163, %v162
  %v186 = vpack.c.b16 %v165, %v164
  %v187 = vpack.c.b16 %v167, %v166
  %v188 = vpack.c.b16 %v169, %v168
  %v189 = vpack.c.b16 %v171, %v170
  %vm208 = vcmask 261120
  %v210 = vsel %vm208, %v92, 0
  %v213 = vsel %vm208, %v95, 0
  %215 = vmatprep.subr.bf16.mxu0 0
  %216 = vmatpush1.bf16.msra.mxu0 %v179
  %217 = vmatprep.subr.bf16.mxu0 0
  %218 = vmatpush1.bf16.msra.mxu0 %v178
  %219 = vmatprep.subr.bf16.mxu0 0
  %220 = vmatpush1.bf16.msra.mxu0 %v177
  %221 = vmatprep.subr.bf16.mxu0 0
  %222 = vmatpush1.bf16.msra.mxu0 %v176
  %223 = vmatprep.subr.bf16.mxu0 0
  %224 = vmatpush1.bf16.msra.mxu0 %v175
  %225 = vmatprep.subr.bf16.mxu0 0
  %226 = vmatpush1.bf16.msra.mxu0 %v174
  %227 = vmatprep.subr.bf16.mxu0 0
  %228 = vmatpush1.bf16.msra.mxu0 %v173
  %229 = vmatprep.subr.bf16.mxu0 0
  %230 = vmatpush1.bf16.msra.mxu0 %v172
  %231 = vmatprep.subr.bf16.mxu0 0
  %232 = vmatpush2.bf16.msra.mxu0 %v187
  %233 = vmatprep.subr.bf16.mxu0 0
  %234 = vmatpush2.bf16.msra.mxu0 %v186
  %235 = vmatprep.subr.bf16.mxu0 0
  %236 = vmatpush2.bf16.msra.mxu0 %v185
  %237 = vmatprep.subr.bf16.mxu0 0
  %238 = vmatpush2.bf16.msra.mxu0 %v184
  %239 = vmatprep.subr.bf16.mxu0 0
  %240 = vmatpush2.bf16.msra.mxu0 %v183
  %241 = vmatprep.subr.bf16.mxu0 0
  %242 = vmatpush2.bf16.msra.mxu0 %v182
  %243 = vmatprep.subr.bf16.mxu0 0
  %244 = vmatpush2.bf16.msra.mxu0 %v181
  %245 = vmatprep.subr.bf16.mxu0 0
  %246 = vmatpush2.bf16.msra.mxu0 %v180
  %247 = vmatprep.mubr.bf16.mxu0 %v91
  %248 = vmatmul.mubr.bf16.gmra.mxu0 %v90
  %v249 = vpop.f32.mrf.mxu0
  %v250 = vadd.f32 %v73, %v249
  %v251 = vpop.f32.mrf.mxu0
  %v252 = vpop.f32.mrf.mxu0
  %v253 = vadd.f32 %v73, %v252
  %v254 = vpop.f32.mrf.mxu0
  %255 = vmatprep.mubr.bf16.mxu0 %v94
  %256 = vmatmul.mubr.bf16.gmra.mxu0 %v93
  %v257 = vpop.f32.mrf.mxu0
  %v258 = vadd.f32 %v73, %v257
  %v259 = vpop.f32.mrf.mxu0
  %v260 = vpop.f32.mrf.mxu0
  %v261 = vpop.f32.mrf.mxu0
  %262 = vdwg.mxu0
  %263 = vmatprep.subr.bf16.mxu0 0
  %264 = vmatpush1.bf16.msra.mxu0 0
  %265 = vmatprep.subr.bf16.mxu0 0
  %266 = vmatpush1.bf16.msra.mxu0 0
  %267 = vmatprep.subr.bf16.mxu0 0
  %268 = vmatpush1.bf16.msra.mxu0 0
  %269 = vmatprep.subr.bf16.mxu0 0
  %270 = vmatpush1.bf16.msra.mxu0 0
  %271 = vmatprep.subr.bf16.mxu0 0
  %272 = vmatpush1.bf16.msra.mxu0 0
  %273 = vmatprep.subr.bf16.mxu0 0
  %274 = vmatpush1.bf16.msra.mxu0 0
  %275 = vmatprep.subr.bf16.mxu0 0
  %276 = vmatpush1.bf16.msra.mxu0 %v189
  %277 = vmatprep.subr.bf16.mxu0 0
  %278 = vmatpush1.bf16.msra.mxu0 %v188
  %279 = vmatprep.subr.bf16.mxu0 0
  %280 = vmatpush2.bf16.msra.mxu0 0
  %281 = vmatprep.subr.bf16.mxu0 0
  %282 = vmatpush2.bf16.msra.mxu0 0
  %283 = vmatprep.subr.bf16.mxu0 0
  %284 = vmatpush2.bf16.msra.mxu0 0
  %285 = vmatprep.subr.bf16.mxu0 0
  %286 = vmatpush2.bf16.msra.mxu0 0
  %287 = vmatprep.subr.bf16.mxu0 0
  %288 = vmatpush2.bf16.msra.mxu0 0
  %289 = vmatprep.subr.bf16.mxu0 0
  %290 = vmatpush2.bf16.msra.mxu0 0
  %291 = vmatprep.subr.bf16.mxu0 0
  %292 = vmatpush2.bf16.msra.mxu0 0
  %293 = vmatprep.subr.bf16.mxu0 0
  %294 = vmatpush2.bf16.msra.mxu0 0
  %295 = vmatprep.mubr.bf16.mxu0 0
  %296 = vmatmul.mubr.bf16.gmra.mxu0 %v210
  %v297 = vpop.f32.mrf.mxu0
  %v298 = vadd.f32 %v250, %v297
  %v299 = vpop.f32.mrf.mxu0
  %v300 = vpop.f32.mrf.mxu0
  %v301 = vadd.f32 %v253, %v300
  %v302 = vpop.f32.mrf.mxu0
  %303 = vmatprep.mubr.bf16.mxu0 0
  %304 = vmatmul.mubr.bf16.gmra.mxu0 %v213
  %v305 = vpop.f32.mrf.mxu0
  %v306 = vadd.f32 %v258, %v305
  %v307 = vpop.f32.mrf.mxu0
  %v308 = vpop.f32.mrf.mxu0
  %v309 = vpop.f32.mrf.mxu0
  %310 = vdwg.mxu0
  %v311 = vmax.f32 %v298, 0.0
  %v312 = vmax.f32 %v301, 0.0
  %v313 = vmax.f32 %v306, 0.0
  %v314 = vld [vmem:[%s3] sm:$0x3]
  %vm315 = vcmask 146432
  %v317 = vsel %vm315, %v314, 0
  %vm319 = vcmask 1041408
  %v321 = vsel %vm319, %v313, 0
  %323 = vmatprep.subr.mxu0 0.0
  %324 = vmatpush1.msra.mxu0 0.0
  %325 = vmatprep.subr.mxu0 0.0
  %326 = vmatpush1.msra.mxu0 0.0
  %327 = vmatprep.subr.mxu0 0.0
  %328 = vmatpush1.msra.mxu0 0.0
  %329 = vmatprep.subr.mxu0 0.0
  %330 = vmatpush1.msra.mxu0 0.0
  %331 = vmatprep.subr.mxu0 0.0
  %332 = vmatpush1.msra.mxu0 0.0
  %333 = vmatprep.subr.mxu0 0.0
  %334 = vmatpush1.msra.mxu0 0.0
  %335 = vmatprep.subr.mxu0 0.0
  %336 = vmatpush1.msra.mxu0 0.0
  %337 = vmatprep.subr.mxu0 0.0
  %338 = vmatpush1.msra.mxu0 0.0
  %339 = vmatprep.subr.mxu0 0.0
  %340 = vmatpush1.msra.mxu0 0.0
  %341 = vmatprep.subr.mxu0 0.0
  %342 = vmatpush1.msra.mxu0 0.0
  %343 = vmatprep.subr.mxu0 0.0
  %344 = vmatpush1.msra.mxu0 0.0
  %345 = vmatprep.subr.mxu0 0.0
  %346 = vmatpush1.msra.mxu0 0.0
  %347 = vmatprep.subr.mxu0 0.0
  %348 = vmatpush1.msra.mxu0 0.0
  %349 = vmatprep.subr.mxu0 0.0
  %350 = vmatpush1.msra.mxu0 %v321
  %351 = vmatprep.subr.mxu0 0.0
  %352 = vmatpush1.msra.mxu0 %v312
  %353 = vmatprep.subr.mxu0 0.0
  %354 = vmatpush1.msra.mxu0 %v311
  %355 = vmatprep.subr.mxu0 0.0
  %356 = vmatpush2.msra.mxu0 0.0
  %357 = vmatprep.subr.mxu0 0.0
  %358 = vmatpush2.msra.mxu0 0.0
  %359 = vmatprep.subr.mxu0 0.0
  %360 = vmatpush2.msra.mxu0 0.0
  %361 = vmatprep.subr.mxu0 0.0
  %362 = vmatpush2.msra.mxu0 0.0
  %363 = vmatprep.subr.mxu0 0.0
  %364 = vmatpush2.msra.mxu0 0.0
  %365 = vmatprep.subr.mxu0 0.0
  %366 = vmatpush2.msra.mxu0 0.0
  %367 = vmatprep.subr.mxu0 0.0
  %368 = vmatpush2.msra.mxu0 0.0
  %369 = vmatprep.subr.mxu0 0.0
  %370 = vmatpush2.msra.mxu0 0.0
  %371 = vmatprep.subr.mxu0 0.0
  %372 = vmatpush2.msra.mxu0 0.0
  %373 = vmatprep.subr.mxu0 0.0
  %374 = vmatpush2.msra.mxu0 0.0
  %375 = vmatprep.subr.mxu0 0.0
  %376 = vmatpush2.msra.mxu0 0.0
  %377 = vmatprep.subr.mxu0 0.0
  %378 = vmatpush2.msra.mxu0 0.0
  %379 = vmatprep.subr.mxu0 0.0
  %380 = vmatpush2.msra.mxu0 0.0
  %381 = vmatprep.subr.mxu0 0.0
  %382 = vmatpush2.msra.mxu0 0.0
  %383 = vmatprep.subr.mxu0 0.0
  %384 = vmatpush2.msra.mxu0 0.0
  %385 = vmatprep.subr.mxu0 0.0
  %386 = vmatpush2.msra.mxu0 0.0
  %387 = vmatprep.mubr.f32.mxu0 0.0
  %388 = vmatmul.mubr.f32.gmra.mxu0 %v317
  %v389 = vpop.f32.mrf.mxu0
  %v390 = vadd.f32 0.0, %v389
  %v391 = vpop.f32.mrf.mxu0
  %392 = vdwg.mxu0
  %v393 = vld [vmem:[%s4] sm:$0xff]
  %v394 = vld [vmem:[%s4 + $0x8] sm:$0xff]
  %v395 = vld [vmem:[%s4 + $0x10] sm:$0xff]
  %v396 = vld [vmem:[%s4 + $0x18] sm:$0xff]
  %v397 = vld [vmem:[#allocation2] sm:$0x1]
  %v399 = vlaneseq
  %v400 = vshrl.u32 %v399, 7
  %v401 = vsub.s32 0, %v400
  %v402 = vrot.slane %v397, %v401
  %v405 = vsel %vm208, %v390, 0
  %407 = vmatprep.subr.mxu0 0.0
  %408 = vmatpush1.msra.mxu0 0.0
  %409 = vmatprep.subr.mxu0 0.0
  %410 = vmatpush1.msra.mxu0 0.0
  %411 = vmatprep.subr.mxu0 0.0
  %412 = vmatpush1.msra.mxu0 0.0
  %413 = vmatprep.subr.mxu0 0.0
  %414 = vmatpush1.msra.mxu0 0.0
  %415 = vmatprep.subr.mxu0 0.0
  %416 = vmatpush1.msra.mxu0 0.0
  %417 = vmatprep.subr.mxu0 0.0
  %418 = vmatpush1.msra.mxu0 0.0
  %419 = vmatprep.subr.mxu0 0.0
  %420 = vmatpush1.msra.mxu0 0.0
  %421 = vmatprep.subr.mxu0 0.0
  %422 = vmatpush1.msra.mxu0 0.0
  %423 = vmatprep.subr.mxu0 0.0
  %424 = vmatpush1.msra.mxu0 0.0
  %425 = vmatprep.subr.mxu0 0.0
  %426 = vmatpush1.msra.mxu0 0.0
  %427 = vmatprep.subr.mxu0 0.0
  %428 = vmatpush1.msra.mxu0 0.0
  %429 = vmatprep.subr.mxu0 0.0
  %430 = vmatpush1.msra.mxu0 0.0
  %431 = vmatprep.subr.mxu0 0.0
  %432 = vmatpush1.msra.mxu0 %v396
  %433 = vmatprep.subr.mxu0 0.0
  %434 = vmatpush1.msra.mxu0 %v395
  %435 = vmatprep.subr.mxu0 0.0
  %436 = vmatpush1.msra.mxu0 %v394
  %437 = vmatprep.subr.mxu0 0.0
  %438 = vmatpush1.msra.mxu0 %v393
  %439 = vmatprep.subr.mxu0 0.0
  %440 = vmatpush2.msra.mxu0 0.0
  %441 = vmatprep.subr.mxu0 0.0
  %442 = vmatpush2.msra.mxu0 0.0
  %443 = vmatprep.subr.mxu0 0.0
  %444 = vmatpush2.msra.mxu0 0.0
  %445 = vmatprep.subr.mxu0 0.0
  %446 = vmatpush2.msra.mxu0 0.0
  %447 = vmatprep.subr.mxu0 0.0
  %448 = vmatpush2.msra.mxu0 0.0
  %449 = vmatprep.subr.mxu0 0.0
  %450 = vmatpush2.msra.mxu0 0.0
  %451 = vmatprep.subr.mxu0 0.0
  %452 = vmatpush2.msra.mxu0 0.0
  %453 = vmatprep.subr.mxu0 0.0
  %454 = vmatpush2.msra.mxu0 0.0
  %455 = vmatprep.subr.mxu0 0.0
  %456 = vmatpush2.msra.mxu0 0.0
  %457 = vmatprep.subr.mxu0 0.0
  %458 = vmatpush2.msra.mxu0 0.0
  %459 = vmatprep.subr.mxu0 0.0
  %460 = vmatpush2.msra.mxu0 0.0
  %461 = vmatprep.subr.mxu0 0.0
  %462 = vmatpush2.msra.mxu0 0.0
  %463 = vmatprep.subr.mxu0 0.0
  %464 = vmatpush2.msra.mxu0 0.0
  %465 = vmatprep.subr.mxu0 0.0
  %466 = vmatpush2.msra.mxu0 0.0
  %467 = vmatprep.subr.mxu0 0.0
  %468 = vmatpush2.msra.mxu0 0.0
  %469 = vmatprep.subr.mxu0 0.0
  %470 = vmatpush2.msra.mxu0 0.0
  %471 = vmatprep.mubr.f32.mxu0 0.0
  %472 = vmatmul.mubr.f32.gmra.mxu0 %v405
  %v473 = vpop.f32.mrf.mxu0
  %v474 = vadd.f32 %v402, %v473
  %v475 = vpop.f32.mrf.mxu0
  %476 = vdwg.mxu0
  %v477 = vsub.f32 0.0, %v474
  %v478 = vmul.f32 %v477, 1.442695
  %v479 = vpow.pop %v478
  %v480 = vadd.f32 %v479, 1.0
  %v481 = vrcp.pop %v480
  %v482 = vmul.f32 1.0, %v481
  %vm483 = vcmask 1024
  %484 = vst.msk [vmem:[%s6] sm:$0x3] %vm483, %v482
  // Predicated region
  $region26: #{discriminator28_forward.13} parent=0 // pred_check
    _
  $region27: #{discriminator28_forward.13} parent=0 // pred_check_branch
    %486 = sbr.rel (0) target = $region29
  $region28: #{discriminator28_forward.13} parent=0 // pred_region
    _
  $region29: #{discriminator28_forward.13} parent=0 // pred_fallthru
    _
  // Predicated region
  $region30: #{discriminator28_forward.13} parent=0 // pred_check
    _
  $region31: #{discriminator28_forward.13} parent=0 // pred_check_branch
    %488 = sbr.rel (0) target = $region33
  $region32: #{discriminator28_forward.13} parent=0 // pred_region
    _
  $region33: #{discriminator28_forward.13} parent=0 // pred_fallthru
    _

</llo_original>
